<compile_context>
chip_gen: v5e
topology: v5e:2x2
jax: 0.10.0
libtpu: 0.0.40
codegen_flags: <defaults>
</compile_context>

<pallas_src>
import jax
import jax.numpy as jnp
from jax.experimental import pallas as pl
from jax.experimental.pallas import tpu as pltpu


def _round_up(x, m):
    return (x + m - 1) // m * m


def _pick_tile(n, candidates):
    for c in candidates:
        if c <= n and n % c == 0:
            return c
    return n


# ---------------------------------------------------------------------------
# Tiled MXU matmul with fused epilogues:
#   "bn_stats": emit bf16 output + per-(row-tile) column sum / sum-of-squares
#   "tanh"    : emit f32 tanh(a @ b)
# ---------------------------------------------------------------------------
def _make_mm_kernel(epilogue):
    def kernel(a_ref, b_ref, *refs):
        if epilogue == "bn_stats":
            o_ref, s_ref, acc_ref = refs
        else:
            o_ref, acc_ref = refs

        @pl.when(pl.program_id(2) == 0)
        def _():
            acc_ref[...] = jnp.zeros_like(acc_ref)

        acc_ref[...] += jnp.dot(a_ref[...], b_ref[...],
                                preferred_element_type=jnp.float32)

        @pl.when(pl.program_id(2) == pl.num_programs(2) - 1)
        def _():
            acc = acc_ref[...]
            if epilogue == "tanh":
                o_ref[...] = jnp.tanh(acc).astype(o_ref.dtype)
            else:
                o_ref[...] = acc.astype(o_ref.dtype)
            if epilogue == "bn_stats":
                col_sum = jnp.sum(acc, axis=0, keepdims=True)         # (1, tn)
                col_sq = jnp.sum(acc * acc, axis=0, keepdims=True)    # (1, tn)
                s_ref[...] = jnp.concatenate([col_sum, col_sq],
                                             axis=0).reshape(1, 2, acc.shape[1])
    return kernel


def matmul_pallas(a, b, *, epilogue):
    """a:(M,K) @ b:(K,N) in bf16, f32 accumulation.

    Requires K, N multiples of 128 and M a multiple of 8 (callers construct
    lane-padded operands, so no large pad copies happen here).
    """
    M, K = a.shape
    K2, N = b.shape
    assert K == K2 and K % 128 == 0 and N % 128 == 0 and M % 8 == 0

    tm = _pick_tile(M, (512, 256, 128, 64, 32, 16, 8))
    if M // tm < 2 and tm >= 16:          # give the 2nd v7x TensorCore work
        tm //= 2
    tn = _pick_tile(N, (512, 256, 128))
    tk = _pick_tile(K, (2048, 1024, 512, 256, 128))
    grid = (M // tm, N // tn, K // tk)

    if epilogue == "bn_stats":
        out_shape = (jax.ShapeDtypeStruct((M, N), jnp.bfloat16),
                     jax.ShapeDtypeStruct((grid[0], 2, N), jnp.float32))
        out_specs = (pl.BlockSpec((tm, tn), lambda i, j, k: (i, j)),
                     pl.BlockSpec((1, 2, tn), lambda i, j, k: (i, 0, j)))
    else:  # "tanh"
        out_shape = jax.ShapeDtypeStruct((M, N), jnp.float32)
        out_specs = pl.BlockSpec((tm, tn), lambda i, j, k: (i, j))

    return pl.pallas_call(
        _make_mm_kernel(epilogue),
        out_shape=out_shape,
        grid_spec=pltpu.PrefetchScalarGridSpec(
            num_scalar_prefetch=0,
            grid=grid,
            in_specs=[pl.BlockSpec((tm, tk), lambda i, j, k: (i, k)),
                      pl.BlockSpec((tk, tn), lambda i, j, k: (k, j))],
            out_specs=out_specs,
            scratch_shapes=[pltpu.VMEM((tm, tn), jnp.float32)]),
        compiler_params=pltpu.CompilerParams(
            dimension_semantics=("parallel", "parallel", "arbitrary")),
    )(a.astype(jnp.bfloat16), b.astype(jnp.bfloat16))


# ---------------------------------------------------------------------------
# Tiled BatchNorm apply (precomputed per-channel scale/shift) + ReLU, bf16 out
# ---------------------------------------------------------------------------
def _bn_relu_kernel(x_ref, sc_ref, sh_ref, o_ref):
    y = x_ref[...].astype(jnp.float32) * sc_ref[...] + sh_ref[...]
    o_ref[...] = jnp.maximum(y, 0.0).astype(o_ref.dtype)


def bn_relu_pallas(x, scale, shift):
    """x:(M,Cp) bf16, scale/shift:(1,Cp) f32 -> (M,Cp) bf16."""
    M, C = x.shape
    assert M % 8 == 0 and C % 128 == 0
    tr = _pick_tile(M, (1024, 512, 256, 128, 64, 32, 16, 8))
    if M // tr < 2 and tr >= 16:
        tr //= 2
    return pl.pallas_call(
        _bn_relu_kernel,
        out_shape=jax.ShapeDtypeStruct((M, C), jnp.bfloat16),
        grid_spec=pltpu.PrefetchScalarGridSpec(
            num_scalar_prefetch=0,
            grid=(M // tr,),
            in_specs=[pl.BlockSpec((tr, C), lambda i: (i, 0)),
                      pl.BlockSpec((1, C), lambda i: (0, 0)),
                      pl.BlockSpec((1, C), lambda i: (0, 0))],
            out_specs=pl.BlockSpec((tr, C), lambda i: (i, 0))),
        compiler_params=pltpu.CompilerParams(
            dimension_semantics=("parallel",)),
    )(x, scale, shift)


def _bn_scale_shift(col_sum, col_sq, count, gamma, beta, cp):
    """Fold batch stats (biased var) + gamma/beta into per-channel scale/shift."""
    mean = col_sum / count
    var = jnp.maximum(col_sq / count - mean * mean, 0.0)
    g = jnp.pad(gamma.astype(jnp.float32), (0, cp - gamma.shape[0]))
    b = jnp.pad(beta.astype(jnp.float32), (0, cp - beta.shape[0]))
    sc = g * jax.lax.rsqrt(var + 1e-5)
    sh = b - mean * sc
    return sc.reshape(1, cp), sh.reshape(1, cp)


# ---------------------------------------------------------------------------
# ConvTranspose2d(k=4, s=2, p=1, bias=False) via 4 output-parity phases.
# For output parity p along one axis, only 2 kernel taps contribute:
#   p=0: (k=3, input shift -1), (k=1, shift 0)
#   p=1: (k=2, shift 0),        (k=0, shift +1)
# (kernel index, start offset into the 1-padded input):
# ---------------------------------------------------------------------------
_PHASE_TAPS = {0: ((3, 0), (1, 1)),
               1: ((2, 1), (0, 2))}


def _phase_lhs(xp, py, px, H, W):
    """xp:(B,H+2,W+2,Cp) -> (B*H*W, 4*Cp) gathered taps for parity (py,px)."""
    parts = []
    for _, ys in _PHASE_TAPS[py]:
        for _, xs in _PHASE_TAPS[px]:
            parts.append(xp[:, ys:ys + H, xs:xs + W, :])
    a = jnp.concatenate(parts, axis=-1)
    return a.reshape(-1, a.shape[-1])


def _phase_rhs(w, py, px, cin_p, cout_p):
    """w:(Cin,Cout,4,4) torch layout -> (4*cin_p, cout_p) bf16, zero-padded."""
    cin, cout = w.shape[0], w.shape[1]
    blocks = []
    for ky, _ in _PHASE_TAPS[py]:
        for kx, _ in _PHASE_TAPS[px]:
            wk = jnp.pad(w[:, :, ky, kx],
                         ((0, cin_p - cin), (0, cout_p - cout)))
            blocks.append(wk)
    return jnp.concatenate(blocks, axis=0).astype(jnp.bfloat16)


def conv_transpose_s2(x, w, cout_p, *, epilogue):
    """Phase-decomposed transposed conv.

    x: (B,H,W,Cp_in) bf16 (zero-padded channels).  Returns:
      "bn_stats": ((B,2H,2W,cout_p) bf16 raw conv out, col_sum, col_sq)
      "tanh"    : (B,2H,2W,cout_p) f32 with tanh applied.
    """
    B, H, W, cin_p = x.shape
    Ho, Wo = 2 * H, 2 * W
    xp = jnp.pad(x, ((0, 0), (1, 1), (1, 1), (0, 0)))
    s_sum = jnp.zeros((cout_p,), jnp.float32)
    s_sq = jnp.zeros((cout_p,), jnp.float32)
    phase_out = [[None, None], [None, None]]
    for py in (0, 1):
        for px in (0, 1):
            a = _phase_lhs(xp, py, px, H, W)
            b = _phase_rhs(w, py, px, cin_p, cout_p)
            if epilogue == "bn_stats":
                o, st = matmul_pallas(a, b, epilogue="bn_stats")
                tot = jnp.sum(st, axis=0)                    # (2, cout_p)
                s_sum = s_sum + tot[0]
                s_sq = s_sq + tot[1]
            else:
                o = matmul_pallas(a, b, epilogue="tanh")
            phase_out[py][px] = o.reshape(B, H, W, cout_p)
    # interleave phases: full[b, 2i+py, 2j+px, c] = phase_out[py][px][b,i,j,c]
    y = jnp.stack([jnp.stack(phase_out[0], 0), jnp.stack(phase_out[1], 0)], 0)
    y = jnp.transpose(y, (2, 3, 0, 4, 1, 5)).reshape(B, Ho, Wo, cout_p)
    if epilogue == "bn_stats":
        return y, s_sum, s_sq
    return y


# ---------------------------------------------------------------------------
# Generator forward
# ---------------------------------------------------------------------------
def generator_forward(z_nchw, params):
    (w1, g1, b1, w2, g2, b2, w3, g3, b3, w4, g4, b4, w5) = params
    B, nz = z_nchw.shape[0], z_nchw.shape[1]
    bf16 = jnp.bfloat16

    # ---- layer 1: ConvTranspose2d(nz, ngf*8, 4, 1, 0) on a 1x1 input --------
    # == plain matmul z(B,nz) @ W(nz, 4*4*Cp1) with columns ordered (ky,kx,co);
    # co zero-padded to a 128-multiple so the result is lane-dense NHWC.
    ngf8 = w1.shape[1]
    c1 = _round_up(ngf8, 128)
    nzp = _round_up(nz, 128)
    mp = _round_up(B, 8)
    a1 = jnp.zeros((mp, nzp), bf16).at[:B, :nz].set(
        z_nchw.reshape(B, nz).astype(bf16))
    k1 = jnp.pad(jnp.transpose(w1, (0, 2, 3, 1)),
                 ((0, nzp - nz), (0, 0), (0, 0), (0, c1 - ngf8)))
    k1 = k1.reshape(nzp, 16 * c1).astype(bf16)
    o1, st1 = matmul_pallas(a1, k1, epilogue="bn_stats")
    tot1 = jnp.sum(st1, axis=0).reshape(2, 16, c1).sum(axis=1)   # (2, c1)
    sc, sh = _bn_scale_shift(tot1[0], tot1[1], B * 16, g1, b1, c1)
    y = bn_relu_pallas(o1[:B].reshape(B * 16, c1), sc, sh)
    y = y.reshape(B, 4, 4, c1)

    # ---- layers 2-4: ConvTranspose2d(k=4,s=2,p=1) + BatchNorm + ReLU --------
    for w, g, bta in ((w2, g2, b2), (w3, g3, b3), (w4, g4, b4)):
        cp = _round_up(w.shape[1], 128)
        yraw, s_sum, s_sq = conv_transpose_s2(y, w, cp, epilogue="bn_stats")
        Bq, Ho, Wo, _ = yraw.shape
        sc, sh = _bn_scale_shift(s_sum, s_sq, Bq * Ho * Wo, g, bta, cp)
        y = bn_relu_pallas(yraw.reshape(Bq * Ho * Wo, cp), sc, sh)
        y = y.reshape(Bq, Ho, Wo, cp)

    # ---- layer 5: ConvTranspose2d(ngf, nc, 4, 2, 1) + Tanh (fused) ----------
    nc = w5.shape[1]
    cp5 = _round_up(nc, 128)
    y = conv_transpose_s2(y, w5, cp5, epilogue="tanh")          # f32
    return jnp.transpose(y[:, :, :, :nc], (0, 3, 1, 2))         # NCHW


# ---------------------------------------------------------------------------
# Pure-JAX f32 reference (PyTorch semantics) for a relaxed-tolerance check
# ---------------------------------------------------------------------------
def _reference_forward(z, params):
    (w1, g1, b1, w2, g2, b2, w3, g3, b3, w4, g4, b4, w5) = params

    def convT(x, w, stride, pad):
        k = w.shape[2]
        rhs = jnp.transpose(w, (1, 0, 2, 3))[:, :, ::-1, ::-1]
        return jax.lax.conv_general_dilated(
            x, rhs, window_strides=(1, 1),
            padding=[(k - 1 - pad, k - 1 - pad)] * 2,
            lhs_dilation=(stride, stride),
            dimension_numbers=("NCHW", "OIHW", "NCHW"),
            precision=jax.lax.Precision.HIGHEST)

    def bn_relu(x, g, b):
        m = jnp.mean(x, axis=(0, 2, 3), keepdims=True)
        v = jnp.mean((x - m) ** 2, axis=(0, 2, 3), keepdims=True)
        y = (x - m) * jax.lax.rsqrt(v + 1e-5)
        y = y * g.reshape(1, -1, 1, 1) + b.reshape(1, -1, 1, 1)
        return jnp.maximum(y, 0.0)

    y = bn_relu(convT(z, w1, 1, 0), g1, b1)
    y = bn_relu(convT(y, w2, 2, 1), g2, b2)
    y = bn_relu(convT(y, w3, 2, 1), g3, b3)
    y = bn_relu(convT(y, w4, 2, 1), g4, b4)
    return jnp.tanh(convT(y, w5, 2, 1))


if __name__ == "__main__":
    nz, ngf, nc, B = 16, 8, 3, 2
    key = jax.random.PRNGKey(0)
    keys = jax.random.split(key, 6)

    def w_init(k, shape):
        return 0.05 * jax.random.normal(k, shape, jnp.float32)

    # ConvTranspose2d weight layout: (C_in, C_out, kH, kW)
    w1 = w_init(keys[0], (nz, ngf * 8, 4, 4))
    w2 = w_init(keys[1], (ngf * 8, ngf * 4, 4, 4))
    w3 = w_init(keys[2], (ngf * 4, ngf * 2, 4, 4))
    w4 = w_init(keys[3], (ngf * 2, ngf, 4, 4))
    w5 = w_init(keys[4], (ngf, nc, 4, 4))
    g1, b1 = jnp.ones((ngf * 8,), jnp.float32), jnp.zeros((ngf * 8,), jnp.float32)
    g2, b2 = jnp.ones((ngf * 4,), jnp.float32), jnp.zeros((ngf * 4,), jnp.float32)
    g3, b3 = jnp.ones((ngf * 2,), jnp.float32), jnp.zeros((ngf * 2,), jnp.float32)
    g4, b4 = jnp.ones((ngf,), jnp.float32), jnp.zeros((ngf,), jnp.float32)

    z = jax.random.normal(keys[5], (B, nz, 1, 1), jnp.float32)
    params = (w1, g1, b1, w2, g2, b2, w3, g3, b3, w4, g4, b4, w5)

    out = jax.jit(generator_forward)(z, params)
    out = jax.block_until_ready(out)
    assert out.shape == (B, nc, 64, 64), out.shape
    assert bool(jnp.all(jnp.isfinite(out)))

    ref = jax.jit(_reference_forward)(z, params)
    max_err = float(jnp.max(jnp.abs(out - ref)))
    assert max_err < 0.1, max_err   # bf16 MXU vs f32 reference, relaxed tol

    print("KERNEL_OK")
</pallas_src>

<mosaic_0001>
module attributes {stable_mosaic.version = 11 : i64} {
  func.func @kernel(%arg0: i32, %arg1: i32, %arg2: i32, %arg3: memref<8x128xbf16, #tpu.memory_space<vmem>>, %arg4: memref<128x512xbf16, #tpu.memory_space<vmem>>, %arg5: memref<8x512xbf16, #tpu.memory_space<vmem>>, %arg6: memref<1x2x512xf32, #tpu.memory_space<vmem>>, %arg7: memref<8x512xf32, #tpu.memory_space<vmem>>) attributes {dimension_semantics = [#tpu.dimension_semantics<parallel>, #tpu.dimension_semantics<parallel>, #tpu.dimension_semantics<arbitrary>], iteration_bounds = array<i64: 1, 4, 1>, scalar_prefetch = 0 : i64, scratch_operands = 1 : i64, tpu.core_type = #tpu.core_type<tc>, window_params = [{transform_indices = @transform_0, window_bounds = array<i64: 8, 128>}, {transform_indices = @transform_1, window_bounds = array<i64: 128, 512>}, {transform_indices = @transform_2, window_bounds = array<i64: 8, 512>}, {transform_indices = @transform_3, window_bounds = array<i64: 1, 2, 512>}]} {
    %c0_i32 = arith.constant 0 : i32
    %0 = arith.cmpi eq, %arg2, %c0_i32 : i32
    %1 = arith.extui %0 : i1 to i32
    %c0_i32_0 = arith.constant 0 : i32
    %2 = arith.cmpi ne, %1, %c0_i32_0 : i32
    scf.if %2 {
      %cst_10 = arith.constant 0.000000e+00 : f32
      %12 = vector.broadcast %cst_10 : f32 to vector<8x512xf32>
      %c0_11 = arith.constant 0 : index
      %c0_12 = arith.constant 0 : index
      %13 = vector.load %arg7[%c0_11, %c0_12] : memref<8x512xf32, #tpu.memory_space<vmem>>, vector<8x512xf32>
      tpu.vector_store %arg7[%c0_11, %c0_12], %12 {strides = array<i32>} : memref<8x512xf32, #tpu.memory_space<vmem>>, vector<8x512xf32>,
    } else {
    }
    %c0 = arith.constant 0 : index
    %c0_1 = arith.constant 0 : index
    %3 = vector.load %arg7[%c0, %c0_1] : memref<8x512xf32, #tpu.memory_space<vmem>>, vector<8x512xf32>
    %c0_2 = arith.constant 0 : index
    %c0_3 = arith.constant 0 : index
    %4 = vector.load %arg3[%c0_2, %c0_3] : memref<8x128xbf16, #tpu.memory_space<vmem>>, vector<8x128xbf16>
    %c0_4 = arith.constant 0 : index
    %c0_5 = arith.constant 0 : index
    %5 = vector.load %arg4[%c0_4, %c0_5] : memref<128x512xbf16, #tpu.memory_space<vmem>>, vector<128x512xbf16>
    %cst = arith.constant dense<0.000000e+00> : vector<8x512xf32>
    %6 = tpu.matmul %4, %5, %cst {dimension_numbers = #tpu.dot_dimension_numbers<[1], [0], [0], [1], [0, 0, 1, 1], [], []>} : vector<8x128xbf16>, vector<128x512xbf16>, vector<8x512xf32> -> vector<8x512xf32>
    %7 = arith.addf %3, %6 : vector<8x512xf32>
    %c0_6 = arith.constant 0 : index
    %c0_7 = arith.constant 0 : index
    %8 = vector.load %arg7[%c0_6, %c0_7] : memref<8x512xf32, #tpu.memory_space<vmem>>, vector<8x512xf32>
    tpu.vector_store %arg7[%c0_6, %c0_7], %7 {strides = array<i32>} : memref<8x512xf32, #tpu.memory_space<vmem>>, vector<8x512xf32>,
    %c0_i32_8 = arith.constant 0 : i32
    %9 = arith.cmpi eq, %arg2, %c0_i32_8 : i32
    %10 = arith.extui %9 : i1 to i32
    %c0_i32_9 = arith.constant 0 : i32
    %11 = arith.cmpi ne, %10, %c0_i32_9 : i32
    scf.if %11 {
      %c0_10 = arith.constant 0 : index
      %c0_11 = arith.constant 0 : index
      %12 = vector.load %arg7[%c0_10, %c0_11] : memref<8x512xf32, #tpu.memory_space<vmem>>, vector<8x512xf32>
      %13 = arith.truncf %12 : vector<8x512xf32> to vector<8x512xbf16>
      %c0_12 = arith.constant 0 : index
      %c0_13 = arith.constant 0 : index
      %14 = vector.load %arg5[%c0_12, %c0_13] : memref<8x512xbf16, #tpu.memory_space<vmem>>, vector<8x512xbf16>
      tpu.vector_store %arg5[%c0_12, %c0_13], %13 {strides = array<i32>} : memref<8x512xbf16, #tpu.memory_space<vmem>>, vector<8x512xbf16>,
      %cst_14 = arith.constant dense<0.000000e+00> : vector<512xf32>
      %15 = vector.multi_reduction <add>, %12, %cst_14 [0] : vector<8x512xf32> to vector<512xf32>
      %16 = vector.shape_cast %15 : vector<512xf32> to vector<1x512xf32>
      %17 = arith.mulf %12, %12 : vector<8x512xf32>
      %cst_15 = arith.constant dense<0.000000e+00> : vector<512xf32>
      %18 = vector.multi_reduction <add>, %17, %cst_15 [0] : vector<8x512xf32> to vector<512xf32>
      %19 = vector.shape_cast %18 : vector<512xf32> to vector<1x512xf32>
      %20 = tpu.concatenate %16, %19 in 0 : vector<1x512xf32>, vector<1x512xf32> -> vector<2x512xf32>
      %21 = vector.shape_cast %20 : vector<2x512xf32> to vector<1x2x512xf32>
      %c0_16 = arith.constant 0 : index
      %c0_17 = arith.constant 0 : index
      %c0_18 = arith.constant 0 : index
      %22 = vector.load %arg6[%c0_16, %c0_17, %c0_18] : memref<1x2x512xf32, #tpu.memory_space<vmem>>, vector<1x2x512xf32>
      tpu.vector_store %arg6[%c0_16, %c0_17, %c0_18], %21 {strides = array<i32>} : memref<1x2x512xf32, #tpu.memory_space<vmem>>, vector<1x2x512xf32>,
    } else {
    }
    return
  }
  func.func @transform_0(%arg0: i32, %arg1: i32, %arg2: i32) -> (i32, i32) {
    %c0_i32 = arith.constant 0 : i32
    return %arg0, %arg2 : i32, i32
  }
  func.func @transform_1(%arg0: i32, %arg1: i32, %arg2: i32) -> (i32, i32) {
    %c0_i32 = arith.constant 0 : i32
    return %arg2, %arg1 : i32, i32
  }
  func.func @transform_2(%arg0: i32, %arg1: i32, %arg2: i32) -> (i32, i32) {
    %c0_i32 = arith.constant 0 : i32
    return %arg0, %arg1 : i32, i32
  }
  func.func @transform_3(%arg0: i32, %arg1: i32, %arg2: i32) -> (i32, i32, i32) {
    %c0_i32 = arith.constant 0 : i32
    %c0_i32_0 = arith.constant 0 : i32
    return %arg0, %c0_i32, %arg1 : i32, i32, i32
  }
}

module attributes {stable_mosaic.version = 11 : i64} {
  func.func @_bn_relu_kernel(%arg0: i32, %arg1: memref<16x128xbf16, #tpu.memory_space<vmem>>, %arg2: memref<1x128xf32, #tpu.memory_space<vmem>>, %arg3: memref<1x128xf32, #tpu.memory_space<vmem>>, %arg4: memref<16x128xbf16, #tpu.memory_space<vmem>>) attributes {dimension_semantics = [#tpu.dimension_semantics<parallel>], iteration_bounds = array<i64: 2>, scalar_prefetch = 0 : i64, scratch_operands = 0 : i64, tpu.core_type = #tpu.core_type<tc>, window_params = [{transform_indices = @transform_0, window_bounds = array<i64: 16, 128>}, {pipeline_mode = #tpu.pipeline_mode<synchronous>, transform_indices = @transform_1, window_bounds = array<i64: 1, 128>}, {pipeline_mode = #tpu.pipeline_mode<synchronous>, transform_indices = @transform_2, window_bounds = array<i64: 1, 128>}, {transform_indices = @transform_3, window_bounds = array<i64: 16, 128>}]} {
    %c0 = arith.constant 0 : index
    %c0_0 = arith.constant 0 : index
    %0 = vector.load %arg1[%c0, %c0_0] : memref<16x128xbf16, #tpu.memory_space<vmem>>, vector<16x128xbf16>
    %1 = arith.extf %0 : vector<16x128xbf16> to vector<16x128xf32>
    %c0_1 = arith.constant 0 : index
    %c0_2 = arith.constant 0 : index
    %2 = vector.load %arg2[%c0_1, %c0_2] : memref<1x128xf32, #tpu.memory_space<vmem>>, vector<1x128xf32>
    %3 = vector.broadcast %2 : vector<1x128xf32> to vector<16x128xf32>
    %4 = arith.mulf %1, %3 : vector<16x128xf32>
    %c0_3 = arith.constant 0 : index
    %c0_4 = arith.constant 0 : index
    %5 = vector.load %arg3[%c0_3, %c0_4] : memref<1x128xf32, #tpu.memory_space<vmem>>, vector<1x128xf32>
    %6 = vector.broadcast %5 : vector<1x128xf32> to vector<16x128xf32>
    %7 = arith.addf %4, %6 : vector<16x128xf32>
    %cst = arith.constant 0.000000e+00 : f32
    %8 = vector.broadcast %cst : f32 to vector<16x128xf32>
    %9 = arith.maximumf %7, %8 : vector<16x128xf32>
    %10 = arith.truncf %9 : vector<16x128xf32> to vector<16x128xbf16>
    %c0_5 = arith.constant 0 : index
    %c0_6 = arith.constant 0 : index
    %11 = vector.load %arg4[%c0_5, %c0_6] : memref<16x128xbf16, #tpu.memory_space<vmem>>, vector<16x128xbf16>
    tpu.vector_store %arg4[%c0_5, %c0_6], %10 {strides = array<i32>} : memref<16x128xbf16, #tpu.memory_space<vmem>>, vector<16x128xbf16>,
    return
  }
  func.func @transform_0(%arg0: i32) -> (i32, i32) {
    %c0_i32 = arith.constant 0 : i32
    %c0_i32_0 = arith.constant 0 : i32
    return %arg0, %c0_i32 : i32, i32
  }
  func.func @transform_1(%arg0: i32) -> (i32, i32) {
    %c0_i32 = arith.constant 0 : i32
    %c0_i32_0 = arith.constant 0 : i32
    %c0_i32_1 = arith.constant 0 : i32
    return %c0_i32, %c0_i32_0 : i32, i32
  }
  func.func @transform_2(%arg0: i32) -> (i32, i32) {
    %c0_i32 = arith.constant 0 : i32
    %c0_i32_0 = arith.constant 0 : i32
    %c0_i32_1 = arith.constant 0 : i32
    return %c0_i32, %c0_i32_0 : i32, i32
  }
  func.func @transform_3(%arg0: i32) -> (i32, i32) {
    %c0_i32 = arith.constant 0 : i32
    %c0_i32_0 = arith.constant 0 : i32
    return %arg0, %c0_i32 : i32, i32
  }
}

module attributes {stable_mosaic.version = 11 : i64} {
  func.func @kernel(%arg0: i32, %arg1: i32, %arg2: i32, %arg3: memref<16x512xbf16, #tpu.memory_space<vmem>>, %arg4: memref<512x128xbf16, #tpu.memory_space<vmem>>, %arg5: memref<16x128xbf16, #tpu.memory_space<vmem>>, %arg6: memref<1x2x128xf32, #tpu.memory_space<vmem>>, %arg7: memref<16x128xf32, #tpu.memory_space<vmem>>) attributes {dimension_semantics = [#tpu.dimension_semantics<parallel>, #tpu.dimension_semantics<parallel>, #tpu.dimension_semantics<arbitrary>], iteration_bounds = array<i64: 2, 1, 1>, scalar_prefetch = 0 : i64, scratch_operands = 1 : i64, tpu.core_type = #tpu.core_type<tc>, window_params = [{transform_indices = @transform_0, window_bounds = array<i64: 16, 512>}, {transform_indices = @transform_1, window_bounds = array<i64: 512, 128>}, {transform_indices = @transform_2, window_bounds = array<i64: 16, 128>}, {transform_indices = @transform_3, window_bounds = array<i64: 1, 2, 128>}]} {
    %c0_i32 = arith.constant 0 : i32
    %0 = arith.cmpi eq, %arg2, %c0_i32 : i32
    %1 = arith.extui %0 : i1 to i32
    %c0_i32_0 = arith.constant 0 : i32
    %2 = arith.cmpi ne, %1, %c0_i32_0 : i32
    scf.if %2 {
      %cst_10 = arith.constant 0.000000e+00 : f32
      %12 = vector.broadcast %cst_10 : f32 to vector<16x128xf32>
      %c0_11 = arith.constant 0 : index
      %c0_12 = arith.constant 0 : index
      %13 = vector.load %arg7[%c0_11, %c0_12] : memref<16x128xf32, #tpu.memory_space<vmem>>, vector<16x128xf32>
      tpu.vector_store %arg7[%c0_11, %c0_12], %12 {strides = array<i32>} : memref<16x128xf32, #tpu.memory_space<vmem>>, vector<16x128xf32>,
    } else {
    }
    %c0 = arith.constant 0 : index
    %c0_1 = arith.constant 0 : index
    %3 = vector.load %arg7[%c0, %c0_1] : memref<16x128xf32, #tpu.memory_space<vmem>>, vector<16x128xf32>
    %c0_2 = arith.constant 0 : index
    %c0_3 = arith.constant 0 : index
    %4 = vector.load %arg3[%c0_2, %c0_3] : memref<16x512xbf16, #tpu.memory_space<vmem>>, vector<16x512xbf16>
    %c0_4 = arith.constant 0 : index
    %c0_5 = arith.constant 0 : index
    %5 = vector.load %arg4[%c0_4, %c0_5] : memref<512x128xbf16, #tpu.memory_space<vmem>>, vector<512x128xbf16>
    %cst = arith.constant dense<0.000000e+00> : vector<16x128xf32>
    %6 = tpu.matmul %4, %5, %cst {dimension_numbers = #tpu.dot_dimension_numbers<[1], [0], [0], [1], [0, 0, 1, 1], [], []>} : vector<16x512xbf16>, vector<512x128xbf16>, vector<16x128xf32> -> vector<16x128xf32>
    %7 = arith.addf %3, %6 : vector<16x128xf32>
    %c0_6 = arith.constant 0 : index
    %c0_7 = arith.constant 0 : index
    %8 = vector.load %arg7[%c0_6, %c0_7] : memref<16x128xf32, #tpu.memory_space<vmem>>, vector<16x128xf32>
    tpu.vector_store %arg7[%c0_6, %c0_7], %7 {strides = array<i32>} : memref<16x128xf32, #tpu.memory_space<vmem>>, vector<16x128xf32>,
    %c0_i32_8 = arith.constant 0 : i32
    %9 = arith.cmpi eq, %arg2, %c0_i32_8 : i32
    %10 = arith.extui %9 : i1 to i32
    %c0_i32_9 = arith.constant 0 : i32
    %11 = arith.cmpi ne, %10, %c0_i32_9 : i32
    scf.if %11 {
      %c0_10 = arith.constant 0 : index
      %c0_11 = arith.constant 0 : index
      %12 = vector.load %arg7[%c0_10, %c0_11] : memref<16x128xf32, #tpu.memory_space<vmem>>, vector<16x128xf32>
      %13 = arith.truncf %12 : vector<16x128xf32> to vector<16x128xbf16>
      %c0_12 = arith.constant 0 : index
      %c0_13 = arith.constant 0 : index
      %14 = vector.load %arg5[%c0_12, %c0_13] : memref<16x128xbf16, #tpu.memory_space<vmem>>, vector<16x128xbf16>
      tpu.vector_store %arg5[%c0_12, %c0_13], %13 {strides = array<i32>} : memref<16x128xbf16, #tpu.memory_space<vmem>>, vector<16x128xbf16>,
      %cst_14 = arith.constant dense<0.000000e+00> : vector<128xf32>
      %15 = vector.multi_reduction <add>, %12, %cst_14 [0] : vector<16x128xf32> to vector<128xf32>
      %16 = vector.shape_cast %15 : vector<128xf32> to vector<1x128xf32>
      %17 = arith.mulf %12, %12 : vector<16x128xf32>
      %cst_15 = arith.constant dense<0.000000e+00> : vector<128xf32>
      %18 = vector.multi_reduction <add>, %17, %cst_15 [0] : vector<16x128xf32> to vector<128xf32>
      %19 = vector.shape_cast %18 : vector<128xf32> to vector<1x128xf32>
      %20 = tpu.concatenate %16, %19 in 0 : vector<1x128xf32>, vector<1x128xf32> -> vector<2x128xf32>
      %21 = vector.shape_cast %20 : vector<2x128xf32> to vector<1x2x128xf32>
      %c0_16 = arith.constant 0 : index
      %c0_17 = arith.constant 0 : index
      %c0_18 = arith.constant 0 : index
      %22 = vector.load %arg6[%c0_16, %c0_17, %c0_18] : memref<1x2x128xf32, #tpu.memory_space<vmem>>, vector<1x2x128xf32>
      tpu.vector_store %arg6[%c0_16, %c0_17, %c0_18], %21 {strides = array<i32>} : memref<1x2x128xf32, #tpu.memory_space<vmem>>, vector<1x2x128xf32>,
    } else {
    }
    return
  }
  func.func @transform_0(%arg0: i32, %arg1: i32, %arg2: i32) -> (i32, i32) {
    %c0_i32 = arith.constant 0 : i32
    return %arg0, %arg2 : i32, i32
  }
  func.func @transform_1(%arg0: i32, %arg1: i32, %arg2: i32) -> (i32, i32) {
    %c0_i32 = arith.constant 0 : i32
    return %arg2, %arg1 : i32, i32
  }
  func.func @transform_2(%arg0: i32, %arg1: i32, %arg2: i32) -> (i32, i32) {
    %c0_i32 = arith.constant 0 : i32
    return %arg0, %arg1 : i32, i32
  }
  func.func @transform_3(%arg0: i32, %arg1: i32, %arg2: i32) -> (i32, i32, i32) {
    %c0_i32 = arith.constant 0 : i32
    %c0_i32_0 = arith.constant 0 : i32
    return %arg0, %c0_i32, %arg1 : i32, i32, i32
  }
}

module attributes {stable_mosaic.version = 11 : i64} {
  func.func @_bn_relu_kernel(%arg0: i32, %arg1: memref<64x128xbf16, #tpu.memory_space<vmem>>, %arg2: memref<1x128xf32, #tpu.memory_space<vmem>>, %arg3: memref<1x128xf32, #tpu.memory_space<vmem>>, %arg4: memref<64x128xbf16, #tpu.memory_space<vmem>>) attributes {dimension_semantics = [#tpu.dimension_semantics<parallel>], iteration_bounds = array<i64: 2>, scalar_prefetch = 0 : i64, scratch_operands = 0 : i64, tpu.core_type = #tpu.core_type<tc>, window_params = [{transform_indices = @transform_0, window_bounds = array<i64: 64, 128>}, {pipeline_mode = #tpu.pipeline_mode<synchronous>, transform_indices = @transform_1, window_bounds = array<i64: 1, 128>}, {pipeline_mode = #tpu.pipeline_mode<synchronous>, transform_indices = @transform_2, window_bounds = array<i64: 1, 128>}, {transform_indices = @transform_3, window_bounds = array<i64: 64, 128>}]} {
    %c0 = arith.constant 0 : index
    %c0_0 = arith.constant 0 : index
    %0 = vector.load %arg1[%c0, %c0_0] : memref<64x128xbf16, #tpu.memory_space<vmem>>, vector<64x128xbf16>
    %1 = arith.extf %0 : vector<64x128xbf16> to vector<64x128xf32>
    %c0_1 = arith.constant 0 : index
    %c0_2 = arith.constant 0 : index
    %2 = vector.load %arg2[%c0_1, %c0_2] : memref<1x128xf32, #tpu.memory_space<vmem>>, vector<1x128xf32>
    %3 = vector.broadcast %2 : vector<1x128xf32> to vector<64x128xf32>
    %4 = arith.mulf %1, %3 : vector<64x128xf32>
    %c0_3 = arith.constant 0 : index
    %c0_4 = arith.constant 0 : index
    %5 = vector.load %arg3[%c0_3, %c0_4] : memref<1x128xf32, #tpu.memory_space<vmem>>, vector<1x128xf32>
    %6 = vector.broadcast %5 : vector<1x128xf32> to vector<64x128xf32>
    %7 = arith.addf %4, %6 : vector<64x128xf32>
    %cst = arith.constant 0.000000e+00 : f32
    %8 = vector.broadcast %cst : f32 to vector<64x128xf32>
    %9 = arith.maximumf %7, %8 : vector<64x128xf32>
    %10 = arith.truncf %9 : vector<64x128xf32> to vector<64x128xbf16>
    %c0_5 = arith.constant 0 : index
    %c0_6 = arith.constant 0 : index
    %11 = vector.load %arg4[%c0_5, %c0_6] : memref<64x128xbf16, #tpu.memory_space<vmem>>, vector<64x128xbf16>
    tpu.vector_store %arg4[%c0_5, %c0_6], %10 {strides = array<i32>} : memref<64x128xbf16, #tpu.memory_space<vmem>>, vector<64x128xbf16>,
    return
  }
  func.func @transform_0(%arg0: i32) -> (i32, i32) {
    %c0_i32 = arith.constant 0 : i32
    %c0_i32_0 = arith.constant 0 : i32
    return %arg0, %c0_i32 : i32, i32
  }
  func.func @transform_1(%arg0: i32) -> (i32, i32) {
    %c0_i32 = arith.constant 0 : i32
    %c0_i32_0 = arith.constant 0 : i32
    %c0_i32_1 = arith.constant 0 : i32
    return %c0_i32, %c0_i32_0 : i32, i32
  }
  func.func @transform_2(%arg0: i32) -> (i32, i32) {
    %c0_i32 = arith.constant 0 : i32
    %c0_i32_0 = arith.constant 0 : i32
    %c0_i32_1 = arith.constant 0 : i32
    return %c0_i32, %c0_i32_0 : i32, i32
  }
  func.func @transform_3(%arg0: i32) -> (i32, i32) {
    %c0_i32 = arith.constant 0 : i32
    %c0_i32_0 = arith.constant 0 : i32
    return %arg0, %c0_i32 : i32, i32
  }
}

module attributes {stable_mosaic.version = 11 : i64} {
  func.func @kernel(%arg0: i32, %arg1: i32, %arg2: i32, %arg3: memref<64x512xbf16, #tpu.memory_space<vmem>>, %arg4: memref<512x128xbf16, #tpu.memory_space<vmem>>, %arg5: memref<64x128xbf16, #tpu.memory_space<vmem>>, %arg6: memref<1x2x128xf32, #tpu.memory_space<vmem>>, %arg7: memref<64x128xf32, #tpu.memory_space<vmem>>) attributes {dimension_semantics = [#tpu.dimension_semantics<parallel>, #tpu.dimension_semantics<parallel>, #tpu.dimension_semantics<arbitrary>], iteration_bounds = array<i64: 2, 1, 1>, scalar_prefetch = 0 : i64, scratch_operands = 1 : i64, tpu.core_type = #tpu.core_type<tc>, window_params = [{transform_indices = @transform_0, window_bounds = array<i64: 64, 512>}, {transform_indices = @transform_1, window_bounds = array<i64: 512, 128>}, {transform_indices = @transform_2, window_bounds = array<i64: 64, 128>}, {transform_indices = @transform_3, window_bounds = array<i64: 1, 2, 128>}]} {
    %c0_i32 = arith.constant 0 : i32
    %0 = arith.cmpi eq, %arg2, %c0_i32 : i32
    %1 = arith.extui %0 : i1 to i32
    %c0_i32_0 = arith.constant 0 : i32
    %2 = arith.cmpi ne, %1, %c0_i32_0 : i32
    scf.if %2 {
      %cst_10 = arith.constant 0.000000e+00 : f32
      %12 = vector.broadcast %cst_10 : f32 to vector<64x128xf32>
      %c0_11 = arith.constant 0 : index
      %c0_12 = arith.constant 0 : index
      %13 = vector.load %arg7[%c0_11, %c0_12] : memref<64x128xf32, #tpu.memory_space<vmem>>, vector<64x128xf32>
      tpu.vector_store %arg7[%c0_11, %c0_12], %12 {strides = array<i32>} : memref<64x128xf32, #tpu.memory_space<vmem>>, vector<64x128xf32>,
    } else {
    }
    %c0 = arith.constant 0 : index
    %c0_1 = arith.constant 0 : index
    %3 = vector.load %arg7[%c0, %c0_1] : memref<64x128xf32, #tpu.memory_space<vmem>>, vector<64x128xf32>
    %c0_2 = arith.constant 0 : index
    %c0_3 = arith.constant 0 : index
    %4 = vector.load %arg3[%c0_2, %c0_3] : memref<64x512xbf16, #tpu.memory_space<vmem>>, vector<64x512xbf16>
    %c0_4 = arith.constant 0 : index
    %c0_5 = arith.constant 0 : index
    %5 = vector.load %arg4[%c0_4, %c0_5] : memref<512x128xbf16, #tpu.memory_space<vmem>>, vector<512x128xbf16>
    %cst = arith.constant dense<0.000000e+00> : vector<64x128xf32>
    %6 = tpu.matmul %4, %5, %cst {dimension_numbers = #tpu.dot_dimension_numbers<[1], [0], [0], [1], [0, 0, 1, 1], [], []>} : vector<64x512xbf16>, vector<512x128xbf16>, vector<64x128xf32> -> vector<64x128xf32>
    %7 = arith.addf %3, %6 : vector<64x128xf32>
    %c0_6 = arith.constant 0 : index
    %c0_7 = arith.constant 0 : index
    %8 = vector.load %arg7[%c0_6, %c0_7] : memref<64x128xf32, #tpu.memory_space<vmem>>, vector<64x128xf32>
    tpu.vector_store %arg7[%c0_6, %c0_7], %7 {strides = array<i32>} : memref<64x128xf32, #tpu.memory_space<vmem>>, vector<64x128xf32>,
    %c0_i32_8 = arith.constant 0 : i32
    %9 = arith.cmpi eq, %arg2, %c0_i32_8 : i32
    %10 = arith.extui %9 : i1 to i32
    %c0_i32_9 = arith.constant 0 : i32
    %11 = arith.cmpi ne, %10, %c0_i32_9 : i32
    scf.if %11 {
      %c0_10 = arith.constant 0 : index
      %c0_11 = arith.constant 0 : index
      %12 = vector.load %arg7[%c0_10, %c0_11] : memref<64x128xf32, #tpu.memory_space<vmem>>, vector<64x128xf32>
      %13 = arith.truncf %12 : vector<64x128xf32> to vector<64x128xbf16>
      %c0_12 = arith.constant 0 : index
      %c0_13 = arith.constant 0 : index
      %14 = vector.load %arg5[%c0_12, %c0_13] : memref<64x128xbf16, #tpu.memory_space<vmem>>, vector<64x128xbf16>
      tpu.vector_store %arg5[%c0_12, %c0_13], %13 {strides = array<i32>} : memref<64x128xbf16, #tpu.memory_space<vmem>>, vector<64x128xbf16>,
      %cst_14 = arith.constant dense<0.000000e+00> : vector<128xf32>
      %15 = vector.multi_reduction <add>, %12, %cst_14 [0] : vector<64x128xf32> to vector<128xf32>
      %16 = vector.shape_cast %15 : vector<128xf32> to vector<1x128xf32>
      %17 = arith.mulf %12, %12 : vector<64x128xf32>
      %cst_15 = arith.constant dense<0.000000e+00> : vector<128xf32>
      %18 = vector.multi_reduction <add>, %17, %cst_15 [0] : vector<64x128xf32> to vector<128xf32>
      %19 = vector.shape_cast %18 : vector<128xf32> to vector<1x128xf32>
      %20 = tpu.concatenate %16, %19 in 0 : vector<1x128xf32>, vector<1x128xf32> -> vector<2x128xf32>
      %21 = vector.shape_cast %20 : vector<2x128xf32> to vector<1x2x128xf32>
      %c0_16 = arith.constant 0 : index
      %c0_17 = arith.constant 0 : index
      %c0_18 = arith.constant 0 : index
      %22 = vector.load %arg6[%c0_16, %c0_17, %c0_18] : memref<1x2x128xf32, #tpu.memory_space<vmem>>, vector<1x2x128xf32>
      tpu.vector_store %arg6[%c0_16, %c0_17, %c0_18], %21 {strides = array<i32>} : memref<1x2x128xf32, #tpu.memory_space<vmem>>, vector<1x2x128xf32>,
    } else {
    }
    return
  }
  func.func @transform_0(%arg0: i32, %arg1: i32, %arg2: i32) -> (i32, i32) {
    %c0_i32 = arith.constant 0 : i32
    return %arg0, %arg2 : i32, i32
  }
  func.func @transform_1(%arg0: i32, %arg1: i32, %arg2: i32) -> (i32, i32) {
    %c0_i32 = arith.constant 0 : i32
    return %arg2, %arg1 : i32, i32
  }
  func.func @transform_2(%arg0: i32, %arg1: i32, %arg2: i32) -> (i32, i32) {
    %c0_i32 = arith.constant 0 : i32
    return %arg0, %arg1 : i32, i32
  }
  func.func @transform_3(%arg0: i32, %arg1: i32, %arg2: i32) -> (i32, i32, i32) {
    %c0_i32 = arith.constant 0 : i32
    %c0_i32_0 = arith.constant 0 : i32
    return %arg0, %c0_i32, %arg1 : i32, i32, i32
  }
}

module attributes {stable_mosaic.version = 11 : i64} {
  func.func @_bn_relu_kernel(%arg0: i32, %arg1: memref<256x128xbf16, #tpu.memory_space<vmem>>, %arg2: memref<1x128xf32, #tpu.memory_space<vmem>>, %arg3: memref<1x128xf32, #tpu.memory_space<vmem>>, %arg4: memref<256x128xbf16, #tpu.memory_space<vmem>>) attributes {dimension_semantics = [#tpu.dimension_semantics<parallel>], iteration_bounds = array<i64: 2>, scalar_prefetch = 0 : i64, scratch_operands = 0 : i64, tpu.core_type = #tpu.core_type<tc>, window_params = [{transform_indices = @transform_0, window_bounds = array<i64: 256, 128>}, {pipeline_mode = #tpu.pipeline_mode<synchronous>, transform_indices = @transform_1, window_bounds = array<i64: 1, 128>}, {pipeline_mode = #tpu.pipeline_mode<synchronous>, transform_indices = @transform_2, window_bounds = array<i64: 1, 128>}, {transform_indices = @transform_3, window_bounds = array<i64: 256, 128>}]} {
    %c0 = arith.constant 0 : index
    %c0_0 = arith.constant 0 : index
    %0 = vector.load %arg1[%c0, %c0_0] : memref<256x128xbf16, #tpu.memory_space<vmem>>, vector<256x128xbf16>
    %1 = arith.extf %0 : vector<256x128xbf16> to vector<256x128xf32>
    %c0_1 = arith.constant 0 : index
    %c0_2 = arith.constant 0 : index
    %2 = vector.load %arg2[%c0_1, %c0_2] : memref<1x128xf32, #tpu.memory_space<vmem>>, vector<1x128xf32>
    %3 = vector.broadcast %2 : vector<1x128xf32> to vector<256x128xf32>
    %4 = arith.mulf %1, %3 : vector<256x128xf32>
    %c0_3 = arith.constant 0 : index
    %c0_4 = arith.constant 0 : index
    %5 = vector.load %arg3[%c0_3, %c0_4] : memref<1x128xf32, #tpu.memory_space<vmem>>, vector<1x128xf32>
    %6 = vector.broadcast %5 : vector<1x128xf32> to vector<256x128xf32>
    %7 = arith.addf %4, %6 : vector<256x128xf32>
    %cst = arith.constant 0.000000e+00 : f32
    %8 = vector.broadcast %cst : f32 to vector<256x128xf32>
    %9 = arith.maximumf %7, %8 : vector<256x128xf32>
    %10 = arith.truncf %9 : vector<256x128xf32> to vector<256x128xbf16>
    %c0_5 = arith.constant 0 : index
    %c0_6 = arith.constant 0 : index
    %11 = vector.load %arg4[%c0_5, %c0_6] : memref<256x128xbf16, #tpu.memory_space<vmem>>, vector<256x128xbf16>
    tpu.vector_store %arg4[%c0_5, %c0_6], %10 {strides = array<i32>} : memref<256x128xbf16, #tpu.memory_space<vmem>>, vector<256x128xbf16>,
    return
  }
  func.func @transform_0(%arg0: i32) -> (i32, i32) {
    %c0_i32 = arith.constant 0 : i32
    %c0_i32_0 = arith.constant 0 : i32
    return %arg0, %c0_i32 : i32, i32
  }
  func.func @transform_1(%arg0: i32) -> (i32, i32) {
    %c0_i32 = arith.constant 0 : i32
    %c0_i32_0 = arith.constant 0 : i32
    %c0_i32_1 = arith.constant 0 : i32
    return %c0_i32, %c0_i32_0 : i32, i32
  }
  func.func @transform_2(%arg0: i32) -> (i32, i32) {
    %c0_i32 = arith.constant 0 : i32
    %c0_i32_0 = arith.constant 0 : i32
    %c0_i32_1 = arith.constant 0 : i32
    return %c0_i32, %c0_i32_0 : i32, i32
  }
  func.func @transform_3(%arg0: i32) -> (i32, i32) {
    %c0_i32 = arith.constant 0 : i32
    %c0_i32_0 = arith.constant 0 : i32
    return %arg0, %c0_i32 : i32, i32
  }
}

module attributes {stable_mosaic.version = 11 : i64} {
  func.func @kernel(%arg0: i32, %arg1: i32, %arg2: i32, %arg3: memref<256x512xbf16, #tpu.memory_space<vmem>>, %arg4: memref<512x128xbf16, #tpu.memory_space<vmem>>, %arg5: memref<256x128xbf16, #tpu.memory_space<vmem>>, %arg6: memref<1x2x128xf32, #tpu.memory_space<vmem>>, %arg7: memref<256x128xf32, #tpu.memory_space<vmem>>) attributes {dimension_semantics = [#tpu.dimension_semantics<parallel>, #tpu.dimension_semantics<parallel>, #tpu.dimension_semantics<arbitrary>], iteration_bounds = array<i64: 2, 1, 1>, scalar_prefetch = 0 : i64, scratch_operands = 1 : i64, tpu.core_type = #tpu.core_type<tc>, window_params = [{transform_indices = @transform_0, window_bounds = array<i64: 256, 512>}, {transform_indices = @transform_1, window_bounds = array<i64: 512, 128>}, {transform_indices = @transform_2, window_bounds = array<i64: 256, 128>}, {transform_indices = @transform_3, window_bounds = array<i64: 1, 2, 128>}]} {
    %c0_i32 = arith.constant 0 : i32
    %0 = arith.cmpi eq, %arg2, %c0_i32 : i32
    %1 = arith.extui %0 : i1 to i32
    %c0_i32_0 = arith.constant 0 : i32
    %2 = arith.cmpi ne, %1, %c0_i32_0 : i32
    scf.if %2 {
      %cst_10 = arith.constant 0.000000e+00 : f32
      %12 = vector.broadcast %cst_10 : f32 to vector<256x128xf32>
      %c0_11 = arith.constant 0 : index
      %c0_12 = arith.constant 0 : index
      %13 = vector.load %arg7[%c0_11, %c0_12] : memref<256x128xf32, #tpu.memory_space<vmem>>, vector<256x128xf32>
      tpu.vector_store %arg7[%c0_11, %c0_12], %12 {strides = array<i32>} : memref<256x128xf32, #tpu.memory_space<vmem>>, vector<256x128xf32>,
    } else {
    }
    %c0 = arith.constant 0 : index
    %c0_1 = arith.constant 0 : index
    %3 = vector.load %arg7[%c0, %c0_1] : memref<256x128xf32, #tpu.memory_space<vmem>>, vector<256x128xf32>
    %c0_2 = arith.constant 0 : index
    %c0_3 = arith.constant 0 : index
    %4 = vector.load %arg3[%c0_2, %c0_3] : memref<256x512xbf16, #tpu.memory_space<vmem>>, vector<256x512xbf16>
    %c0_4 = arith.constant 0 : index
    %c0_5 = arith.constant 0 : index
    %5 = vector.load %arg4[%c0_4, %c0_5] : memref<512x128xbf16, #tpu.memory_space<vmem>>, vector<512x128xbf16>
    %cst = arith.constant dense<0.000000e+00> : vector<256x128xf32>
    %6 = tpu.matmul %4, %5, %cst {dimension_numbers = #tpu.dot_dimension_numbers<[1], [0], [0], [1], [0, 0, 1, 1], [], []>} : vector<256x512xbf16>, vector<512x128xbf16>, vector<256x128xf32> -> vector<256x128xf32>
    %7 = arith.addf %3, %6 : vector<256x128xf32>
    %c0_6 = arith.constant 0 : index
    %c0_7 = arith.constant 0 : index
    %8 = vector.load %arg7[%c0_6, %c0_7] : memref<256x128xf32, #tpu.memory_space<vmem>>, vector<256x128xf32>
    tpu.vector_store %arg7[%c0_6, %c0_7], %7 {strides = array<i32>} : memref<256x128xf32, #tpu.memory_space<vmem>>, vector<256x128xf32>,
    %c0_i32_8 = arith.constant 0 : i32
    %9 = arith.cmpi eq, %arg2, %c0_i32_8 : i32
    %10 = arith.extui %9 : i1 to i32
    %c0_i32_9 = arith.constant 0 : i32
    %11 = arith.cmpi ne, %10, %c0_i32_9 : i32
    scf.if %11 {
      %c0_10 = arith.constant 0 : index
      %c0_11 = arith.constant 0 : index
      %12 = vector.load %arg7[%c0_10, %c0_11] : memref<256x128xf32, #tpu.memory_space<vmem>>, vector<256x128xf32>
      %13 = arith.truncf %12 : vector<256x128xf32> to vector<256x128xbf16>
      %c0_12 = arith.constant 0 : index
      %c0_13 = arith.constant 0 : index
      %14 = vector.load %arg5[%c0_12, %c0_13] : memref<256x128xbf16, #tpu.memory_space<vmem>>, vector<256x128xbf16>
      tpu.vector_store %arg5[%c0_12, %c0_13], %13 {strides = array<i32>} : memref<256x128xbf16, #tpu.memory_space<vmem>>, vector<256x128xbf16>,
      %cst_14 = arith.constant dense<0.000000e+00> : vector<128xf32>
      %15 = vector.multi_reduction <add>, %12, %cst_14 [0] : vector<256x128xf32> to vector<128xf32>
      %16 = vector.shape_cast %15 : vector<128xf32> to vector<1x128xf32>
      %17 = arith.mulf %12, %12 : vector<256x128xf32>
      %cst_15 = arith.constant dense<0.000000e+00> : vector<128xf32>
      %18 = vector.multi_reduction <add>, %17, %cst_15 [0] : vector<256x128xf32> to vector<128xf32>
      %19 = vector.shape_cast %18 : vector<128xf32> to vector<1x128xf32>
      %20 = tpu.concatenate %16, %19 in 0 : vector<1x128xf32>, vector<1x128xf32> -> vector<2x128xf32>
      %21 = vector.shape_cast %20 : vector<2x128xf32> to vector<1x2x128xf32>
      %c0_16 = arith.constant 0 : index
      %c0_17 = arith.constant 0 : index
      %c0_18 = arith.constant 0 : index
      %22 = vector.load %arg6[%c0_16, %c0_17, %c0_18] : memref<1x2x128xf32, #tpu.memory_space<vmem>>, vector<1x2x128xf32>
      tpu.vector_store %arg6[%c0_16, %c0_17, %c0_18], %21 {strides = array<i32>} : memref<1x2x128xf32, #tpu.memory_space<vmem>>, vector<1x2x128xf32>,
    } else {
    }
    return
  }
  func.func @transform_0(%arg0: i32, %arg1: i32, %arg2: i32) -> (i32, i32) {
    %c0_i32 = arith.constant 0 : i32
    return %arg0, %arg2 : i32, i32
  }
  func.func @transform_1(%arg0: i32, %arg1: i32, %arg2: i32) -> (i32, i32) {
    %c0_i32 = arith.constant 0 : i32
    return %arg2, %arg1 : i32, i32
  }
  func.func @transform_2(%arg0: i32, %arg1: i32, %arg2: i32) -> (i32, i32) {
    %c0_i32 = arith.constant 0 : i32
    return %arg0, %arg1 : i32, i32
  }
  func.func @transform_3(%arg0: i32, %arg1: i32, %arg2: i32) -> (i32, i32, i32) {
    %c0_i32 = arith.constant 0 : i32
    %c0_i32_0 = arith.constant 0 : i32
    return %arg0, %c0_i32, %arg1 : i32, i32, i32
  }
}

module attributes {stable_mosaic.version = 11 : i64} {
  func.func @_bn_relu_kernel(%arg0: i32, %arg1: memref<1024x128xbf16, #tpu.memory_space<vmem>>, %arg2: memref<1x128xf32, #tpu.memory_space<vmem>>, %arg3: memref<1x128xf32, #tpu.memory_space<vmem>>, %arg4: memref<1024x128xbf16, #tpu.memory_space<vmem>>) attributes {dimension_semantics = [#tpu.dimension_semantics<parallel>], iteration_bounds = array<i64: 2>, scalar_prefetch = 0 : i64, scratch_operands = 0 : i64, tpu.core_type = #tpu.core_type<tc>, window_params = [{transform_indices = @transform_0, window_bounds = array<i64: 1024, 128>}, {pipeline_mode = #tpu.pipeline_mode<synchronous>, transform_indices = @transform_1, window_bounds = array<i64: 1, 128>}, {pipeline_mode = #tpu.pipeline_mode<synchronous>, transform_indices = @transform_2, window_bounds = array<i64: 1, 128>}, {transform_indices = @transform_3, window_bounds = array<i64: 1024, 128>}]} {
    %c0 = arith.constant 0 : index
    %c0_0 = arith.constant 0 : index
    %0 = vector.load %arg1[%c0, %c0_0] : memref<1024x128xbf16, #tpu.memory_space<vmem>>, vector<1024x128xbf16>
    %1 = arith.extf %0 : vector<1024x128xbf16> to vector<1024x128xf32>
    %c0_1 = arith.constant 0 : index
    %c0_2 = arith.constant 0 : index
    %2 = vector.load %arg2[%c0_1, %c0_2] : memref<1x128xf32, #tpu.memory_space<vmem>>, vector<1x128xf32>
    %3 = vector.broadcast %2 : vector<1x128xf32> to vector<1024x128xf32>
    %4 = arith.mulf %1, %3 : vector<1024x128xf32>
    %c0_3 = arith.constant 0 : index
    %c0_4 = arith.constant 0 : index
    %5 = vector.load %arg3[%c0_3, %c0_4] : memref<1x128xf32, #tpu.memory_space<vmem>>, vector<1x128xf32>
    %6 = vector.broadcast %5 : vector<1x128xf32> to vector<1024x128xf32>
    %7 = arith.addf %4, %6 : vector<1024x128xf32>
    %cst = arith.constant 0.000000e+00 : f32
    %8 = vector.broadcast %cst : f32 to vector<1024x128xf32>
    %9 = arith.maximumf %7, %8 : vector<1024x128xf32>
    %10 = arith.truncf %9 : vector<1024x128xf32> to vector<1024x128xbf16>
    %c0_5 = arith.constant 0 : index
    %c0_6 = arith.constant 0 : index
    %11 = vector.load %arg4[%c0_5, %c0_6] : memref<1024x128xbf16, #tpu.memory_space<vmem>>, vector<1024x128xbf16>
    tpu.vector_store %arg4[%c0_5, %c0_6], %10 {strides = array<i32>} : memref<1024x128xbf16, #tpu.memory_space<vmem>>, vector<1024x128xbf16>,
    return
  }
  func.func @transform_0(%arg0: i32) -> (i32, i32) {
    %c0_i32 = arith.constant 0 : i32
    %c0_i32_0 = arith.constant 0 : i32
    return %arg0, %c0_i32 : i32, i32
  }
  func.func @transform_1(%arg0: i32) -> (i32, i32) {
    %c0_i32 = arith.constant 0 : i32
    %c0_i32_0 = arith.constant 0 : i32
    %c0_i32_1 = arith.constant 0 : i32
    return %c0_i32, %c0_i32_0 : i32, i32
  }
  func.func @transform_2(%arg0: i32) -> (i32, i32) {
    %c0_i32 = arith.constant 0 : i32
    %c0_i32_0 = arith.constant 0 : i32
    %c0_i32_1 = arith.constant 0 : i32
    return %c0_i32, %c0_i32_0 : i32, i32
  }
  func.func @transform_3(%arg0: i32) -> (i32, i32) {
    %c0_i32 = arith.constant 0 : i32
    %c0_i32_0 = arith.constant 0 : i32
    return %arg0, %c0_i32 : i32, i32
  }
}

module attributes {stable_mosaic.version = 11 : i64} {
  func.func @kernel(%arg0: i32, %arg1: i32, %arg2: i32, %arg3: memref<512x512xbf16, #tpu.memory_space<vmem>>, %arg4: memref<512x128xbf16, #tpu.memory_space<vmem>>, %arg5: memref<512x128xf32, #tpu.memory_space<vmem>>, %arg6: memref<512x128xf32, #tpu.memory_space<vmem>>) attributes {dimension_semantics = [#tpu.dimension_semantics<parallel>, #tpu.dimension_semantics<parallel>, #tpu.dimension_semantics<arbitrary>], iteration_bounds = array<i64: 4, 1, 1>, scalar_prefetch = 0 : i64, scratch_operands = 1 : i64, tpu.core_type = #tpu.core_type<tc>, window_params = [{transform_indices = @transform_0, window_bounds = array<i64: 512, 512>}, {transform_indices = @transform_1, window_bounds = array<i64: 512, 128>}, {transform_indices = @transform_2, window_bounds = array<i64: 512, 128>}]} {
    %c0_i32 = arith.constant 0 : i32
    %0 = arith.cmpi eq, %arg2, %c0_i32 : i32
    %1 = arith.extui %0 : i1 to i32
    %c0_i32_0 = arith.constant 0 : i32
    %2 = arith.cmpi ne, %1, %c0_i32_0 : i32
    scf.if %2 {
      %cst_10 = arith.constant 0.000000e+00 : f32
      %12 = vector.broadcast %cst_10 : f32 to vector<512x128xf32>
      %c0_11 = arith.constant 0 : index
      %c0_12 = arith.constant 0 : index
      %13 = vector.load %arg6[%c0_11, %c0_12] : memref<512x128xf32, #tpu.memory_space<vmem>>, vector<512x128xf32>
      tpu.vector_store %arg6[%c0_11, %c0_12], %12 {strides = array<i32>} : memref<512x128xf32, #tpu.memory_space<vmem>>, vector<512x128xf32>,
    } else {
    }
    %c0 = arith.constant 0 : index
    %c0_1 = arith.constant 0 : index
    %3 = vector.load %arg6[%c0, %c0_1] : memref<512x128xf32, #tpu.memory_space<vmem>>, vector<512x128xf32>
    %c0_2 = arith.constant 0 : index
    %c0_3 = arith.constant 0 : index
    %4 = vector.load %arg3[%c0_2, %c0_3] : memref<512x512xbf16, #tpu.memory_space<vmem>>, vector<512x512xbf16>
    %c0_4 = arith.constant 0 : index
    %c0_5 = arith.constant 0 : index
    %5 = vector.load %arg4[%c0_4, %c0_5] : memref<512x128xbf16, #tpu.memory_space<vmem>>, vector<512x128xbf16>
    %cst = arith.constant dense<0.000000e+00> : vector<512x128xf32>
    %6 = tpu.matmul %4, %5, %cst {dimension_numbers = #tpu.dot_dimension_numbers<[1], [0], [0], [1], [0, 0, 1, 1], [], []>} : vector<512x512xbf16>, vector<512x128xbf16>, vector<512x128xf32> -> vector<512x128xf32>
    %7 = arith.addf %3, %6 : vector<512x128xf32>
    %c0_6 = arith.constant 0 : index
    %c0_7 = arith.constant 0 : index
    %8 = vector.load %arg6[%c0_6, %c0_7] : memref<512x128xf32, #tpu.memory_space<vmem>>, vector<512x128xf32>
    tpu.vector_store %arg6[%c0_6, %c0_7], %7 {strides = array<i32>} : memref<512x128xf32, #tpu.memory_space<vmem>>, vector<512x128xf32>,
    %c0_i32_8 = arith.constant 0 : i32
    %9 = arith.cmpi eq, %arg2, %c0_i32_8 : i32
    %10 = arith.extui %9 : i1 to i32
    %c0_i32_9 = arith.constant 0 : i32
    %11 = arith.cmpi ne, %10, %c0_i32_9 : i32
    scf.if %11 {
      %c0_10 = arith.constant 0 : index
      %c0_11 = arith.constant 0 : index
      %12 = vector.load %arg6[%c0_10, %c0_11] : memref<512x128xf32, #tpu.memory_space<vmem>>, vector<512x128xf32>
      %13 = math.tanh %12 : vector<512x128xf32>
      %c0_12 = arith.constant 0 : index
      %c0_13 = arith.constant 0 : index
      %14 = vector.load %arg5[%c0_12, %c0_13] : memref<512x128xf32, #tpu.memory_space<vmem>>, vector<512x128xf32>
      tpu.vector_store %arg5[%c0_12, %c0_13], %13 {strides = array<i32>} : memref<512x128xf32, #tpu.memory_space<vmem>>, vector<512x128xf32>,
    } else {
    }
    return
  }
  func.func @transform_0(%arg0: i32, %arg1: i32, %arg2: i32) -> (i32, i32) {
    %c0_i32 = arith.constant 0 : i32
    return %arg0, %arg2 : i32, i32
  }
  func.func @transform_1(%arg0: i32, %arg1: i32, %arg2: i32) -> (i32, i32) {
    %c0_i32 = arith.constant 0 : i32
    return %arg2, %arg1 : i32, i32
  }
  func.func @transform_2(%arg0: i32, %arg1: i32, %arg2: i32) -> (i32, i32) {
    %c0_i32 = arith.constant 0 : i32
    return %arg0, %arg1 : i32, i32
  }
}

</mosaic_0001>

<llo_original>
// kernel: generator_forward.22
$region0: #{generator_forward.22}
  #allocation0 [shape = 'u32[]', space=smem, size = 0x4, offset = 0x4, fixed_abs, tag = 'smem constant byte address 0x4 - core index']
  #allocation1 [shape = 'u32[72,128]{1,0:T(1,128)}', space=vmem, size = 0x9000, scoped, tag = 'internal scratch']
  %s0 = inlined_call_operand.vmem [shape: bf16[32,128], index: 0, kind: input, shape index: {}]
  %s1 = inlined_call_operand.vmem [shape: f32[1,128], index: 1, kind: input, shape index: {}]
  %s2 = inlined_call_operand.vmem [shape: f32[1,128], index: 2, kind: input, shape index: {}]
  %s3 = inlined_call_operand.vmem [shape: bf16[32,128], index: 3, kind: output, shape index: {}]
  %s4 = sld [smem:[#allocation0]]
  $region45: #{generator_forward.22} parent=0
    _
  %s6 = ssub.s32 1, %s4
  %s7 = scalar_select 0, %s6, %s4
  loop: start=0, step=1, limit=4
  $region2: #{generator_forward.22} parent=0 // loop_pre_header
    _
  $region3: #{generator_forward.22} parent=0 // loop_header
    %s9 = sphi 0, %s13
    %p10 = scmp.ge.s32.totalorder %s9, 4
    %s19 = sphi 0, %s21
    %s22 = sphi 0, %s19
    %s23 = sphi 0, %s22
    %s39 = sphi 0, %s23
    %s43 = sphi 0, %s43
    %s45 = sphi 0, %s43
    %s46 = sphi 0, %s45
    %s60 = sphi 0, %s46
    %s64 = sphi 0, %s64
    %s66 = sphi 0, %s64
    %s67 = sphi 0, %s66
    %s81 = sphi 0, %s67
    %s87 = sphi 0, %s89
    %s90 = sphi 0, %s87
    %s91 = sphi 0, %s90
    %s107 = sphi 0, %s91
  $region4: #{generator_forward.22} parent=0 // loop_header_branch
    %12 = sbr.rel (%p10) target = $region8
  $region5: #{generator_forward.22} parent=0 // loop_body
    %s14 = ssub.s32 %s9, 1
    %s15 = ssub.s32 %s9, 2
    %s16 = sadd.s32 %s9, 1
    %s17 = ssub.s32 %s9, %s16
    %p18 = scmp.eq.s32.totalorder %s17, 0
    %s20 = sadd.s32 %s19, 1
    %s21 = scalar_select %p18, %s19, %s20
    %p24 = pneg %p18
    %p25 = scmp.eq.s32.totalorder %s9, 1
    %p26 = por %p24, %p25
    %p27 = scmp.ne.s32.totalorder %s19, %s22
    %p28 = scmp.eq.s32.totalorder %s9, 0
    %p29 = por %p27, %p28
    %p30 = scmp.ne.s32.totalorder %s19, %s22
    %p31 = scmp.eq.s32.totalorder %s14, 1
    %p32 = por %p30, %p31
    %p33 = scmp.ne.s32.totalorder %s22, %s23
    %p34 = scmp.eq.s32.totalorder %s14, 0
    %p35 = por %p33, %p34
    %p36 = scmp.ne.s32.totalorder %s22, %s23
    %p37 = scmp.eq.s32.totalorder %s15, 1
    %p38 = por %p36, %p37
    %p40 = scmp.ne.s32.totalorder %s23, %s39
    %p41 = scmp.eq.s32.totalorder %s15, 0
    %p42 = por %p40, %p41
    %s44 = sadd.s32 %s43, 1
    %p47 = scmp.eq.s32.totalorder %s9, 1
    %p48 = scmp.ne.s32.totalorder %s43, %s45
    %p49 = scmp.eq.s32.totalorder %s9, 0
    %p50 = por %p48, %p49
    %p51 = scmp.ne.s32.totalorder %s43, %s45
    %p52 = scmp.eq.s32.totalorder %s14, 1
    %p53 = por %p51, %p52
    %p54 = scmp.ne.s32.totalorder %s45, %s46
    %p55 = scmp.eq.s32.totalorder %s14, 0
    %p56 = por %p54, %p55
    %p57 = scmp.ne.s32.totalorder %s45, %s46
    %p58 = scmp.eq.s32.totalorder %s15, 1
    %p59 = por %p57, %p58
    %p61 = scmp.ne.s32.totalorder %s46, %s60
    %p62 = scmp.eq.s32.totalorder %s15, 0
    %p63 = por %p61, %p62
    %s65 = sadd.s32 %s64, 1
    %p68 = scmp.eq.s32.totalorder %s9, 1
    %p69 = scmp.ne.s32.totalorder %s64, %s66
    %p70 = scmp.eq.s32.totalorder %s9, 0
    %p71 = por %p69, %p70
    %p72 = scmp.ne.s32.totalorder %s64, %s66
    %p73 = scmp.eq.s32.totalorder %s14, 1
    %p74 = por %p72, %p73
    %p75 = scmp.ne.s32.totalorder %s66, %s67
    %p76 = scmp.eq.s32.totalorder %s14, 0
    %p77 = por %p75, %p76
    %p78 = scmp.ne.s32.totalorder %s66, %s67
    %p79 = scmp.eq.s32.totalorder %s15, 1
    %p80 = por %p78, %p79
    %p82 = scmp.ne.s32.totalorder %s67, %s81
    %p83 = scmp.eq.s32.totalorder %s15, 0
    %p84 = por %p82, %p83
    %s85 = ssub.s32 %s9, %s16
    %p86 = scmp.eq.s32.totalorder %s85, 0
    %s88 = sadd.s32 %s87, 1
    %s89 = scalar_select %p86, %s87, %s88
    %p92 = pneg %p86
    %p93 = scmp.eq.s32.totalorder %s9, 1
    %p94 = por %p92, %p93
    %p95 = scmp.ne.s32.totalorder %s87, %s90
    %p96 = scmp.eq.s32.totalorder %s9, 0
    %p97 = por %p95, %p96
    %p98 = scmp.ne.s32.totalorder %s87, %s90
    %p99 = scmp.eq.s32.totalorder %s14, 1
    %p100 = por %p98, %p99
    %p101 = scmp.ne.s32.totalorder %s90, %s91
    %p102 = scmp.eq.s32.totalorder %s14, 0
    %p103 = por %p101, %p102
    %p104 = scmp.ne.s32.totalorder %s90, %s91
    %p105 = scmp.eq.s32.totalorder %s15, 1
    %p106 = por %p104, %p105
    %p108 = scmp.ne.s32.totalorder %s91, %s107
    %p109 = scmp.eq.s32.totalorder %s15, 0
    %p110 = por %p108, %p109
    %p111 = scmp.le.s32.totalorder 1, %s9
    %p112 = scmp.lt.s32.totalorder %s9, 3
    %p113 = pnand %p111, %p112
    %p114 = pneg %p113
    // Predicated region
    $region9: #{generator_forward.22} parent=5 // pred_check
      _
    $region10: #{generator_forward.22} parent=5 // pred_check_branch
      %116 = sbr.rel (%p113) target = $region12
    $region11: #{generator_forward.22} parent=5 // pred_region
      %s117 = ssub.s32 %s9, 1
      // Predicated region
      $region13: #{generator_forward.22} parent=11 // pred_check
        %p118 = pneg %p56
      $region14: #{generator_forward.22} parent=11 // pred_check_branch
        %120 = sbr.rel (%p118) target = $region16
      $region15: #{generator_forward.22} parent=11 // pred_region
        _
      $region16: #{generator_forward.22} parent=11 // pred_fallthru
        _
      // Predicated region
      $region17: #{generator_forward.22} parent=11 // pred_check
        %p121 = pneg %p77
      $region18: #{generator_forward.22} parent=11 // pred_check_branch
        %123 = sbr.rel (%p121) target = $region20
      $region19: #{generator_forward.22} parent=11 // pred_region
        _
      $region20: #{generator_forward.22} parent=11 // pred_fallthru
        _
    $region12: #{generator_forward.22} parent=5 // pred_fallthru
      _
    %p124 = scmp.lt.s32.totalorder %s9, 2
    // Predicated region
    $region21: #{generator_forward.22} parent=5 // pred_check
      %p125 = pneg %p124
    $region22: #{generator_forward.22} parent=5 // pred_check_branch
      %127 = sbr.rel (%p125) target = $region24
    $region23: #{generator_forward.22} parent=5 // pred_region
      // Predicated region
      $region25: #{generator_forward.22} parent=23 // pred_check
        %p128 = pneg %p29
      $region26: #{generator_forward.22} parent=23 // pred_check_branch
        %130 = sbr.rel (%p128) target = $region28
      $region27: #{generator_forward.22} parent=23 // pred_region
        %s131 = smul.u32 2, %s9
        %p132 = scmp.lt.s32.totalorder %s131, 3
        %s133 = scalar_select %p132, %s131, 3
        %s134 = smul.addr %s133, 4
        %s135 = scalar_lea.vmem %s0, %s134
        %s136 = smul.u32 2, %s9
      $region28: #{generator_forward.22} parent=23 // pred_fallthru
        _
    $region24: #{generator_forward.22} parent=5 // pred_fallthru
      _
    %p137 = scmp.le.s32.totalorder 1, %s9
    %p138 = scmp.lt.s32.totalorder %s9, 3
    %p139 = pnand %p137, %p138
    %p140 = pneg %p139
    // Predicated region
    $region29: #{generator_forward.22} parent=5 // pred_check
      _
    $region30: #{generator_forward.22} parent=5 // pred_check_branch
      %142 = sbr.rel (%p139) target = $region32
    $region31: #{generator_forward.22} parent=5 // pred_region
      %s143 = ssub.s32 %s9, 1
      %s144 = smul.u32 2, %s14
      %p145 = scmp.lt.s32.totalorder %s144, 3
      %s146 = scalar_select %p145, %s144, 3
      %s147 = smul.addr %s146, 4
      %s148 = scalar_lea.vmem %s0, %s147
      %p149 = pneg %p35
      %p150 = pneg %p32
      %p151 = pneg %p56
      %p152 = pneg %p53
      %p153 = pneg %p77
      %p154 = pneg %p74
      %p155 = pneg %p103
      %p156 = pneg %p100
      %s157 = smul.u32 2, %s14
      %p158 = scmp.lt.s32.totalorder %s157, 3
      %s159 = scalar_select %p158, %s157, 3
      %s160 = smul.addr %s159, 4
      %s161 = scalar_lea.vmem %s3, %s160
      %s162 = smul.u32 2, %s14
      %p163 = scmp.lt.s32.totalorder %s162, 3
      %s164 = scalar_select %p163, %s162, 3
      %s165 = smul.addr %s164, 4
      %s166 = scalar_lea.vmem %s0, %s165
      %s167 = smul.u32 2, %s14
      %s168 = smul.u32 2, %s14
      %p169 = scmp.lt.s32.totalorder %s168, 3
      %s170 = scalar_select %p169, %s168, 3
      %s171 = smul.addr %s170, 4
      %s172 = scalar_lea.vmem %s3, %s171
      %s173 = smul.u32 2, %s14
      %v174 = vld [vmem:[%s166] sm:$0xf]
      %v175 = vld [vmem:[%s166 + $0x4] sm:$0xf]
      %v176 = vunpack.c.l.bf16 %v174
      %v177 = vunpack.c.l.bf16 %v175
      %v178 = vld [vmem:[%s1] sm:$0x1]
      %v180 = vperm.slane %v178, 0
      %v182 = vmul.f32 %v176, %v180
      %v183 = vmul.f32 %v177, %v180
      %v184 = vld [vmem:[%s2] sm:$0x1]
      %v186 = vperm.slane %v184, 0
      %v188 = vadd.f32 %v182, %v186
      %v189 = vadd.f32 %v183, %v186
      %v190 = vmax.f32 %v188, 0.0
      %v191 = vmax.f32 %v189, 0.0
      %v192 = vpack.c.bf16 %v190, %v190
      %v193 = vpack.c.bf16 %v191, %v191
      %194 = vst [vmem:[%s172] sm:$0xf] %v192
      %195 = vst [vmem:[%s172 + $0x4] sm:$0xf] %v193
      %s196 = smul.u32 2, %s14
      %p197 = scmp.lt.s32.totalorder %s196, 3
      %s198 = scalar_select %p197, %s196, 3
      %s199 = smul.addr %s198, 4
      %s200 = scalar_lea.vmem %s3, %s199
      // Predicated region
      $region33: #{generator_forward.22} parent=31 // pred_check
        %p201 = pneg %p100
      $region34: #{generator_forward.22} parent=31 // pred_check_branch
        %203 = sbr.rel (%p201) target = $region36
      $region35: #{generator_forward.22} parent=31 // pred_region
        %s204 = smul.u32 2, %s14
      $region36: #{generator_forward.22} parent=31 // pred_fallthru
        _
    $region32: #{generator_forward.22} parent=5 // pred_fallthru
      _
    %p205 = scmp.le.s32.totalorder 2, %s9
    // Predicated region
    $region37: #{generator_forward.22} parent=5 // pred_check
      %p206 = pneg %p205
    $region38: #{generator_forward.22} parent=5 // pred_check_branch
      %208 = sbr.rel (%p206) target = $region40
    $region39: #{generator_forward.22} parent=5 // pred_region
      %s209 = ssub.s32 %s9, 2
      // Predicated region
      $region41: #{generator_forward.22} parent=39 // pred_check
        %p210 = pneg %p106
      $region42: #{generator_forward.22} parent=39 // pred_check_branch
        %212 = sbr.rel (%p210) target = $region44
      $region43: #{generator_forward.22} parent=39 // pred_region
        %s213 = smul.u32 2, %s15
        %p214 = scmp.lt.s32.totalorder %s213, 3
        %s215 = scalar_select %p214, %s213, 3
        %s216 = smul.addr %s215, 4
        %s217 = scalar_lea.vmem %s3, %s216
      $region44: #{generator_forward.22} parent=39 // pred_fallthru
        _
    $region40: #{generator_forward.22} parent=5 // pred_fallthru
      _
  $region6: #{generator_forward.22} parent=0 // loop_footer
    %s13 = sadd.s32 1, %s9
  $region7: #{generator_forward.22} parent=0 // loop_footer_branch
    %8 = sbr.rel target = $region3
  $region8: #{generator_forward.22} parent=0 // loop_exit
    _

// kernel: generator_forward.21
$region0: #{generator_forward.21}
  #allocation0 [shape = 'u32[]', space=smem, size = 0x4, offset = 0x4, fixed_abs, tag = 'smem constant byte address 0x4 - core index']
  #allocation1 [shape = 'u32[72,128]{1,0:T(1,128)}', space=vmem, size = 0x9000, scoped, tag = 'internal scratch']
  #allocation2 [shape = 'f32[8,512]{1,0:T(8,128)}', space=vmem, size = 0x4000, scoped, tag = 'scratch operand']
  %s0 = inlined_call_operand.vmem [shape: bf16[8,128], index: 0, kind: input, shape index: {}]
  %s1 = inlined_call_operand.vmem [shape: bf16[128,2048], index: 1, kind: input, shape index: {}]
  %s2 = inlined_call_operand.vmem [shape: bf16[8,2048], index: 2, kind: output, shape index: {0}]
  %s3 = inlined_call_operand.vmem [shape: f32[1,2,2048], index: 3, kind: output, shape index: {1}]
  %4 = xla_tuple %s2, %s3
  %s5 = sld [smem:[#allocation0]]
  $region80: #{generator_forward.21} parent=0
    _
  %s7 = ssub.s32 1, %s5
  %s8 = scalar_select 0, %s7, %s5
  $region1: #{generator_forward.21} parent=0
    #allocation3 [shape = 'u8[262144]{0}', space=vmem, size = 0x40000, scoped, tag = 'input window, operand 1']
    loop: start=0, step=1, limit=6
    $region2: #{generator_forward.21} parent=1 // loop_pre_header
      _
    $region3: #{generator_forward.21} parent=1 // loop_header
      %s10 = sphi 0, %s14
      %p11 = scmp.ge.s32.totalorder %s10, 6
      %s17 = sphi 0, %s36
      %s18 = sphi 0, %s32
      %s19 = sphi 0, %s28
      %s20 = sphi 0, %s17
      %s21 = sphi 0, %s18
      %s22 = sphi 0, %s19
      %s23 = sphi 0, %s20
      %s24 = sphi 0, %s21
      %s25 = sphi 0, %s22
      %s41 = sphi 0, %s43
      %s44 = sphi 0, %s41
      %s45 = sphi 0, %s44
      %s61 = sphi 0, %s45
      %s69 = sphi 0, %s71
      %s72 = sphi 0, %s69
      %s73 = sphi 0, %s72
      %s89 = sphi 0, %s73
      %s97 = sphi 0, %s99
      %s100 = sphi 0, %s97
      %s101 = sphi 0, %s100
      %s117 = sphi 0, %s101
      %s125 = sphi 0, %s127
      %s128 = sphi 0, %s125
      %s129 = sphi 0, %s128
      %s145 = sphi 0, %s129
    $region4: #{generator_forward.21} parent=1 // loop_header_branch
      %13 = sbr.rel (%p11) target = $region8
    $region5: #{generator_forward.21} parent=1 // loop_body
      %s15 = ssub.s32 %s10, 1
      %s16 = ssub.s32 %s10, 2
      %s26 = sadd.s32 1, %s19
      %p27 = scmp.ge.s32.totalorder %s26, 1
      %s28 = scalar_select %p27, 0, %s26
      %s29 = sadd.s32 1, %s18
      %s30 = scalar_select %p27, %s29, %s18
      %p31 = scmp.ge.s32.totalorder %s30, 4
      %s32 = scalar_select %p31, 0, %s30
      %s33 = sadd.s32 1, %s17
      %s34 = scalar_select %p31, %s33, %s17
      %p35 = scmp.ge.s32.totalorder %s34, 1
      %s36 = scalar_select %p35, 0, %s34
      %s37 = ssub.s32 %s17, %s36
      %s38 = ssub.s32 %s19, %s28
      %s39 = sor.u32 %s37, %s38
      %p40 = scmp.eq.s32.totalorder %s39, 0
      %s42 = sadd.s32 %s41, 1
      %s43 = scalar_select %p40, %s41, %s42
      %p46 = pneg %p40
      %p47 = scmp.eq.s32.totalorder %s10, 3
      %p48 = por %p46, %p47
      %p49 = scmp.ne.s32.totalorder %s41, %s44
      %p50 = scmp.eq.s32.totalorder %s10, 0
      %p51 = por %p49, %p50
      %p52 = scmp.ne.s32.totalorder %s41, %s44
      %p53 = scmp.eq.s32.totalorder %s15, 3
      %p54 = por %p52, %p53
      %p55 = scmp.ne.s32.totalorder %s44, %s45
      %p56 = scmp.eq.s32.totalorder %s15, 0
      %p57 = por %p55, %p56
      %p58 = scmp.ne.s32.totalorder %s44, %s45
      %p59 = scmp.eq.s32.totalorder %s16, 3
      %p60 = por %p58, %p59
      %p62 = scmp.ne.s32.totalorder %s45, %s61
      %p63 = scmp.eq.s32.totalorder %s16, 0
      %p64 = por %p62, %p63
      %s65 = ssub.s32 %s19, %s28
      %s66 = ssub.s32 %s18, %s32
      %s67 = sor.u32 %s65, %s66
      %p68 = scmp.eq.s32.totalorder %s67, 0
      %s70 = sadd.s32 %s69, 1
      %s71 = scalar_select %p68, %s69, %s70
      %p74 = pneg %p68
      %p75 = scmp.eq.s32.totalorder %s10, 3
      %p76 = por %p74, %p75
      %p77 = scmp.ne.s32.totalorder %s69, %s72
      %p78 = scmp.eq.s32.totalorder %s10, 0
      %p79 = por %p77, %p78
      %p80 = scmp.ne.s32.totalorder %s69, %s72
      %p81 = scmp.eq.s32.totalorder %s15, 3
      %p82 = por %p80, %p81
      %p83 = scmp.ne.s32.totalorder %s72, %s73
      %p84 = scmp.eq.s32.totalorder %s15, 0
      %p85 = por %p83, %p84
      %p86 = scmp.ne.s32.totalorder %s72, %s73
      %p87 = scmp.eq.s32.totalorder %s16, 3
      %p88 = por %p86, %p87
      %p90 = scmp.ne.s32.totalorder %s73, %s89
      %p91 = scmp.eq.s32.totalorder %s16, 0
      %p92 = por %p90, %p91
      %s93 = ssub.s32 %s17, %s36
      %s94 = ssub.s32 %s18, %s32
      %s95 = sor.u32 %s93, %s94
      %p96 = scmp.eq.s32.totalorder %s95, 0
      %s98 = sadd.s32 %s97, 1
      %s99 = scalar_select %p96, %s97, %s98
      %p102 = pneg %p96
      %p103 = scmp.eq.s32.totalorder %s10, 3
      %p104 = por %p102, %p103
      %p105 = scmp.ne.s32.totalorder %s97, %s100
      %p106 = scmp.eq.s32.totalorder %s10, 0
      %p107 = por %p105, %p106
      %p108 = scmp.ne.s32.totalorder %s97, %s100
      %p109 = scmp.eq.s32.totalorder %s15, 3
      %p110 = por %p108, %p109
      %p111 = scmp.ne.s32.totalorder %s100, %s101
      %p112 = scmp.eq.s32.totalorder %s15, 0
      %p113 = por %p111, %p112
      %p114 = scmp.ne.s32.totalorder %s100, %s101
      %p115 = scmp.eq.s32.totalorder %s16, 3
      %p116 = por %p114, %p115
      %p118 = scmp.ne.s32.totalorder %s101, %s117
      %p119 = scmp.eq.s32.totalorder %s16, 0
      %p120 = por %p118, %p119
      %s121 = ssub.s32 %s17, %s36
      %s122 = ssub.s32 %s18, %s32
      %s123 = sor.u32 %s121, %s122
      %p124 = scmp.eq.s32.totalorder %s123, 0
      %s126 = sadd.s32 %s125, 1
      %s127 = scalar_select %p124, %s125, %s126
      %p130 = pneg %p124
      %p131 = scmp.eq.s32.totalorder %s10, 3
      %p132 = por %p130, %p131
      %p133 = scmp.ne.s32.totalorder %s125, %s128
      %p134 = scmp.eq.s32.totalorder %s10, 0
      %p135 = por %p133, %p134
      %p136 = scmp.ne.s32.totalorder %s125, %s128
      %p137 = scmp.eq.s32.totalorder %s15, 3
      %p138 = por %p136, %p137
      %p139 = scmp.ne.s32.totalorder %s128, %s129
      %p140 = scmp.eq.s32.totalorder %s15, 0
      %p141 = por %p139, %p140
      %p142 = scmp.ne.s32.totalorder %s128, %s129
      %p143 = scmp.eq.s32.totalorder %s16, 3
      %p144 = por %p142, %p143
      %p146 = scmp.ne.s32.totalorder %s129, %s145
      %p147 = scmp.eq.s32.totalorder %s16, 0
      %p148 = por %p146, %p147
      %p149 = scmp.le.s32.totalorder 1, %s10
      %p150 = scmp.lt.s32.totalorder %s10, 5
      %p151 = pnand %p149, %p150
      %p152 = pneg %p151
      // Predicated region
      $region9: #{generator_forward.21} parent=5 // pred_check
        _
      $region10: #{generator_forward.21} parent=5 // pred_check_branch
        %154 = sbr.rel (%p151) target = $region12
      $region11: #{generator_forward.21} parent=5 // pred_region
        %s155 = ssub.s32 %s10, 1
        // Predicated region
        $region13: #{generator_forward.21} parent=11 // pred_check
          %p156 = pneg %p57
        $region14: #{generator_forward.21} parent=11 // pred_check_branch
          %158 = sbr.rel (%p156) target = $region16
        $region15: #{generator_forward.21} parent=11 // pred_region
          %p159 = scmp.lt.s32.totalorder %s20, 0
          %s160 = scalar_select %p159, %s20, 0
          %p161 = scmp.lt.s32.totalorder %s22, 0
          %s162 = scalar_select %p161, %s22, 0
          %s163 = sadd.s32 %s162, %s160
          %s164 = smul.addr %s163, 4
          %s165 = scalar_lea.vmem %s0, %s164
        $region16: #{generator_forward.21} parent=11 // pred_fallthru
          _
      $region12: #{generator_forward.21} parent=5 // pred_fallthru
        _
      %p166 = scmp.lt.s32.totalorder %s10, 4
      // Predicated region
      $region17: #{generator_forward.21} parent=5 // pred_check
        %p167 = pneg %p166
      $region18: #{generator_forward.21} parent=5 // pred_check_branch
        %169 = sbr.rel (%p167) target = $region20
      $region19: #{generator_forward.21} parent=5 // pred_region
        // Predicated region
        $region21: #{generator_forward.21} parent=19 // pred_check
          %p170 = pneg %p79
        $region22: #{generator_forward.21} parent=19 // pred_check_branch
          %172 = sbr.rel (%p170) target = $region24
        $region23: #{generator_forward.21} parent=19 // pred_region
          %s173 = sand.u32 %s69, 1
          %s174 = sand.u32 %s69, 1
          %s175 = smul.addr %s174, 256
          %s176 = scalar_lea.vmem [#allocation3], %s175
          %s177 = smul.u32 16, %s19
          %s178 = smul.u32 4, %s18
          %s179 = smul.addr %s177, 16
          %s180 = sadd.s32 %s178, %s179
          %s181 = smul.addr %s180, 4
          %s182 = scalar_lea.vmem %s1, %s181
          // Predicated region
          $region25: #{generator_forward.21} parent=23 // pred_check
            _
          $region26: #{generator_forward.21} parent=23 // pred_check_branch
            %184 = sbr.rel (0) target = $region28
          $region27: #{generator_forward.21} parent=23 // pred_region
            // Predicated region
            $region29: #{generator_forward.21} parent=27 // pred_check
              _
            $region30: #{generator_forward.21} parent=27 // pred_check_branch
              %186 = sbr.rel (0) target = $region32
            $region31: #{generator_forward.21} parent=27 // pred_region
              loop: start=0, step=1, limit=1
              $region33: #{generator_forward.21} parent=31 // loop_pre_header
                _
              $region34: #{generator_forward.21} parent=31 // loop_header
                %s188 = sphi 0, %s192
                %p189 = scmp.ge.s32.totalorder %s188, 1
                %s193 = sphi %s182, %s182
                %s194 = sphi %s176, %s176
              $region35: #{generator_forward.21} parent=31 // loop_header_branch
                %191 = sbr.rel (%p189) target = $region39
              $region36: #{generator_forward.21} parent=31 // loop_body
                %v195 = vld [vmem:[%s193] sm:$0xff]
                %196 = vst [vmem:[%s194] sm:$0xff] %v195
                %v197 = vld [vmem:[%s193 + $0x8] sm:$0xff]
                %198 = vst [vmem:[%s194 + $0x8] sm:$0xff] %v197
                %v199 = vld [vmem:[%s193 + $0x40] sm:$0xff]
                %200 = vst [vmem:[%s194 + $0x10] sm:$0xff] %v199
                %v201 = vld [vmem:[%s193 + $0x48] sm:$0xff]
                %202 = vst [vmem:[%s194 + $0x18] sm:$0xff] %v201
                %v203 = vld [vmem:[%s193 + $0x80] sm:$0xff]
                %204 = vst [vmem:[%s194 + $0x20] sm:$0xff] %v203
                %v205 = vld [vmem:[%s193 + $0x88] sm:$0xff]
                %206 = vst [vmem:[%s194 + $0x28] sm:$0xff] %v205
                %v207 = vld [vmem:[%s193 + $0xc0] sm:$0xff]
                %208 = vst [vmem:[%s194 + $0x30] sm:$0xff] %v207
                %v209 = vld [vmem:[%s193 + $0xc8] sm:$0xff]
                %210 = vst [vmem:[%s194 + $0x38] sm:$0xff] %v209
                %v211 = vld [vmem:[%s193 + $0x100] sm:$0xff]
                %212 = vst [vmem:[%s194 + $0x40] sm:$0xff] %v211
                %v213 = vld [vmem:[%s193 + $0x108] sm:$0xff]
                %214 = vst [vmem:[%s194 + $0x48] sm:$0xff] %v213
                %v215 = vld [vmem:[%s193 + $0x140] sm:$0xff]
                %216 = vst [vmem:[%s194 + $0x50] sm:$0xff] %v215
                %v217 = vld [vmem:[%s193 + $0x148] sm:$0xff]
                %218 = vst [vmem:[%s194 + $0x58] sm:$0xff] %v217
                %v219 = vld [vmem:[%s193 + $0x180] sm:$0xff]
                %220 = vst [vmem:[%s194 + $0x60] sm:$0xff] %v219
                %v221 = vld [vmem:[%s193 + $0x188] sm:$0xff]
                %222 = vst [vmem:[%s194 + $0x68] sm:$0xff] %v221
                %v223 = vld [vmem:[%s193 + $0x1c0] sm:$0xff]
                %224 = vst [vmem:[%s194 + $0x70] sm:$0xff] %v223
                %v225 = vld [vmem:[%s193 + $0x1c8] sm:$0xff]
                %226 = vst [vmem:[%s194 + $0x78] sm:$0xff] %v225
                %v227 = vld [vmem:[%s193 + $0x200] sm:$0xff]
                %228 = vst [vmem:[%s194 + $0x80] sm:$0xff] %v227
                %v229 = vld [vmem:[%s193 + $0x208] sm:$0xff]
                %230 = vst [vmem:[%s194 + $0x88] sm:$0xff] %v229
                %v231 = vld [vmem:[%s193 + $0x240] sm:$0xff]
                %232 = vst [vmem:[%s194 + $0x90] sm:$0xff] %v231
                %v233 = vld [vmem:[%s193 + $0x248] sm:$0xff]
                %234 = vst [vmem:[%s194 + $0x98] sm:$0xff] %v233
                %v235 = vld [vmem:[%s193 + $0x280] sm:$0xff]
                %236 = vst [vmem:[%s194 + $0xa0] sm:$0xff] %v235
                %v237 = vld [vmem:[%s193 + $0x288] sm:$0xff]
                %238 = vst [vmem:[%s194 + $0xa8] sm:$0xff] %v237
                %v239 = vld [vmem:[%s193 + $0x2c0] sm:$0xff]
                %240 = vst [vmem:[%s194 + $0xb0] sm:$0xff] %v239
                %v241 = vld [vmem:[%s193 + $0x2c8] sm:$0xff]
                %242 = vst [vmem:[%s194 + $0xb8] sm:$0xff] %v241
                %v243 = vld [vmem:[%s193 + $0x300] sm:$0xff]
                %244 = vst [vmem:[%s194 + $0xc0] sm:$0xff] %v243
                %v245 = vld [vmem:[%s193 + $0x308] sm:$0xff]
                %246 = vst [vmem:[%s194 + $0xc8] sm:$0xff] %v245
                %v247 = vld [vmem:[%s193 + $0x340] sm:$0xff]
                %248 = vst [vmem:[%s194 + $0xd0] sm:$0xff] %v247
                %v249 = vld [vmem:[%s193 + $0x348] sm:$0xff]
                %250 = vst [vmem:[%s194 + $0xd8] sm:$0xff] %v249
                %v251 = vld [vmem:[%s193 + $0x380] sm:$0xff]
                %252 = vst [vmem:[%s194 + $0xe0] sm:$0xff] %v251
                %v253 = vld [vmem:[%s193 + $0x388] sm:$0xff]
                %254 = vst [vmem:[%s194 + $0xe8] sm:$0xff] %v253
                %v255 = vld [vmem:[%s193 + $0x3c0] sm:$0xff]
                %256 = vst [vmem:[%s194 + $0xf0] sm:$0xff] %v255
                %v257 = vld [vmem:[%s193 + $0x3c8] sm:$0xff]
                %258 = vst [vmem:[%s194 + $0xf8] sm:$0xff] %v257
              $region37: #{generator_forward.21} parent=31 // loop_footer
                %s192 = sadd.s32 1, %s188
              $region38: #{generator_forward.21} parent=31 // loop_footer_branch
                %187 = sbr.rel target = $region34
              $region39: #{generator_forward.21} parent=31 // loop_exit
                _
            $region32: #{generator_forward.21} parent=27 // pred_fallthru
              _
            // Predicated region
            $region40: #{generator_forward.21} parent=27 // pred_check
              _
            $region41: #{generator_forward.21} parent=27 // pred_check_branch
              %260 = sbr.rel target = $region43
            $region42: #{generator_forward.21} parent=27 // pred_region
              _
            $region43: #{generator_forward.21} parent=27 // pred_fallthru
              _
          $region28: #{generator_forward.21} parent=23 // pred_fallthru
            _
          %261 = vnop
        $region24: #{generator_forward.21} parent=19 // pred_fallthru
          _
      $region20: #{generator_forward.21} parent=5 // pred_fallthru
        _
      %p262 = scmp.le.s32.totalorder 1, %s10
      %p263 = scmp.lt.s32.totalorder %s10, 5
      %p264 = pnand %p262, %p263
      %p265 = pneg %p264
      // Predicated region
      $region44: #{generator_forward.21} parent=5 // pred_check
        _
      $region45: #{generator_forward.21} parent=5 // pred_check_branch
        %267 = sbr.rel (%p264) target = $region47
      $region46: #{generator_forward.21} parent=5 // pred_region
        %s268 = ssub.s32 %s10, 1
        %s269 = sand.u32 %s72, 1
        %s270 = sand.u32 %s72, 1
        %s271 = smul.addr %s270, 256
        %s272 = scalar_lea.vmem [#allocation3], %s271
        // Predicated region
        $region48: #{generator_forward.21} parent=46 // pred_check
          %p273 = pneg %p85
        $region49: #{generator_forward.21} parent=46 // pred_check_branch
          %275 = sbr.rel (%p273) target = $region51
        $region50: #{generator_forward.21} parent=46 // pred_region
          _
        $region51: #{generator_forward.21} parent=46 // pred_fallthru
          _
        %p276 = scmp.lt.s32.totalorder %s20, 0
        %s277 = scalar_select %p276, %s20, 0
        %p278 = scmp.lt.s32.totalorder %s22, 0
        %s279 = scalar_select %p278, %s22, 0
        %s280 = sadd.s32 %s279, %s277
        %s281 = smul.addr %s280, 4
        %s282 = scalar_lea.vmem %s0, %s281
        %p283 = pneg %p57
        %p284 = pneg %p54
        %s285 = sand.u32 %s72, 1
        %s286 = sand.u32 %s72, 1
        %s287 = smul.addr %s286, 256
        %s288 = scalar_lea.vmem [#allocation3], %s287
        %p289 = pneg %p85
        %p290 = pneg %p82
        %p291 = pneg %p113
        %p292 = pneg %p110
        %s293 = smul.u32 4, %s21
        %p294 = scmp.lt.s32.totalorder %s20, 0
        %s295 = scalar_select %p294, %s20, 0
        %p296 = scmp.lt.s32.totalorder %s293, 15
        %s297 = scalar_select %p296, %s293, 15
        %s298 = smul.addr %s295, 16
        %s299 = sadd.s32 %s297, %s298
        %s300 = smul.addr %s299, 4
        %s301 = scalar_lea.vmem %s2, %s300
        %p302 = pneg %p141
        %p303 = pneg %p138
        %s304 = smul.u32 4, %s21
        %p305 = scmp.lt.s32.totalorder %s20, 0
        %s306 = scalar_select %p305, %s20, 0
        %p307 = scmp.lt.s32.totalorder %s304, 15
        %s308 = scalar_select %p307, %s304, 15
        %s309 = smul.addr %s306, 16
        %s310 = sadd.s32 %s308, %s309
        %s311 = smul.addr %s310, 2
        %s312 = scalar_lea.vmem %s3, %s311
        %p313 = scmp.lt.s32.totalorder %s20, 0
        %s314 = scalar_select %p313, %s20, 0
        %p315 = scmp.lt.s32.totalorder %s22, 0
        %s316 = scalar_select %p315, %s22, 0
        %s317 = sadd.s32 %s316, %s314
        %s318 = smul.addr %s317, 4
        %s319 = scalar_lea.vmem %s0, %s318
        %s320 = smul.u32 16, %s22
        %s321 = smul.u32 4, %s21
        %s322 = smul.u32 4, %s21
        %p323 = scmp.lt.s32.totalorder %s20, 0
        %s324 = scalar_select %p323, %s20, 0
        %p325 = scmp.lt.s32.totalorder %s322, 15
        %s326 = scalar_select %p325, %s322, 15
        %s327 = smul.addr %s324, 16
        %s328 = sadd.s32 %s326, %s327
        %s329 = smul.addr %s328, 4
        %s330 = scalar_lea.vmem %s2, %s329
        %s331 = smul.u32 4, %s21
        %s332 = smul.u32 4, %s21
        %p333 = scmp.lt.s32.totalorder %s20, 0
        %s334 = scalar_select %p333, %s20, 0
        %p335 = scmp.lt.s32.totalorder %s332, 15
        %s336 = scalar_select %p335, %s332, 15
        %s337 = smul.addr %s334, 16
        %s338 = sadd.s32 %s336, %s337
        %s339 = smul.addr %s338, 2
        %s340 = scalar_lea.vmem %s3, %s339
        %s341 = smul.u32 4, %s21
        %p342 = scmp.eq.s32.totalorder %s22, 0
        // Predicated region
        $region52: #{generator_forward.21} parent=46 // pred_check
          %p343 = pneg %p342
        $region53: #{generator_forward.21} parent=46 // pred_check_branch
          %345 = sbr.rel (%p343) target = $region55
        $region54: #{generator_forward.21} parent=46 // pred_region
          %346 = vst [vmem:[#allocation2] sm:$0xff] 0.0
          %347 = vst [vmem:[#allocation2 + $0x8] sm:$0xff] 0.0
          %348 = vst [vmem:[#allocation2 + $0x10] sm:$0xff] 0.0
          %349 = vst [vmem:[#allocation2 + $0x18] sm:$0xff] 0.0
        $region55: #{generator_forward.21} parent=46 // pred_fallthru
          _
        %v350 = vld [vmem:[#allocation2] sm:$0xff]
        %v351 = vld [vmem:[#allocation2 + $0x8] sm:$0xff]
        %v352 = vld [vmem:[#allocation2 + $0x10] sm:$0xff]
        %v353 = vld [vmem:[#allocation2 + $0x18] sm:$0xff]
        %v354 = vld [vmem:[%s319] sm:$0xf]
        %v355 = vld [vmem:[%s272] sm:$0xff]
        %v356 = vld [vmem:[%s272 + $0x8] sm:$0xff]
        %v357 = vld [vmem:[%s272 + $0x10] sm:$0xff]
        %v358 = vld [vmem:[%s272 + $0x18] sm:$0xff]
        %v359 = vld [vmem:[%s272 + $0x20] sm:$0xff]
        %v360 = vld [vmem:[%s272 + $0x28] sm:$0xff]
        %v361 = vld [vmem:[%s272 + $0x30] sm:$0xff]
        %v362 = vld [vmem:[%s272 + $0x38] sm:$0xff]
        %v363 = vld [vmem:[%s272 + $0x40] sm:$0xff]
        %v364 = vld [vmem:[%s272 + $0x48] sm:$0xff]
        %v365 = vld [vmem:[%s272 + $0x50] sm:$0xff]
        %v366 = vld [vmem:[%s272 + $0x58] sm:$0xff]
        %v367 = vld [vmem:[%s272 + $0x60] sm:$0xff]
        %v368 = vld [vmem:[%s272 + $0x68] sm:$0xff]
        %v369 = vld [vmem:[%s272 + $0x70] sm:$0xff]
        %v370 = vld [vmem:[%s272 + $0x78] sm:$0xff]
        %v371 = vld [vmem:[%s272 + $0x80] sm:$0xff]
        %v372 = vld [vmem:[%s272 + $0x88] sm:$0xff]
        %v373 = vld [vmem:[%s272 + $0x90] sm:$0xff]
        %v374 = vld [vmem:[%s272 + $0x98] sm:$0xff]
        %v375 = vld [vmem:[%s272 + $0xa0] sm:$0xff]
        %v376 = vld [vmem:[%s272 + $0xa8] sm:$0xff]
        %v377 = vld [vmem:[%s272 + $0xb0] sm:$0xff]
        %v378 = vld [vmem:[%s272 + $0xb8] sm:$0xff]
        %v379 = vld [vmem:[%s272 + $0xc0] sm:$0xff]
        %v380 = vld [vmem:[%s272 + $0xc8] sm:$0xff]
        %v381 = vld [vmem:[%s272 + $0xd0] sm:$0xff]
        %v382 = vld [vmem:[%s272 + $0xd8] sm:$0xff]
        %v383 = vld [vmem:[%s272 + $0xe0] sm:$0xff]
        %v384 = vld [vmem:[%s272 + $0xe8] sm:$0xff]
        %v385 = vld [vmem:[%s272 + $0xf0] sm:$0xff]
        %v386 = vld [vmem:[%s272 + $0xf8] sm:$0xff]
        %v419 = vunpack.c.l.b16 %v355
        %v420 = vunpack.c.h.b16 %v355
        %v421 = vunpack.c.l.b16 %v356
        %v422 = vunpack.c.h.b16 %v356
        %v423 = vunpack.c.l.b16 %v357
        %v424 = vunpack.c.h.b16 %v357
        %v425 = vunpack.c.l.b16 %v358
        %v426 = vunpack.c.h.b16 %v358
        %v427 = vunpack.c.l.b16 %v359
        %v428 = vunpack.c.h.b16 %v359
        %v429 = vunpack.c.l.b16 %v360
        %v430 = vunpack.c.h.b16 %v360
        %v431 = vunpack.c.l.b16 %v361
        %v432 = vunpack.c.h.b16 %v361
        %v433 = vunpack.c.l.b16 %v362
        %v434 = vunpack.c.h.b16 %v362
        %v435 = vunpack.c.l.b16 %v363
        %v436 = vunpack.c.h.b16 %v363
        %v437 = vunpack.c.l.b16 %v364
        %v438 = vunpack.c.h.b16 %v364
        %v439 = vunpack.c.l.b16 %v365
        %v440 = vunpack.c.h.b16 %v365
        %v441 = vunpack.c.l.b16 %v366
        %v442 = vunpack.c.h.b16 %v366
        %v443 = vunpack.c.l.b16 %v367
        %v444 = vunpack.c.h.b16 %v367
        %v445 = vunpack.c.l.b16 %v368
        %v446 = vunpack.c.h.b16 %v368
        %v447 = vunpack.c.l.b16 %v369
        %v448 = vunpack.c.h.b16 %v369
        %v449 = vunpack.c.l.b16 %v370
        %v450 = vunpack.c.h.b16 %v370
        %v451 = vunpack.c.l.b16 %v371
        %v452 = vunpack.c.h.b16 %v371
        %v453 = vunpack.c.l.b16 %v372
        %v454 = vunpack.c.h.b16 %v372
        %v455 = vunpack.c.l.b16 %v373
        %v456 = vunpack.c.h.b16 %v373
        %v457 = vunpack.c.l.b16 %v374
        %v458 = vunpack.c.h.b16 %v374
        %v459 = vunpack.c.l.b16 %v375
        %v460 = vunpack.c.h.b16 %v375
        %v461 = vunpack.c.l.b16 %v376
        %v462 = vunpack.c.h.b16 %v376
        %v463 = vunpack.c.l.b16 %v377
        %v464 = vunpack.c.h.b16 %v377
        %v465 = vunpack.c.l.b16 %v378
        %v466 = vunpack.c.h.b16 %v378
        %v467 = vunpack.c.l.b16 %v379
        %v468 = vunpack.c.h.b16 %v379
        %v469 = vunpack.c.l.b16 %v380
        %v470 = vunpack.c.h.b16 %v380
        %v471 = vunpack.c.l.b16 %v381
        %v472 = vunpack.c.h.b16 %v381
        %v473 = vunpack.c.l.b16 %v382
        %v474 = vunpack.c.h.b16 %v382
        %v475 = vunpack.c.l.b16 %v383
        %v476 = vunpack.c.h.b16 %v383
        %v477 = vunpack.c.l.b16 %v384
        %v478 = vunpack.c.h.b16 %v384
        %v479 = vunpack.c.l.b16 %v385
        %v480 = vunpack.c.h.b16 %v385
        %v481 = vunpack.c.l.b16 %v386
        %v482 = vunpack.c.h.b16 %v386
        %v483 = vpack.c.b16 %v423, %v419
        %v484 = vpack.c.b16 %v424, %v420
        %v485 = vpack.c.b16 %v425, %v421
        %v486 = vpack.c.b16 %v426, %v422
        %v487 = vpack.c.b16 %v431, %v427
        %v488 = vpack.c.b16 %v432, %v428
        %v489 = vpack.c.b16 %v433, %v429
        %v490 = vpack.c.b16 %v434, %v430
        %v491 = vpack.c.b16 %v439, %v435
        %v492 = vpack.c.b16 %v440, %v436
        %v493 = vpack.c.b16 %v441, %v437
        %v494 = vpack.c.b16 %v442, %v438
        %v495 = vpack.c.b16 %v447, %v443
        %v496 = vpack.c.b16 %v448, %v444
        %v497 = vpack.c.b16 %v449, %v445
        %v498 = vpack.c.b16 %v450, %v446
        %v499 = vpack.c.b16 %v455, %v451
        %v500 = vpack.c.b16 %v456, %v452
        %v501 = vpack.c.b16 %v457, %v453
        %v502 = vpack.c.b16 %v458, %v454
        %v503 = vpack.c.b16 %v463, %v459
        %v504 = vpack.c.b16 %v464, %v460
        %v505 = vpack.c.b16 %v465, %v461
        %v506 = vpack.c.b16 %v466, %v462
        %v507 = vpack.c.b16 %v471, %v467
        %v508 = vpack.c.b16 %v472, %v468
        %v509 = vpack.c.b16 %v473, %v469
        %v510 = vpack.c.b16 %v474, %v470
        %v511 = vpack.c.b16 %v479, %v475
        %v512 = vpack.c.b16 %v480, %v476
        %v513 = vpack.c.b16 %v481, %v477
        %v514 = vpack.c.b16 %v482, %v478
        %547 = vmatpush.bf16.msra.mxu0 %v511
        %548 = vmatpush.bf16.msra.mxu0 %v507
        %549 = vmatpush.bf16.msra.mxu0 %v503
        %550 = vmatpush.bf16.msra.mxu0 %v499
        %551 = vmatpush.bf16.msra.mxu0 %v495
        %552 = vmatpush.bf16.msra.mxu0 %v491
        %553 = vmatpush.bf16.msra.mxu0 %v487
        %554 = vmatpush.bf16.msra.mxu0 %v483
        %555 = vmatmul.bf16.gmra.mxu0 %v354
        %v556 = vpop.f32.mrf.mxu0
        %v557 = vadd.f32 0.0, %v556
        %v558 = vpop.f32.mrf.mxu0
        %559 = vdwg.mxu0
        %560 = vmatpush.bf16.msra.mxu0 %v512
        %561 = vmatpush.bf16.msra.mxu0 %v508
        %562 = vmatpush.bf16.msra.mxu0 %v504
        %563 = vmatpush.bf16.msra.mxu0 %v500
        %564 = vmatpush.bf16.msra.mxu0 %v496
        %565 = vmatpush.bf16.msra.mxu0 %v492
        %566 = vmatpush.bf16.msra.mxu0 %v488
        %567 = vmatpush.bf16.msra.mxu0 %v484
        %568 = vmatmul.bf16.gmra.mxu0 %v354
        %v569 = vpop.f32.mrf.mxu0
        %v570 = vadd.f32 0.0, %v569
        %v571 = vpop.f32.mrf.mxu0
        %572 = vdwg.mxu0
        %573 = vmatpush.bf16.msra.mxu0 %v513
        %574 = vmatpush.bf16.msra.mxu0 %v509
        %575 = vmatpush.bf16.msra.mxu0 %v505
        %576 = vmatpush.bf16.msra.mxu0 %v501
        %577 = vmatpush.bf16.msra.mxu0 %v497
        %578 = vmatpush.bf16.msra.mxu0 %v493
        %579 = vmatpush.bf16.msra.mxu0 %v489
        %580 = vmatpush.bf16.msra.mxu0 %v485
        %581 = vmatmul.bf16.gmra.mxu0 %v354
        %v582 = vpop.f32.mrf.mxu0
        %v583 = vadd.f32 0.0, %v582
        %v584 = vpop.f32.mrf.mxu0
        %585 = vdwg.mxu0
        %586 = vmatpush.bf16.msra.mxu0 %v514
        %587 = vmatpush.bf16.msra.mxu0 %v510
        %588 = vmatpush.bf16.msra.mxu0 %v506
        %589 = vmatpush.bf16.msra.mxu0 %v502
        %590 = vmatpush.bf16.msra.mxu0 %v498
        %591 = vmatpush.bf16.msra.mxu0 %v494
        %592 = vmatpush.bf16.msra.mxu0 %v490
        %593 = vmatpush.bf16.msra.mxu0 %v486
        %594 = vmatmul.bf16.gmra.mxu0 %v354
        %v595 = vpop.f32.mrf.mxu0
        %v596 = vadd.f32 0.0, %v595
        %v597 = vpop.f32.mrf.mxu0
        %598 = vdwg.mxu0
        %v599 = vadd.f32 %v350, %v557
        %v600 = vadd.f32 %v351, %v570
        %v601 = vadd.f32 %v352, %v583
        %v602 = vadd.f32 %v353, %v596
        %603 = vst [vmem:[#allocation2] sm:$0xff] %v599
        %604 = vst [vmem:[#allocation2 + $0x8] sm:$0xff] %v600
        %605 = vst [vmem:[#allocation2 + $0x10] sm:$0xff] %v601
        %606 = vst [vmem:[#allocation2 + $0x18] sm:$0xff] %v602
        // Predicated region
        $region56: #{generator_forward.21} parent=46 // pred_check
          %p607 = pneg %p342
        $region57: #{generator_forward.21} parent=46 // pred_check_branch
          %609 = sbr.rel (%p607) target = $region59
        $region58: #{generator_forward.21} parent=46 // pred_region
          %v610 = vld [vmem:[#allocation2] sm:$0xff]
          %v611 = vld [vmem:[#allocation2 + $0x8] sm:$0xff]
          %v612 = vld [vmem:[#allocation2 + $0x10] sm:$0xff]
          %v613 = vld [vmem:[#allocation2 + $0x18] sm:$0xff]
          %v614 = vpack.c.bf16 %v611, %v610
          %v615 = vpack.c.bf16 %v613, %v612
          %616 = vst [vmem:[%s330] sm:$0xff] %v614
          %617 = vst [vmem:[%s330 + $0x8] sm:$0xff] %v615
          %v618 = vrot.slane %v610, 4
          %v619 = vadd.f32 %v610, %v618
          %v620 = vrot.slane %v619, 2
          %v621 = vadd.f32 %v619, %v620
          %v622 = vrot.slane %v621, 1
          %v623 = vadd.f32 %v621, %v622
          %v624 = vrot.slane %v611, 4
          %v625 = vadd.f32 %v611, %v624
          %v626 = vrot.slane %v625, 2
          %v627 = vadd.f32 %v625, %v626
          %v628 = vrot.slane %v627, 1
          %v629 = vadd.f32 %v627, %v628
          %v630 = vrot.slane %v612, 4
          %v631 = vadd.f32 %v612, %v630
          %v632 = vrot.slane %v631, 2
          %v633 = vadd.f32 %v631, %v632
          %v634 = vrot.slane %v633, 1
          %v635 = vadd.f32 %v633, %v634
          %v636 = vrot.slane %v613, 4
          %v637 = vadd.f32 %v613, %v636
          %v638 = vrot.slane %v637, 2
          %v639 = vadd.f32 %v637, %v638
          %v640 = vrot.slane %v639, 1
          %v641 = vadd.f32 %v639, %v640
          %v642 = vmul.f32 %v610, %v610
          %v643 = vmul.f32 %v611, %v611
          %v644 = vmul.f32 %v612, %v612
          %v645 = vmul.f32 %v613, %v613
          %v646 = vrot.slane %v642, 4
          %v647 = vadd.f32 %v642, %v646
          %v648 = vrot.slane %v647, 2
          %v649 = vadd.f32 %v647, %v648
          %v650 = vrot.slane %v649, 1
          %v651 = vadd.f32 %v649, %v650
          %v652 = vrot.slane %v643, 4
          %v653 = vadd.f32 %v643, %v652
          %v654 = vrot.slane %v653, 2
          %v655 = vadd.f32 %v653, %v654
          %v656 = vrot.slane %v655, 1
          %v657 = vadd.f32 %v655, %v656
          %v658 = vrot.slane %v644, 4
          %v659 = vadd.f32 %v644, %v658
          %v660 = vrot.slane %v659, 2
          %v661 = vadd.f32 %v659, %v660
          %v662 = vrot.slane %v661, 1
          %v663 = vadd.f32 %v661, %v662
          %v664 = vrot.slane %v645, 4
          %v665 = vadd.f32 %v645, %v664
          %v666 = vrot.slane %v665, 2
          %v667 = vadd.f32 %v665, %v666
          %v668 = vrot.slane %v667, 1
          %v669 = vadd.f32 %v667, %v668
          %vm670 = vcmask 1040384
          %v671 = vsel %vm670, %v623, %v651
          %v672 = vsel %vm670, %v629, %v657
          %v673 = vsel %vm670, %v635, %v663
          %v674 = vsel %vm670, %v641, %v669
          %v679 = vrot.slane %v672, 6
          %v680 = vrot.slane %v673, 4
          %v681 = vrot.slane %v674, 2
          %vm682 = vcmask 1041408
          %v683 = vsel %vm682, %v671, %v679
          %vm684 = vcmask 1045508
          %v685 = vsel %vm684, %v680, %v681
          %vm686 = vcmask 1043456
          %v687 = vsel %vm686, %v683, %v685
          %689 = vst [vmem:[%s340] sm:$0xff] %v687
        $region59: #{generator_forward.21} parent=46 // pred_fallthru
          _
        %s690 = smul.u32 4, %s21
        %p691 = scmp.lt.s32.totalorder %s20, 0
        %s692 = scalar_select %p691, %s20, 0
        %p693 = scmp.lt.s32.totalorder %s690, 15
        %s694 = scalar_select %p693, %s690, 15
        %s695 = smul.addr %s692, 16
        %s696 = sadd.s32 %s694, %s695
        %s697 = smul.addr %s696, 4
        %s698 = scalar_lea.vmem %s2, %s697
        %s699 = smul.u32 4, %s21
        %p700 = scmp.lt.s32.totalorder %s20, 0
        %s701 = scalar_select %p700, %s20, 0
        %p702 = scmp.lt.s32.totalorder %s699, 15
        %s703 = scalar_select %p702, %s699, 15
        %s704 = smul.addr %s701, 16
        %s705 = sadd.s32 %s703, %s704
        %s706 = smul.addr %s705, 2
        %s707 = scalar_lea.vmem %s3, %s706
        // Predicated region
        $region60: #{generator_forward.21} parent=46 // pred_check
          %p708 = pneg %p110
        $region61: #{generator_forward.21} parent=46 // pred_check_branch
          %710 = sbr.rel (%p708) target = $region63
        $region62: #{generator_forward.21} parent=46 // pred_region
          %s711 = smul.u32 4, %s21
        $region63: #{generator_forward.21} parent=46 // pred_fallthru
          _
        // Predicated region
        $region64: #{generator_forward.21} parent=46 // pred_check
          %p712 = pneg %p138
        $region65: #{generator_forward.21} parent=46 // pred_check_branch
          %714 = sbr.rel (%p712) target = $region67
        $region66: #{generator_forward.21} parent=46 // pred_region
          %s715 = smul.u32 4, %s21
        $region67: #{generator_forward.21} parent=46 // pred_fallthru
          _
      $region47: #{generator_forward.21} parent=5 // pred_fallthru
        _
      %p716 = scmp.le.s32.totalorder 2, %s10
      // Predicated region
      $region68: #{generator_forward.21} parent=5 // pred_check
        %p717 = pneg %p716
      $region69: #{generator_forward.21} parent=5 // pred_check_branch
        %719 = sbr.rel (%p717) target = $region71
      $region70: #{generator_forward.21} parent=5 // pred_region
        %s720 = ssub.s32 %s10, 2
        // Predicated region
        $region72: #{generator_forward.21} parent=70 // pred_check
          %p721 = pneg %p116
        $region73: #{generator_forward.21} parent=70 // pred_check_branch
          %723 = sbr.rel (%p721) target = $region75
        $region74: #{generator_forward.21} parent=70 // pred_region
          %s724 = smul.u32 4, %s24
          %p725 = scmp.lt.s32.totalorder %s23, 0
          %s726 = scalar_select %p725, %s23, 0
          %p727 = scmp.lt.s32.totalorder %s724, 15
          %s728 = scalar_select %p727, %s724, 15
          %s729 = smul.addr %s726, 16
          %s730 = sadd.s32 %s728, %s729
          %s731 = smul.addr %s730, 4
          %s732 = scalar_lea.vmem %s2, %s731
        $region75: #{generator_forward.21} parent=70 // pred_fallthru
          _
        // Predicated region
        $region76: #{generator_forward.21} parent=70 // pred_check
          %p733 = pneg %p144
        $region77: #{generator_forward.21} parent=70 // pred_check_branch
          %735 = sbr.rel (%p733) target = $region79
        $region78: #{generator_forward.21} parent=70 // pred_region
          %s736 = smul.u32 4, %s24
          %p737 = scmp.lt.s32.totalorder %s23, 0
          %s738 = scalar_select %p737, %s23, 0
          %p739 = scmp.lt.s32.totalorder %s736, 15
          %s740 = scalar_select %p739, %s736, 15
          %s741 = smul.addr %s738, 16
          %s742 = sadd.s32 %s740, %s741
          %s743 = smul.addr %s742, 2
          %s744 = scalar_lea.vmem %s3, %s743
        $region79: #{generator_forward.21} parent=70 // pred_fallthru
          _
      $region71: #{generator_forward.21} parent=5 // pred_fallthru
        _
    $region6: #{generator_forward.21} parent=1 // loop_footer
      %s14 = sadd.s32 1, %s10
    $region7: #{generator_forward.21} parent=1 // loop_footer_branch
      %9 = sbr.rel target = $region3
    $region8: #{generator_forward.21} parent=1 // loop_exit
      _

// kernel: generator_forward.23
$region0: #{generator_forward.23}
  #allocation0 [shape = 'u32[]', space=smem, size = 0x4, offset = 0x4, fixed_abs, tag = 'smem constant byte address 0x4 - core index']
  #allocation1 [shape = 'u32[72,128]{1,0:T(1,128)}', space=vmem, size = 0x9000, scoped, tag = 'internal scratch']
  #allocation2 [shape = 'f32[16,128]{1,0:T(8,128)}', space=vmem, size = 0x2000, scoped, tag = 'scratch operand']
  %s0 = inlined_call_operand.vmem [shape: bf16[32,512], index: 0, kind: input, shape index: {}]
  %s1 = inlined_call_operand.vmem [shape: bf16[512,128], index: 1, kind: input, shape index: {}]
  %s2 = inlined_call_operand.vmem [shape: bf16[32,128], index: 2, kind: output, shape index: {0}]
  %s3 = inlined_call_operand.vmem [shape: f32[2,2,128], index: 3, kind: output, shape index: {1}]
  %4 = xla_tuple %s2, %s3
  %s5 = sld [smem:[#allocation0]]
  $region57: #{generator_forward.23} parent=0
    _
  %s7 = ssub.s32 1, %s5
  %s8 = scalar_select 0, %s7, %s5
  loop: start=0, step=1, limit=4
  $region2: #{generator_forward.23} parent=0 // loop_pre_header
    _
  $region3: #{generator_forward.23} parent=0 // loop_header
    %s10 = sphi 0, %s14
    %p11 = scmp.ge.s32.totalorder %s10, 4
    %s17 = sphi 0, %s36
    %s18 = sphi 0, %s32
    %s19 = sphi 0, %s28
    %s20 = sphi 0, %s17
    %s21 = sphi 0, %s18
    %s22 = sphi 0, %s19
    %s23 = sphi 0, %s20
    %s24 = sphi 0, %s21
    %s25 = sphi 0, %s22
    %s41 = sphi 0, %s43
    %s44 = sphi 0, %s41
    %s45 = sphi 0, %s44
    %s61 = sphi 0, %s45
    %s69 = sphi 0, %s71
    %s72 = sphi 0, %s69
    %s73 = sphi 0, %s72
    %s89 = sphi 0, %s73
    %s97 = sphi 0, %s99
    %s100 = sphi 0, %s97
    %s101 = sphi 0, %s100
    %s117 = sphi 0, %s101
    %s125 = sphi 0, %s127
    %s128 = sphi 0, %s125
    %s129 = sphi 0, %s128
    %s145 = sphi 0, %s129
  $region4: #{generator_forward.23} parent=0 // loop_header_branch
    %13 = sbr.rel (%p11) target = $region8
  $region5: #{generator_forward.23} parent=0 // loop_body
    %s15 = ssub.s32 %s10, 1
    %s16 = ssub.s32 %s10, 2
    %s26 = sadd.s32 1, %s19
    %p27 = scmp.ge.s32.totalorder %s26, 1
    %s28 = scalar_select %p27, 0, %s26
    %s29 = sadd.s32 1, %s18
    %s30 = scalar_select %p27, %s29, %s18
    %p31 = scmp.ge.s32.totalorder %s30, 1
    %s32 = scalar_select %p31, 0, %s30
    %s33 = sadd.s32 1, %s17
    %s34 = scalar_select %p31, %s33, %s17
    %p35 = scmp.ge.s32.totalorder %s34, 2
    %s36 = scalar_select %p35, 0, %s34
    %s37 = ssub.s32 %s17, %s36
    %s38 = ssub.s32 %s19, %s28
    %s39 = sor.u32 %s37, %s38
    %p40 = scmp.eq.s32.totalorder %s39, 0
    %s42 = sadd.s32 %s41, 1
    %s43 = scalar_select %p40, %s41, %s42
    %p46 = pneg %p40
    %p47 = scmp.eq.s32.totalorder %s10, 1
    %p48 = por %p46, %p47
    %p49 = scmp.ne.s32.totalorder %s41, %s44
    %p50 = scmp.eq.s32.totalorder %s10, 0
    %p51 = por %p49, %p50
    %p52 = scmp.ne.s32.totalorder %s41, %s44
    %p53 = scmp.eq.s32.totalorder %s15, 1
    %p54 = por %p52, %p53
    %p55 = scmp.ne.s32.totalorder %s44, %s45
    %p56 = scmp.eq.s32.totalorder %s15, 0
    %p57 = por %p55, %p56
    %p58 = scmp.ne.s32.totalorder %s44, %s45
    %p59 = scmp.eq.s32.totalorder %s16, 1
    %p60 = por %p58, %p59
    %p62 = scmp.ne.s32.totalorder %s45, %s61
    %p63 = scmp.eq.s32.totalorder %s16, 0
    %p64 = por %p62, %p63
    %s65 = ssub.s32 %s19, %s28
    %s66 = ssub.s32 %s18, %s32
    %s67 = sor.u32 %s65, %s66
    %p68 = scmp.eq.s32.totalorder %s67, 0
    %s70 = sadd.s32 %s69, 1
    %s71 = scalar_select %p68, %s69, %s70
    %p74 = pneg %p68
    %p75 = scmp.eq.s32.totalorder %s10, 1
    %p76 = por %p74, %p75
    %p77 = scmp.ne.s32.totalorder %s69, %s72
    %p78 = scmp.eq.s32.totalorder %s10, 0
    %p79 = por %p77, %p78
    %p80 = scmp.ne.s32.totalorder %s69, %s72
    %p81 = scmp.eq.s32.totalorder %s15, 1
    %p82 = por %p80, %p81
    %p83 = scmp.ne.s32.totalorder %s72, %s73
    %p84 = scmp.eq.s32.totalorder %s15, 0
    %p85 = por %p83, %p84
    %p86 = scmp.ne.s32.totalorder %s72, %s73
    %p87 = scmp.eq.s32.totalorder %s16, 1
    %p88 = por %p86, %p87
    %p90 = scmp.ne.s32.totalorder %s73, %s89
    %p91 = scmp.eq.s32.totalorder %s16, 0
    %p92 = por %p90, %p91
    %s93 = ssub.s32 %s17, %s36
    %s94 = ssub.s32 %s18, %s32
    %s95 = sor.u32 %s93, %s94
    %p96 = scmp.eq.s32.totalorder %s95, 0
    %s98 = sadd.s32 %s97, 1
    %s99 = scalar_select %p96, %s97, %s98
    %p102 = pneg %p96
    %p103 = scmp.eq.s32.totalorder %s10, 1
    %p104 = por %p102, %p103
    %p105 = scmp.ne.s32.totalorder %s97, %s100
    %p106 = scmp.eq.s32.totalorder %s10, 0
    %p107 = por %p105, %p106
    %p108 = scmp.ne.s32.totalorder %s97, %s100
    %p109 = scmp.eq.s32.totalorder %s15, 1
    %p110 = por %p108, %p109
    %p111 = scmp.ne.s32.totalorder %s100, %s101
    %p112 = scmp.eq.s32.totalorder %s15, 0
    %p113 = por %p111, %p112
    %p114 = scmp.ne.s32.totalorder %s100, %s101
    %p115 = scmp.eq.s32.totalorder %s16, 1
    %p116 = por %p114, %p115
    %p118 = scmp.ne.s32.totalorder %s101, %s117
    %p119 = scmp.eq.s32.totalorder %s16, 0
    %p120 = por %p118, %p119
    %s121 = ssub.s32 %s17, %s36
    %s122 = ssub.s32 %s18, %s32
    %s123 = sor.u32 %s121, %s122
    %p124 = scmp.eq.s32.totalorder %s123, 0
    %s126 = sadd.s32 %s125, 1
    %s127 = scalar_select %p124, %s125, %s126
    %p130 = pneg %p124
    %p131 = scmp.eq.s32.totalorder %s10, 1
    %p132 = por %p130, %p131
    %p133 = scmp.ne.s32.totalorder %s125, %s128
    %p134 = scmp.eq.s32.totalorder %s10, 0
    %p135 = por %p133, %p134
    %p136 = scmp.ne.s32.totalorder %s125, %s128
    %p137 = scmp.eq.s32.totalorder %s15, 1
    %p138 = por %p136, %p137
    %p139 = scmp.ne.s32.totalorder %s128, %s129
    %p140 = scmp.eq.s32.totalorder %s15, 0
    %p141 = por %p139, %p140
    %p142 = scmp.ne.s32.totalorder %s128, %s129
    %p143 = scmp.eq.s32.totalorder %s16, 1
    %p144 = por %p142, %p143
    %p146 = scmp.ne.s32.totalorder %s129, %s145
    %p147 = scmp.eq.s32.totalorder %s16, 0
    %p148 = por %p146, %p147
    %p149 = scmp.le.s32.totalorder 1, %s10
    %p150 = scmp.lt.s32.totalorder %s10, 3
    %p151 = pnand %p149, %p150
    %p152 = pneg %p151
    // Predicated region
    $region9: #{generator_forward.23} parent=5 // pred_check
      _
    $region10: #{generator_forward.23} parent=5 // pred_check_branch
      %154 = sbr.rel (%p151) target = $region12
    $region11: #{generator_forward.23} parent=5 // pred_region
      %s155 = ssub.s32 %s10, 1
      // Predicated region
      $region13: #{generator_forward.23} parent=11 // pred_check
        %p156 = pneg %p85
      $region14: #{generator_forward.23} parent=11 // pred_check_branch
        %158 = sbr.rel (%p156) target = $region16
      $region15: #{generator_forward.23} parent=11 // pred_region
        %s159 = smul.u32 64, %s22
        %p160 = scmp.lt.s32.totalorder %s159, 63
        %s161 = scalar_select %p160, %s159, 63
        %p162 = scmp.lt.s32.totalorder %s21, 0
        %s163 = scalar_select %p162, %s21, 0
        %s164 = sadd.s32 %s163, %s161
        %s165 = smul.addr %s164, 4
        %s166 = scalar_lea.vmem %s1, %s165
        %s167 = smul.u32 64, %s22
      $region16: #{generator_forward.23} parent=11 // pred_fallthru
        _
    $region12: #{generator_forward.23} parent=5 // pred_fallthru
      _
    %p168 = scmp.lt.s32.totalorder %s10, 2
    // Predicated region
    $region17: #{generator_forward.23} parent=5 // pred_check
      %p169 = pneg %p168
    $region18: #{generator_forward.23} parent=5 // pred_check_branch
      %171 = sbr.rel (%p169) target = $region20
    $region19: #{generator_forward.23} parent=5 // pred_region
      // Predicated region
      $region21: #{generator_forward.23} parent=19 // pred_check
        %p172 = pneg %p51
      $region22: #{generator_forward.23} parent=19 // pred_check_branch
        %174 = sbr.rel (%p172) target = $region24
      $region23: #{generator_forward.23} parent=19 // pred_region
        %s175 = smul.u32 2, %s17
        %s176 = smul.u32 4, %s19
        %p177 = scmp.lt.s32.totalorder %s175, 3
        %s178 = scalar_select %p177, %s175, 3
        %p179 = scmp.lt.s32.totalorder %s176, 3
        %s180 = scalar_select %p179, %s176, 3
        %s181 = smul.addr %s178, 4
        %s182 = sadd.s32 %s180, %s181
        %s183 = smul.addr %s182, 4
        %s184 = scalar_lea.vmem %s0, %s183
        %s185 = smul.u32 2, %s17
        %s186 = smul.u32 4, %s19
      $region24: #{generator_forward.23} parent=19 // pred_fallthru
        _
    $region20: #{generator_forward.23} parent=5 // pred_fallthru
      _
    %p187 = scmp.le.s32.totalorder 1, %s10
    %p188 = scmp.lt.s32.totalorder %s10, 3
    %p189 = pnand %p187, %p188
    %p190 = pneg %p189
    // Predicated region
    $region25: #{generator_forward.23} parent=5 // pred_check
      _
    $region26: #{generator_forward.23} parent=5 // pred_check_branch
      %192 = sbr.rel (%p189) target = $region28
    $region27: #{generator_forward.23} parent=5 // pred_region
      %s193 = ssub.s32 %s10, 1
      %s194 = smul.u32 2, %s20
      %s195 = smul.u32 4, %s22
      %p196 = scmp.lt.s32.totalorder %s194, 3
      %s197 = scalar_select %p196, %s194, 3
      %p198 = scmp.lt.s32.totalorder %s195, 3
      %s199 = scalar_select %p198, %s195, 3
      %s200 = smul.addr %s197, 4
      %s201 = sadd.s32 %s199, %s200
      %s202 = smul.addr %s201, 4
      %s203 = scalar_lea.vmem %s0, %s202
      %p204 = pneg %p57
      %p205 = pneg %p54
      %s206 = smul.u32 64, %s22
      %p207 = scmp.lt.s32.totalorder %s206, 63
      %s208 = scalar_select %p207, %s206, 63
      %p209 = scmp.lt.s32.totalorder %s21, 0
      %s210 = scalar_select %p209, %s21, 0
      %s211 = sadd.s32 %s210, %s208
      %s212 = smul.addr %s211, 4
      %s213 = scalar_lea.vmem %s1, %s212
      %p214 = pneg %p85
      %p215 = pneg %p82
      %p216 = pneg %p113
      %p217 = pneg %p110
      %s218 = smul.u32 2, %s20
      %p219 = scmp.lt.s32.totalorder %s218, 3
      %s220 = scalar_select %p219, %s218, 3
      %p221 = scmp.lt.s32.totalorder %s21, 0
      %s222 = scalar_select %p221, %s21, 0
      %s223 = sadd.s32 %s222, %s220
      %s224 = smul.addr %s223, 4
      %s225 = scalar_lea.vmem %s2, %s224
      %p226 = pneg %p141
      %p227 = pneg %p138
      %p228 = scmp.lt.s32.totalorder %s20, 1
      %s229 = scalar_select %p228, %s20, 1
      %p230 = scmp.lt.s32.totalorder %s21, 0
      %s231 = scalar_select %p230, %s21, 0
      %s232 = sadd.s32 %s231, %s229
      %s233 = smul.addr %s232, 2
      %s234 = scalar_lea.vmem %s3, %s233
      %s235 = smul.u32 2, %s20
      %s236 = smul.u32 4, %s22
      %p237 = scmp.lt.s32.totalorder %s235, 3
      %s238 = scalar_select %p237, %s235, 3
      %p239 = scmp.lt.s32.totalorder %s236, 3
      %s240 = scalar_select %p239, %s236, 3
      %s241 = smul.addr %s238, 4
      %s242 = sadd.s32 %s240, %s241
      %s243 = smul.addr %s242, 4
      %s244 = scalar_lea.vmem %s0, %s243
      %s245 = smul.u32 2, %s20
      %s246 = smul.u32 4, %s22
      %s247 = smul.u32 64, %s22
      %p248 = scmp.lt.s32.totalorder %s247, 63
      %s249 = scalar_select %p248, %s247, 63
      %p250 = scmp.lt.s32.totalorder %s21, 0
      %s251 = scalar_select %p250, %s21, 0
      %s252 = sadd.s32 %s251, %s249
      %s253 = smul.addr %s252, 4
      %s254 = scalar_lea.vmem %s1, %s253
      %s255 = smul.u32 64, %s22
      %s256 = smul.u32 2, %s20
      %p257 = scmp.lt.s32.totalorder %s256, 3
      %s258 = scalar_select %p257, %s256, 3
      %p259 = scmp.lt.s32.totalorder %s21, 0
      %s260 = scalar_select %p259, %s21, 0
      %s261 = sadd.s32 %s260, %s258
      %s262 = smul.addr %s261, 4
      %s263 = scalar_lea.vmem %s2, %s262
      %s264 = smul.u32 2, %s20
      %p265 = scmp.lt.s32.totalorder %s20, 1
      %s266 = scalar_select %p265, %s20, 1
      %p267 = scmp.lt.s32.totalorder %s21, 0
      %s268 = scalar_select %p267, %s21, 0
      %s269 = sadd.s32 %s268, %s266
      %s270 = smul.addr %s269, 2
      %s271 = scalar_lea.vmem %s3, %s270
      %p272 = scmp.eq.s32.totalorder %s22, 0
      // Predicated region
      $region29: #{generator_forward.23} parent=27 // pred_check
        %p273 = pneg %p272
      $region30: #{generator_forward.23} parent=27 // pred_check_branch
        %275 = sbr.rel (%p273) target = $region32
      $region31: #{generator_forward.23} parent=27 // pred_region
        %276 = vst [vmem:[#allocation2] sm:$0xff] 0.0
        %277 = vst [vmem:[#allocation2 + $0x8] sm:$0xff] 0.0
      $region32: #{generator_forward.23} parent=27 // pred_fallthru
        _
      %v278 = vld [vmem:[#allocation2] sm:$0xff]
      %v279 = vld [vmem:[#allocation2 + $0x8] sm:$0xff]
      %v280 = vld [vmem:[%s244] sm:$0xff]
      %v281 = vld [vmem:[%s244 + $0x8] sm:$0xff]
      %v282 = vld [vmem:[%s244 + $0x10] sm:$0xff]
      %v283 = vld [vmem:[%s244 + $0x18] sm:$0xff]
      %v284 = vld [vmem:[%s254] sm:$0xf]
      %v285 = vld [vmem:[%s254 + $0x4] sm:$0xf]
      %v286 = vld [vmem:[%s254 + $0x8] sm:$0xf]
      %v287 = vld [vmem:[%s254 + $0xc] sm:$0xf]
      %v288 = vld [vmem:[%s254 + $0x10] sm:$0xf]
      %v289 = vld [vmem:[%s254 + $0x14] sm:$0xf]
      %v290 = vld [vmem:[%s254 + $0x18] sm:$0xf]
      %v291 = vld [vmem:[%s254 + $0x1c] sm:$0xf]
      %v292 = vld [vmem:[%s254 + $0x20] sm:$0xf]
      %v293 = vld [vmem:[%s254 + $0x24] sm:$0xf]
      %v294 = vld [vmem:[%s254 + $0x28] sm:$0xf]
      %v295 = vld [vmem:[%s254 + $0x2c] sm:$0xf]
      %v296 = vld [vmem:[%s254 + $0x30] sm:$0xf]
      %v297 = vld [vmem:[%s254 + $0x34] sm:$0xf]
      %v298 = vld [vmem:[%s254 + $0x38] sm:$0xf]
      %v299 = vld [vmem:[%s254 + $0x3c] sm:$0xf]
      %v300 = vld [vmem:[%s254 + $0x40] sm:$0xf]
      %v301 = vld [vmem:[%s254 + $0x44] sm:$0xf]
      %v302 = vld [vmem:[%s254 + $0x48] sm:$0xf]
      %v303 = vld [vmem:[%s254 + $0x4c] sm:$0xf]
      %v304 = vld [vmem:[%s254 + $0x50] sm:$0xf]
      %v305 = vld [vmem:[%s254 + $0x54] sm:$0xf]
      %v306 = vld [vmem:[%s254 + $0x58] sm:$0xf]
      %v307 = vld [vmem:[%s254 + $0x5c] sm:$0xf]
      %v308 = vld [vmem:[%s254 + $0x60] sm:$0xf]
      %v309 = vld [vmem:[%s254 + $0x64] sm:$0xf]
      %v310 = vld [vmem:[%s254 + $0x68] sm:$0xf]
      %v311 = vld [vmem:[%s254 + $0x6c] sm:$0xf]
      %v312 = vld [vmem:[%s254 + $0x70] sm:$0xf]
      %v313 = vld [vmem:[%s254 + $0x74] sm:$0xf]
      %v314 = vld [vmem:[%s254 + $0x78] sm:$0xf]
      %v315 = vld [vmem:[%s254 + $0x7c] sm:$0xf]
      %v316 = vld [vmem:[%s254 + $0x80] sm:$0xf]
      %v317 = vld [vmem:[%s254 + $0x84] sm:$0xf]
      %v318 = vld [vmem:[%s254 + $0x88] sm:$0xf]
      %v319 = vld [vmem:[%s254 + $0x8c] sm:$0xf]
      %v320 = vld [vmem:[%s254 + $0x90] sm:$0xf]
      %v321 = vld [vmem:[%s254 + $0x94] sm:$0xf]
      %v322 = vld [vmem:[%s254 + $0x98] sm:$0xf]
      %v323 = vld [vmem:[%s254 + $0x9c] sm:$0xf]
      %v324 = vld [vmem:[%s254 + $0xa0] sm:$0xf]
      %v325 = vld [vmem:[%s254 + $0xa4] sm:$0xf]
      %v326 = vld [vmem:[%s254 + $0xa8] sm:$0xf]
      %v327 = vld [vmem:[%s254 + $0xac] sm:$0xf]
      %v328 = vld [vmem:[%s254 + $0xb0] sm:$0xf]
      %v329 = vld [vmem:[%s254 + $0xb4] sm:$0xf]
      %v330 = vld [vmem:[%s254 + $0xb8] sm:$0xf]
      %v331 = vld [vmem:[%s254 + $0xbc] sm:$0xf]
      %v332 = vld [vmem:[%s254 + $0xc0] sm:$0xf]
      %v333 = vld [vmem:[%s254 + $0xc4] sm:$0xf]
      %v334 = vld [vmem:[%s254 + $0xc8] sm:$0xf]
      %v335 = vld [vmem:[%s254 + $0xcc] sm:$0xf]
      %v336 = vld [vmem:[%s254 + $0xd0] sm:$0xf]
      %v337 = vld [vmem:[%s254 + $0xd4] sm:$0xf]
      %v338 = vld [vmem:[%s254 + $0xd8] sm:$0xf]
      %v339 = vld [vmem:[%s254 + $0xdc] sm:$0xf]
      %v340 = vld [vmem:[%s254 + $0xe0] sm:$0xf]
      %v341 = vld [vmem:[%s254 + $0xe4] sm:$0xf]
      %v342 = vld [vmem:[%s254 + $0xe8] sm:$0xf]
      %v343 = vld [vmem:[%s254 + $0xec] sm:$0xf]
      %v344 = vld [vmem:[%s254 + $0xf0] sm:$0xf]
      %v345 = vld [vmem:[%s254 + $0xf4] sm:$0xf]
      %v346 = vld [vmem:[%s254 + $0xf8] sm:$0xf]
      %v347 = vld [vmem:[%s254 + $0xfc] sm:$0xf]
      %v352 = vunpack.c.l.b16 %v280
      %v353 = vunpack.c.h.b16 %v280
      %v354 = vunpack.c.l.b16 %v281
      %v355 = vunpack.c.h.b16 %v281
      %v356 = vunpack.c.l.b16 %v282
      %v357 = vunpack.c.h.b16 %v282
      %v358 = vunpack.c.l.b16 %v283
      %v359 = vunpack.c.h.b16 %v283
      %v360 = vpack.c.b16 %v356, %v352
      %v361 = vpack.c.b16 %v357, %v353
      %v362 = vpack.c.b16 %v358, %v354
      %v363 = vpack.c.b16 %v359, %v355
      %v432 = vunpack.c.l.b16 %v284
      %v433 = vunpack.c.l.b16 %v285
      %v434 = vunpack.c.l.b16 %v286
      %v435 = vunpack.c.l.b16 %v287
      %v436 = vunpack.c.l.b16 %v288
      %v437 = vunpack.c.l.b16 %v289
      %v438 = vunpack.c.l.b16 %v290
      %v439 = vunpack.c.l.b16 %v291
      %v440 = vunpack.c.l.b16 %v292
      %v441 = vunpack.c.l.b16 %v293
      %v442 = vunpack.c.l.b16 %v294
      %v443 = vunpack.c.l.b16 %v295
      %v444 = vunpack.c.l.b16 %v296
      %v445 = vunpack.c.l.b16 %v297
      %v446 = vunpack.c.l.b16 %v298
      %v447 = vunpack.c.l.b16 %v299
      %v448 = vunpack.c.l.b16 %v300
      %v449 = vunpack.c.l.b16 %v301
      %v450 = vunpack.c.l.b16 %v302
      %v451 = vunpack.c.l.b16 %v303
      %v452 = vunpack.c.l.b16 %v304
      %v453 = vunpack.c.l.b16 %v305
      %v454 = vunpack.c.l.b16 %v306
      %v455 = vunpack.c.l.b16 %v307
      %v456 = vunpack.c.l.b16 %v308
      %v457 = vunpack.c.l.b16 %v309
      %v458 = vunpack.c.l.b16 %v310
      %v459 = vunpack.c.l.b16 %v311
      %v460 = vunpack.c.l.b16 %v312
      %v461 = vunpack.c.l.b16 %v313
      %v462 = vunpack.c.l.b16 %v314
      %v463 = vunpack.c.l.b16 %v315
      %v464 = vunpack.c.l.b16 %v316
      %v465 = vunpack.c.l.b16 %v317
      %v466 = vunpack.c.l.b16 %v318
      %v467 = vunpack.c.l.b16 %v319
      %v468 = vunpack.c.l.b16 %v320
      %v469 = vunpack.c.l.b16 %v321
      %v470 = vunpack.c.l.b16 %v322
      %v471 = vunpack.c.l.b16 %v323
      %v472 = vunpack.c.l.b16 %v324
      %v473 = vunpack.c.l.b16 %v325
      %v474 = vunpack.c.l.b16 %v326
      %v475 = vunpack.c.l.b16 %v327
      %v476 = vunpack.c.l.b16 %v328
      %v477 = vunpack.c.l.b16 %v329
      %v478 = vunpack.c.l.b16 %v330
      %v479 = vunpack.c.l.b16 %v331
      %v480 = vunpack.c.l.b16 %v332
      %v481 = vunpack.c.l.b16 %v333
      %v482 = vunpack.c.l.b16 %v334
      %v483 = vunpack.c.l.b16 %v335
      %v484 = vunpack.c.l.b16 %v336
      %v485 = vunpack.c.l.b16 %v337
      %v486 = vunpack.c.l.b16 %v338
      %v487 = vunpack.c.l.b16 %v339
      %v488 = vunpack.c.l.b16 %v340
      %v489 = vunpack.c.l.b16 %v341
      %v490 = vunpack.c.l.b16 %v342
      %v491 = vunpack.c.l.b16 %v343
      %v492 = vunpack.c.l.b16 %v344
      %v493 = vunpack.c.l.b16 %v345
      %v494 = vunpack.c.l.b16 %v346
      %v495 = vunpack.c.l.b16 %v347
      %v496 = vpack.c.b16 %v433, %v432
      %v497 = vpack.c.b16 %v435, %v434
      %v498 = vpack.c.b16 %v437, %v436
      %v499 = vpack.c.b16 %v439, %v438
      %v500 = vpack.c.b16 %v441, %v440
      %v501 = vpack.c.b16 %v443, %v442
      %v502 = vpack.c.b16 %v445, %v444
      %v503 = vpack.c.b16 %v447, %v446
      %v504 = vpack.c.b16 %v449, %v448
      %v505 = vpack.c.b16 %v451, %v450
      %v506 = vpack.c.b16 %v453, %v452
      %v507 = vpack.c.b16 %v455, %v454
      %v508 = vpack.c.b16 %v457, %v456
      %v509 = vpack.c.b16 %v459, %v458
      %v510 = vpack.c.b16 %v461, %v460
      %v511 = vpack.c.b16 %v463, %v462
      %v512 = vpack.c.b16 %v465, %v464
      %v513 = vpack.c.b16 %v467, %v466
      %v514 = vpack.c.b16 %v469, %v468
      %v515 = vpack.c.b16 %v471, %v470
      %v516 = vpack.c.b16 %v473, %v472
      %v517 = vpack.c.b16 %v475, %v474
      %v518 = vpack.c.b16 %v477, %v476
      %v519 = vpack.c.b16 %v479, %v478
      %v520 = vpack.c.b16 %v481, %v480
      %v521 = vpack.c.b16 %v483, %v482
      %v522 = vpack.c.b16 %v485, %v484
      %v523 = vpack.c.b16 %v487, %v486
      %v524 = vpack.c.b16 %v489, %v488
      %v525 = vpack.c.b16 %v491, %v490
      %v526 = vpack.c.b16 %v493, %v492
      %v527 = vpack.c.b16 %v495, %v494
      %560 = vmatpush.bf16.msra.mxu0 %v503
      %561 = vmatpush.bf16.msra.mxu0 %v502
      %562 = vmatpush.bf16.msra.mxu0 %v501
      %563 = vmatpush.bf16.msra.mxu0 %v500
      %564 = vmatpush.bf16.msra.mxu0 %v499
      %565 = vmatpush.bf16.msra.mxu0 %v498
      %566 = vmatpush.bf16.msra.mxu0 %v497
      %567 = vmatpush.bf16.msra.mxu0 %v496
      %568 = vmatmul.bf16.gmra.mxu0 %v360
      %v569 = vpop.f32.mrf.mxu0
      %v570 = vadd.f32 0.0, %v569
      %v571 = vpop.f32.mrf.mxu0
      %v572 = vadd.f32 0.0, %v571
      %573 = vdwg.mxu0
      %574 = vmatpush.bf16.msra.mxu0 %v511
      %575 = vmatpush.bf16.msra.mxu0 %v510
      %576 = vmatpush.bf16.msra.mxu0 %v509
      %577 = vmatpush.bf16.msra.mxu0 %v508
      %578 = vmatpush.bf16.msra.mxu0 %v507
      %579 = vmatpush.bf16.msra.mxu0 %v506
      %580 = vmatpush.bf16.msra.mxu0 %v505
      %581 = vmatpush.bf16.msra.mxu0 %v504
      %582 = vmatmul.bf16.gmra.mxu0 %v361
      %v583 = vpop.f32.mrf.mxu0
      %v584 = vadd.f32 %v570, %v583
      %v585 = vpop.f32.mrf.mxu0
      %v586 = vadd.f32 %v572, %v585
      %587 = vdwg.mxu0
      %588 = vmatpush.bf16.msra.mxu0 %v519
      %589 = vmatpush.bf16.msra.mxu0 %v518
      %590 = vmatpush.bf16.msra.mxu0 %v517
      %591 = vmatpush.bf16.msra.mxu0 %v516
      %592 = vmatpush.bf16.msra.mxu0 %v515
      %593 = vmatpush.bf16.msra.mxu0 %v514
      %594 = vmatpush.bf16.msra.mxu0 %v513
      %595 = vmatpush.bf16.msra.mxu0 %v512
      %596 = vmatmul.bf16.gmra.mxu0 %v362
      %v597 = vpop.f32.mrf.mxu0
      %v598 = vadd.f32 %v584, %v597
      %v599 = vpop.f32.mrf.mxu0
      %v600 = vadd.f32 %v586, %v599
      %601 = vdwg.mxu0
      %602 = vmatpush.bf16.msra.mxu0 %v527
      %603 = vmatpush.bf16.msra.mxu0 %v526
      %604 = vmatpush.bf16.msra.mxu0 %v525
      %605 = vmatpush.bf16.msra.mxu0 %v524
      %606 = vmatpush.bf16.msra.mxu0 %v523
      %607 = vmatpush.bf16.msra.mxu0 %v522
      %608 = vmatpush.bf16.msra.mxu0 %v521
      %609 = vmatpush.bf16.msra.mxu0 %v520
      %610 = vmatmul.bf16.gmra.mxu0 %v363
      %v611 = vpop.f32.mrf.mxu0
      %v612 = vadd.f32 %v598, %v611
      %v613 = vpop.f32.mrf.mxu0
      %v614 = vadd.f32 %v600, %v613
      %615 = vdwg.mxu0
      %v616 = vadd.f32 %v278, %v612
      %v617 = vadd.f32 %v279, %v614
      %618 = vst [vmem:[#allocation2] sm:$0xff] %v616
      %619 = vst [vmem:[#allocation2 + $0x8] sm:$0xff] %v617
      // Predicated region
      $region33: #{generator_forward.23} parent=27 // pred_check
        %p620 = pneg %p272
      $region34: #{generator_forward.23} parent=27 // pred_check_branch
        %622 = sbr.rel (%p620) target = $region36
      $region35: #{generator_forward.23} parent=27 // pred_region
        %v623 = vld [vmem:[#allocation2] sm:$0xff]
        %v624 = vld [vmem:[#allocation2 + $0x8] sm:$0xff]
        %v625 = vpack.c.bf16 %v623, %v623
        %v626 = vpack.c.bf16 %v624, %v624
        %627 = vst [vmem:[%s263] sm:$0xf] %v625
        %628 = vst [vmem:[%s263 + $0x4] sm:$0xf] %v626
        %v629 = vadd.f32 %v623, %v624
        %v630 = vrot.slane %v629, 4
        %v631 = vadd.f32 %v629, %v630
        %v632 = vrot.slane %v631, 2
        %v633 = vadd.f32 %v631, %v632
        %v634 = vrot.slane %v633, 1
        %v635 = vadd.f32 %v633, %v634
        %v636 = vmul.f32 %v623, %v623
        %v637 = vmul.f32 %v624, %v624
        %v638 = vadd.f32 %v636, %v637
        %v639 = vrot.slane %v638, 4
        %v640 = vadd.f32 %v638, %v639
        %v641 = vrot.slane %v640, 2
        %v642 = vadd.f32 %v640, %v641
        %v643 = vrot.slane %v642, 1
        %v644 = vadd.f32 %v642, %v643
        %vm645 = vcmask 1040384
        %v646 = vsel %vm645, %v635, %v644
        %647 = vst [vmem:[%s271] sm:$0x3] %v646
      $region36: #{generator_forward.23} parent=27 // pred_fallthru
        _
      %s648 = smul.u32 2, %s20
      %p649 = scmp.lt.s32.totalorder %s648, 3
      %s650 = scalar_select %p649, %s648, 3
      %p651 = scmp.lt.s32.totalorder %s21, 0
      %s652 = scalar_select %p651, %s21, 0
      %s653 = sadd.s32 %s652, %s650
      %s654 = smul.addr %s653, 4
      %s655 = scalar_lea.vmem %s2, %s654
      %p656 = scmp.lt.s32.totalorder %s20, 1
      %s657 = scalar_select %p656, %s20, 1
      %p658 = scmp.lt.s32.totalorder %s21, 0
      %s659 = scalar_select %p658, %s21, 0
      %s660 = sadd.s32 %s659, %s657
      %s661 = smul.addr %s660, 2
      %s662 = scalar_lea.vmem %s3, %s661
      // Predicated region
      $region37: #{generator_forward.23} parent=27 // pred_check
        %p663 = pneg %p110
      $region38: #{generator_forward.23} parent=27 // pred_check_branch
        %665 = sbr.rel (%p663) target = $region40
      $region39: #{generator_forward.23} parent=27 // pred_region
        %s666 = smul.u32 2, %s20
      $region40: #{generator_forward.23} parent=27 // pred_fallthru
        _
      // Predicated region
      $region41: #{generator_forward.23} parent=27 // pred_check
        %p667 = pneg %p138
      $region42: #{generator_forward.23} parent=27 // pred_check_branch
        %669 = sbr.rel (%p667) target = $region44
      $region43: #{generator_forward.23} parent=27 // pred_region
        _
      $region44: #{generator_forward.23} parent=27 // pred_fallthru
        _
    $region28: #{generator_forward.23} parent=5 // pred_fallthru
      _
    %p670 = scmp.le.s32.totalorder 2, %s10
    // Predicated region
    $region45: #{generator_forward.23} parent=5 // pred_check
      %p671 = pneg %p670
    $region46: #{generator_forward.23} parent=5 // pred_check_branch
      %673 = sbr.rel (%p671) target = $region48
    $region47: #{generator_forward.23} parent=5 // pred_region
      %s674 = ssub.s32 %s10, 2
      // Predicated region
      $region49: #{generator_forward.23} parent=47 // pred_check
        %p675 = pneg %p116
      $region50: #{generator_forward.23} parent=47 // pred_check_branch
        %677 = sbr.rel (%p675) target = $region52
      $region51: #{generator_forward.23} parent=47 // pred_region
        %s678 = smul.u32 2, %s23
        %p679 = scmp.lt.s32.totalorder %s678, 3
        %s680 = scalar_select %p679, %s678, 3
        %p681 = scmp.lt.s32.totalorder %s24, 0
        %s682 = scalar_select %p681, %s24, 0
        %s683 = sadd.s32 %s682, %s680
        %s684 = smul.addr %s683, 4
        %s685 = scalar_lea.vmem %s2, %s684
      $region52: #{generator_forward.23} parent=47 // pred_fallthru
        _
      // Predicated region
      $region53: #{generator_forward.23} parent=47 // pred_check
        %p686 = pneg %p144
      $region54: #{generator_forward.23} parent=47 // pred_check_branch
        %688 = sbr.rel (%p686) target = $region56
      $region55: #{generator_forward.23} parent=47 // pred_region
        %p689 = scmp.lt.s32.totalorder %s23, 1
        %s690 = scalar_select %p689, %s23, 1
        %p691 = scmp.lt.s32.totalorder %s24, 0
        %s692 = scalar_select %p691, %s24, 0
        %s693 = sadd.s32 %s692, %s690
        %s694 = smul.addr %s693, 2
        %s695 = scalar_lea.vmem %s3, %s694
      $region56: #{generator_forward.23} parent=47 // pred_fallthru
        _
    $region48: #{generator_forward.23} parent=5 // pred_fallthru
      _
  $region6: #{generator_forward.23} parent=0 // loop_footer
    %s14 = sadd.s32 1, %s10
  $region7: #{generator_forward.23} parent=0 // loop_footer_branch
    %9 = sbr.rel target = $region3
  $region8: #{generator_forward.23} parent=0 // loop_exit
    _

// kernel: generator_forward.27
$region0: #{generator_forward.27}
  #allocation0 [shape = 'u32[]', space=smem, size = 0x4, offset = 0x4, fixed_abs, tag = 'smem constant byte address 0x4 - core index']
  #allocation1 [shape = 'u32[72,128]{1,0:T(1,128)}', space=vmem, size = 0x9000, scoped, tag = 'internal scratch']
  %s0 = inlined_call_operand.vmem [shape: bf16[128,128], index: 0, kind: input, shape index: {}]
  %s1 = inlined_call_operand.vmem [shape: f32[1,128], index: 1, kind: input, shape index: {}]
  %s2 = inlined_call_operand.vmem [shape: f32[1,128], index: 2, kind: input, shape index: {}]
  %s3 = inlined_call_operand.vmem [shape: bf16[128,128], index: 3, kind: output, shape index: {}]
  %s4 = sld [smem:[#allocation0]]
  $region45: #{generator_forward.27} parent=0
    _
  %s6 = ssub.s32 1, %s4
  %s7 = scalar_select 0, %s6, %s4
  loop: start=0, step=1, limit=4
  $region2: #{generator_forward.27} parent=0 // loop_pre_header
    _
  $region3: #{generator_forward.27} parent=0 // loop_header
    %s9 = sphi 0, %s13
    %p10 = scmp.ge.s32.totalorder %s9, 4
    %s19 = sphi 0, %s21
    %s22 = sphi 0, %s19
    %s23 = sphi 0, %s22
    %s39 = sphi 0, %s23
    %s43 = sphi 0, %s43
    %s45 = sphi 0, %s43
    %s46 = sphi 0, %s45
    %s60 = sphi 0, %s46
    %s64 = sphi 0, %s64
    %s66 = sphi 0, %s64
    %s67 = sphi 0, %s66
    %s81 = sphi 0, %s67
    %s87 = sphi 0, %s89
    %s90 = sphi 0, %s87
    %s91 = sphi 0, %s90
    %s107 = sphi 0, %s91
  $region4: #{generator_forward.27} parent=0 // loop_header_branch
    %12 = sbr.rel (%p10) target = $region8
  $region5: #{generator_forward.27} parent=0 // loop_body
    %s14 = ssub.s32 %s9, 1
    %s15 = ssub.s32 %s9, 2
    %s16 = sadd.s32 %s9, 1
    %s17 = ssub.s32 %s9, %s16
    %p18 = scmp.eq.s32.totalorder %s17, 0
    %s20 = sadd.s32 %s19, 1
    %s21 = scalar_select %p18, %s19, %s20
    %p24 = pneg %p18
    %p25 = scmp.eq.s32.totalorder %s9, 1
    %p26 = por %p24, %p25
    %p27 = scmp.ne.s32.totalorder %s19, %s22
    %p28 = scmp.eq.s32.totalorder %s9, 0
    %p29 = por %p27, %p28
    %p30 = scmp.ne.s32.totalorder %s19, %s22
    %p31 = scmp.eq.s32.totalorder %s14, 1
    %p32 = por %p30, %p31
    %p33 = scmp.ne.s32.totalorder %s22, %s23
    %p34 = scmp.eq.s32.totalorder %s14, 0
    %p35 = por %p33, %p34
    %p36 = scmp.ne.s32.totalorder %s22, %s23
    %p37 = scmp.eq.s32.totalorder %s15, 1
    %p38 = por %p36, %p37
    %p40 = scmp.ne.s32.totalorder %s23, %s39
    %p41 = scmp.eq.s32.totalorder %s15, 0
    %p42 = por %p40, %p41
    %s44 = sadd.s32 %s43, 1
    %p47 = scmp.eq.s32.totalorder %s9, 1
    %p48 = scmp.ne.s32.totalorder %s43, %s45
    %p49 = scmp.eq.s32.totalorder %s9, 0
    %p50 = por %p48, %p49
    %p51 = scmp.ne.s32.totalorder %s43, %s45
    %p52 = scmp.eq.s32.totalorder %s14, 1
    %p53 = por %p51, %p52
    %p54 = scmp.ne.s32.totalorder %s45, %s46
    %p55 = scmp.eq.s32.totalorder %s14, 0
    %p56 = por %p54, %p55
    %p57 = scmp.ne.s32.totalorder %s45, %s46
    %p58 = scmp.eq.s32.totalorder %s15, 1
    %p59 = por %p57, %p58
    %p61 = scmp.ne.s32.totalorder %s46, %s60
    %p62 = scmp.eq.s32.totalorder %s15, 0
    %p63 = por %p61, %p62
    %s65 = sadd.s32 %s64, 1
    %p68 = scmp.eq.s32.totalorder %s9, 1
    %p69 = scmp.ne.s32.totalorder %s64, %s66
    %p70 = scmp.eq.s32.totalorder %s9, 0
    %p71 = por %p69, %p70
    %p72 = scmp.ne.s32.totalorder %s64, %s66
    %p73 = scmp.eq.s32.totalorder %s14, 1
    %p74 = por %p72, %p73
    %p75 = scmp.ne.s32.totalorder %s66, %s67
    %p76 = scmp.eq.s32.totalorder %s14, 0
    %p77 = por %p75, %p76
    %p78 = scmp.ne.s32.totalorder %s66, %s67
    %p79 = scmp.eq.s32.totalorder %s15, 1
    %p80 = por %p78, %p79
    %p82 = scmp.ne.s32.totalorder %s67, %s81
    %p83 = scmp.eq.s32.totalorder %s15, 0
    %p84 = por %p82, %p83
    %s85 = ssub.s32 %s9, %s16
    %p86 = scmp.eq.s32.totalorder %s85, 0
    %s88 = sadd.s32 %s87, 1
    %s89 = scalar_select %p86, %s87, %s88
    %p92 = pneg %p86
    %p93 = scmp.eq.s32.totalorder %s9, 1
    %p94 = por %p92, %p93
    %p95 = scmp.ne.s32.totalorder %s87, %s90
    %p96 = scmp.eq.s32.totalorder %s9, 0
    %p97 = por %p95, %p96
    %p98 = scmp.ne.s32.totalorder %s87, %s90
    %p99 = scmp.eq.s32.totalorder %s14, 1
    %p100 = por %p98, %p99
    %p101 = scmp.ne.s32.totalorder %s90, %s91
    %p102 = scmp.eq.s32.totalorder %s14, 0
    %p103 = por %p101, %p102
    %p104 = scmp.ne.s32.totalorder %s90, %s91
    %p105 = scmp.eq.s32.totalorder %s15, 1
    %p106 = por %p104, %p105
    %p108 = scmp.ne.s32.totalorder %s91, %s107
    %p109 = scmp.eq.s32.totalorder %s15, 0
    %p110 = por %p108, %p109
    %p111 = scmp.le.s32.totalorder 1, %s9
    %p112 = scmp.lt.s32.totalorder %s9, 3
    %p113 = pnand %p111, %p112
    %p114 = pneg %p113
    // Predicated region
    $region9: #{generator_forward.27} parent=5 // pred_check
      _
    $region10: #{generator_forward.27} parent=5 // pred_check_branch
      %116 = sbr.rel (%p113) target = $region12
    $region11: #{generator_forward.27} parent=5 // pred_region
      %s117 = ssub.s32 %s9, 1
      // Predicated region
      $region13: #{generator_forward.27} parent=11 // pred_check
        %p118 = pneg %p56
      $region14: #{generator_forward.27} parent=11 // pred_check_branch
        %120 = sbr.rel (%p118) target = $region16
      $region15: #{generator_forward.27} parent=11 // pred_region
        _
      $region16: #{generator_forward.27} parent=11 // pred_fallthru
        _
      // Predicated region
      $region17: #{generator_forward.27} parent=11 // pred_check
        %p121 = pneg %p77
      $region18: #{generator_forward.27} parent=11 // pred_check_branch
        %123 = sbr.rel (%p121) target = $region20
      $region19: #{generator_forward.27} parent=11 // pred_region
        _
      $region20: #{generator_forward.27} parent=11 // pred_fallthru
        _
    $region12: #{generator_forward.27} parent=5 // pred_fallthru
      _
    %p124 = scmp.lt.s32.totalorder %s9, 2
    // Predicated region
    $region21: #{generator_forward.27} parent=5 // pred_check
      %p125 = pneg %p124
    $region22: #{generator_forward.27} parent=5 // pred_check_branch
      %127 = sbr.rel (%p125) target = $region24
    $region23: #{generator_forward.27} parent=5 // pred_region
      // Predicated region
      $region25: #{generator_forward.27} parent=23 // pred_check
        %p128 = pneg %p29
      $region26: #{generator_forward.27} parent=23 // pred_check_branch
        %130 = sbr.rel (%p128) target = $region28
      $region27: #{generator_forward.27} parent=23 // pred_region
        %s131 = smul.u32 8, %s9
        %p132 = scmp.lt.s32.totalorder %s131, 15
        %s133 = scalar_select %p132, %s131, 15
        %s134 = smul.addr %s133, 4
        %s135 = scalar_lea.vmem %s0, %s134
        %s136 = smul.u32 8, %s9
      $region28: #{generator_forward.27} parent=23 // pred_fallthru
        _
    $region24: #{generator_forward.27} parent=5 // pred_fallthru
      _
    %p137 = scmp.le.s32.totalorder 1, %s9
    %p138 = scmp.lt.s32.totalorder %s9, 3
    %p139 = pnand %p137, %p138
    %p140 = pneg %p139
    // Predicated region
    $region29: #{generator_forward.27} parent=5 // pred_check
      _
    $region30: #{generator_forward.27} parent=5 // pred_check_branch
      %142 = sbr.rel (%p139) target = $region32
    $region31: #{generator_forward.27} parent=5 // pred_region
      %s143 = ssub.s32 %s9, 1
      %s144 = smul.u32 8, %s14
      %p145 = scmp.lt.s32.totalorder %s144, 15
      %s146 = scalar_select %p145, %s144, 15
      %s147 = smul.addr %s146, 4
      %s148 = scalar_lea.vmem %s0, %s147
      %p149 = pneg %p35
      %p150 = pneg %p32
      %p151 = pneg %p56
      %p152 = pneg %p53
      %p153 = pneg %p77
      %p154 = pneg %p74
      %p155 = pneg %p103
      %p156 = pneg %p100
      %s157 = smul.u32 8, %s14
      %p158 = scmp.lt.s32.totalorder %s157, 15
      %s159 = scalar_select %p158, %s157, 15
      %s160 = smul.addr %s159, 4
      %s161 = scalar_lea.vmem %s3, %s160
      %s162 = smul.u32 8, %s14
      %p163 = scmp.lt.s32.totalorder %s162, 15
      %s164 = scalar_select %p163, %s162, 15
      %s165 = smul.addr %s164, 4
      %s166 = scalar_lea.vmem %s0, %s165
      %s167 = smul.u32 8, %s14
      %s168 = smul.u32 8, %s14
      %p169 = scmp.lt.s32.totalorder %s168, 15
      %s170 = scalar_select %p169, %s168, 15
      %s171 = smul.addr %s170, 4
      %s172 = scalar_lea.vmem %s3, %s171
      %s173 = smul.u32 8, %s14
      %v174 = vld [vmem:[%s166] sm:$0xf]
      %v175 = vld [vmem:[%s166 + $0x4] sm:$0xf]
      %v176 = vld [vmem:[%s166 + $0x8] sm:$0xf]
      %v177 = vld [vmem:[%s166 + $0xc] sm:$0xf]
      %v178 = vld [vmem:[%s166 + $0x10] sm:$0xf]
      %v179 = vld [vmem:[%s166 + $0x14] sm:$0xf]
      %v180 = vld [vmem:[%s166 + $0x18] sm:$0xf]
      %v181 = vld [vmem:[%s166 + $0x1c] sm:$0xf]
      %v182 = vunpack.c.l.bf16 %v174
      %v183 = vunpack.c.l.bf16 %v175
      %v184 = vunpack.c.l.bf16 %v176
      %v185 = vunpack.c.l.bf16 %v177
      %v186 = vunpack.c.l.bf16 %v178
      %v187 = vunpack.c.l.bf16 %v179
      %v188 = vunpack.c.l.bf16 %v180
      %v189 = vunpack.c.l.bf16 %v181
      %v190 = vld [vmem:[%s1] sm:$0x1]
      %v192 = vperm.slane %v190, 0
      %v194 = vmul.f32 %v182, %v192
      %v195 = vmul.f32 %v183, %v192
      %v196 = vmul.f32 %v184, %v192
      %v197 = vmul.f32 %v185, %v192
      %v198 = vmul.f32 %v186, %v192
      %v199 = vmul.f32 %v187, %v192
      %v200 = vmul.f32 %v188, %v192
      %v201 = vmul.f32 %v189, %v192
      %v202 = vld [vmem:[%s2] sm:$0x1]
      %v204 = vperm.slane %v202, 0
      %v206 = vadd.f32 %v194, %v204
      %v207 = vadd.f32 %v195, %v204
      %v208 = vadd.f32 %v196, %v204
      %v209 = vadd.f32 %v197, %v204
      %v210 = vadd.f32 %v198, %v204
      %v211 = vadd.f32 %v199, %v204
      %v212 = vadd.f32 %v200, %v204
      %v213 = vadd.f32 %v201, %v204
      %v214 = vmax.f32 %v206, 0.0
      %v215 = vmax.f32 %v207, 0.0
      %v216 = vmax.f32 %v208, 0.0
      %v217 = vmax.f32 %v209, 0.0
      %v218 = vmax.f32 %v210, 0.0
      %v219 = vmax.f32 %v211, 0.0
      %v220 = vmax.f32 %v212, 0.0
      %v221 = vmax.f32 %v213, 0.0
      %v222 = vpack.c.bf16 %v214, %v214
      %v223 = vpack.c.bf16 %v215, %v215
      %v224 = vpack.c.bf16 %v216, %v216
      %v225 = vpack.c.bf16 %v217, %v217
      %v226 = vpack.c.bf16 %v218, %v218
      %v227 = vpack.c.bf16 %v219, %v219
      %v228 = vpack.c.bf16 %v220, %v220
      %v229 = vpack.c.bf16 %v221, %v221
      %230 = vst [vmem:[%s172] sm:$0xf] %v222
      %231 = vst [vmem:[%s172 + $0x4] sm:$0xf] %v223
      %232 = vst [vmem:[%s172 + $0x8] sm:$0xf] %v224
      %233 = vst [vmem:[%s172 + $0xc] sm:$0xf] %v225
      %234 = vst [vmem:[%s172 + $0x10] sm:$0xf] %v226
      %235 = vst [vmem:[%s172 + $0x14] sm:$0xf] %v227
      %236 = vst [vmem:[%s172 + $0x18] sm:$0xf] %v228
      %237 = vst [vmem:[%s172 + $0x1c] sm:$0xf] %v229
      %s238 = smul.u32 8, %s14
      %p239 = scmp.lt.s32.totalorder %s238, 15
      %s240 = scalar_select %p239, %s238, 15
      %s241 = smul.addr %s240, 4
      %s242 = scalar_lea.vmem %s3, %s241
      // Predicated region
      $region33: #{generator_forward.27} parent=31 // pred_check
        %p243 = pneg %p100
      $region34: #{generator_forward.27} parent=31 // pred_check_branch
        %245 = sbr.rel (%p243) target = $region36
      $region35: #{generator_forward.27} parent=31 // pred_region
        %s246 = smul.u32 8, %s14
      $region36: #{generator_forward.27} parent=31 // pred_fallthru
        _
    $region32: #{generator_forward.27} parent=5 // pred_fallthru
      _
    %p247 = scmp.le.s32.totalorder 2, %s9
    // Predicated region
    $region37: #{generator_forward.27} parent=5 // pred_check
      %p248 = pneg %p247
    $region38: #{generator_forward.27} parent=5 // pred_check_branch
      %250 = sbr.rel (%p248) target = $region40
    $region39: #{generator_forward.27} parent=5 // pred_region
      %s251 = ssub.s32 %s9, 2
      // Predicated region
      $region41: #{generator_forward.27} parent=39 // pred_check
        %p252 = pneg %p106
      $region42: #{generator_forward.27} parent=39 // pred_check_branch
        %254 = sbr.rel (%p252) target = $region44
      $region43: #{generator_forward.27} parent=39 // pred_region
        %s255 = smul.u32 8, %s15
        %p256 = scmp.lt.s32.totalorder %s255, 15
        %s257 = scalar_select %p256, %s255, 15
        %s258 = smul.addr %s257, 4
        %s259 = scalar_lea.vmem %s3, %s258
      $region44: #{generator_forward.27} parent=39 // pred_fallthru
        _
    $region40: #{generator_forward.27} parent=5 // pred_fallthru
      _
  $region6: #{generator_forward.27} parent=0 // loop_footer
    %s13 = sadd.s32 1, %s9
  $region7: #{generator_forward.27} parent=0 // loop_footer_branch
    %8 = sbr.rel target = $region3
  $region8: #{generator_forward.27} parent=0 // loop_exit
    _

// kernel: generator_forward.28
$region0: #{generator_forward.28}
  #allocation0 [shape = 'u32[]', space=smem, size = 0x4, offset = 0x4, fixed_abs, tag = 'smem constant byte address 0x4 - core index']
  #allocation1 [shape = 'u32[72,128]{1,0:T(1,128)}', space=vmem, size = 0x9000, scoped, tag = 'internal scratch']
  #allocation2 [shape = 'f32[64,128]{1,0:T(8,128)}', space=vmem, size = 0x8000, scoped, tag = 'scratch operand']
  %s0 = inlined_call_operand.vmem [shape: bf16[128,512], index: 0, kind: input, shape index: {}]
  %s1 = inlined_call_operand.vmem [shape: bf16[512,128], index: 1, kind: input, shape index: {}]
  %s2 = inlined_call_operand.vmem [shape: bf16[128,128], index: 2, kind: output, shape index: {0}]
  %s3 = inlined_call_operand.vmem [shape: f32[2,2,128], index: 3, kind: output, shape index: {1}]
  %4 = xla_tuple %s2, %s3
  %s5 = sld [smem:[#allocation0]]
  $region57: #{generator_forward.28} parent=0
    _
  %s7 = ssub.s32 1, %s5
  %s8 = scalar_select 0, %s7, %s5
  loop: start=0, step=1, limit=4
  $region2: #{generator_forward.28} parent=0 // loop_pre_header
    _
  $region3: #{generator_forward.28} parent=0 // loop_header
    %s10 = sphi 0, %s14
    %p11 = scmp.ge.s32.totalorder %s10, 4
    %s17 = sphi 0, %s36
    %s18 = sphi 0, %s32
    %s19 = sphi 0, %s28
    %s20 = sphi 0, %s17
    %s21 = sphi 0, %s18
    %s22 = sphi 0, %s19
    %s23 = sphi 0, %s20
    %s24 = sphi 0, %s21
    %s25 = sphi 0, %s22
    %s41 = sphi 0, %s43
    %s44 = sphi 0, %s41
    %s45 = sphi 0, %s44
    %s61 = sphi 0, %s45
    %s69 = sphi 0, %s71
    %s72 = sphi 0, %s69
    %s73 = sphi 0, %s72
    %s89 = sphi 0, %s73
    %s97 = sphi 0, %s99
    %s100 = sphi 0, %s97
    %s101 = sphi 0, %s100
    %s117 = sphi 0, %s101
    %s125 = sphi 0, %s127
    %s128 = sphi 0, %s125
    %s129 = sphi 0, %s128
    %s145 = sphi 0, %s129
  $region4: #{generator_forward.28} parent=0 // loop_header_branch
    %13 = sbr.rel (%p11) target = $region8
  $region5: #{generator_forward.28} parent=0 // loop_body
    %s15 = ssub.s32 %s10, 1
    %s16 = ssub.s32 %s10, 2
    %s26 = sadd.s32 1, %s19
    %p27 = scmp.ge.s32.totalorder %s26, 1
    %s28 = scalar_select %p27, 0, %s26
    %s29 = sadd.s32 1, %s18
    %s30 = scalar_select %p27, %s29, %s18
    %p31 = scmp.ge.s32.totalorder %s30, 1
    %s32 = scalar_select %p31, 0, %s30
    %s33 = sadd.s32 1, %s17
    %s34 = scalar_select %p31, %s33, %s17
    %p35 = scmp.ge.s32.totalorder %s34, 2
    %s36 = scalar_select %p35, 0, %s34
    %s37 = ssub.s32 %s17, %s36
    %s38 = ssub.s32 %s19, %s28
    %s39 = sor.u32 %s37, %s38
    %p40 = scmp.eq.s32.totalorder %s39, 0
    %s42 = sadd.s32 %s41, 1
    %s43 = scalar_select %p40, %s41, %s42
    %p46 = pneg %p40
    %p47 = scmp.eq.s32.totalorder %s10, 1
    %p48 = por %p46, %p47
    %p49 = scmp.ne.s32.totalorder %s41, %s44
    %p50 = scmp.eq.s32.totalorder %s10, 0
    %p51 = por %p49, %p50
    %p52 = scmp.ne.s32.totalorder %s41, %s44
    %p53 = scmp.eq.s32.totalorder %s15, 1
    %p54 = por %p52, %p53
    %p55 = scmp.ne.s32.totalorder %s44, %s45
    %p56 = scmp.eq.s32.totalorder %s15, 0
    %p57 = por %p55, %p56
    %p58 = scmp.ne.s32.totalorder %s44, %s45
    %p59 = scmp.eq.s32.totalorder %s16, 1
    %p60 = por %p58, %p59
    %p62 = scmp.ne.s32.totalorder %s45, %s61
    %p63 = scmp.eq.s32.totalorder %s16, 0
    %p64 = por %p62, %p63
    %s65 = ssub.s32 %s19, %s28
    %s66 = ssub.s32 %s18, %s32
    %s67 = sor.u32 %s65, %s66
    %p68 = scmp.eq.s32.totalorder %s67, 0
    %s70 = sadd.s32 %s69, 1
    %s71 = scalar_select %p68, %s69, %s70
    %p74 = pneg %p68
    %p75 = scmp.eq.s32.totalorder %s10, 1
    %p76 = por %p74, %p75
    %p77 = scmp.ne.s32.totalorder %s69, %s72
    %p78 = scmp.eq.s32.totalorder %s10, 0
    %p79 = por %p77, %p78
    %p80 = scmp.ne.s32.totalorder %s69, %s72
    %p81 = scmp.eq.s32.totalorder %s15, 1
    %p82 = por %p80, %p81
    %p83 = scmp.ne.s32.totalorder %s72, %s73
    %p84 = scmp.eq.s32.totalorder %s15, 0
    %p85 = por %p83, %p84
    %p86 = scmp.ne.s32.totalorder %s72, %s73
    %p87 = scmp.eq.s32.totalorder %s16, 1
    %p88 = por %p86, %p87
    %p90 = scmp.ne.s32.totalorder %s73, %s89
    %p91 = scmp.eq.s32.totalorder %s16, 0
    %p92 = por %p90, %p91
    %s93 = ssub.s32 %s17, %s36
    %s94 = ssub.s32 %s18, %s32
    %s95 = sor.u32 %s93, %s94
    %p96 = scmp.eq.s32.totalorder %s95, 0
    %s98 = sadd.s32 %s97, 1
    %s99 = scalar_select %p96, %s97, %s98
    %p102 = pneg %p96
    %p103 = scmp.eq.s32.totalorder %s10, 1
    %p104 = por %p102, %p103
    %p105 = scmp.ne.s32.totalorder %s97, %s100
    %p106 = scmp.eq.s32.totalorder %s10, 0
    %p107 = por %p105, %p106
    %p108 = scmp.ne.s32.totalorder %s97, %s100
    %p109 = scmp.eq.s32.totalorder %s15, 1
    %p110 = por %p108, %p109
    %p111 = scmp.ne.s32.totalorder %s100, %s101
    %p112 = scmp.eq.s32.totalorder %s15, 0
    %p113 = por %p111, %p112
    %p114 = scmp.ne.s32.totalorder %s100, %s101
    %p115 = scmp.eq.s32.totalorder %s16, 1
    %p116 = por %p114, %p115
    %p118 = scmp.ne.s32.totalorder %s101, %s117
    %p119 = scmp.eq.s32.totalorder %s16, 0
    %p120 = por %p118, %p119
    %s121 = ssub.s32 %s17, %s36
    %s122 = ssub.s32 %s18, %s32
    %s123 = sor.u32 %s121, %s122
    %p124 = scmp.eq.s32.totalorder %s123, 0
    %s126 = sadd.s32 %s125, 1
    %s127 = scalar_select %p124, %s125, %s126
    %p130 = pneg %p124
    %p131 = scmp.eq.s32.totalorder %s10, 1
    %p132 = por %p130, %p131
    %p133 = scmp.ne.s32.totalorder %s125, %s128
    %p134 = scmp.eq.s32.totalorder %s10, 0
    %p135 = por %p133, %p134
    %p136 = scmp.ne.s32.totalorder %s125, %s128
    %p137 = scmp.eq.s32.totalorder %s15, 1
    %p138 = por %p136, %p137
    %p139 = scmp.ne.s32.totalorder %s128, %s129
    %p140 = scmp.eq.s32.totalorder %s15, 0
    %p141 = por %p139, %p140
    %p142 = scmp.ne.s32.totalorder %s128, %s129
    %p143 = scmp.eq.s32.totalorder %s16, 1
    %p144 = por %p142, %p143
    %p146 = scmp.ne.s32.totalorder %s129, %s145
    %p147 = scmp.eq.s32.totalorder %s16, 0
    %p148 = por %p146, %p147
    %p149 = scmp.le.s32.totalorder 1, %s10
    %p150 = scmp.lt.s32.totalorder %s10, 3
    %p151 = pnand %p149, %p150
    %p152 = pneg %p151
    // Predicated region
    $region9: #{generator_forward.28} parent=5 // pred_check
      _
    $region10: #{generator_forward.28} parent=5 // pred_check_branch
      %154 = sbr.rel (%p151) target = $region12
    $region11: #{generator_forward.28} parent=5 // pred_region
      %s155 = ssub.s32 %s10, 1
      // Predicated region
      $region13: #{generator_forward.28} parent=11 // pred_check
        %p156 = pneg %p85
      $region14: #{generator_forward.28} parent=11 // pred_check_branch
        %158 = sbr.rel (%p156) target = $region16
      $region15: #{generator_forward.28} parent=11 // pred_region
        %s159 = smul.u32 64, %s22
        %p160 = scmp.lt.s32.totalorder %s159, 63
        %s161 = scalar_select %p160, %s159, 63
        %p162 = scmp.lt.s32.totalorder %s21, 0
        %s163 = scalar_select %p162, %s21, 0
        %s164 = sadd.s32 %s163, %s161
        %s165 = smul.addr %s164, 4
        %s166 = scalar_lea.vmem %s1, %s165
        %s167 = smul.u32 64, %s22
      $region16: #{generator_forward.28} parent=11 // pred_fallthru
        _
    $region12: #{generator_forward.28} parent=5 // pred_fallthru
      _
    %p168 = scmp.lt.s32.totalorder %s10, 2
    // Predicated region
    $region17: #{generator_forward.28} parent=5 // pred_check
      %p169 = pneg %p168
    $region18: #{generator_forward.28} parent=5 // pred_check_branch
      %171 = sbr.rel (%p169) target = $region20
    $region19: #{generator_forward.28} parent=5 // pred_region
      // Predicated region
      $region21: #{generator_forward.28} parent=19 // pred_check
        %p172 = pneg %p51
      $region22: #{generator_forward.28} parent=19 // pred_check_branch
        %174 = sbr.rel (%p172) target = $region24
      $region23: #{generator_forward.28} parent=19 // pred_region
        %s175 = smul.u32 8, %s17
        %s176 = smul.u32 4, %s19
        %p177 = scmp.lt.s32.totalorder %s175, 15
        %s178 = scalar_select %p177, %s175, 15
        %p179 = scmp.lt.s32.totalorder %s176, 3
        %s180 = scalar_select %p179, %s176, 3
        %s181 = smul.addr %s178, 4
        %s182 = sadd.s32 %s180, %s181
        %s183 = smul.addr %s182, 4
        %s184 = scalar_lea.vmem %s0, %s183
        %s185 = smul.u32 8, %s17
        %s186 = smul.u32 4, %s19
      $region24: #{generator_forward.28} parent=19 // pred_fallthru
        _
    $region20: #{generator_forward.28} parent=5 // pred_fallthru
      _
    %p187 = scmp.le.s32.totalorder 1, %s10
    %p188 = scmp.lt.s32.totalorder %s10, 3
    %p189 = pnand %p187, %p188
    %p190 = pneg %p189
    // Predicated region
    $region25: #{generator_forward.28} parent=5 // pred_check
      _
    $region26: #{generator_forward.28} parent=5 // pred_check_branch
      %192 = sbr.rel (%p189) target = $region28
    $region27: #{generator_forward.28} parent=5 // pred_region
      %s193 = ssub.s32 %s10, 1
      %s194 = smul.u32 8, %s20
      %s195 = smul.u32 4, %s22
      %p196 = scmp.lt.s32.totalorder %s194, 15
      %s197 = scalar_select %p196, %s194, 15
      %p198 = scmp.lt.s32.totalorder %s195, 3
      %s199 = scalar_select %p198, %s195, 3
      %s200 = smul.addr %s197, 4
      %s201 = sadd.s32 %s199, %s200
      %s202 = smul.addr %s201, 4
      %s203 = scalar_lea.vmem %s0, %s202
      %p204 = pneg %p57
      %p205 = pneg %p54
      %s206 = smul.u32 64, %s22
      %p207 = scmp.lt.s32.totalorder %s206, 63
      %s208 = scalar_select %p207, %s206, 63
      %p209 = scmp.lt.s32.totalorder %s21, 0
      %s210 = scalar_select %p209, %s21, 0
      %s211 = sadd.s32 %s210, %s208
      %s212 = smul.addr %s211, 4
      %s213 = scalar_lea.vmem %s1, %s212
      %p214 = pneg %p85
      %p215 = pneg %p82
      %p216 = pneg %p113
      %p217 = pneg %p110
      %s218 = smul.u32 8, %s20
      %p219 = scmp.lt.s32.totalorder %s218, 15
      %s220 = scalar_select %p219, %s218, 15
      %p221 = scmp.lt.s32.totalorder %s21, 0
      %s222 = scalar_select %p221, %s21, 0
      %s223 = sadd.s32 %s222, %s220
      %s224 = smul.addr %s223, 4
      %s225 = scalar_lea.vmem %s2, %s224
      %p226 = pneg %p141
      %p227 = pneg %p138
      %p228 = scmp.lt.s32.totalorder %s20, 1
      %s229 = scalar_select %p228, %s20, 1
      %p230 = scmp.lt.s32.totalorder %s21, 0
      %s231 = scalar_select %p230, %s21, 0
      %s232 = sadd.s32 %s231, %s229
      %s233 = smul.addr %s232, 2
      %s234 = scalar_lea.vmem %s3, %s233
      %s235 = smul.u32 8, %s20
      %s236 = smul.u32 4, %s22
      %p237 = scmp.lt.s32.totalorder %s235, 15
      %s238 = scalar_select %p237, %s235, 15
      %p239 = scmp.lt.s32.totalorder %s236, 3
      %s240 = scalar_select %p239, %s236, 3
      %s241 = smul.addr %s238, 4
      %s242 = sadd.s32 %s240, %s241
      %s243 = smul.addr %s242, 4
      %s244 = scalar_lea.vmem %s0, %s243
      %s245 = smul.u32 8, %s20
      %s246 = smul.u32 4, %s22
      %s247 = smul.u32 64, %s22
      %p248 = scmp.lt.s32.totalorder %s247, 63
      %s249 = scalar_select %p248, %s247, 63
      %p250 = scmp.lt.s32.totalorder %s21, 0
      %s251 = scalar_select %p250, %s21, 0
      %s252 = sadd.s32 %s251, %s249
      %s253 = smul.addr %s252, 4
      %s254 = scalar_lea.vmem %s1, %s253
      %s255 = smul.u32 64, %s22
      %s256 = smul.u32 8, %s20
      %p257 = scmp.lt.s32.totalorder %s256, 15
      %s258 = scalar_select %p257, %s256, 15
      %p259 = scmp.lt.s32.totalorder %s21, 0
      %s260 = scalar_select %p259, %s21, 0
      %s261 = sadd.s32 %s260, %s258
      %s262 = smul.addr %s261, 4
      %s263 = scalar_lea.vmem %s2, %s262
      %s264 = smul.u32 8, %s20
      %p265 = scmp.lt.s32.totalorder %s20, 1
      %s266 = scalar_select %p265, %s20, 1
      %p267 = scmp.lt.s32.totalorder %s21, 0
      %s268 = scalar_select %p267, %s21, 0
      %s269 = sadd.s32 %s268, %s266
      %s270 = smul.addr %s269, 2
      %s271 = scalar_lea.vmem %s3, %s270
      %p272 = scmp.eq.s32.totalorder %s22, 0
      // Predicated region
      $region29: #{generator_forward.28} parent=27 // pred_check
        %p273 = pneg %p272
      $region30: #{generator_forward.28} parent=27 // pred_check_branch
        %275 = sbr.rel (%p273) target = $region32
      $region31: #{generator_forward.28} parent=27 // pred_region
        %276 = vst [vmem:[#allocation2] sm:$0xff] 0.0
        %277 = vst [vmem:[#allocation2 + $0x8] sm:$0xff] 0.0
        %278 = vst [vmem:[#allocation2 + $0x10] sm:$0xff] 0.0
        %279 = vst [vmem:[#allocation2 + $0x18] sm:$0xff] 0.0
        %280 = vst [vmem:[#allocation2 + $0x20] sm:$0xff] 0.0
        %281 = vst [vmem:[#allocation2 + $0x28] sm:$0xff] 0.0
        %282 = vst [vmem:[#allocation2 + $0x30] sm:$0xff] 0.0
        %283 = vst [vmem:[#allocation2 + $0x38] sm:$0xff] 0.0
      $region32: #{generator_forward.28} parent=27 // pred_fallthru
        _
      %v284 = vld [vmem:[#allocation2] sm:$0xff]
      %v285 = vld [vmem:[#allocation2 + $0x8] sm:$0xff]
      %v286 = vld [vmem:[#allocation2 + $0x10] sm:$0xff]
      %v287 = vld [vmem:[#allocation2 + $0x18] sm:$0xff]
      %v288 = vld [vmem:[#allocation2 + $0x20] sm:$0xff]
      %v289 = vld [vmem:[#allocation2 + $0x28] sm:$0xff]
      %v290 = vld [vmem:[#allocation2 + $0x30] sm:$0xff]
      %v291 = vld [vmem:[#allocation2 + $0x38] sm:$0xff]
      %v292 = vld [vmem:[%s244] sm:$0xff]
      %v293 = vld [vmem:[%s244 + $0x8] sm:$0xff]
      %v294 = vld [vmem:[%s244 + $0x10] sm:$0xff]
      %v295 = vld [vmem:[%s244 + $0x18] sm:$0xff]
      %v296 = vld [vmem:[%s244 + $0x20] sm:$0xff]
      %v297 = vld [vmem:[%s244 + $0x28] sm:$0xff]
      %v298 = vld [vmem:[%s244 + $0x30] sm:$0xff]
      %v299 = vld [vmem:[%s244 + $0x38] sm:$0xff]
      %v300 = vld [vmem:[%s244 + $0x40] sm:$0xff]
      %v301 = vld [vmem:[%s244 + $0x48] sm:$0xff]
      %v302 = vld [vmem:[%s244 + $0x50] sm:$0xff]
      %v303 = vld [vmem:[%s244 + $0x58] sm:$0xff]
      %v304 = vld [vmem:[%s244 + $0x60] sm:$0xff]
      %v305 = vld [vmem:[%s244 + $0x68] sm:$0xff]
      %v306 = vld [vmem:[%s244 + $0x70] sm:$0xff]
      %v307 = vld [vmem:[%s244 + $0x78] sm:$0xff]
      %v308 = vld [vmem:[%s254] sm:$0xf]
      %v309 = vld [vmem:[%s254 + $0x4] sm:$0xf]
      %v310 = vld [vmem:[%s254 + $0x8] sm:$0xf]
      %v311 = vld [vmem:[%s254 + $0xc] sm:$0xf]
      %v312 = vld [vmem:[%s254 + $0x10] sm:$0xf]
      %v313 = vld [vmem:[%s254 + $0x14] sm:$0xf]
      %v314 = vld [vmem:[%s254 + $0x18] sm:$0xf]
      %v315 = vld [vmem:[%s254 + $0x1c] sm:$0xf]
      %v316 = vld [vmem:[%s254 + $0x20] sm:$0xf]
      %v317 = vld [vmem:[%s254 + $0x24] sm:$0xf]
      %v318 = vld [vmem:[%s254 + $0x28] sm:$0xf]
      %v319 = vld [vmem:[%s254 + $0x2c] sm:$0xf]
      %v320 = vld [vmem:[%s254 + $0x30] sm:$0xf]
      %v321 = vld [vmem:[%s254 + $0x34] sm:$0xf]
      %v322 = vld [vmem:[%s254 + $0x38] sm:$0xf]
      %v323 = vld [vmem:[%s254 + $0x3c] sm:$0xf]
      %v324 = vld [vmem:[%s254 + $0x40] sm:$0xf]
      %v325 = vld [vmem:[%s254 + $0x44] sm:$0xf]
      %v326 = vld [vmem:[%s254 + $0x48] sm:$0xf]
      %v327 = vld [vmem:[%s254 + $0x4c] sm:$0xf]
      %v328 = vld [vmem:[%s254 + $0x50] sm:$0xf]
      %v329 = vld [vmem:[%s254 + $0x54] sm:$0xf]
      %v330 = vld [vmem:[%s254 + $0x58] sm:$0xf]
      %v331 = vld [vmem:[%s254 + $0x5c] sm:$0xf]
      %v332 = vld [vmem:[%s254 + $0x60] sm:$0xf]
      %v333 = vld [vmem:[%s254 + $0x64] sm:$0xf]
      %v334 = vld [vmem:[%s254 + $0x68] sm:$0xf]
      %v335 = vld [vmem:[%s254 + $0x6c] sm:$0xf]
      %v336 = vld [vmem:[%s254 + $0x70] sm:$0xf]
      %v337 = vld [vmem:[%s254 + $0x74] sm:$0xf]
      %v338 = vld [vmem:[%s254 + $0x78] sm:$0xf]
      %v339 = vld [vmem:[%s254 + $0x7c] sm:$0xf]
      %v340 = vld [vmem:[%s254 + $0x80] sm:$0xf]
      %v341 = vld [vmem:[%s254 + $0x84] sm:$0xf]
      %v342 = vld [vmem:[%s254 + $0x88] sm:$0xf]
      %v343 = vld [vmem:[%s254 + $0x8c] sm:$0xf]
      %v344 = vld [vmem:[%s254 + $0x90] sm:$0xf]
      %v345 = vld [vmem:[%s254 + $0x94] sm:$0xf]
      %v346 = vld [vmem:[%s254 + $0x98] sm:$0xf]
      %v347 = vld [vmem:[%s254 + $0x9c] sm:$0xf]
      %v348 = vld [vmem:[%s254 + $0xa0] sm:$0xf]
      %v349 = vld [vmem:[%s254 + $0xa4] sm:$0xf]
      %v350 = vld [vmem:[%s254 + $0xa8] sm:$0xf]
      %v351 = vld [vmem:[%s254 + $0xac] sm:$0xf]
      %v352 = vld [vmem:[%s254 + $0xb0] sm:$0xf]
      %v353 = vld [vmem:[%s254 + $0xb4] sm:$0xf]
      %v354 = vld [vmem:[%s254 + $0xb8] sm:$0xf]
      %v355 = vld [vmem:[%s254 + $0xbc] sm:$0xf]
      %v356 = vld [vmem:[%s254 + $0xc0] sm:$0xf]
      %v357 = vld [vmem:[%s254 + $0xc4] sm:$0xf]
      %v358 = vld [vmem:[%s254 + $0xc8] sm:$0xf]
      %v359 = vld [vmem:[%s254 + $0xcc] sm:$0xf]
      %v360 = vld [vmem:[%s254 + $0xd0] sm:$0xf]
      %v361 = vld [vmem:[%s254 + $0xd4] sm:$0xf]
      %v362 = vld [vmem:[%s254 + $0xd8] sm:$0xf]
      %v363 = vld [vmem:[%s254 + $0xdc] sm:$0xf]
      %v364 = vld [vmem:[%s254 + $0xe0] sm:$0xf]
      %v365 = vld [vmem:[%s254 + $0xe4] sm:$0xf]
      %v366 = vld [vmem:[%s254 + $0xe8] sm:$0xf]
      %v367 = vld [vmem:[%s254 + $0xec] sm:$0xf]
      %v368 = vld [vmem:[%s254 + $0xf0] sm:$0xf]
      %v369 = vld [vmem:[%s254 + $0xf4] sm:$0xf]
      %v370 = vld [vmem:[%s254 + $0xf8] sm:$0xf]
      %v371 = vld [vmem:[%s254 + $0xfc] sm:$0xf]
      %v388 = vunpack.c.l.b16 %v292
      %v389 = vunpack.c.h.b16 %v292
      %v390 = vunpack.c.l.b16 %v293
      %v391 = vunpack.c.h.b16 %v293
      %v392 = vunpack.c.l.b16 %v294
      %v393 = vunpack.c.h.b16 %v294
      %v394 = vunpack.c.l.b16 %v295
      %v395 = vunpack.c.h.b16 %v295
      %v396 = vunpack.c.l.b16 %v296
      %v397 = vunpack.c.h.b16 %v296
      %v398 = vunpack.c.l.b16 %v297
      %v399 = vunpack.c.h.b16 %v297
      %v400 = vunpack.c.l.b16 %v298
      %v401 = vunpack.c.h.b16 %v298
      %v402 = vunpack.c.l.b16 %v299
      %v403 = vunpack.c.h.b16 %v299
      %v404 = vunpack.c.l.b16 %v300
      %v405 = vunpack.c.h.b16 %v300
      %v406 = vunpack.c.l.b16 %v301
      %v407 = vunpack.c.h.b16 %v301
      %v408 = vunpack.c.l.b16 %v302
      %v409 = vunpack.c.h.b16 %v302
      %v410 = vunpack.c.l.b16 %v303
      %v411 = vunpack.c.h.b16 %v303
      %v412 = vunpack.c.l.b16 %v304
      %v413 = vunpack.c.h.b16 %v304
      %v414 = vunpack.c.l.b16 %v305
      %v415 = vunpack.c.h.b16 %v305
      %v416 = vunpack.c.l.b16 %v306
      %v417 = vunpack.c.h.b16 %v306
      %v418 = vunpack.c.l.b16 %v307
      %v419 = vunpack.c.h.b16 %v307
      %v420 = vpack.c.b16 %v392, %v388
      %v421 = vpack.c.b16 %v393, %v389
      %v422 = vpack.c.b16 %v394, %v390
      %v423 = vpack.c.b16 %v395, %v391
      %v424 = vpack.c.b16 %v400, %v396
      %v425 = vpack.c.b16 %v401, %v397
      %v426 = vpack.c.b16 %v402, %v398
      %v427 = vpack.c.b16 %v403, %v399
      %v428 = vpack.c.b16 %v408, %v404
      %v429 = vpack.c.b16 %v409, %v405
      %v430 = vpack.c.b16 %v410, %v406
      %v431 = vpack.c.b16 %v411, %v407
      %v432 = vpack.c.b16 %v416, %v412
      %v433 = vpack.c.b16 %v417, %v413
      %v434 = vpack.c.b16 %v418, %v414
      %v435 = vpack.c.b16 %v419, %v415
      %v516 = vunpack.c.l.b16 %v308
      %v517 = vunpack.c.l.b16 %v309
      %v518 = vunpack.c.l.b16 %v310
      %v519 = vunpack.c.l.b16 %v311
      %v520 = vunpack.c.l.b16 %v312
      %v521 = vunpack.c.l.b16 %v313
      %v522 = vunpack.c.l.b16 %v314
      %v523 = vunpack.c.l.b16 %v315
      %v524 = vunpack.c.l.b16 %v316
      %v525 = vunpack.c.l.b16 %v317
      %v526 = vunpack.c.l.b16 %v318
      %v527 = vunpack.c.l.b16 %v319
      %v528 = vunpack.c.l.b16 %v320
      %v529 = vunpack.c.l.b16 %v321
      %v530 = vunpack.c.l.b16 %v322
      %v531 = vunpack.c.l.b16 %v323
      %v532 = vunpack.c.l.b16 %v324
      %v533 = vunpack.c.l.b16 %v325
      %v534 = vunpack.c.l.b16 %v326
      %v535 = vunpack.c.l.b16 %v327
      %v536 = vunpack.c.l.b16 %v328
      %v537 = vunpack.c.l.b16 %v329
      %v538 = vunpack.c.l.b16 %v330
      %v539 = vunpack.c.l.b16 %v331
      %v540 = vunpack.c.l.b16 %v332
      %v541 = vunpack.c.l.b16 %v333
      %v542 = vunpack.c.l.b16 %v334
      %v543 = vunpack.c.l.b16 %v335
      %v544 = vunpack.c.l.b16 %v336
      %v545 = vunpack.c.l.b16 %v337
      %v546 = vunpack.c.l.b16 %v338
      %v547 = vunpack.c.l.b16 %v339
      %v548 = vunpack.c.l.b16 %v340
      %v549 = vunpack.c.l.b16 %v341
      %v550 = vunpack.c.l.b16 %v342
      %v551 = vunpack.c.l.b16 %v343
      %v552 = vunpack.c.l.b16 %v344
      %v553 = vunpack.c.l.b16 %v345
      %v554 = vunpack.c.l.b16 %v346
      %v555 = vunpack.c.l.b16 %v347
      %v556 = vunpack.c.l.b16 %v348
      %v557 = vunpack.c.l.b16 %v349
      %v558 = vunpack.c.l.b16 %v350
      %v559 = vunpack.c.l.b16 %v351
      %v560 = vunpack.c.l.b16 %v352
      %v561 = vunpack.c.l.b16 %v353
      %v562 = vunpack.c.l.b16 %v354
      %v563 = vunpack.c.l.b16 %v355
      %v564 = vunpack.c.l.b16 %v356
      %v565 = vunpack.c.l.b16 %v357
      %v566 = vunpack.c.l.b16 %v358
      %v567 = vunpack.c.l.b16 %v359
      %v568 = vunpack.c.l.b16 %v360
      %v569 = vunpack.c.l.b16 %v361
      %v570 = vunpack.c.l.b16 %v362
      %v571 = vunpack.c.l.b16 %v363
      %v572 = vunpack.c.l.b16 %v364
      %v573 = vunpack.c.l.b16 %v365
      %v574 = vunpack.c.l.b16 %v366
      %v575 = vunpack.c.l.b16 %v367
      %v576 = vunpack.c.l.b16 %v368
      %v577 = vunpack.c.l.b16 %v369
      %v578 = vunpack.c.l.b16 %v370
      %v579 = vunpack.c.l.b16 %v371
      %v580 = vpack.c.b16 %v517, %v516
      %v581 = vpack.c.b16 %v519, %v518
      %v582 = vpack.c.b16 %v521, %v520
      %v583 = vpack.c.b16 %v523, %v522
      %v584 = vpack.c.b16 %v525, %v524
      %v585 = vpack.c.b16 %v527, %v526
      %v586 = vpack.c.b16 %v529, %v528
      %v587 = vpack.c.b16 %v531, %v530
      %v588 = vpack.c.b16 %v533, %v532
      %v589 = vpack.c.b16 %v535, %v534
      %v590 = vpack.c.b16 %v537, %v536
      %v591 = vpack.c.b16 %v539, %v538
      %v592 = vpack.c.b16 %v541, %v540
      %v593 = vpack.c.b16 %v543, %v542
      %v594 = vpack.c.b16 %v545, %v544
      %v595 = vpack.c.b16 %v547, %v546
      %v596 = vpack.c.b16 %v549, %v548
      %v597 = vpack.c.b16 %v551, %v550
      %v598 = vpack.c.b16 %v553, %v552
      %v599 = vpack.c.b16 %v555, %v554
      %v600 = vpack.c.b16 %v557, %v556
      %v601 = vpack.c.b16 %v559, %v558
      %v602 = vpack.c.b16 %v561, %v560
      %v603 = vpack.c.b16 %v563, %v562
      %v604 = vpack.c.b16 %v565, %v564
      %v605 = vpack.c.b16 %v567, %v566
      %v606 = vpack.c.b16 %v569, %v568
      %v607 = vpack.c.b16 %v571, %v570
      %v608 = vpack.c.b16 %v573, %v572
      %v609 = vpack.c.b16 %v575, %v574
      %v610 = vpack.c.b16 %v577, %v576
      %v611 = vpack.c.b16 %v579, %v578
      %644 = vmatpush.bf16.msra.mxu0 %v587
      %645 = vmatpush.bf16.msra.mxu0 %v586
      %646 = vmatpush.bf16.msra.mxu0 %v585
      %647 = vmatpush.bf16.msra.mxu0 %v584
      %648 = vmatpush.bf16.msra.mxu0 %v583
      %649 = vmatpush.bf16.msra.mxu0 %v582
      %650 = vmatpush.bf16.msra.mxu0 %v581
      %651 = vmatpush.bf16.msra.mxu0 %v580
      %652 = vmatmul.bf16.gmra.mxu0 %v420
      %v653 = vpop.f32.mrf.mxu0
      %v654 = vadd.f32 0.0, %v653
      %v655 = vpop.f32.mrf.mxu0
      %v656 = vadd.f32 0.0, %v655
      %657 = vmatmul.bf16.gmra.mxu0 %v424
      %v658 = vpop.f32.mrf.mxu0
      %v659 = vadd.f32 0.0, %v658
      %v660 = vpop.f32.mrf.mxu0
      %v661 = vadd.f32 0.0, %v660
      %662 = vmatmul.bf16.gmra.mxu0 %v428
      %v663 = vpop.f32.mrf.mxu0
      %v664 = vadd.f32 0.0, %v663
      %v665 = vpop.f32.mrf.mxu0
      %v666 = vadd.f32 0.0, %v665
      %667 = vmatmul.bf16.gmra.mxu0 %v432
      %v668 = vpop.f32.mrf.mxu0
      %v669 = vadd.f32 0.0, %v668
      %v670 = vpop.f32.mrf.mxu0
      %v671 = vadd.f32 0.0, %v670
      %672 = vdwg.mxu0
      %673 = vmatpush.bf16.msra.mxu0 %v595
      %674 = vmatpush.bf16.msra.mxu0 %v594
      %675 = vmatpush.bf16.msra.mxu0 %v593
      %676 = vmatpush.bf16.msra.mxu0 %v592
      %677 = vmatpush.bf16.msra.mxu0 %v591
      %678 = vmatpush.bf16.msra.mxu0 %v590
      %679 = vmatpush.bf16.msra.mxu0 %v589
      %680 = vmatpush.bf16.msra.mxu0 %v588
      %681 = vmatmul.bf16.gmra.mxu0 %v421
      %v682 = vpop.f32.mrf.mxu0
      %v683 = vadd.f32 %v654, %v682
      %v684 = vpop.f32.mrf.mxu0
      %v685 = vadd.f32 %v656, %v684
      %686 = vmatmul.bf16.gmra.mxu0 %v425
      %v687 = vpop.f32.mrf.mxu0
      %v688 = vadd.f32 %v659, %v687
      %v689 = vpop.f32.mrf.mxu0
      %v690 = vadd.f32 %v661, %v689
      %691 = vmatmul.bf16.gmra.mxu0 %v429
      %v692 = vpop.f32.mrf.mxu0
      %v693 = vadd.f32 %v664, %v692
      %v694 = vpop.f32.mrf.mxu0
      %v695 = vadd.f32 %v666, %v694
      %696 = vmatmul.bf16.gmra.mxu0 %v433
      %v697 = vpop.f32.mrf.mxu0
      %v698 = vadd.f32 %v669, %v697
      %v699 = vpop.f32.mrf.mxu0
      %v700 = vadd.f32 %v671, %v699
      %701 = vdwg.mxu0
      %702 = vmatpush.bf16.msra.mxu0 %v603
      %703 = vmatpush.bf16.msra.mxu0 %v602
      %704 = vmatpush.bf16.msra.mxu0 %v601
      %705 = vmatpush.bf16.msra.mxu0 %v600
      %706 = vmatpush.bf16.msra.mxu0 %v599
      %707 = vmatpush.bf16.msra.mxu0 %v598
      %708 = vmatpush.bf16.msra.mxu0 %v597
      %709 = vmatpush.bf16.msra.mxu0 %v596
      %710 = vmatmul.bf16.gmra.mxu0 %v422
      %v711 = vpop.f32.mrf.mxu0
      %v712 = vadd.f32 %v683, %v711
      %v713 = vpop.f32.mrf.mxu0
      %v714 = vadd.f32 %v685, %v713
      %715 = vmatmul.bf16.gmra.mxu0 %v426
      %v716 = vpop.f32.mrf.mxu0
      %v717 = vadd.f32 %v688, %v716
      %v718 = vpop.f32.mrf.mxu0
      %v719 = vadd.f32 %v690, %v718
      %720 = vmatmul.bf16.gmra.mxu0 %v430
      %v721 = vpop.f32.mrf.mxu0
      %v722 = vadd.f32 %v693, %v721
      %v723 = vpop.f32.mrf.mxu0
      %v724 = vadd.f32 %v695, %v723
      %725 = vmatmul.bf16.gmra.mxu0 %v434
      %v726 = vpop.f32.mrf.mxu0
      %v727 = vadd.f32 %v698, %v726
      %v728 = vpop.f32.mrf.mxu0
      %v729 = vadd.f32 %v700, %v728
      %730 = vdwg.mxu0
      %731 = vmatpush.bf16.msra.mxu0 %v611
      %732 = vmatpush.bf16.msra.mxu0 %v610
      %733 = vmatpush.bf16.msra.mxu0 %v609
      %734 = vmatpush.bf16.msra.mxu0 %v608
      %735 = vmatpush.bf16.msra.mxu0 %v607
      %736 = vmatpush.bf16.msra.mxu0 %v606
      %737 = vmatpush.bf16.msra.mxu0 %v605
      %738 = vmatpush.bf16.msra.mxu0 %v604
      %739 = vmatmul.bf16.gmra.mxu0 %v423
      %v740 = vpop.f32.mrf.mxu0
      %v741 = vadd.f32 %v712, %v740
      %v742 = vpop.f32.mrf.mxu0
      %v743 = vadd.f32 %v714, %v742
      %744 = vmatmul.bf16.gmra.mxu0 %v427
      %v745 = vpop.f32.mrf.mxu0
      %v746 = vadd.f32 %v717, %v745
      %v747 = vpop.f32.mrf.mxu0
      %v748 = vadd.f32 %v719, %v747
      %749 = vmatmul.bf16.gmra.mxu0 %v431
      %v750 = vpop.f32.mrf.mxu0
      %v751 = vadd.f32 %v722, %v750
      %v752 = vpop.f32.mrf.mxu0
      %v753 = vadd.f32 %v724, %v752
      %754 = vmatmul.bf16.gmra.mxu0 %v435
      %v755 = vpop.f32.mrf.mxu0
      %v756 = vadd.f32 %v727, %v755
      %v757 = vpop.f32.mrf.mxu0
      %v758 = vadd.f32 %v729, %v757
      %759 = vdwg.mxu0
      %v760 = vadd.f32 %v284, %v741
      %v761 = vadd.f32 %v285, %v743
      %v762 = vadd.f32 %v286, %v746
      %v763 = vadd.f32 %v287, %v748
      %v764 = vadd.f32 %v288, %v751
      %v765 = vadd.f32 %v289, %v753
      %v766 = vadd.f32 %v290, %v756
      %v767 = vadd.f32 %v291, %v758
      %768 = vst [vmem:[#allocation2] sm:$0xff] %v760
      %769 = vst [vmem:[#allocation2 + $0x8] sm:$0xff] %v761
      %770 = vst [vmem:[#allocation2 + $0x10] sm:$0xff] %v762
      %771 = vst [vmem:[#allocation2 + $0x18] sm:$0xff] %v763
      %772 = vst [vmem:[#allocation2 + $0x20] sm:$0xff] %v764
      %773 = vst [vmem:[#allocation2 + $0x28] sm:$0xff] %v765
      %774 = vst [vmem:[#allocation2 + $0x30] sm:$0xff] %v766
      %775 = vst [vmem:[#allocation2 + $0x38] sm:$0xff] %v767
      // Predicated region
      $region33: #{generator_forward.28} parent=27 // pred_check
        %p776 = pneg %p272
      $region34: #{generator_forward.28} parent=27 // pred_check_branch
        %778 = sbr.rel (%p776) target = $region36
      $region35: #{generator_forward.28} parent=27 // pred_region
        %v779 = vld [vmem:[#allocation2] sm:$0xff]
        %v780 = vld [vmem:[#allocation2 + $0x8] sm:$0xff]
        %v781 = vld [vmem:[#allocation2 + $0x10] sm:$0xff]
        %v782 = vld [vmem:[#allocation2 + $0x18] sm:$0xff]
        %v783 = vld [vmem:[#allocation2 + $0x20] sm:$0xff]
        %v784 = vld [vmem:[#allocation2 + $0x28] sm:$0xff]
        %v785 = vld [vmem:[#allocation2 + $0x30] sm:$0xff]
        %v786 = vld [vmem:[#allocation2 + $0x38] sm:$0xff]
        %v787 = vpack.c.bf16 %v779, %v779
        %v788 = vpack.c.bf16 %v780, %v780
        %v789 = vpack.c.bf16 %v781, %v781
        %v790 = vpack.c.bf16 %v782, %v782
        %v791 = vpack.c.bf16 %v783, %v783
        %v792 = vpack.c.bf16 %v784, %v784
        %v793 = vpack.c.bf16 %v785, %v785
        %v794 = vpack.c.bf16 %v786, %v786
        %795 = vst [vmem:[%s263] sm:$0xf] %v787
        %796 = vst [vmem:[%s263 + $0x4] sm:$0xf] %v788
        %797 = vst [vmem:[%s263 + $0x8] sm:$0xf] %v789
        %798 = vst [vmem:[%s263 + $0xc] sm:$0xf] %v790
        %799 = vst [vmem:[%s263 + $0x10] sm:$0xf] %v791
        %800 = vst [vmem:[%s263 + $0x14] sm:$0xf] %v792
        %801 = vst [vmem:[%s263 + $0x18] sm:$0xf] %v793
        %802 = vst [vmem:[%s263 + $0x1c] sm:$0xf] %v794
        %v803 = vadd.f32 %v779, %v780
        %v804 = vadd.f32 %v803, %v781
        %v805 = vadd.f32 %v804, %v782
        %v806 = vadd.f32 %v805, %v783
        %v807 = vadd.f32 %v806, %v784
        %v808 = vadd.f32 %v807, %v785
        %v809 = vadd.f32 %v808, %v786
        %v810 = vrot.slane %v809, 4
        %v811 = vadd.f32 %v809, %v810
        %v812 = vrot.slane %v811, 2
        %v813 = vadd.f32 %v811, %v812
        %v814 = vrot.slane %v813, 1
        %v815 = vadd.f32 %v813, %v814
        %v816 = vmul.f32 %v779, %v779
        %v817 = vmul.f32 %v780, %v780
        %v818 = vmul.f32 %v781, %v781
        %v819 = vmul.f32 %v782, %v782
        %v820 = vmul.f32 %v783, %v783
        %v821 = vmul.f32 %v784, %v784
        %v822 = vmul.f32 %v785, %v785
        %v823 = vmul.f32 %v786, %v786
        %v824 = vadd.f32 %v816, %v817
        %v825 = vadd.f32 %v824, %v818
        %v826 = vadd.f32 %v825, %v819
        %v827 = vadd.f32 %v826, %v820
        %v828 = vadd.f32 %v827, %v821
        %v829 = vadd.f32 %v828, %v822
        %v830 = vadd.f32 %v829, %v823
        %v831 = vrot.slane %v830, 4
        %v832 = vadd.f32 %v830, %v831
        %v833 = vrot.slane %v832, 2
        %v834 = vadd.f32 %v832, %v833
        %v835 = vrot.slane %v834, 1
        %v836 = vadd.f32 %v834, %v835
        %vm837 = vcmask 1040384
        %v838 = vsel %vm837, %v815, %v836
        %839 = vst [vmem:[%s271] sm:$0x3] %v838
      $region36: #{generator_forward.28} parent=27 // pred_fallthru
        _
      %s840 = smul.u32 8, %s20
      %p841 = scmp.lt.s32.totalorder %s840, 15
      %s842 = scalar_select %p841, %s840, 15
      %p843 = scmp.lt.s32.totalorder %s21, 0
      %s844 = scalar_select %p843, %s21, 0
      %s845 = sadd.s32 %s844, %s842
      %s846 = smul.addr %s845, 4
      %s847 = scalar_lea.vmem %s2, %s846
      %p848 = scmp.lt.s32.totalorder %s20, 1
      %s849 = scalar_select %p848, %s20, 1
      %p850 = scmp.lt.s32.totalorder %s21, 0
      %s851 = scalar_select %p850, %s21, 0
      %s852 = sadd.s32 %s851, %s849
      %s853 = smul.addr %s852, 2
      %s854 = scalar_lea.vmem %s3, %s853
      // Predicated region
      $region37: #{generator_forward.28} parent=27 // pred_check
        %p855 = pneg %p110
      $region38: #{generator_forward.28} parent=27 // pred_check_branch
        %857 = sbr.rel (%p855) target = $region40
      $region39: #{generator_forward.28} parent=27 // pred_region
        %s858 = smul.u32 8, %s20
      $region40: #{generator_forward.28} parent=27 // pred_fallthru
        _
      // Predicated region
      $region41: #{generator_forward.28} parent=27 // pred_check
        %p859 = pneg %p138
      $region42: #{generator_forward.28} parent=27 // pred_check_branch
        %861 = sbr.rel (%p859) target = $region44
      $region43: #{generator_forward.28} parent=27 // pred_region
        _
      $region44: #{generator_forward.28} parent=27 // pred_fallthru
        _
    $region28: #{generator_forward.28} parent=5 // pred_fallthru
      _
    %p862 = scmp.le.s32.totalorder 2, %s10
    // Predicated region
    $region45: #{generator_forward.28} parent=5 // pred_check
      %p863 = pneg %p862
    $region46: #{generator_forward.28} parent=5 // pred_check_branch
      %865 = sbr.rel (%p863) target = $region48
    $region47: #{generator_forward.28} parent=5 // pred_region
      %s866 = ssub.s32 %s10, 2
      // Predicated region
      $region49: #{generator_forward.28} parent=47 // pred_check
        %p867 = pneg %p116
      $region50: #{generator_forward.28} parent=47 // pred_check_branch
        %869 = sbr.rel (%p867) target = $region52
      $region51: #{generator_forward.28} parent=47 // pred_region
        %s870 = smul.u32 8, %s23
        %p871 = scmp.lt.s32.totalorder %s870, 15
        %s872 = scalar_select %p871, %s870, 15
        %p873 = scmp.lt.s32.totalorder %s24, 0
        %s874 = scalar_select %p873, %s24, 0
        %s875 = sadd.s32 %s874, %s872
        %s876 = smul.addr %s875, 4
        %s877 = scalar_lea.vmem %s2, %s876
      $region52: #{generator_forward.28} parent=47 // pred_fallthru
        _
      // Predicated region
      $region53: #{generator_forward.28} parent=47 // pred_check
        %p878 = pneg %p144
      $region54: #{generator_forward.28} parent=47 // pred_check_branch
        %880 = sbr.rel (%p878) target = $region56
      $region55: #{generator_forward.28} parent=47 // pred_region
        %p881 = scmp.lt.s32.totalorder %s23, 1
        %s882 = scalar_select %p881, %s23, 1
        %p883 = scmp.lt.s32.totalorder %s24, 0
        %s884 = scalar_select %p883, %s24, 0
        %s885 = sadd.s32 %s884, %s882
        %s886 = smul.addr %s885, 2
        %s887 = scalar_lea.vmem %s3, %s886
      $region56: #{generator_forward.28} parent=47 // pred_fallthru
        _
    $region48: #{generator_forward.28} parent=5 // pred_fallthru
      _
  $region6: #{generator_forward.28} parent=0 // loop_footer
    %s14 = sadd.s32 1, %s10
  $region7: #{generator_forward.28} parent=0 // loop_footer_branch
    %9 = sbr.rel target = $region3
  $region8: #{generator_forward.28} parent=0 // loop_exit
    _

// kernel: generator_forward.32
$region0: #{generator_forward.32}
  #allocation0 [shape = 'u32[]', space=smem, size = 0x4, offset = 0x4, fixed_abs, tag = 'smem constant byte address 0x4 - core index']
  #allocation1 [shape = 'u32[72,128]{1,0:T(1,128)}', space=vmem, size = 0x9000, scoped, tag = 'internal scratch']
  %s0 = inlined_call_operand.vmem [shape: bf16[512,128], index: 0, kind: input, shape index: {}]
  %s1 = inlined_call_operand.vmem [shape: f32[1,128], index: 1, kind: input, shape index: {}]
  %s2 = inlined_call_operand.vmem [shape: f32[1,128], index: 2, kind: input, shape index: {}]
  %s3 = inlined_call_operand.vmem [shape: bf16[512,128], index: 3, kind: output, shape index: {}]
  %s4 = sld [smem:[#allocation0]]
  $region45: #{generator_forward.32} parent=0
    _
  %s6 = ssub.s32 1, %s4
  %s7 = scalar_select 0, %s6, %s4
  loop: start=0, step=1, limit=4
  $region2: #{generator_forward.32} parent=0 // loop_pre_header
    _
  $region3: #{generator_forward.32} parent=0 // loop_header
    %s9 = sphi 0, %s13
    %p10 = scmp.ge.s32.totalorder %s9, 4
    %s19 = sphi 0, %s21
    %s22 = sphi 0, %s19
    %s23 = sphi 0, %s22
    %s39 = sphi 0, %s23
    %s43 = sphi 0, %s43
    %s45 = sphi 0, %s43
    %s46 = sphi 0, %s45
    %s60 = sphi 0, %s46
    %s64 = sphi 0, %s64
    %s66 = sphi 0, %s64
    %s67 = sphi 0, %s66
    %s81 = sphi 0, %s67
    %s87 = sphi 0, %s89
    %s90 = sphi 0, %s87
    %s91 = sphi 0, %s90
    %s107 = sphi 0, %s91
  $region4: #{generator_forward.32} parent=0 // loop_header_branch
    %12 = sbr.rel (%p10) target = $region8
  $region5: #{generator_forward.32} parent=0 // loop_body
    %s14 = ssub.s32 %s9, 1
    %s15 = ssub.s32 %s9, 2
    %s16 = sadd.s32 %s9, 1
    %s17 = ssub.s32 %s9, %s16
    %p18 = scmp.eq.s32.totalorder %s17, 0
    %s20 = sadd.s32 %s19, 1
    %s21 = scalar_select %p18, %s19, %s20
    %p24 = pneg %p18
    %p25 = scmp.eq.s32.totalorder %s9, 1
    %p26 = por %p24, %p25
    %p27 = scmp.ne.s32.totalorder %s19, %s22
    %p28 = scmp.eq.s32.totalorder %s9, 0
    %p29 = por %p27, %p28
    %p30 = scmp.ne.s32.totalorder %s19, %s22
    %p31 = scmp.eq.s32.totalorder %s14, 1
    %p32 = por %p30, %p31
    %p33 = scmp.ne.s32.totalorder %s22, %s23
    %p34 = scmp.eq.s32.totalorder %s14, 0
    %p35 = por %p33, %p34
    %p36 = scmp.ne.s32.totalorder %s22, %s23
    %p37 = scmp.eq.s32.totalorder %s15, 1
    %p38 = por %p36, %p37
    %p40 = scmp.ne.s32.totalorder %s23, %s39
    %p41 = scmp.eq.s32.totalorder %s15, 0
    %p42 = por %p40, %p41
    %s44 = sadd.s32 %s43, 1
    %p47 = scmp.eq.s32.totalorder %s9, 1
    %p48 = scmp.ne.s32.totalorder %s43, %s45
    %p49 = scmp.eq.s32.totalorder %s9, 0
    %p50 = por %p48, %p49
    %p51 = scmp.ne.s32.totalorder %s43, %s45
    %p52 = scmp.eq.s32.totalorder %s14, 1
    %p53 = por %p51, %p52
    %p54 = scmp.ne.s32.totalorder %s45, %s46
    %p55 = scmp.eq.s32.totalorder %s14, 0
    %p56 = por %p54, %p55
    %p57 = scmp.ne.s32.totalorder %s45, %s46
    %p58 = scmp.eq.s32.totalorder %s15, 1
    %p59 = por %p57, %p58
    %p61 = scmp.ne.s32.totalorder %s46, %s60
    %p62 = scmp.eq.s32.totalorder %s15, 0
    %p63 = por %p61, %p62
    %s65 = sadd.s32 %s64, 1
    %p68 = scmp.eq.s32.totalorder %s9, 1
    %p69 = scmp.ne.s32.totalorder %s64, %s66
    %p70 = scmp.eq.s32.totalorder %s9, 0
    %p71 = por %p69, %p70
    %p72 = scmp.ne.s32.totalorder %s64, %s66
    %p73 = scmp.eq.s32.totalorder %s14, 1
    %p74 = por %p72, %p73
    %p75 = scmp.ne.s32.totalorder %s66, %s67
    %p76 = scmp.eq.s32.totalorder %s14, 0
    %p77 = por %p75, %p76
    %p78 = scmp.ne.s32.totalorder %s66, %s67
    %p79 = scmp.eq.s32.totalorder %s15, 1
    %p80 = por %p78, %p79
    %p82 = scmp.ne.s32.totalorder %s67, %s81
    %p83 = scmp.eq.s32.totalorder %s15, 0
    %p84 = por %p82, %p83
    %s85 = ssub.s32 %s9, %s16
    %p86 = scmp.eq.s32.totalorder %s85, 0
    %s88 = sadd.s32 %s87, 1
    %s89 = scalar_select %p86, %s87, %s88
    %p92 = pneg %p86
    %p93 = scmp.eq.s32.totalorder %s9, 1
    %p94 = por %p92, %p93
    %p95 = scmp.ne.s32.totalorder %s87, %s90
    %p96 = scmp.eq.s32.totalorder %s9, 0
    %p97 = por %p95, %p96
    %p98 = scmp.ne.s32.totalorder %s87, %s90
    %p99 = scmp.eq.s32.totalorder %s14, 1
    %p100 = por %p98, %p99
    %p101 = scmp.ne.s32.totalorder %s90, %s91
    %p102 = scmp.eq.s32.totalorder %s14, 0
    %p103 = por %p101, %p102
    %p104 = scmp.ne.s32.totalorder %s90, %s91
    %p105 = scmp.eq.s32.totalorder %s15, 1
    %p106 = por %p104, %p105
    %p108 = scmp.ne.s32.totalorder %s91, %s107
    %p109 = scmp.eq.s32.totalorder %s15, 0
    %p110 = por %p108, %p109
    %p111 = scmp.le.s32.totalorder 1, %s9
    %p112 = scmp.lt.s32.totalorder %s9, 3
    %p113 = pnand %p111, %p112
    %p114 = pneg %p113
    // Predicated region
    $region9: #{generator_forward.32} parent=5 // pred_check
      _
    $region10: #{generator_forward.32} parent=5 // pred_check_branch
      %116 = sbr.rel (%p113) target = $region12
    $region11: #{generator_forward.32} parent=5 // pred_region
      %s117 = ssub.s32 %s9, 1
      // Predicated region
      $region13: #{generator_forward.32} parent=11 // pred_check
        %p118 = pneg %p56
      $region14: #{generator_forward.32} parent=11 // pred_check_branch
        %120 = sbr.rel (%p118) target = $region16
      $region15: #{generator_forward.32} parent=11 // pred_region
        _
      $region16: #{generator_forward.32} parent=11 // pred_fallthru
        _
      // Predicated region
      $region17: #{generator_forward.32} parent=11 // pred_check
        %p121 = pneg %p77
      $region18: #{generator_forward.32} parent=11 // pred_check_branch
        %123 = sbr.rel (%p121) target = $region20
      $region19: #{generator_forward.32} parent=11 // pred_region
        _
      $region20: #{generator_forward.32} parent=11 // pred_fallthru
        _
    $region12: #{generator_forward.32} parent=5 // pred_fallthru
      _
    %p124 = scmp.lt.s32.totalorder %s9, 2
    // Predicated region
    $region21: #{generator_forward.32} parent=5 // pred_check
      %p125 = pneg %p124
    $region22: #{generator_forward.32} parent=5 // pred_check_branch
      %127 = sbr.rel (%p125) target = $region24
    $region23: #{generator_forward.32} parent=5 // pred_region
      // Predicated region
      $region25: #{generator_forward.32} parent=23 // pred_check
        %p128 = pneg %p29
      $region26: #{generator_forward.32} parent=23 // pred_check_branch
        %130 = sbr.rel (%p128) target = $region28
      $region27: #{generator_forward.32} parent=23 // pred_region
        %s131 = smul.u32 32, %s9
        %p132 = scmp.lt.s32.totalorder %s131, 63
        %s133 = scalar_select %p132, %s131, 63
        %s134 = smul.addr %s133, 4
        %s135 = scalar_lea.vmem %s0, %s134
        %s136 = smul.u32 32, %s9
      $region28: #{generator_forward.32} parent=23 // pred_fallthru
        _
    $region24: #{generator_forward.32} parent=5 // pred_fallthru
      _
    %p137 = scmp.le.s32.totalorder 1, %s9
    %p138 = scmp.lt.s32.totalorder %s9, 3
    %p139 = pnand %p137, %p138
    %p140 = pneg %p139
    // Predicated region
    $region29: #{generator_forward.32} parent=5 // pred_check
      _
    $region30: #{generator_forward.32} parent=5 // pred_check_branch
      %142 = sbr.rel (%p139) target = $region32
    $region31: #{generator_forward.32} parent=5 // pred_region
      %s143 = ssub.s32 %s9, 1
      %s144 = smul.u32 32, %s14
      %p145 = scmp.lt.s32.totalorder %s144, 63
      %s146 = scalar_select %p145, %s144, 63
      %s147 = smul.addr %s146, 4
      %s148 = scalar_lea.vmem %s0, %s147
      %p149 = pneg %p35
      %p150 = pneg %p32
      %p151 = pneg %p56
      %p152 = pneg %p53
      %p153 = pneg %p77
      %p154 = pneg %p74
      %p155 = pneg %p103
      %p156 = pneg %p100
      %s157 = smul.u32 32, %s14
      %p158 = scmp.lt.s32.totalorder %s157, 63
      %s159 = scalar_select %p158, %s157, 63
      %s160 = smul.addr %s159, 4
      %s161 = scalar_lea.vmem %s3, %s160
      %s162 = smul.u32 32, %s14
      %p163 = scmp.lt.s32.totalorder %s162, 63
      %s164 = scalar_select %p163, %s162, 63
      %s165 = smul.addr %s164, 4
      %s166 = scalar_lea.vmem %s0, %s165
      %s167 = smul.u32 32, %s14
      %s168 = smul.u32 32, %s14
      %p169 = scmp.lt.s32.totalorder %s168, 63
      %s170 = scalar_select %p169, %s168, 63
      %s171 = smul.addr %s170, 4
      %s172 = scalar_lea.vmem %s3, %s171
      %s173 = smul.u32 32, %s14
      %v174 = vld [vmem:[%s166] sm:$0xf]
      %v175 = vld [vmem:[%s166 + $0x4] sm:$0xf]
      %v176 = vld [vmem:[%s166 + $0x8] sm:$0xf]
      %v177 = vld [vmem:[%s166 + $0xc] sm:$0xf]
      %v178 = vld [vmem:[%s166 + $0x10] sm:$0xf]
      %v179 = vld [vmem:[%s166 + $0x14] sm:$0xf]
      %v180 = vld [vmem:[%s166 + $0x18] sm:$0xf]
      %v181 = vld [vmem:[%s166 + $0x1c] sm:$0xf]
      %v182 = vld [vmem:[%s166 + $0x20] sm:$0xf]
      %v183 = vld [vmem:[%s166 + $0x24] sm:$0xf]
      %v184 = vld [vmem:[%s166 + $0x28] sm:$0xf]
      %v185 = vld [vmem:[%s166 + $0x2c] sm:$0xf]
      %v186 = vld [vmem:[%s166 + $0x30] sm:$0xf]
      %v187 = vld [vmem:[%s166 + $0x34] sm:$0xf]
      %v188 = vld [vmem:[%s166 + $0x38] sm:$0xf]
      %v189 = vld [vmem:[%s166 + $0x3c] sm:$0xf]
      %v190 = vld [vmem:[%s166 + $0x40] sm:$0xf]
      %v191 = vld [vmem:[%s166 + $0x44] sm:$0xf]
      %v192 = vld [vmem:[%s166 + $0x48] sm:$0xf]
      %v193 = vld [vmem:[%s166 + $0x4c] sm:$0xf]
      %v194 = vld [vmem:[%s166 + $0x50] sm:$0xf]
      %v195 = vld [vmem:[%s166 + $0x54] sm:$0xf]
      %v196 = vld [vmem:[%s166 + $0x58] sm:$0xf]
      %v197 = vld [vmem:[%s166 + $0x5c] sm:$0xf]
      %v198 = vld [vmem:[%s166 + $0x60] sm:$0xf]
      %v199 = vld [vmem:[%s166 + $0x64] sm:$0xf]
      %v200 = vld [vmem:[%s166 + $0x68] sm:$0xf]
      %v201 = vld [vmem:[%s166 + $0x6c] sm:$0xf]
      %v202 = vld [vmem:[%s166 + $0x70] sm:$0xf]
      %v203 = vld [vmem:[%s166 + $0x74] sm:$0xf]
      %v204 = vld [vmem:[%s166 + $0x78] sm:$0xf]
      %v205 = vld [vmem:[%s166 + $0x7c] sm:$0xf]
      %v206 = vunpack.c.l.bf16 %v174
      %v207 = vunpack.c.l.bf16 %v175
      %v208 = vunpack.c.l.bf16 %v176
      %v209 = vunpack.c.l.bf16 %v177
      %v210 = vunpack.c.l.bf16 %v178
      %v211 = vunpack.c.l.bf16 %v179
      %v212 = vunpack.c.l.bf16 %v180
      %v213 = vunpack.c.l.bf16 %v181
      %v214 = vunpack.c.l.bf16 %v182
      %v215 = vunpack.c.l.bf16 %v183
      %v216 = vunpack.c.l.bf16 %v184
      %v217 = vunpack.c.l.bf16 %v185
      %v218 = vunpack.c.l.bf16 %v186
      %v219 = vunpack.c.l.bf16 %v187
      %v220 = vunpack.c.l.bf16 %v188
      %v221 = vunpack.c.l.bf16 %v189
      %v222 = vunpack.c.l.bf16 %v190
      %v223 = vunpack.c.l.bf16 %v191
      %v224 = vunpack.c.l.bf16 %v192
      %v225 = vunpack.c.l.bf16 %v193
      %v226 = vunpack.c.l.bf16 %v194
      %v227 = vunpack.c.l.bf16 %v195
      %v228 = vunpack.c.l.bf16 %v196
      %v229 = vunpack.c.l.bf16 %v197
      %v230 = vunpack.c.l.bf16 %v198
      %v231 = vunpack.c.l.bf16 %v199
      %v232 = vunpack.c.l.bf16 %v200
      %v233 = vunpack.c.l.bf16 %v201
      %v234 = vunpack.c.l.bf16 %v202
      %v235 = vunpack.c.l.bf16 %v203
      %v236 = vunpack.c.l.bf16 %v204
      %v237 = vunpack.c.l.bf16 %v205
      %v238 = vld [vmem:[%s1] sm:$0x1]
      %v240 = vperm.slane %v238, 0
      %v242 = vmul.f32 %v206, %v240
      %v243 = vmul.f32 %v207, %v240
      %v244 = vmul.f32 %v208, %v240
      %v245 = vmul.f32 %v209, %v240
      %v246 = vmul.f32 %v210, %v240
      %v247 = vmul.f32 %v211, %v240
      %v248 = vmul.f32 %v212, %v240
      %v249 = vmul.f32 %v213, %v240
      %v250 = vmul.f32 %v214, %v240
      %v251 = vmul.f32 %v215, %v240
      %v252 = vmul.f32 %v216, %v240
      %v253 = vmul.f32 %v217, %v240
      %v254 = vmul.f32 %v218, %v240
      %v255 = vmul.f32 %v219, %v240
      %v256 = vmul.f32 %v220, %v240
      %v257 = vmul.f32 %v221, %v240
      %v258 = vmul.f32 %v222, %v240
      %v259 = vmul.f32 %v223, %v240
      %v260 = vmul.f32 %v224, %v240
      %v261 = vmul.f32 %v225, %v240
      %v262 = vmul.f32 %v226, %v240
      %v263 = vmul.f32 %v227, %v240
      %v264 = vmul.f32 %v228, %v240
      %v265 = vmul.f32 %v229, %v240
      %v266 = vmul.f32 %v230, %v240
      %v267 = vmul.f32 %v231, %v240
      %v268 = vmul.f32 %v232, %v240
      %v269 = vmul.f32 %v233, %v240
      %v270 = vmul.f32 %v234, %v240
      %v271 = vmul.f32 %v235, %v240
      %v272 = vmul.f32 %v236, %v240
      %v273 = vmul.f32 %v237, %v240
      %v274 = vld [vmem:[%s2] sm:$0x1]
      %v276 = vperm.slane %v274, 0
      %v278 = vadd.f32 %v242, %v276
      %v279 = vadd.f32 %v243, %v276
      %v280 = vadd.f32 %v244, %v276
      %v281 = vadd.f32 %v245, %v276
      %v282 = vadd.f32 %v246, %v276
      %v283 = vadd.f32 %v247, %v276
      %v284 = vadd.f32 %v248, %v276
      %v285 = vadd.f32 %v249, %v276
      %v286 = vadd.f32 %v250, %v276
      %v287 = vadd.f32 %v251, %v276
      %v288 = vadd.f32 %v252, %v276
      %v289 = vadd.f32 %v253, %v276
      %v290 = vadd.f32 %v254, %v276
      %v291 = vadd.f32 %v255, %v276
      %v292 = vadd.f32 %v256, %v276
      %v293 = vadd.f32 %v257, %v276
      %v294 = vadd.f32 %v258, %v276
      %v295 = vadd.f32 %v259, %v276
      %v296 = vadd.f32 %v260, %v276
      %v297 = vadd.f32 %v261, %v276
      %v298 = vadd.f32 %v262, %v276
      %v299 = vadd.f32 %v263, %v276
      %v300 = vadd.f32 %v264, %v276
      %v301 = vadd.f32 %v265, %v276
      %v302 = vadd.f32 %v266, %v276
      %v303 = vadd.f32 %v267, %v276
      %v304 = vadd.f32 %v268, %v276
      %v305 = vadd.f32 %v269, %v276
      %v306 = vadd.f32 %v270, %v276
      %v307 = vadd.f32 %v271, %v276
      %v308 = vadd.f32 %v272, %v276
      %v309 = vadd.f32 %v273, %v276
      %v310 = vmax.f32 %v278, 0.0
      %v311 = vmax.f32 %v279, 0.0
      %v312 = vmax.f32 %v280, 0.0
      %v313 = vmax.f32 %v281, 0.0
      %v314 = vmax.f32 %v282, 0.0
      %v315 = vmax.f32 %v283, 0.0
      %v316 = vmax.f32 %v284, 0.0
      %v317 = vmax.f32 %v285, 0.0
      %v318 = vmax.f32 %v286, 0.0
      %v319 = vmax.f32 %v287, 0.0
      %v320 = vmax.f32 %v288, 0.0
      %v321 = vmax.f32 %v289, 0.0
      %v322 = vmax.f32 %v290, 0.0
      %v323 = vmax.f32 %v291, 0.0
      %v324 = vmax.f32 %v292, 0.0
      %v325 = vmax.f32 %v293, 0.0
      %v326 = vmax.f32 %v294, 0.0
      %v327 = vmax.f32 %v295, 0.0
      %v328 = vmax.f32 %v296, 0.0
      %v329 = vmax.f32 %v297, 0.0
      %v330 = vmax.f32 %v298, 0.0
      %v331 = vmax.f32 %v299, 0.0
      %v332 = vmax.f32 %v300, 0.0
      %v333 = vmax.f32 %v301, 0.0
      %v334 = vmax.f32 %v302, 0.0
      %v335 = vmax.f32 %v303, 0.0
      %v336 = vmax.f32 %v304, 0.0
      %v337 = vmax.f32 %v305, 0.0
      %v338 = vmax.f32 %v306, 0.0
      %v339 = vmax.f32 %v307, 0.0
      %v340 = vmax.f32 %v308, 0.0
      %v341 = vmax.f32 %v309, 0.0
      %v342 = vpack.c.bf16 %v310, %v310
      %v343 = vpack.c.bf16 %v311, %v311
      %v344 = vpack.c.bf16 %v312, %v312
      %v345 = vpack.c.bf16 %v313, %v313
      %v346 = vpack.c.bf16 %v314, %v314
      %v347 = vpack.c.bf16 %v315, %v315
      %v348 = vpack.c.bf16 %v316, %v316
      %v349 = vpack.c.bf16 %v317, %v317
      %v350 = vpack.c.bf16 %v318, %v318
      %v351 = vpack.c.bf16 %v319, %v319
      %v352 = vpack.c.bf16 %v320, %v320
      %v353 = vpack.c.bf16 %v321, %v321
      %v354 = vpack.c.bf16 %v322, %v322
      %v355 = vpack.c.bf16 %v323, %v323
      %v356 = vpack.c.bf16 %v324, %v324
      %v357 = vpack.c.bf16 %v325, %v325
      %v358 = vpack.c.bf16 %v326, %v326
      %v359 = vpack.c.bf16 %v327, %v327
      %v360 = vpack.c.bf16 %v328, %v328
      %v361 = vpack.c.bf16 %v329, %v329
      %v362 = vpack.c.bf16 %v330, %v330
      %v363 = vpack.c.bf16 %v331, %v331
      %v364 = vpack.c.bf16 %v332, %v332
      %v365 = vpack.c.bf16 %v333, %v333
      %v366 = vpack.c.bf16 %v334, %v334
      %v367 = vpack.c.bf16 %v335, %v335
      %v368 = vpack.c.bf16 %v336, %v336
      %v369 = vpack.c.bf16 %v337, %v337
      %v370 = vpack.c.bf16 %v338, %v338
      %v371 = vpack.c.bf16 %v339, %v339
      %v372 = vpack.c.bf16 %v340, %v340
      %v373 = vpack.c.bf16 %v341, %v341
      %374 = vst [vmem:[%s172] sm:$0xf] %v342
      %375 = vst [vmem:[%s172 + $0x4] sm:$0xf] %v343
      %376 = vst [vmem:[%s172 + $0x8] sm:$0xf] %v344
      %377 = vst [vmem:[%s172 + $0xc] sm:$0xf] %v345
      %378 = vst [vmem:[%s172 + $0x10] sm:$0xf] %v346
      %379 = vst [vmem:[%s172 + $0x14] sm:$0xf] %v347
      %380 = vst [vmem:[%s172 + $0x18] sm:$0xf] %v348
      %381 = vst [vmem:[%s172 + $0x1c] sm:$0xf] %v349
      %382 = vst [vmem:[%s172 + $0x20] sm:$0xf] %v350
      %383 = vst [vmem:[%s172 + $0x24] sm:$0xf] %v351
      %384 = vst [vmem:[%s172 + $0x28] sm:$0xf] %v352
      %385 = vst [vmem:[%s172 + $0x2c] sm:$0xf] %v353
      %386 = vst [vmem:[%s172 + $0x30] sm:$0xf] %v354
      %387 = vst [vmem:[%s172 + $0x34] sm:$0xf] %v355
      %388 = vst [vmem:[%s172 + $0x38] sm:$0xf] %v356
      %389 = vst [vmem:[%s172 + $0x3c] sm:$0xf] %v357
      %390 = vst [vmem:[%s172 + $0x40] sm:$0xf] %v358
      %391 = vst [vmem:[%s172 + $0x44] sm:$0xf] %v359
      %392 = vst [vmem:[%s172 + $0x48] sm:$0xf] %v360
      %393 = vst [vmem:[%s172 + $0x4c] sm:$0xf] %v361
      %394 = vst [vmem:[%s172 + $0x50] sm:$0xf] %v362
      %395 = vst [vmem:[%s172 + $0x54] sm:$0xf] %v363
      %396 = vst [vmem:[%s172 + $0x58] sm:$0xf] %v364
      %397 = vst [vmem:[%s172 + $0x5c] sm:$0xf] %v365
      %398 = vst [vmem:[%s172 + $0x60] sm:$0xf] %v366
      %399 = vst [vmem:[%s172 + $0x64] sm:$0xf] %v367
      %400 = vst [vmem:[%s172 + $0x68] sm:$0xf] %v368
      %401 = vst [vmem:[%s172 + $0x6c] sm:$0xf] %v369
      %402 = vst [vmem:[%s172 + $0x70] sm:$0xf] %v370
      %403 = vst [vmem:[%s172 + $0x74] sm:$0xf] %v371
      %404 = vst [vmem:[%s172 + $0x78] sm:$0xf] %v372
      %405 = vst [vmem:[%s172 + $0x7c] sm:$0xf] %v373
      %s406 = smul.u32 32, %s14
      %p407 = scmp.lt.s32.totalorder %s406, 63
      %s408 = scalar_select %p407, %s406, 63
      %s409 = smul.addr %s408, 4
      %s410 = scalar_lea.vmem %s3, %s409
      // Predicated region
      $region33: #{generator_forward.32} parent=31 // pred_check
        %p411 = pneg %p100
      $region34: #{generator_forward.32} parent=31 // pred_check_branch
        %413 = sbr.rel (%p411) target = $region36
      $region35: #{generator_forward.32} parent=31 // pred_region
        %s414 = smul.u32 32, %s14
      $region36: #{generator_forward.32} parent=31 // pred_fallthru
        _
    $region32: #{generator_forward.32} parent=5 // pred_fallthru
      _
    %p415 = scmp.le.s32.totalorder 2, %s9
    // Predicated region
    $region37: #{generator_forward.32} parent=5 // pred_check
      %p416 = pneg %p415
    $region38: #{generator_forward.32} parent=5 // pred_check_branch
      %418 = sbr.rel (%p416) target = $region40
    $region39: #{generator_forward.32} parent=5 // pred_region
      %s419 = ssub.s32 %s9, 2
      // Predicated region
      $region41: #{generator_forward.32} parent=39 // pred_check
        %p420 = pneg %p106
      $region42: #{generator_forward.32} parent=39 // pred_check_branch
        %422 = sbr.rel (%p420) target = $region44
      $region43: #{generator_forward.32} parent=39 // pred_region
        %s423 = smul.u32 32, %s15
        %p424 = scmp.lt.s32.totalorder %s423, 63
        %s425 = scalar_select %p424, %s423, 63
        %s426 = smul.addr %s425, 4
        %s427 = scalar_lea.vmem %s3, %s426
      $region44: #{generator_forward.32} parent=39 // pred_fallthru
        _
    $region40: #{generator_forward.32} parent=5 // pred_fallthru
      _
  $region6: #{generator_forward.32} parent=0 // loop_footer
    %s13 = sadd.s32 1, %s9
  $region7: #{generator_forward.32} parent=0 // loop_footer_branch
    %8 = sbr.rel target = $region3
  $region8: #{generator_forward.32} parent=0 // loop_exit
    _

// kernel: generator_forward.33
$region0: #{generator_forward.33}
  #allocation0 [shape = 'u32[]', space=smem, size = 0x4, offset = 0x4, fixed_abs, tag = 'smem constant byte address 0x4 - core index']
  #allocation1 [shape = 'u32[72,128]{1,0:T(1,128)}', space=vmem, size = 0x9000, scoped, tag = 'internal scratch']
  #allocation2 [shape = 'f32[256,128]{1,0:T(8,128)}', space=vmem, size = 0x20000, scoped, tag = 'scratch operand']
  %s0 = inlined_call_operand.vmem [shape: bf16[512,512], index: 0, kind: input, shape index: {}]
  %s1 = inlined_call_operand.vmem [shape: bf16[512,128], index: 1, kind: input, shape index: {}]
  %s2 = inlined_call_operand.vmem [shape: bf16[512,128], index: 2, kind: output, shape index: {0}]
  %s3 = inlined_call_operand.vmem [shape: f32[2,2,128], index: 3, kind: output, shape index: {1}]
  %4 = xla_tuple %s2, %s3
  %s5 = sld [smem:[#allocation0]]
  $region57: #{generator_forward.33} parent=0
    _
  %s7 = ssub.s32 1, %s5
  %s8 = scalar_select 0, %s7, %s5
  loop: start=0, step=1, limit=4
  $region2: #{generator_forward.33} parent=0 // loop_pre_header
    _
  $region3: #{generator_forward.33} parent=0 // loop_header
    %s10 = sphi 0, %s14
    %p11 = scmp.ge.s32.totalorder %s10, 4
    %s17 = sphi 0, %s36
    %s18 = sphi 0, %s32
    %s19 = sphi 0, %s28
    %s20 = sphi 0, %s17
    %s21 = sphi 0, %s18
    %s22 = sphi 0, %s19
    %s23 = sphi 0, %s20
    %s24 = sphi 0, %s21
    %s25 = sphi 0, %s22
    %s41 = sphi 0, %s43
    %s44 = sphi 0, %s41
    %s45 = sphi 0, %s44
    %s61 = sphi 0, %s45
    %s69 = sphi 0, %s71
    %s72 = sphi 0, %s69
    %s73 = sphi 0, %s72
    %s89 = sphi 0, %s73
    %s97 = sphi 0, %s99
    %s100 = sphi 0, %s97
    %s101 = sphi 0, %s100
    %s117 = sphi 0, %s101
    %s125 = sphi 0, %s127
    %s128 = sphi 0, %s125
    %s129 = sphi 0, %s128
    %s145 = sphi 0, %s129
  $region4: #{generator_forward.33} parent=0 // loop_header_branch
    %13 = sbr.rel (%p11) target = $region8
  $region5: #{generator_forward.33} parent=0 // loop_body
    %s15 = ssub.s32 %s10, 1
    %s16 = ssub.s32 %s10, 2
    %s26 = sadd.s32 1, %s19
    %p27 = scmp.ge.s32.totalorder %s26, 1
    %s28 = scalar_select %p27, 0, %s26
    %s29 = sadd.s32 1, %s18
    %s30 = scalar_select %p27, %s29, %s18
    %p31 = scmp.ge.s32.totalorder %s30, 1
    %s32 = scalar_select %p31, 0, %s30
    %s33 = sadd.s32 1, %s17
    %s34 = scalar_select %p31, %s33, %s17
    %p35 = scmp.ge.s32.totalorder %s34, 2
    %s36 = scalar_select %p35, 0, %s34
    %s37 = ssub.s32 %s17, %s36
    %s38 = ssub.s32 %s19, %s28
    %s39 = sor.u32 %s37, %s38
    %p40 = scmp.eq.s32.totalorder %s39, 0
    %s42 = sadd.s32 %s41, 1
    %s43 = scalar_select %p40, %s41, %s42
    %p46 = pneg %p40
    %p47 = scmp.eq.s32.totalorder %s10, 1
    %p48 = por %p46, %p47
    %p49 = scmp.ne.s32.totalorder %s41, %s44
    %p50 = scmp.eq.s32.totalorder %s10, 0
    %p51 = por %p49, %p50
    %p52 = scmp.ne.s32.totalorder %s41, %s44
    %p53 = scmp.eq.s32.totalorder %s15, 1
    %p54 = por %p52, %p53
    %p55 = scmp.ne.s32.totalorder %s44, %s45
    %p56 = scmp.eq.s32.totalorder %s15, 0
    %p57 = por %p55, %p56
    %p58 = scmp.ne.s32.totalorder %s44, %s45
    %p59 = scmp.eq.s32.totalorder %s16, 1
    %p60 = por %p58, %p59
    %p62 = scmp.ne.s32.totalorder %s45, %s61
    %p63 = scmp.eq.s32.totalorder %s16, 0
    %p64 = por %p62, %p63
    %s65 = ssub.s32 %s19, %s28
    %s66 = ssub.s32 %s18, %s32
    %s67 = sor.u32 %s65, %s66
    %p68 = scmp.eq.s32.totalorder %s67, 0
    %s70 = sadd.s32 %s69, 1
    %s71 = scalar_select %p68, %s69, %s70
    %p74 = pneg %p68
    %p75 = scmp.eq.s32.totalorder %s10, 1
    %p76 = por %p74, %p75
    %p77 = scmp.ne.s32.totalorder %s69, %s72
    %p78 = scmp.eq.s32.totalorder %s10, 0
    %p79 = por %p77, %p78
    %p80 = scmp.ne.s32.totalorder %s69, %s72
    %p81 = scmp.eq.s32.totalorder %s15, 1
    %p82 = por %p80, %p81
    %p83 = scmp.ne.s32.totalorder %s72, %s73
    %p84 = scmp.eq.s32.totalorder %s15, 0
    %p85 = por %p83, %p84
    %p86 = scmp.ne.s32.totalorder %s72, %s73
    %p87 = scmp.eq.s32.totalorder %s16, 1
    %p88 = por %p86, %p87
    %p90 = scmp.ne.s32.totalorder %s73, %s89
    %p91 = scmp.eq.s32.totalorder %s16, 0
    %p92 = por %p90, %p91
    %s93 = ssub.s32 %s17, %s36
    %s94 = ssub.s32 %s18, %s32
    %s95 = sor.u32 %s93, %s94
    %p96 = scmp.eq.s32.totalorder %s95, 0
    %s98 = sadd.s32 %s97, 1
    %s99 = scalar_select %p96, %s97, %s98
    %p102 = pneg %p96
    %p103 = scmp.eq.s32.totalorder %s10, 1
    %p104 = por %p102, %p103
    %p105 = scmp.ne.s32.totalorder %s97, %s100
    %p106 = scmp.eq.s32.totalorder %s10, 0
    %p107 = por %p105, %p106
    %p108 = scmp.ne.s32.totalorder %s97, %s100
    %p109 = scmp.eq.s32.totalorder %s15, 1
    %p110 = por %p108, %p109
    %p111 = scmp.ne.s32.totalorder %s100, %s101
    %p112 = scmp.eq.s32.totalorder %s15, 0
    %p113 = por %p111, %p112
    %p114 = scmp.ne.s32.totalorder %s100, %s101
    %p115 = scmp.eq.s32.totalorder %s16, 1
    %p116 = por %p114, %p115
    %p118 = scmp.ne.s32.totalorder %s101, %s117
    %p119 = scmp.eq.s32.totalorder %s16, 0
    %p120 = por %p118, %p119
    %s121 = ssub.s32 %s17, %s36
    %s122 = ssub.s32 %s18, %s32
    %s123 = sor.u32 %s121, %s122
    %p124 = scmp.eq.s32.totalorder %s123, 0
    %s126 = sadd.s32 %s125, 1
    %s127 = scalar_select %p124, %s125, %s126
    %p130 = pneg %p124
    %p131 = scmp.eq.s32.totalorder %s10, 1
    %p132 = por %p130, %p131
    %p133 = scmp.ne.s32.totalorder %s125, %s128
    %p134 = scmp.eq.s32.totalorder %s10, 0
    %p135 = por %p133, %p134
    %p136 = scmp.ne.s32.totalorder %s125, %s128
    %p137 = scmp.eq.s32.totalorder %s15, 1
    %p138 = por %p136, %p137
    %p139 = scmp.ne.s32.totalorder %s128, %s129
    %p140 = scmp.eq.s32.totalorder %s15, 0
    %p141 = por %p139, %p140
    %p142 = scmp.ne.s32.totalorder %s128, %s129
    %p143 = scmp.eq.s32.totalorder %s16, 1
    %p144 = por %p142, %p143
    %p146 = scmp.ne.s32.totalorder %s129, %s145
    %p147 = scmp.eq.s32.totalorder %s16, 0
    %p148 = por %p146, %p147
    %p149 = scmp.le.s32.totalorder 1, %s10
    %p150 = scmp.lt.s32.totalorder %s10, 3
    %p151 = pnand %p149, %p150
    %p152 = pneg %p151
    // Predicated region
    $region9: #{generator_forward.33} parent=5 // pred_check
      _
    $region10: #{generator_forward.33} parent=5 // pred_check_branch
      %154 = sbr.rel (%p151) target = $region12
    $region11: #{generator_forward.33} parent=5 // pred_region
      %s155 = ssub.s32 %s10, 1
      // Predicated region
      $region13: #{generator_forward.33} parent=11 // pred_check
        %p156 = pneg %p85
      $region14: #{generator_forward.33} parent=11 // pred_check_branch
        %158 = sbr.rel (%p156) target = $region16
      $region15: #{generator_forward.33} parent=11 // pred_region
        %s159 = smul.u32 64, %s22
        %p160 = scmp.lt.s32.totalorder %s159, 63
        %s161 = scalar_select %p160, %s159, 63
        %p162 = scmp.lt.s32.totalorder %s21, 0
        %s163 = scalar_select %p162, %s21, 0
        %s164 = sadd.s32 %s163, %s161
        %s165 = smul.addr %s164, 4
        %s166 = scalar_lea.vmem %s1, %s165
        %s167 = smul.u32 64, %s22
      $region16: #{generator_forward.33} parent=11 // pred_fallthru
        _
    $region12: #{generator_forward.33} parent=5 // pred_fallthru
      _
    %p168 = scmp.lt.s32.totalorder %s10, 2
    // Predicated region
    $region17: #{generator_forward.33} parent=5 // pred_check
      %p169 = pneg %p168
    $region18: #{generator_forward.33} parent=5 // pred_check_branch
      %171 = sbr.rel (%p169) target = $region20
    $region19: #{generator_forward.33} parent=5 // pred_region
      // Predicated region
      $region21: #{generator_forward.33} parent=19 // pred_check
        %p172 = pneg %p51
      $region22: #{generator_forward.33} parent=19 // pred_check_branch
        %174 = sbr.rel (%p172) target = $region24
      $region23: #{generator_forward.33} parent=19 // pred_region
        %s175 = smul.u32 32, %s17
        %s176 = smul.u32 4, %s19
        %p177 = scmp.lt.s32.totalorder %s175, 63
        %s178 = scalar_select %p177, %s175, 63
        %p179 = scmp.lt.s32.totalorder %s176, 3
        %s180 = scalar_select %p179, %s176, 3
        %s181 = smul.addr %s178, 4
        %s182 = sadd.s32 %s180, %s181
        %s183 = smul.addr %s182, 4
        %s184 = scalar_lea.vmem %s0, %s183
        %s185 = smul.u32 32, %s17
        %s186 = smul.u32 4, %s19
      $region24: #{generator_forward.33} parent=19 // pred_fallthru
        _
    $region20: #{generator_forward.33} parent=5 // pred_fallthru
      _
    %p187 = scmp.le.s32.totalorder 1, %s10
    %p188 = scmp.lt.s32.totalorder %s10, 3
    %p189 = pnand %p187, %p188
    %p190 = pneg %p189
    // Predicated region
    $region25: #{generator_forward.33} parent=5 // pred_check
      _
    $region26: #{generator_forward.33} parent=5 // pred_check_branch
      %192 = sbr.rel (%p189) target = $region28
    $region27: #{generator_forward.33} parent=5 // pred_region
      %s193 = ssub.s32 %s10, 1
      %s194 = smul.u32 32, %s20
      %s195 = smul.u32 4, %s22
      %p196 = scmp.lt.s32.totalorder %s194, 63
      %s197 = scalar_select %p196, %s194, 63
      %p198 = scmp.lt.s32.totalorder %s195, 3
      %s199 = scalar_select %p198, %s195, 3
      %s200 = smul.addr %s197, 4
      %s201 = sadd.s32 %s199, %s200
      %s202 = smul.addr %s201, 4
      %s203 = scalar_lea.vmem %s0, %s202
      %p204 = pneg %p57
      %p205 = pneg %p54
      %s206 = smul.u32 64, %s22
      %p207 = scmp.lt.s32.totalorder %s206, 63
      %s208 = scalar_select %p207, %s206, 63
      %p209 = scmp.lt.s32.totalorder %s21, 0
      %s210 = scalar_select %p209, %s21, 0
      %s211 = sadd.s32 %s210, %s208
      %s212 = smul.addr %s211, 4
      %s213 = scalar_lea.vmem %s1, %s212
      %p214 = pneg %p85
      %p215 = pneg %p82
      %p216 = pneg %p113
      %p217 = pneg %p110
      %s218 = smul.u32 32, %s20
      %p219 = scmp.lt.s32.totalorder %s218, 63
      %s220 = scalar_select %p219, %s218, 63
      %p221 = scmp.lt.s32.totalorder %s21, 0
      %s222 = scalar_select %p221, %s21, 0
      %s223 = sadd.s32 %s222, %s220
      %s224 = smul.addr %s223, 4
      %s225 = scalar_lea.vmem %s2, %s224
      %p226 = pneg %p141
      %p227 = pneg %p138
      %p228 = scmp.lt.s32.totalorder %s20, 1
      %s229 = scalar_select %p228, %s20, 1
      %p230 = scmp.lt.s32.totalorder %s21, 0
      %s231 = scalar_select %p230, %s21, 0
      %s232 = sadd.s32 %s231, %s229
      %s233 = smul.addr %s232, 2
      %s234 = scalar_lea.vmem %s3, %s233
      %s235 = smul.u32 32, %s20
      %s236 = smul.u32 4, %s22
      %p237 = scmp.lt.s32.totalorder %s235, 63
      %s238 = scalar_select %p237, %s235, 63
      %p239 = scmp.lt.s32.totalorder %s236, 3
      %s240 = scalar_select %p239, %s236, 3
      %s241 = smul.addr %s238, 4
      %s242 = sadd.s32 %s240, %s241
      %s243 = smul.addr %s242, 4
      %s244 = scalar_lea.vmem %s0, %s243
      %s245 = smul.u32 32, %s20
      %s246 = smul.u32 4, %s22
      %s247 = smul.u32 64, %s22
      %p248 = scmp.lt.s32.totalorder %s247, 63
      %s249 = scalar_select %p248, %s247, 63
      %p250 = scmp.lt.s32.totalorder %s21, 0
      %s251 = scalar_select %p250, %s21, 0
      %s252 = sadd.s32 %s251, %s249
      %s253 = smul.addr %s252, 4
      %s254 = scalar_lea.vmem %s1, %s253
      %s255 = smul.u32 64, %s22
      %s256 = smul.u32 32, %s20
      %p257 = scmp.lt.s32.totalorder %s256, 63
      %s258 = scalar_select %p257, %s256, 63
      %p259 = scmp.lt.s32.totalorder %s21, 0
      %s260 = scalar_select %p259, %s21, 0
      %s261 = sadd.s32 %s260, %s258
      %s262 = smul.addr %s261, 4
      %s263 = scalar_lea.vmem %s2, %s262
      %s264 = smul.u32 32, %s20
      %p265 = scmp.lt.s32.totalorder %s20, 1
      %s266 = scalar_select %p265, %s20, 1
      %p267 = scmp.lt.s32.totalorder %s21, 0
      %s268 = scalar_select %p267, %s21, 0
      %s269 = sadd.s32 %s268, %s266
      %s270 = smul.addr %s269, 2
      %s271 = scalar_lea.vmem %s3, %s270
      %p272 = scmp.eq.s32.totalorder %s22, 0
      // Predicated region
      $region29: #{generator_forward.33} parent=27 // pred_check
        %p273 = pneg %p272
      $region30: #{generator_forward.33} parent=27 // pred_check_branch
        %275 = sbr.rel (%p273) target = $region32
      $region31: #{generator_forward.33} parent=27 // pred_region
        %276 = vst [vmem:[#allocation2] sm:$0xff] 0.0
        %277 = vst [vmem:[#allocation2 + $0x8] sm:$0xff] 0.0
        %278 = vst [vmem:[#allocation2 + $0x10] sm:$0xff] 0.0
        %279 = vst [vmem:[#allocation2 + $0x18] sm:$0xff] 0.0
        %280 = vst [vmem:[#allocation2 + $0x20] sm:$0xff] 0.0
        %281 = vst [vmem:[#allocation2 + $0x28] sm:$0xff] 0.0
        %282 = vst [vmem:[#allocation2 + $0x30] sm:$0xff] 0.0
        %283 = vst [vmem:[#allocation2 + $0x38] sm:$0xff] 0.0
        %284 = vst [vmem:[#allocation2 + $0x40] sm:$0xff] 0.0
        %285 = vst [vmem:[#allocation2 + $0x48] sm:$0xff] 0.0
        %286 = vst [vmem:[#allocation2 + $0x50] sm:$0xff] 0.0
        %287 = vst [vmem:[#allocation2 + $0x58] sm:$0xff] 0.0
        %288 = vst [vmem:[#allocation2 + $0x60] sm:$0xff] 0.0
        %289 = vst [vmem:[#allocation2 + $0x68] sm:$0xff] 0.0
        %290 = vst [vmem:[#allocation2 + $0x70] sm:$0xff] 0.0
        %291 = vst [vmem:[#allocation2 + $0x78] sm:$0xff] 0.0
        %292 = vst [vmem:[#allocation2 + $0x80] sm:$0xff] 0.0
        %293 = vst [vmem:[#allocation2 + $0x88] sm:$0xff] 0.0
        %294 = vst [vmem:[#allocation2 + $0x90] sm:$0xff] 0.0
        %295 = vst [vmem:[#allocation2 + $0x98] sm:$0xff] 0.0
        %296 = vst [vmem:[#allocation2 + $0xa0] sm:$0xff] 0.0
        %297 = vst [vmem:[#allocation2 + $0xa8] sm:$0xff] 0.0
        %298 = vst [vmem:[#allocation2 + $0xb0] sm:$0xff] 0.0
        %299 = vst [vmem:[#allocation2 + $0xb8] sm:$0xff] 0.0
        %300 = vst [vmem:[#allocation2 + $0xc0] sm:$0xff] 0.0
        %301 = vst [vmem:[#allocation2 + $0xc8] sm:$0xff] 0.0
        %302 = vst [vmem:[#allocation2 + $0xd0] sm:$0xff] 0.0
        %303 = vst [vmem:[#allocation2 + $0xd8] sm:$0xff] 0.0
        %304 = vst [vmem:[#allocation2 + $0xe0] sm:$0xff] 0.0
        %305 = vst [vmem:[#allocation2 + $0xe8] sm:$0xff] 0.0
        %306 = vst [vmem:[#allocation2 + $0xf0] sm:$0xff] 0.0
        %307 = vst [vmem:[#allocation2 + $0xf8] sm:$0xff] 0.0
      $region32: #{generator_forward.33} parent=27 // pred_fallthru
        _
      %v308 = vld [vmem:[#allocation2] sm:$0xff]
      %v309 = vld [vmem:[#allocation2 + $0x8] sm:$0xff]
      %v310 = vld [vmem:[#allocation2 + $0x10] sm:$0xff]
      %v311 = vld [vmem:[#allocation2 + $0x18] sm:$0xff]
      %v312 = vld [vmem:[#allocation2 + $0x20] sm:$0xff]
      %v313 = vld [vmem:[#allocation2 + $0x28] sm:$0xff]
      %v314 = vld [vmem:[#allocation2 + $0x30] sm:$0xff]
      %v315 = vld [vmem:[#allocation2 + $0x38] sm:$0xff]
      %v316 = vld [vmem:[#allocation2 + $0x40] sm:$0xff]
      %v317 = vld [vmem:[#allocation2 + $0x48] sm:$0xff]
      %v318 = vld [vmem:[#allocation2 + $0x50] sm:$0xff]
      %v319 = vld [vmem:[#allocation2 + $0x58] sm:$0xff]
      %v320 = vld [vmem:[#allocation2 + $0x60] sm:$0xff]
      %v321 = vld [vmem:[#allocation2 + $0x68] sm:$0xff]
      %v322 = vld [vmem:[#allocation2 + $0x70] sm:$0xff]
      %v323 = vld [vmem:[#allocation2 + $0x78] sm:$0xff]
      %v324 = vld [vmem:[#allocation2 + $0x80] sm:$0xff]
      %v325 = vld [vmem:[#allocation2 + $0x88] sm:$0xff]
      %v326 = vld [vmem:[#allocation2 + $0x90] sm:$0xff]
      %v327 = vld [vmem:[#allocation2 + $0x98] sm:$0xff]
      %v328 = vld [vmem:[#allocation2 + $0xa0] sm:$0xff]
      %v329 = vld [vmem:[#allocation2 + $0xa8] sm:$0xff]
      %v330 = vld [vmem:[#allocation2 + $0xb0] sm:$0xff]
      %v331 = vld [vmem:[#allocation2 + $0xb8] sm:$0xff]
      %v332 = vld [vmem:[#allocation2 + $0xc0] sm:$0xff]
      %v333 = vld [vmem:[#allocation2 + $0xc8] sm:$0xff]
      %v334 = vld [vmem:[#allocation2 + $0xd0] sm:$0xff]
      %v335 = vld [vmem:[#allocation2 + $0xd8] sm:$0xff]
      %v336 = vld [vmem:[#allocation2 + $0xe0] sm:$0xff]
      %v337 = vld [vmem:[#allocation2 + $0xe8] sm:$0xff]
      %v338 = vld [vmem:[#allocation2 + $0xf0] sm:$0xff]
      %v339 = vld [vmem:[#allocation2 + $0xf8] sm:$0xff]
      %v340 = vld [vmem:[%s244] sm:$0xff]
      %v341 = vld [vmem:[%s244 + $0x8] sm:$0xff]
      %v342 = vld [vmem:[%s244 + $0x10] sm:$0xff]
      %v343 = vld [vmem:[%s244 + $0x18] sm:$0xff]
      %v344 = vld [vmem:[%s244 + $0x20] sm:$0xff]
      %v345 = vld [vmem:[%s244 + $0x28] sm:$0xff]
      %v346 = vld [vmem:[%s244 + $0x30] sm:$0xff]
      %v347 = vld [vmem:[%s244 + $0x38] sm:$0xff]
      %v348 = vld [vmem:[%s244 + $0x40] sm:$0xff]
      %v349 = vld [vmem:[%s244 + $0x48] sm:$0xff]
      %v350 = vld [vmem:[%s244 + $0x50] sm:$0xff]
      %v351 = vld [vmem:[%s244 + $0x58] sm:$0xff]
      %v352 = vld [vmem:[%s244 + $0x60] sm:$0xff]
      %v353 = vld [vmem:[%s244 + $0x68] sm:$0xff]
      %v354 = vld [vmem:[%s244 + $0x70] sm:$0xff]
      %v355 = vld [vmem:[%s244 + $0x78] sm:$0xff]
      %v356 = vld [vmem:[%s244 + $0x80] sm:$0xff]
      %v357 = vld [vmem:[%s244 + $0x88] sm:$0xff]
      %v358 = vld [vmem:[%s244 + $0x90] sm:$0xff]
      %v359 = vld [vmem:[%s244 + $0x98] sm:$0xff]
      %v360 = vld [vmem:[%s244 + $0xa0] sm:$0xff]
      %v361 = vld [vmem:[%s244 + $0xa8] sm:$0xff]
      %v362 = vld [vmem:[%s244 + $0xb0] sm:$0xff]
      %v363 = vld [vmem:[%s244 + $0xb8] sm:$0xff]
      %v364 = vld [vmem:[%s244 + $0xc0] sm:$0xff]
      %v365 = vld [vmem:[%s244 + $0xc8] sm:$0xff]
      %v366 = vld [vmem:[%s244 + $0xd0] sm:$0xff]
      %v367 = vld [vmem:[%s244 + $0xd8] sm:$0xff]
      %v368 = vld [vmem:[%s244 + $0xe0] sm:$0xff]
      %v369 = vld [vmem:[%s244 + $0xe8] sm:$0xff]
      %v370 = vld [vmem:[%s244 + $0xf0] sm:$0xff]
      %v371 = vld [vmem:[%s244 + $0xf8] sm:$0xff]
      %v372 = vld [vmem:[%s244 + $0x100] sm:$0xff]
      %v373 = vld [vmem:[%s244 + $0x108] sm:$0xff]
      %v374 = vld [vmem:[%s244 + $0x110] sm:$0xff]
      %v375 = vld [vmem:[%s244 + $0x118] sm:$0xff]
      %v376 = vld [vmem:[%s244 + $0x120] sm:$0xff]
      %v377 = vld [vmem:[%s244 + $0x128] sm:$0xff]
      %v378 = vld [vmem:[%s244 + $0x130] sm:$0xff]
      %v379 = vld [vmem:[%s244 + $0x138] sm:$0xff]
      %v380 = vld [vmem:[%s244 + $0x140] sm:$0xff]
      %v381 = vld [vmem:[%s244 + $0x148] sm:$0xff]
      %v382 = vld [vmem:[%s244 + $0x150] sm:$0xff]
      %v383 = vld [vmem:[%s244 + $0x158] sm:$0xff]
      %v384 = vld [vmem:[%s244 + $0x160] sm:$0xff]
      %v385 = vld [vmem:[%s244 + $0x168] sm:$0xff]
      %v386 = vld [vmem:[%s244 + $0x170] sm:$0xff]
      %v387 = vld [vmem:[%s244 + $0x178] sm:$0xff]
      %v388 = vld [vmem:[%s244 + $0x180] sm:$0xff]
      %v389 = vld [vmem:[%s244 + $0x188] sm:$0xff]
      %v390 = vld [vmem:[%s244 + $0x190] sm:$0xff]
      %v391 = vld [vmem:[%s244 + $0x198] sm:$0xff]
      %v392 = vld [vmem:[%s244 + $0x1a0] sm:$0xff]
      %v393 = vld [vmem:[%s244 + $0x1a8] sm:$0xff]
      %v394 = vld [vmem:[%s244 + $0x1b0] sm:$0xff]
      %v395 = vld [vmem:[%s244 + $0x1b8] sm:$0xff]
      %v396 = vld [vmem:[%s244 + $0x1c0] sm:$0xff]
      %v397 = vld [vmem:[%s244 + $0x1c8] sm:$0xff]
      %v398 = vld [vmem:[%s244 + $0x1d0] sm:$0xff]
      %v399 = vld [vmem:[%s244 + $0x1d8] sm:$0xff]
      %v400 = vld [vmem:[%s244 + $0x1e0] sm:$0xff]
      %v401 = vld [vmem:[%s244 + $0x1e8] sm:$0xff]
      %v402 = vld [vmem:[%s244 + $0x1f0] sm:$0xff]
      %v403 = vld [vmem:[%s244 + $0x1f8] sm:$0xff]
      %v404 = vld [vmem:[%s254] sm:$0xf]
      %v405 = vld [vmem:[%s254 + $0x4] sm:$0xf]
      %v406 = vld [vmem:[%s254 + $0x8] sm:$0xf]
      %v407 = vld [vmem:[%s254 + $0xc] sm:$0xf]
      %v408 = vld [vmem:[%s254 + $0x10] sm:$0xf]
      %v409 = vld [vmem:[%s254 + $0x14] sm:$0xf]
      %v410 = vld [vmem:[%s254 + $0x18] sm:$0xf]
      %v411 = vld [vmem:[%s254 + $0x1c] sm:$0xf]
      %v412 = vld [vmem:[%s254 + $0x20] sm:$0xf]
      %v413 = vld [vmem:[%s254 + $0x24] sm:$0xf]
      %v414 = vld [vmem:[%s254 + $0x28] sm:$0xf]
      %v415 = vld [vmem:[%s254 + $0x2c] sm:$0xf]
      %v416 = vld [vmem:[%s254 + $0x30] sm:$0xf]
      %v417 = vld [vmem:[%s254 + $0x34] sm:$0xf]
      %v418 = vld [vmem:[%s254 + $0x38] sm:$0xf]
      %v419 = vld [vmem:[%s254 + $0x3c] sm:$0xf]
      %v420 = vld [vmem:[%s254 + $0x40] sm:$0xf]
      %v421 = vld [vmem:[%s254 + $0x44] sm:$0xf]
      %v422 = vld [vmem:[%s254 + $0x48] sm:$0xf]
      %v423 = vld [vmem:[%s254 + $0x4c] sm:$0xf]
      %v424 = vld [vmem:[%s254 + $0x50] sm:$0xf]
      %v425 = vld [vmem:[%s254 + $0x54] sm:$0xf]
      %v426 = vld [vmem:[%s254 + $0x58] sm:$0xf]
      %v427 = vld [vmem:[%s254 + $0x5c] sm:$0xf]
      %v428 = vld [vmem:[%s254 + $0x60] sm:$0xf]
      %v429 = vld [vmem:[%s254 + $0x64] sm:$0xf]
      %v430 = vld [vmem:[%s254 + $0x68] sm:$0xf]
      %v431 = vld [vmem:[%s254 + $0x6c] sm:$0xf]
      %v432 = vld [vmem:[%s254 + $0x70] sm:$0xf]
      %v433 = vld [vmem:[%s254 + $0x74] sm:$0xf]
      %v434 = vld [vmem:[%s254 + $0x78] sm:$0xf]
      %v435 = vld [vmem:[%s254 + $0x7c] sm:$0xf]
      %v436 = vld [vmem:[%s254 + $0x80] sm:$0xf]
      %v437 = vld [vmem:[%s254 + $0x84] sm:$0xf]
      %v438 = vld [vmem:[%s254 + $0x88] sm:$0xf]
      %v439 = vld [vmem:[%s254 + $0x8c] sm:$0xf]
      %v440 = vld [vmem:[%s254 + $0x90] sm:$0xf]
      %v441 = vld [vmem:[%s254 + $0x94] sm:$0xf]
      %v442 = vld [vmem:[%s254 + $0x98] sm:$0xf]
      %v443 = vld [vmem:[%s254 + $0x9c] sm:$0xf]
      %v444 = vld [vmem:[%s254 + $0xa0] sm:$0xf]
      %v445 = vld [vmem:[%s254 + $0xa4] sm:$0xf]
      %v446 = vld [vmem:[%s254 + $0xa8] sm:$0xf]
      %v447 = vld [vmem:[%s254 + $0xac] sm:$0xf]
      %v448 = vld [vmem:[%s254 + $0xb0] sm:$0xf]
      %v449 = vld [vmem:[%s254 + $0xb4] sm:$0xf]
      %v450 = vld [vmem:[%s254 + $0xb8] sm:$0xf]
      %v451 = vld [vmem:[%s254 + $0xbc] sm:$0xf]
      %v452 = vld [vmem:[%s254 + $0xc0] sm:$0xf]
      %v453 = vld [vmem:[%s254 + $0xc4] sm:$0xf]
      %v454 = vld [vmem:[%s254 + $0xc8] sm:$0xf]
      %v455 = vld [vmem:[%s254 + $0xcc] sm:$0xf]
      %v456 = vld [vmem:[%s254 + $0xd0] sm:$0xf]
      %v457 = vld [vmem:[%s254 + $0xd4] sm:$0xf]
      %v458 = vld [vmem:[%s254 + $0xd8] sm:$0xf]
      %v459 = vld [vmem:[%s254 + $0xdc] sm:$0xf]
      %v460 = vld [vmem:[%s254 + $0xe0] sm:$0xf]
      %v461 = vld [vmem:[%s254 + $0xe4] sm:$0xf]
      %v462 = vld [vmem:[%s254 + $0xe8] sm:$0xf]
      %v463 = vld [vmem:[%s254 + $0xec] sm:$0xf]
      %v464 = vld [vmem:[%s254 + $0xf0] sm:$0xf]
      %v465 = vld [vmem:[%s254 + $0xf4] sm:$0xf]
      %v466 = vld [vmem:[%s254 + $0xf8] sm:$0xf]
      %v467 = vld [vmem:[%s254 + $0xfc] sm:$0xf]
      %v532 = vunpack.c.l.b16 %v340
      %v533 = vunpack.c.h.b16 %v340
      %v534 = vunpack.c.l.b16 %v341
      %v535 = vunpack.c.h.b16 %v341
      %v536 = vunpack.c.l.b16 %v342
      %v537 = vunpack.c.h.b16 %v342
      %v538 = vunpack.c.l.b16 %v343
      %v539 = vunpack.c.h.b16 %v343
      %v540 = vunpack.c.l.b16 %v344
      %v541 = vunpack.c.h.b16 %v344
      %v542 = vunpack.c.l.b16 %v345
      %v543 = vunpack.c.h.b16 %v345
      %v544 = vunpack.c.l.b16 %v346
      %v545 = vunpack.c.h.b16 %v346
      %v546 = vunpack.c.l.b16 %v347
      %v547 = vunpack.c.h.b16 %v347
      %v548 = vunpack.c.l.b16 %v348
      %v549 = vunpack.c.h.b16 %v348
      %v550 = vunpack.c.l.b16 %v349
      %v551 = vunpack.c.h.b16 %v349
      %v552 = vunpack.c.l.b16 %v350
      %v553 = vunpack.c.h.b16 %v350
      %v554 = vunpack.c.l.b16 %v351
      %v555 = vunpack.c.h.b16 %v351
      %v556 = vunpack.c.l.b16 %v352
      %v557 = vunpack.c.h.b16 %v352
      %v558 = vunpack.c.l.b16 %v353
      %v559 = vunpack.c.h.b16 %v353
      %v560 = vunpack.c.l.b16 %v354
      %v561 = vunpack.c.h.b16 %v354
      %v562 = vunpack.c.l.b16 %v355
      %v563 = vunpack.c.h.b16 %v355
      %v564 = vunpack.c.l.b16 %v356
      %v565 = vunpack.c.h.b16 %v356
      %v566 = vunpack.c.l.b16 %v357
      %v567 = vunpack.c.h.b16 %v357
      %v568 = vunpack.c.l.b16 %v358
      %v569 = vunpack.c.h.b16 %v358
      %v570 = vunpack.c.l.b16 %v359
      %v571 = vunpack.c.h.b16 %v359
      %v572 = vunpack.c.l.b16 %v360
      %v573 = vunpack.c.h.b16 %v360
      %v574 = vunpack.c.l.b16 %v361
      %v575 = vunpack.c.h.b16 %v361
      %v576 = vunpack.c.l.b16 %v362
      %v577 = vunpack.c.h.b16 %v362
      %v578 = vunpack.c.l.b16 %v363
      %v579 = vunpack.c.h.b16 %v363
      %v580 = vunpack.c.l.b16 %v364
      %v581 = vunpack.c.h.b16 %v364
      %v582 = vunpack.c.l.b16 %v365
      %v583 = vunpack.c.h.b16 %v365
      %v584 = vunpack.c.l.b16 %v366
      %v585 = vunpack.c.h.b16 %v366
      %v586 = vunpack.c.l.b16 %v367
      %v587 = vunpack.c.h.b16 %v367
      %v588 = vunpack.c.l.b16 %v368
      %v589 = vunpack.c.h.b16 %v368
      %v590 = vunpack.c.l.b16 %v369
      %v591 = vunpack.c.h.b16 %v369
      %v592 = vunpack.c.l.b16 %v370
      %v593 = vunpack.c.h.b16 %v370
      %v594 = vunpack.c.l.b16 %v371
      %v595 = vunpack.c.h.b16 %v371
      %v596 = vunpack.c.l.b16 %v372
      %v597 = vunpack.c.h.b16 %v372
      %v598 = vunpack.c.l.b16 %v373
      %v599 = vunpack.c.h.b16 %v373
      %v600 = vunpack.c.l.b16 %v374
      %v601 = vunpack.c.h.b16 %v374
      %v602 = vunpack.c.l.b16 %v375
      %v603 = vunpack.c.h.b16 %v375
      %v604 = vunpack.c.l.b16 %v376
      %v605 = vunpack.c.h.b16 %v376
      %v606 = vunpack.c.l.b16 %v377
      %v607 = vunpack.c.h.b16 %v377
      %v608 = vunpack.c.l.b16 %v378
      %v609 = vunpack.c.h.b16 %v378
      %v610 = vunpack.c.l.b16 %v379
      %v611 = vunpack.c.h.b16 %v379
      %v612 = vunpack.c.l.b16 %v380
      %v613 = vunpack.c.h.b16 %v380
      %v614 = vunpack.c.l.b16 %v381
      %v615 = vunpack.c.h.b16 %v381
      %v616 = vunpack.c.l.b16 %v382
      %v617 = vunpack.c.h.b16 %v382
      %v618 = vunpack.c.l.b16 %v383
      %v619 = vunpack.c.h.b16 %v383
      %v620 = vunpack.c.l.b16 %v384
      %v621 = vunpack.c.h.b16 %v384
      %v622 = vunpack.c.l.b16 %v385
      %v623 = vunpack.c.h.b16 %v385
      %v624 = vunpack.c.l.b16 %v386
      %v625 = vunpack.c.h.b16 %v386
      %v626 = vunpack.c.l.b16 %v387
      %v627 = vunpack.c.h.b16 %v387
      %v628 = vunpack.c.l.b16 %v388
      %v629 = vunpack.c.h.b16 %v388
      %v630 = vunpack.c.l.b16 %v389
      %v631 = vunpack.c.h.b16 %v389
      %v632 = vunpack.c.l.b16 %v390
      %v633 = vunpack.c.h.b16 %v390
      %v634 = vunpack.c.l.b16 %v391
      %v635 = vunpack.c.h.b16 %v391
      %v636 = vunpack.c.l.b16 %v392
      %v637 = vunpack.c.h.b16 %v392
      %v638 = vunpack.c.l.b16 %v393
      %v639 = vunpack.c.h.b16 %v393
      %v640 = vunpack.c.l.b16 %v394
      %v641 = vunpack.c.h.b16 %v394
      %v642 = vunpack.c.l.b16 %v395
      %v643 = vunpack.c.h.b16 %v395
      %v644 = vunpack.c.l.b16 %v396
      %v645 = vunpack.c.h.b16 %v396
      %v646 = vunpack.c.l.b16 %v397
      %v647 = vunpack.c.h.b16 %v397
      %v648 = vunpack.c.l.b16 %v398
      %v649 = vunpack.c.h.b16 %v398
      %v650 = vunpack.c.l.b16 %v399
      %v651 = vunpack.c.h.b16 %v399
      %v652 = vunpack.c.l.b16 %v400
      %v653 = vunpack.c.h.b16 %v400
      %v654 = vunpack.c.l.b16 %v401
      %v655 = vunpack.c.h.b16 %v401
      %v656 = vunpack.c.l.b16 %v402
      %v657 = vunpack.c.h.b16 %v402
      %v658 = vunpack.c.l.b16 %v403
      %v659 = vunpack.c.h.b16 %v403
      %v660 = vpack.c.b16 %v536, %v532
      %v661 = vpack.c.b16 %v537, %v533
      %v662 = vpack.c.b16 %v538, %v534
      %v663 = vpack.c.b16 %v539, %v535
      %v664 = vpack.c.b16 %v544, %v540
      %v665 = vpack.c.b16 %v545, %v541
      %v666 = vpack.c.b16 %v546, %v542
      %v667 = vpack.c.b16 %v547, %v543
      %v668 = vpack.c.b16 %v552, %v548
      %v669 = vpack.c.b16 %v553, %v549
      %v670 = vpack.c.b16 %v554, %v550
      %v671 = vpack.c.b16 %v555, %v551
      %v672 = vpack.c.b16 %v560, %v556
      %v673 = vpack.c.b16 %v561, %v557
      %v674 = vpack.c.b16 %v562, %v558
      %v675 = vpack.c.b16 %v563, %v559
      %v676 = vpack.c.b16 %v568, %v564
      %v677 = vpack.c.b16 %v569, %v565
      %v678 = vpack.c.b16 %v570, %v566
      %v679 = vpack.c.b16 %v571, %v567
      %v680 = vpack.c.b16 %v576, %v572
      %v681 = vpack.c.b16 %v577, %v573
      %v682 = vpack.c.b16 %v578, %v574
      %v683 = vpack.c.b16 %v579, %v575
      %v684 = vpack.c.b16 %v584, %v580
      %v685 = vpack.c.b16 %v585, %v581
      %v686 = vpack.c.b16 %v586, %v582
      %v687 = vpack.c.b16 %v587, %v583
      %v688 = vpack.c.b16 %v592, %v588
      %v689 = vpack.c.b16 %v593, %v589
      %v690 = vpack.c.b16 %v594, %v590
      %v691 = vpack.c.b16 %v595, %v591
      %v692 = vpack.c.b16 %v600, %v596
      %v693 = vpack.c.b16 %v601, %v597
      %v694 = vpack.c.b16 %v602, %v598
      %v695 = vpack.c.b16 %v603, %v599
      %v696 = vpack.c.b16 %v608, %v604
      %v697 = vpack.c.b16 %v609, %v605
      %v698 = vpack.c.b16 %v610, %v606
      %v699 = vpack.c.b16 %v611, %v607
      %v700 = vpack.c.b16 %v616, %v612
      %v701 = vpack.c.b16 %v617, %v613
      %v702 = vpack.c.b16 %v618, %v614
      %v703 = vpack.c.b16 %v619, %v615
      %v704 = vpack.c.b16 %v624, %v620
      %v705 = vpack.c.b16 %v625, %v621
      %v706 = vpack.c.b16 %v626, %v622
      %v707 = vpack.c.b16 %v627, %v623
      %v708 = vpack.c.b16 %v632, %v628
      %v709 = vpack.c.b16 %v633, %v629
      %v710 = vpack.c.b16 %v634, %v630
      %v711 = vpack.c.b16 %v635, %v631
      %v712 = vpack.c.b16 %v640, %v636
      %v713 = vpack.c.b16 %v641, %v637
      %v714 = vpack.c.b16 %v642, %v638
      %v715 = vpack.c.b16 %v643, %v639
      %v716 = vpack.c.b16 %v648, %v644
      %v717 = vpack.c.b16 %v649, %v645
      %v718 = vpack.c.b16 %v650, %v646
      %v719 = vpack.c.b16 %v651, %v647
      %v720 = vpack.c.b16 %v656, %v652
      %v721 = vpack.c.b16 %v657, %v653
      %v722 = vpack.c.b16 %v658, %v654
      %v723 = vpack.c.b16 %v659, %v655
      %v852 = vunpack.c.l.b16 %v404
      %v853 = vunpack.c.l.b16 %v405
      %v854 = vunpack.c.l.b16 %v406
      %v855 = vunpack.c.l.b16 %v407
      %v856 = vunpack.c.l.b16 %v408
      %v857 = vunpack.c.l.b16 %v409
      %v858 = vunpack.c.l.b16 %v410
      %v859 = vunpack.c.l.b16 %v411
      %v860 = vunpack.c.l.b16 %v412
      %v861 = vunpack.c.l.b16 %v413
      %v862 = vunpack.c.l.b16 %v414
      %v863 = vunpack.c.l.b16 %v415
      %v864 = vunpack.c.l.b16 %v416
      %v865 = vunpack.c.l.b16 %v417
      %v866 = vunpack.c.l.b16 %v418
      %v867 = vunpack.c.l.b16 %v419
      %v868 = vunpack.c.l.b16 %v420
      %v869 = vunpack.c.l.b16 %v421
      %v870 = vunpack.c.l.b16 %v422
      %v871 = vunpack.c.l.b16 %v423
      %v872 = vunpack.c.l.b16 %v424
      %v873 = vunpack.c.l.b16 %v425
      %v874 = vunpack.c.l.b16 %v426
      %v875 = vunpack.c.l.b16 %v427
      %v876 = vunpack.c.l.b16 %v428
      %v877 = vunpack.c.l.b16 %v429
      %v878 = vunpack.c.l.b16 %v430
      %v879 = vunpack.c.l.b16 %v431
      %v880 = vunpack.c.l.b16 %v432
      %v881 = vunpack.c.l.b16 %v433
      %v882 = vunpack.c.l.b16 %v434
      %v883 = vunpack.c.l.b16 %v435
      %v884 = vunpack.c.l.b16 %v436
      %v885 = vunpack.c.l.b16 %v437
      %v886 = vunpack.c.l.b16 %v438
      %v887 = vunpack.c.l.b16 %v439
      %v888 = vunpack.c.l.b16 %v440
      %v889 = vunpack.c.l.b16 %v441
      %v890 = vunpack.c.l.b16 %v442
      %v891 = vunpack.c.l.b16 %v443
      %v892 = vunpack.c.l.b16 %v444
      %v893 = vunpack.c.l.b16 %v445
      %v894 = vunpack.c.l.b16 %v446
      %v895 = vunpack.c.l.b16 %v447
      %v896 = vunpack.c.l.b16 %v448
      %v897 = vunpack.c.l.b16 %v449
      %v898 = vunpack.c.l.b16 %v450
      %v899 = vunpack.c.l.b16 %v451
      %v900 = vunpack.c.l.b16 %v452
      %v901 = vunpack.c.l.b16 %v453
      %v902 = vunpack.c.l.b16 %v454
      %v903 = vunpack.c.l.b16 %v455
      %v904 = vunpack.c.l.b16 %v456
      %v905 = vunpack.c.l.b16 %v457
      %v906 = vunpack.c.l.b16 %v458
      %v907 = vunpack.c.l.b16 %v459
      %v908 = vunpack.c.l.b16 %v460
      %v909 = vunpack.c.l.b16 %v461
      %v910 = vunpack.c.l.b16 %v462
      %v911 = vunpack.c.l.b16 %v463
      %v912 = vunpack.c.l.b16 %v464
      %v913 = vunpack.c.l.b16 %v465
      %v914 = vunpack.c.l.b16 %v466
      %v915 = vunpack.c.l.b16 %v467
      %v916 = vpack.c.b16 %v853, %v852
      %v917 = vpack.c.b16 %v855, %v854
      %v918 = vpack.c.b16 %v857, %v856
      %v919 = vpack.c.b16 %v859, %v858
      %v920 = vpack.c.b16 %v861, %v860
      %v921 = vpack.c.b16 %v863, %v862
      %v922 = vpack.c.b16 %v865, %v864
      %v923 = vpack.c.b16 %v867, %v866
      %v924 = vpack.c.b16 %v869, %v868
      %v925 = vpack.c.b16 %v871, %v870
      %v926 = vpack.c.b16 %v873, %v872
      %v927 = vpack.c.b16 %v875, %v874
      %v928 = vpack.c.b16 %v877, %v876
      %v929 = vpack.c.b16 %v879, %v878
      %v930 = vpack.c.b16 %v881, %v880
      %v931 = vpack.c.b16 %v883, %v882
      %v932 = vpack.c.b16 %v885, %v884
      %v933 = vpack.c.b16 %v887, %v886
      %v934 = vpack.c.b16 %v889, %v888
      %v935 = vpack.c.b16 %v891, %v890
      %v936 = vpack.c.b16 %v893, %v892
      %v937 = vpack.c.b16 %v895, %v894
      %v938 = vpack.c.b16 %v897, %v896
      %v939 = vpack.c.b16 %v899, %v898
      %v940 = vpack.c.b16 %v901, %v900
      %v941 = vpack.c.b16 %v903, %v902
      %v942 = vpack.c.b16 %v905, %v904
      %v943 = vpack.c.b16 %v907, %v906
      %v944 = vpack.c.b16 %v909, %v908
      %v945 = vpack.c.b16 %v911, %v910
      %v946 = vpack.c.b16 %v913, %v912
      %v947 = vpack.c.b16 %v915, %v914
      %980 = vmatpush.bf16.msra.mxu0 %v923
      %981 = vmatpush.bf16.msra.mxu0 %v922
      %982 = vmatpush.bf16.msra.mxu0 %v921
      %983 = vmatpush.bf16.msra.mxu0 %v920
      %984 = vmatpush.bf16.msra.mxu0 %v919
      %985 = vmatpush.bf16.msra.mxu0 %v918
      %986 = vmatpush.bf16.msra.mxu0 %v917
      %987 = vmatpush.bf16.msra.mxu0 %v916
      %988 = vmatmul.bf16.gmra.mxu0 %v660
      %v989 = vpop.f32.mrf.mxu0
      %v990 = vadd.f32 0.0, %v989
      %v991 = vpop.f32.mrf.mxu0
      %v992 = vadd.f32 0.0, %v991
      %993 = vmatmul.bf16.gmra.mxu0 %v664
      %v994 = vpop.f32.mrf.mxu0
      %v995 = vadd.f32 0.0, %v994
      %v996 = vpop.f32.mrf.mxu0
      %v997 = vadd.f32 0.0, %v996
      %998 = vmatmul.bf16.gmra.mxu0 %v668
      %v999 = vpop.f32.mrf.mxu0
      %v1000 = vadd.f32 0.0, %v999
      %v1001 = vpop.f32.mrf.mxu0
      %v1002 = vadd.f32 0.0, %v1001
      %1003 = vmatmul.bf16.gmra.mxu0 %v672
      %v1004 = vpop.f32.mrf.mxu0
      %v1005 = vadd.f32 0.0, %v1004
      %v1006 = vpop.f32.mrf.mxu0
      %v1007 = vadd.f32 0.0, %v1006
      %1008 = vmatmul.bf16.gmra.mxu0 %v676
      %v1009 = vpop.f32.mrf.mxu0
      %v1010 = vadd.f32 0.0, %v1009
      %v1011 = vpop.f32.mrf.mxu0
      %v1012 = vadd.f32 0.0, %v1011
      %1013 = vmatmul.bf16.gmra.mxu0 %v680
      %v1014 = vpop.f32.mrf.mxu0
      %v1015 = vadd.f32 0.0, %v1014
      %v1016 = vpop.f32.mrf.mxu0
      %v1017 = vadd.f32 0.0, %v1016
      %1018 = vmatmul.bf16.gmra.mxu0 %v684
      %v1019 = vpop.f32.mrf.mxu0
      %v1020 = vadd.f32 0.0, %v1019
      %v1021 = vpop.f32.mrf.mxu0
      %v1022 = vadd.f32 0.0, %v1021
      %1023 = vmatmul.bf16.gmra.mxu0 %v688
      %v1024 = vpop.f32.mrf.mxu0
      %v1025 = vadd.f32 0.0, %v1024
      %v1026 = vpop.f32.mrf.mxu0
      %v1027 = vadd.f32 0.0, %v1026
      %1028 = vmatmul.bf16.gmra.mxu0 %v692
      %v1029 = vpop.f32.mrf.mxu0
      %v1030 = vadd.f32 0.0, %v1029
      %v1031 = vpop.f32.mrf.mxu0
      %v1032 = vadd.f32 0.0, %v1031
      %1033 = vmatmul.bf16.gmra.mxu0 %v696
      %v1034 = vpop.f32.mrf.mxu0
      %v1035 = vadd.f32 0.0, %v1034
      %v1036 = vpop.f32.mrf.mxu0
      %v1037 = vadd.f32 0.0, %v1036
      %1038 = vmatmul.bf16.gmra.mxu0 %v700
      %v1039 = vpop.f32.mrf.mxu0
      %v1040 = vadd.f32 0.0, %v1039
      %v1041 = vpop.f32.mrf.mxu0
      %v1042 = vadd.f32 0.0, %v1041
      %1043 = vmatmul.bf16.gmra.mxu0 %v704
      %v1044 = vpop.f32.mrf.mxu0
      %v1045 = vadd.f32 0.0, %v1044
      %v1046 = vpop.f32.mrf.mxu0
      %v1047 = vadd.f32 0.0, %v1046
      %1048 = vmatmul.bf16.gmra.mxu0 %v708
      %v1049 = vpop.f32.mrf.mxu0
      %v1050 = vadd.f32 0.0, %v1049
      %v1051 = vpop.f32.mrf.mxu0
      %v1052 = vadd.f32 0.0, %v1051
      %1053 = vmatmul.bf16.gmra.mxu0 %v712
      %v1054 = vpop.f32.mrf.mxu0
      %v1055 = vadd.f32 0.0, %v1054
      %v1056 = vpop.f32.mrf.mxu0
      %v1057 = vadd.f32 0.0, %v1056
      %1058 = vmatmul.bf16.gmra.mxu0 %v716
      %v1059 = vpop.f32.mrf.mxu0
      %v1060 = vadd.f32 0.0, %v1059
      %v1061 = vpop.f32.mrf.mxu0
      %v1062 = vadd.f32 0.0, %v1061
      %1063 = vmatmul.bf16.gmra.mxu0 %v720
      %v1064 = vpop.f32.mrf.mxu0
      %v1065 = vadd.f32 0.0, %v1064
      %v1066 = vpop.f32.mrf.mxu0
      %v1067 = vadd.f32 0.0, %v1066
      %1068 = vdwg.mxu0
      %1069 = vmatpush.bf16.msra.mxu0 %v931
      %1070 = vmatpush.bf16.msra.mxu0 %v930
      %1071 = vmatpush.bf16.msra.mxu0 %v929
      %1072 = vmatpush.bf16.msra.mxu0 %v928
      %1073 = vmatpush.bf16.msra.mxu0 %v927
      %1074 = vmatpush.bf16.msra.mxu0 %v926
      %1075 = vmatpush.bf16.msra.mxu0 %v925
      %1076 = vmatpush.bf16.msra.mxu0 %v924
      %1077 = vmatmul.bf16.gmra.mxu0 %v661
      %v1078 = vpop.f32.mrf.mxu0
      %v1079 = vadd.f32 %v990, %v1078
      %v1080 = vpop.f32.mrf.mxu0
      %v1081 = vadd.f32 %v992, %v1080
      %1082 = vmatmul.bf16.gmra.mxu0 %v665
      %v1083 = vpop.f32.mrf.mxu0
      %v1084 = vadd.f32 %v995, %v1083
      %v1085 = vpop.f32.mrf.mxu0
      %v1086 = vadd.f32 %v997, %v1085
      %1087 = vmatmul.bf16.gmra.mxu0 %v669
      %v1088 = vpop.f32.mrf.mxu0
      %v1089 = vadd.f32 %v1000, %v1088
      %v1090 = vpop.f32.mrf.mxu0
      %v1091 = vadd.f32 %v1002, %v1090
      %1092 = vmatmul.bf16.gmra.mxu0 %v673
      %v1093 = vpop.f32.mrf.mxu0
      %v1094 = vadd.f32 %v1005, %v1093
      %v1095 = vpop.f32.mrf.mxu0
      %v1096 = vadd.f32 %v1007, %v1095
      %1097 = vmatmul.bf16.gmra.mxu0 %v677
      %v1098 = vpop.f32.mrf.mxu0
      %v1099 = vadd.f32 %v1010, %v1098
      %v1100 = vpop.f32.mrf.mxu0
      %v1101 = vadd.f32 %v1012, %v1100
      %1102 = vmatmul.bf16.gmra.mxu0 %v681
      %v1103 = vpop.f32.mrf.mxu0
      %v1104 = vadd.f32 %v1015, %v1103
      %v1105 = vpop.f32.mrf.mxu0
      %v1106 = vadd.f32 %v1017, %v1105
      %1107 = vmatmul.bf16.gmra.mxu0 %v685
      %v1108 = vpop.f32.mrf.mxu0
      %v1109 = vadd.f32 %v1020, %v1108
      %v1110 = vpop.f32.mrf.mxu0
      %v1111 = vadd.f32 %v1022, %v1110
      %1112 = vmatmul.bf16.gmra.mxu0 %v689
      %v1113 = vpop.f32.mrf.mxu0
      %v1114 = vadd.f32 %v1025, %v1113
      %v1115 = vpop.f32.mrf.mxu0
      %v1116 = vadd.f32 %v1027, %v1115
      %1117 = vmatmul.bf16.gmra.mxu0 %v693
      %v1118 = vpop.f32.mrf.mxu0
      %v1119 = vadd.f32 %v1030, %v1118
      %v1120 = vpop.f32.mrf.mxu0
      %v1121 = vadd.f32 %v1032, %v1120
      %1122 = vmatmul.bf16.gmra.mxu0 %v697
      %v1123 = vpop.f32.mrf.mxu0
      %v1124 = vadd.f32 %v1035, %v1123
      %v1125 = vpop.f32.mrf.mxu0
      %v1126 = vadd.f32 %v1037, %v1125
      %1127 = vmatmul.bf16.gmra.mxu0 %v701
      %v1128 = vpop.f32.mrf.mxu0
      %v1129 = vadd.f32 %v1040, %v1128
      %v1130 = vpop.f32.mrf.mxu0
      %v1131 = vadd.f32 %v1042, %v1130
      %1132 = vmatmul.bf16.gmra.mxu0 %v705
      %v1133 = vpop.f32.mrf.mxu0
      %v1134 = vadd.f32 %v1045, %v1133
      %v1135 = vpop.f32.mrf.mxu0
      %v1136 = vadd.f32 %v1047, %v1135
      %1137 = vmatmul.bf16.gmra.mxu0 %v709
      %v1138 = vpop.f32.mrf.mxu0
      %v1139 = vadd.f32 %v1050, %v1138
      %v1140 = vpop.f32.mrf.mxu0
      %v1141 = vadd.f32 %v1052, %v1140
      %1142 = vmatmul.bf16.gmra.mxu0 %v713
      %v1143 = vpop.f32.mrf.mxu0
      %v1144 = vadd.f32 %v1055, %v1143
      %v1145 = vpop.f32.mrf.mxu0
      %v1146 = vadd.f32 %v1057, %v1145
      %1147 = vmatmul.bf16.gmra.mxu0 %v717
      %v1148 = vpop.f32.mrf.mxu0
      %v1149 = vadd.f32 %v1060, %v1148
      %v1150 = vpop.f32.mrf.mxu0
      %v1151 = vadd.f32 %v1062, %v1150
      %1152 = vmatmul.bf16.gmra.mxu0 %v721
      %v1153 = vpop.f32.mrf.mxu0
      %v1154 = vadd.f32 %v1065, %v1153
      %v1155 = vpop.f32.mrf.mxu0
      %v1156 = vadd.f32 %v1067, %v1155
      %1157 = vdwg.mxu0
      %1158 = vmatpush.bf16.msra.mxu0 %v939
      %1159 = vmatpush.bf16.msra.mxu0 %v938
      %1160 = vmatpush.bf16.msra.mxu0 %v937
      %1161 = vmatpush.bf16.msra.mxu0 %v936
      %1162 = vmatpush.bf16.msra.mxu0 %v935
      %1163 = vmatpush.bf16.msra.mxu0 %v934
      %1164 = vmatpush.bf16.msra.mxu0 %v933
      %1165 = vmatpush.bf16.msra.mxu0 %v932
      %1166 = vmatmul.bf16.gmra.mxu0 %v662
      %v1167 = vpop.f32.mrf.mxu0
      %v1168 = vadd.f32 %v1079, %v1167
      %v1169 = vpop.f32.mrf.mxu0
      %v1170 = vadd.f32 %v1081, %v1169
      %1171 = vmatmul.bf16.gmra.mxu0 %v666
      %v1172 = vpop.f32.mrf.mxu0
      %v1173 = vadd.f32 %v1084, %v1172
      %v1174 = vpop.f32.mrf.mxu0
      %v1175 = vadd.f32 %v1086, %v1174
      %1176 = vmatmul.bf16.gmra.mxu0 %v670
      %v1177 = vpop.f32.mrf.mxu0
      %v1178 = vadd.f32 %v1089, %v1177
      %v1179 = vpop.f32.mrf.mxu0
      %v1180 = vadd.f32 %v1091, %v1179
      %1181 = vmatmul.bf16.gmra.mxu0 %v674
      %v1182 = vpop.f32.mrf.mxu0
      %v1183 = vadd.f32 %v1094, %v1182
      %v1184 = vpop.f32.mrf.mxu0
      %v1185 = vadd.f32 %v1096, %v1184
      %1186 = vmatmul.bf16.gmra.mxu0 %v678
      %v1187 = vpop.f32.mrf.mxu0
      %v1188 = vadd.f32 %v1099, %v1187
      %v1189 = vpop.f32.mrf.mxu0
      %v1190 = vadd.f32 %v1101, %v1189
      %1191 = vmatmul.bf16.gmra.mxu0 %v682
      %v1192 = vpop.f32.mrf.mxu0
      %v1193 = vadd.f32 %v1104, %v1192
      %v1194 = vpop.f32.mrf.mxu0
      %v1195 = vadd.f32 %v1106, %v1194
      %1196 = vmatmul.bf16.gmra.mxu0 %v686
      %v1197 = vpop.f32.mrf.mxu0
      %v1198 = vadd.f32 %v1109, %v1197
      %v1199 = vpop.f32.mrf.mxu0
      %v1200 = vadd.f32 %v1111, %v1199
      %1201 = vmatmul.bf16.gmra.mxu0 %v690
      %v1202 = vpop.f32.mrf.mxu0
      %v1203 = vadd.f32 %v1114, %v1202
      %v1204 = vpop.f32.mrf.mxu0
      %v1205 = vadd.f32 %v1116, %v1204
      %1206 = vmatmul.bf16.gmra.mxu0 %v694
      %v1207 = vpop.f32.mrf.mxu0
      %v1208 = vadd.f32 %v1119, %v1207
      %v1209 = vpop.f32.mrf.mxu0
      %v1210 = vadd.f32 %v1121, %v1209
      %1211 = vmatmul.bf16.gmra.mxu0 %v698
      %v1212 = vpop.f32.mrf.mxu0
      %v1213 = vadd.f32 %v1124, %v1212
      %v1214 = vpop.f32.mrf.mxu0
      %v1215 = vadd.f32 %v1126, %v1214
      %1216 = vmatmul.bf16.gmra.mxu0 %v702
      %v1217 = vpop.f32.mrf.mxu0
      %v1218 = vadd.f32 %v1129, %v1217
      %v1219 = vpop.f32.mrf.mxu0
      %v1220 = vadd.f32 %v1131, %v1219
      %1221 = vmatmul.bf16.gmra.mxu0 %v706
      %v1222 = vpop.f32.mrf.mxu0
      %v1223 = vadd.f32 %v1134, %v1222
      %v1224 = vpop.f32.mrf.mxu0
      %v1225 = vadd.f32 %v1136, %v1224
      %1226 = vmatmul.bf16.gmra.mxu0 %v710
      %v1227 = vpop.f32.mrf.mxu0
      %v1228 = vadd.f32 %v1139, %v1227
      %v1229 = vpop.f32.mrf.mxu0
      %v1230 = vadd.f32 %v1141, %v1229
      %1231 = vmatmul.bf16.gmra.mxu0 %v714
      %v1232 = vpop.f32.mrf.mxu0
      %v1233 = vadd.f32 %v1144, %v1232
      %v1234 = vpop.f32.mrf.mxu0
      %v1235 = vadd.f32 %v1146, %v1234
      %1236 = vmatmul.bf16.gmra.mxu0 %v718
      %v1237 = vpop.f32.mrf.mxu0
      %v1238 = vadd.f32 %v1149, %v1237
      %v1239 = vpop.f32.mrf.mxu0
      %v1240 = vadd.f32 %v1151, %v1239
      %1241 = vmatmul.bf16.gmra.mxu0 %v722
      %v1242 = vpop.f32.mrf.mxu0
      %v1243 = vadd.f32 %v1154, %v1242
      %v1244 = vpop.f32.mrf.mxu0
      %v1245 = vadd.f32 %v1156, %v1244
      %1246 = vdwg.mxu0
      %1247 = vmatpush.bf16.msra.mxu0 %v947
      %1248 = vmatpush.bf16.msra.mxu0 %v946
      %1249 = vmatpush.bf16.msra.mxu0 %v945
      %1250 = vmatpush.bf16.msra.mxu0 %v944
      %1251 = vmatpush.bf16.msra.mxu0 %v943
      %1252 = vmatpush.bf16.msra.mxu0 %v942
      %1253 = vmatpush.bf16.msra.mxu0 %v941
      %1254 = vmatpush.bf16.msra.mxu0 %v940
      %1255 = vmatmul.bf16.gmra.mxu0 %v663
      %v1256 = vpop.f32.mrf.mxu0
      %v1257 = vadd.f32 %v1168, %v1256
      %v1258 = vpop.f32.mrf.mxu0
      %v1259 = vadd.f32 %v1170, %v1258
      %1260 = vmatmul.bf16.gmra.mxu0 %v667
      %v1261 = vpop.f32.mrf.mxu0
      %v1262 = vadd.f32 %v1173, %v1261
      %v1263 = vpop.f32.mrf.mxu0
      %v1264 = vadd.f32 %v1175, %v1263
      %1265 = vmatmul.bf16.gmra.mxu0 %v671
      %v1266 = vpop.f32.mrf.mxu0
      %v1267 = vadd.f32 %v1178, %v1266
      %v1268 = vpop.f32.mrf.mxu0
      %v1269 = vadd.f32 %v1180, %v1268
      %1270 = vmatmul.bf16.gmra.mxu0 %v675
      %v1271 = vpop.f32.mrf.mxu0
      %v1272 = vadd.f32 %v1183, %v1271
      %v1273 = vpop.f32.mrf.mxu0
      %v1274 = vadd.f32 %v1185, %v1273
      %1275 = vmatmul.bf16.gmra.mxu0 %v679
      %v1276 = vpop.f32.mrf.mxu0
      %v1277 = vadd.f32 %v1188, %v1276
      %v1278 = vpop.f32.mrf.mxu0
      %v1279 = vadd.f32 %v1190, %v1278
      %1280 = vmatmul.bf16.gmra.mxu0 %v683
      %v1281 = vpop.f32.mrf.mxu0
      %v1282 = vadd.f32 %v1193, %v1281
      %v1283 = vpop.f32.mrf.mxu0
      %v1284 = vadd.f32 %v1195, %v1283
      %1285 = vmatmul.bf16.gmra.mxu0 %v687
      %v1286 = vpop.f32.mrf.mxu0
      %v1287 = vadd.f32 %v1198, %v1286
      %v1288 = vpop.f32.mrf.mxu0
      %v1289 = vadd.f32 %v1200, %v1288
      %1290 = vmatmul.bf16.gmra.mxu0 %v691
      %v1291 = vpop.f32.mrf.mxu0
      %v1292 = vadd.f32 %v1203, %v1291
      %v1293 = vpop.f32.mrf.mxu0
      %v1294 = vadd.f32 %v1205, %v1293
      %1295 = vmatmul.bf16.gmra.mxu0 %v695
      %v1296 = vpop.f32.mrf.mxu0
      %v1297 = vadd.f32 %v1208, %v1296
      %v1298 = vpop.f32.mrf.mxu0
      %v1299 = vadd.f32 %v1210, %v1298
      %1300 = vmatmul.bf16.gmra.mxu0 %v699
      %v1301 = vpop.f32.mrf.mxu0
      %v1302 = vadd.f32 %v1213, %v1301
      %v1303 = vpop.f32.mrf.mxu0
      %v1304 = vadd.f32 %v1215, %v1303
      %1305 = vmatmul.bf16.gmra.mxu0 %v703
      %v1306 = vpop.f32.mrf.mxu0
      %v1307 = vadd.f32 %v1218, %v1306
      %v1308 = vpop.f32.mrf.mxu0
      %v1309 = vadd.f32 %v1220, %v1308
      %1310 = vmatmul.bf16.gmra.mxu0 %v707
      %v1311 = vpop.f32.mrf.mxu0
      %v1312 = vadd.f32 %v1223, %v1311
      %v1313 = vpop.f32.mrf.mxu0
      %v1314 = vadd.f32 %v1225, %v1313
      %1315 = vmatmul.bf16.gmra.mxu0 %v711
      %v1316 = vpop.f32.mrf.mxu0
      %v1317 = vadd.f32 %v1228, %v1316
      %v1318 = vpop.f32.mrf.mxu0
      %v1319 = vadd.f32 %v1230, %v1318
      %1320 = vmatmul.bf16.gmra.mxu0 %v715
      %v1321 = vpop.f32.mrf.mxu0
      %v1322 = vadd.f32 %v1233, %v1321
      %v1323 = vpop.f32.mrf.mxu0
      %v1324 = vadd.f32 %v1235, %v1323
      %1325 = vmatmul.bf16.gmra.mxu0 %v719
      %v1326 = vpop.f32.mrf.mxu0
      %v1327 = vadd.f32 %v1238, %v1326
      %v1328 = vpop.f32.mrf.mxu0
      %v1329 = vadd.f32 %v1240, %v1328
      %1330 = vmatmul.bf16.gmra.mxu0 %v723
      %v1331 = vpop.f32.mrf.mxu0
      %v1332 = vadd.f32 %v1243, %v1331
      %v1333 = vpop.f32.mrf.mxu0
      %v1334 = vadd.f32 %v1245, %v1333
      %1335 = vdwg.mxu0
      %v1336 = vadd.f32 %v308, %v1257
      %v1337 = vadd.f32 %v309, %v1259
      %v1338 = vadd.f32 %v310, %v1262
      %v1339 = vadd.f32 %v311, %v1264
      %v1340 = vadd.f32 %v312, %v1267
      %v1341 = vadd.f32 %v313, %v1269
      %v1342 = vadd.f32 %v314, %v1272
      %v1343 = vadd.f32 %v315, %v1274
      %v1344 = vadd.f32 %v316, %v1277
      %v1345 = vadd.f32 %v317, %v1279
      %v1346 = vadd.f32 %v318, %v1282
      %v1347 = vadd.f32 %v319, %v1284
      %v1348 = vadd.f32 %v320, %v1287
      %v1349 = vadd.f32 %v321, %v1289
      %v1350 = vadd.f32 %v322, %v1292
      %v1351 = vadd.f32 %v323, %v1294
      %v1352 = vadd.f32 %v324, %v1297
      %v1353 = vadd.f32 %v325, %v1299
      %v1354 = vadd.f32 %v326, %v1302
      %v1355 = vadd.f32 %v327, %v1304
      %v1356 = vadd.f32 %v328, %v1307
      %v1357 = vadd.f32 %v329, %v1309
      %v1358 = vadd.f32 %v330, %v1312
      %v1359 = vadd.f32 %v331, %v1314
      %v1360 = vadd.f32 %v332, %v1317
      %v1361 = vadd.f32 %v333, %v1319
      %v1362 = vadd.f32 %v334, %v1322
      %v1363 = vadd.f32 %v335, %v1324
      %v1364 = vadd.f32 %v336, %v1327
      %v1365 = vadd.f32 %v337, %v1329
      %v1366 = vadd.f32 %v338, %v1332
      %v1367 = vadd.f32 %v339, %v1334
      %1368 = vst [vmem:[#allocation2] sm:$0xff] %v1336
      %1369 = vst [vmem:[#allocation2 + $0x8] sm:$0xff] %v1337
      %1370 = vst [vmem:[#allocation2 + $0x10] sm:$0xff] %v1338
      %1371 = vst [vmem:[#allocation2 + $0x18] sm:$0xff] %v1339
      %1372 = vst [vmem:[#allocation2 + $0x20] sm:$0xff] %v1340
      %1373 = vst [vmem:[#allocation2 + $0x28] sm:$0xff] %v1341
      %1374 = vst [vmem:[#allocation2 + $0x30] sm:$0xff] %v1342
      %1375 = vst [vmem:[#allocation2 + $0x38] sm:$0xff] %v1343
      %1376 = vst [vmem:[#allocation2 + $0x40] sm:$0xff] %v1344
      %1377 = vst [vmem:[#allocation2 + $0x48] sm:$0xff] %v1345
      %1378 = vst [vmem:[#allocation2 + $0x50] sm:$0xff] %v1346
      %1379 = vst [vmem:[#allocation2 + $0x58] sm:$0xff] %v1347
      %1380 = vst [vmem:[#allocation2 + $0x60] sm:$0xff] %v1348
      %1381 = vst [vmem:[#allocation2 + $0x68] sm:$0xff] %v1349
      %1382 = vst [vmem:[#allocation2 + $0x70] sm:$0xff] %v1350
      %1383 = vst [vmem:[#allocation2 + $0x78] sm:$0xff] %v1351
      %1384 = vst [vmem:[#allocation2 + $0x80] sm:$0xff] %v1352
      %1385 = vst [vmem:[#allocation2 + $0x88] sm:$0xff] %v1353
      %1386 = vst [vmem:[#allocation2 + $0x90] sm:$0xff] %v1354
      %1387 = vst [vmem:[#allocation2 + $0x98] sm:$0xff] %v1355
      %1388 = vst [vmem:[#allocation2 + $0xa0] sm:$0xff] %v1356
      %1389 = vst [vmem:[#allocation2 + $0xa8] sm:$0xff] %v1357
      %1390 = vst [vmem:[#allocation2 + $0xb0] sm:$0xff] %v1358
      %1391 = vst [vmem:[#allocation2 + $0xb8] sm:$0xff] %v1359
      %1392 = vst [vmem:[#allocation2 + $0xc0] sm:$0xff] %v1360
      %1393 = vst [vmem:[#allocation2 + $0xc8] sm:$0xff] %v1361
      %1394 = vst [vmem:[#allocation2 + $0xd0] sm:$0xff] %v1362
      %1395 = vst [vmem:[#allocation2 + $0xd8] sm:$0xff] %v1363
      %1396 = vst [vmem:[#allocation2 + $0xe0] sm:$0xff] %v1364
      %1397 = vst [vmem:[#allocation2 + $0xe8] sm:$0xff] %v1365
      %1398 = vst [vmem:[#allocation2 + $0xf0] sm:$0xff] %v1366
      %1399 = vst [vmem:[#allocation2 + $0xf8] sm:$0xff] %v1367
      // Predicated region
      $region33: #{generator_forward.33} parent=27 // pred_check
        %p1400 = pneg %p272
      $region34: #{generator_forward.33} parent=27 // pred_check_branch
        %1402 = sbr.rel (%p1400) target = $region36
      $region35: #{generator_forward.33} parent=27 // pred_region
        %v1403 = vld [vmem:[#allocation2] sm:$0xff]
        %v1404 = vld [vmem:[#allocation2 + $0x8] sm:$0xff]
        %v1405 = vld [vmem:[#allocation2 + $0x10] sm:$0xff]
        %v1406 = vld [vmem:[#allocation2 + $0x18] sm:$0xff]
        %v1407 = vld [vmem:[#allocation2 + $0x20] sm:$0xff]
        %v1408 = vld [vmem:[#allocation2 + $0x28] sm:$0xff]
        %v1409 = vld [vmem:[#allocation2 + $0x30] sm:$0xff]
        %v1410 = vld [vmem:[#allocation2 + $0x38] sm:$0xff]
        %v1411 = vld [vmem:[#allocation2 + $0x40] sm:$0xff]
        %v1412 = vld [vmem:[#allocation2 + $0x48] sm:$0xff]
        %v1413 = vld [vmem:[#allocation2 + $0x50] sm:$0xff]
        %v1414 = vld [vmem:[#allocation2 + $0x58] sm:$0xff]
        %v1415 = vld [vmem:[#allocation2 + $0x60] sm:$0xff]
        %v1416 = vld [vmem:[#allocation2 + $0x68] sm:$0xff]
        %v1417 = vld [vmem:[#allocation2 + $0x70] sm:$0xff]
        %v1418 = vld [vmem:[#allocation2 + $0x78] sm:$0xff]
        %v1419 = vld [vmem:[#allocation2 + $0x80] sm:$0xff]
        %v1420 = vld [vmem:[#allocation2 + $0x88] sm:$0xff]
        %v1421 = vld [vmem:[#allocation2 + $0x90] sm:$0xff]
        %v1422 = vld [vmem:[#allocation2 + $0x98] sm:$0xff]
        %v1423 = vld [vmem:[#allocation2 + $0xa0] sm:$0xff]
        %v1424 = vld [vmem:[#allocation2 + $0xa8] sm:$0xff]
        %v1425 = vld [vmem:[#allocation2 + $0xb0] sm:$0xff]
        %v1426 = vld [vmem:[#allocation2 + $0xb8] sm:$0xff]
        %v1427 = vld [vmem:[#allocation2 + $0xc0] sm:$0xff]
        %v1428 = vld [vmem:[#allocation2 + $0xc8] sm:$0xff]
        %v1429 = vld [vmem:[#allocation2 + $0xd0] sm:$0xff]
        %v1430 = vld [vmem:[#allocation2 + $0xd8] sm:$0xff]
        %v1431 = vld [vmem:[#allocation2 + $0xe0] sm:$0xff]
        %v1432 = vld [vmem:[#allocation2 + $0xe8] sm:$0xff]
        %v1433 = vld [vmem:[#allocation2 + $0xf0] sm:$0xff]
        %v1434 = vld [vmem:[#allocation2 + $0xf8] sm:$0xff]
        %v1435 = vpack.c.bf16 %v1403, %v1403
        %v1436 = vpack.c.bf16 %v1404, %v1404
        %v1437 = vpack.c.bf16 %v1405, %v1405
        %v1438 = vpack.c.bf16 %v1406, %v1406
        %v1439 = vpack.c.bf16 %v1407, %v1407
        %v1440 = vpack.c.bf16 %v1408, %v1408
        %v1441 = vpack.c.bf16 %v1409, %v1409
        %v1442 = vpack.c.bf16 %v1410, %v1410
        %v1443 = vpack.c.bf16 %v1411, %v1411
        %v1444 = vpack.c.bf16 %v1412, %v1412
        %v1445 = vpack.c.bf16 %v1413, %v1413
        %v1446 = vpack.c.bf16 %v1414, %v1414
        %v1447 = vpack.c.bf16 %v1415, %v1415
        %v1448 = vpack.c.bf16 %v1416, %v1416
        %v1449 = vpack.c.bf16 %v1417, %v1417
        %v1450 = vpack.c.bf16 %v1418, %v1418
        %v1451 = vpack.c.bf16 %v1419, %v1419
        %v1452 = vpack.c.bf16 %v1420, %v1420
        %v1453 = vpack.c.bf16 %v1421, %v1421
        %v1454 = vpack.c.bf16 %v1422, %v1422
        %v1455 = vpack.c.bf16 %v1423, %v1423
        %v1456 = vpack.c.bf16 %v1424, %v1424
        %v1457 = vpack.c.bf16 %v1425, %v1425
        %v1458 = vpack.c.bf16 %v1426, %v1426
        %v1459 = vpack.c.bf16 %v1427, %v1427
        %v1460 = vpack.c.bf16 %v1428, %v1428
        %v1461 = vpack.c.bf16 %v1429, %v1429
        %v1462 = vpack.c.bf16 %v1430, %v1430
        %v1463 = vpack.c.bf16 %v1431, %v1431
        %v1464 = vpack.c.bf16 %v1432, %v1432
        %v1465 = vpack.c.bf16 %v1433, %v1433
        %v1466 = vpack.c.bf16 %v1434, %v1434
        %1467 = vst [vmem:[%s263] sm:$0xf] %v1435
        %1468 = vst [vmem:[%s263 + $0x4] sm:$0xf] %v1436
        %1469 = vst [vmem:[%s263 + $0x8] sm:$0xf] %v1437
        %1470 = vst [vmem:[%s263 + $0xc] sm:$0xf] %v1438
        %1471 = vst [vmem:[%s263 + $0x10] sm:$0xf] %v1439
        %1472 = vst [vmem:[%s263 + $0x14] sm:$0xf] %v1440
        %1473 = vst [vmem:[%s263 + $0x18] sm:$0xf] %v1441
        %1474 = vst [vmem:[%s263 + $0x1c] sm:$0xf] %v1442
        %1475 = vst [vmem:[%s263 + $0x20] sm:$0xf] %v1443
        %1476 = vst [vmem:[%s263 + $0x24] sm:$0xf] %v1444
        %1477 = vst [vmem:[%s263 + $0x28] sm:$0xf] %v1445
        %1478 = vst [vmem:[%s263 + $0x2c] sm:$0xf] %v1446
        %1479 = vst [vmem:[%s263 + $0x30] sm:$0xf] %v1447
        %1480 = vst [vmem:[%s263 + $0x34] sm:$0xf] %v1448
        %1481 = vst [vmem:[%s263 + $0x38] sm:$0xf] %v1449
        %1482 = vst [vmem:[%s263 + $0x3c] sm:$0xf] %v1450
        %1483 = vst [vmem:[%s263 + $0x40] sm:$0xf] %v1451
        %1484 = vst [vmem:[%s263 + $0x44] sm:$0xf] %v1452
        %1485 = vst [vmem:[%s263 + $0x48] sm:$0xf] %v1453
        %1486 = vst [vmem:[%s263 + $0x4c] sm:$0xf] %v1454
        %1487 = vst [vmem:[%s263 + $0x50] sm:$0xf] %v1455
        %1488 = vst [vmem:[%s263 + $0x54] sm:$0xf] %v1456
        %1489 = vst [vmem:[%s263 + $0x58] sm:$0xf] %v1457
        %1490 = vst [vmem:[%s263 + $0x5c] sm:$0xf] %v1458
        %1491 = vst [vmem:[%s263 + $0x60] sm:$0xf] %v1459
        %1492 = vst [vmem:[%s263 + $0x64] sm:$0xf] %v1460
        %1493 = vst [vmem:[%s263 + $0x68] sm:$0xf] %v1461
        %1494 = vst [vmem:[%s263 + $0x6c] sm:$0xf] %v1462
        %1495 = vst [vmem:[%s263 + $0x70] sm:$0xf] %v1463
        %1496 = vst [vmem:[%s263 + $0x74] sm:$0xf] %v1464
        %1497 = vst [vmem:[%s263 + $0x78] sm:$0xf] %v1465
        %1498 = vst [vmem:[%s263 + $0x7c] sm:$0xf] %v1466
        %v1499 = vadd.f32 %v1403, %v1404
        %v1500 = vadd.f32 %v1499, %v1405
        %v1501 = vadd.f32 %v1500, %v1406
        %v1502 = vadd.f32 %v1501, %v1407
        %v1503 = vadd.f32 %v1502, %v1408
        %v1504 = vadd.f32 %v1503, %v1409
        %v1505 = vadd.f32 %v1504, %v1410
        %v1506 = vadd.f32 %v1505, %v1411
        %v1507 = vadd.f32 %v1506, %v1412
        %v1508 = vadd.f32 %v1507, %v1413
        %v1509 = vadd.f32 %v1508, %v1414
        %v1510 = vadd.f32 %v1509, %v1415
        %v1511 = vadd.f32 %v1510, %v1416
        %v1512 = vadd.f32 %v1511, %v1417
        %v1513 = vadd.f32 %v1512, %v1418
        %v1514 = vadd.f32 %v1513, %v1419
        %v1515 = vadd.f32 %v1514, %v1420
        %v1516 = vadd.f32 %v1515, %v1421
        %v1517 = vadd.f32 %v1516, %v1422
        %v1518 = vadd.f32 %v1517, %v1423
        %v1519 = vadd.f32 %v1518, %v1424
        %v1520 = vadd.f32 %v1519, %v1425
        %v1521 = vadd.f32 %v1520, %v1426
        %v1522 = vadd.f32 %v1521, %v1427
        %v1523 = vadd.f32 %v1522, %v1428
        %v1524 = vadd.f32 %v1523, %v1429
        %v1525 = vadd.f32 %v1524, %v1430
        %v1526 = vadd.f32 %v1525, %v1431
        %v1527 = vadd.f32 %v1526, %v1432
        %v1528 = vadd.f32 %v1527, %v1433
        %v1529 = vadd.f32 %v1528, %v1434
        %v1530 = vrot.slane %v1529, 4
        %v1531 = vadd.f32 %v1529, %v1530
        %v1532 = vrot.slane %v1531, 2
        %v1533 = vadd.f32 %v1531, %v1532
        %v1534 = vrot.slane %v1533, 1
        %v1535 = vadd.f32 %v1533, %v1534
        %v1536 = vmul.f32 %v1403, %v1403
        %v1537 = vmul.f32 %v1404, %v1404
        %v1538 = vmul.f32 %v1405, %v1405
        %v1539 = vmul.f32 %v1406, %v1406
        %v1540 = vmul.f32 %v1407, %v1407
        %v1541 = vmul.f32 %v1408, %v1408
        %v1542 = vmul.f32 %v1409, %v1409
        %v1543 = vmul.f32 %v1410, %v1410
        %v1544 = vmul.f32 %v1411, %v1411
        %v1545 = vmul.f32 %v1412, %v1412
        %v1546 = vmul.f32 %v1413, %v1413
        %v1547 = vmul.f32 %v1414, %v1414
        %v1548 = vmul.f32 %v1415, %v1415
        %v1549 = vmul.f32 %v1416, %v1416
        %v1550 = vmul.f32 %v1417, %v1417
        %v1551 = vmul.f32 %v1418, %v1418
        %v1552 = vmul.f32 %v1419, %v1419
        %v1553 = vmul.f32 %v1420, %v1420
        %v1554 = vmul.f32 %v1421, %v1421
        %v1555 = vmul.f32 %v1422, %v1422
        %v1556 = vmul.f32 %v1423, %v1423
        %v1557 = vmul.f32 %v1424, %v1424
        %v1558 = vmul.f32 %v1425, %v1425
        %v1559 = vmul.f32 %v1426, %v1426
        %v1560 = vmul.f32 %v1427, %v1427
        %v1561 = vmul.f32 %v1428, %v1428
        %v1562 = vmul.f32 %v1429, %v1429
        %v1563 = vmul.f32 %v1430, %v1430
        %v1564 = vmul.f32 %v1431, %v1431
        %v1565 = vmul.f32 %v1432, %v1432
        %v1566 = vmul.f32 %v1433, %v1433
        %v1567 = vmul.f32 %v1434, %v1434
        %v1568 = vadd.f32 %v1536, %v1537
        %v1569 = vadd.f32 %v1568, %v1538
        %v1570 = vadd.f32 %v1569, %v1539
        %v1571 = vadd.f32 %v1570, %v1540
        %v1572 = vadd.f32 %v1571, %v1541
        %v1573 = vadd.f32 %v1572, %v1542
        %v1574 = vadd.f32 %v1573, %v1543
        %v1575 = vadd.f32 %v1574, %v1544
        %v1576 = vadd.f32 %v1575, %v1545
        %v1577 = vadd.f32 %v1576, %v1546
        %v1578 = vadd.f32 %v1577, %v1547
        %v1579 = vadd.f32 %v1578, %v1548
        %v1580 = vadd.f32 %v1579, %v1549
        %v1581 = vadd.f32 %v1580, %v1550
        %v1582 = vadd.f32 %v1581, %v1551
        %v1583 = vadd.f32 %v1582, %v1552
        %v1584 = vadd.f32 %v1583, %v1553
        %v1585 = vadd.f32 %v1584, %v1554
        %v1586 = vadd.f32 %v1585, %v1555
        %v1587 = vadd.f32 %v1586, %v1556
        %v1588 = vadd.f32 %v1587, %v1557
        %v1589 = vadd.f32 %v1588, %v1558
        %v1590 = vadd.f32 %v1589, %v1559
        %v1591 = vadd.f32 %v1590, %v1560
        %v1592 = vadd.f32 %v1591, %v1561
        %v1593 = vadd.f32 %v1592, %v1562
        %v1594 = vadd.f32 %v1593, %v1563
        %v1595 = vadd.f32 %v1594, %v1564
        %v1596 = vadd.f32 %v1595, %v1565
        %v1597 = vadd.f32 %v1596, %v1566
        %v1598 = vadd.f32 %v1597, %v1567
        %v1599 = vrot.slane %v1598, 4
        %v1600 = vadd.f32 %v1598, %v1599
        %v1601 = vrot.slane %v1600, 2
        %v1602 = vadd.f32 %v1600, %v1601
        %v1603 = vrot.slane %v1602, 1
        %v1604 = vadd.f32 %v1602, %v1603
        %vm1605 = vcmask 1040384
        %v1606 = vsel %vm1605, %v1535, %v1604
        %1607 = vst [vmem:[%s271] sm:$0x3] %v1606
      $region36: #{generator_forward.33} parent=27 // pred_fallthru
        _
      %s1608 = smul.u32 32, %s20
      %p1609 = scmp.lt.s32.totalorder %s1608, 63
      %s1610 = scalar_select %p1609, %s1608, 63
      %p1611 = scmp.lt.s32.totalorder %s21, 0
      %s1612 = scalar_select %p1611, %s21, 0
      %s1613 = sadd.s32 %s1612, %s1610
      %s1614 = smul.addr %s1613, 4
      %s1615 = scalar_lea.vmem %s2, %s1614
      %p1616 = scmp.lt.s32.totalorder %s20, 1
      %s1617 = scalar_select %p1616, %s20, 1
      %p1618 = scmp.lt.s32.totalorder %s21, 0
      %s1619 = scalar_select %p1618, %s21, 0
      %s1620 = sadd.s32 %s1619, %s1617
      %s1621 = smul.addr %s1620, 2
      %s1622 = scalar_lea.vmem %s3, %s1621
      // Predicated region
      $region37: #{generator_forward.33} parent=27 // pred_check
        %p1623 = pneg %p110
      $region38: #{generator_forward.33} parent=27 // pred_check_branch
        %1625 = sbr.rel (%p1623) target = $region40
      $region39: #{generator_forward.33} parent=27 // pred_region
        %s1626 = smul.u32 32, %s20
      $region40: #{generator_forward.33} parent=27 // pred_fallthru
        _
      // Predicated region
      $region41: #{generator_forward.33} parent=27 // pred_check
        %p1627 = pneg %p138
      $region42: #{generator_forward.33} parent=27 // pred_check_branch
        %1629 = sbr.rel (%p1627) target = $region44
      $region43: #{generator_forward.33} parent=27 // pred_region
        _
      $region44: #{generator_forward.33} parent=27 // pred_fallthru
        _
    $region28: #{generator_forward.33} parent=5 // pred_fallthru
      _
    %p1630 = scmp.le.s32.totalorder 2, %s10
    // Predicated region
    $region45: #{generator_forward.33} parent=5 // pred_check
      %p1631 = pneg %p1630
    $region46: #{generator_forward.33} parent=5 // pred_check_branch
      %1633 = sbr.rel (%p1631) target = $region48
    $region47: #{generator_forward.33} parent=5 // pred_region
      %s1634 = ssub.s32 %s10, 2
      // Predicated region
      $region49: #{generator_forward.33} parent=47 // pred_check
        %p1635 = pneg %p116
      $region50: #{generator_forward.33} parent=47 // pred_check_branch
        %1637 = sbr.rel (%p1635) target = $region52
      $region51: #{generator_forward.33} parent=47 // pred_region
        %s1638 = smul.u32 32, %s23
        %p1639 = scmp.lt.s32.totalorder %s1638, 63
        %s1640 = scalar_select %p1639, %s1638, 63
        %p1641 = scmp.lt.s32.totalorder %s24, 0
        %s1642 = scalar_select %p1641, %s24, 0
        %s1643 = sadd.s32 %s1642, %s1640
        %s1644 = smul.addr %s1643, 4
        %s1645 = scalar_lea.vmem %s2, %s1644
      $region52: #{generator_forward.33} parent=47 // pred_fallthru
        _
      // Predicated region
      $region53: #{generator_forward.33} parent=47 // pred_check
        %p1646 = pneg %p144
      $region54: #{generator_forward.33} parent=47 // pred_check_branch
        %1648 = sbr.rel (%p1646) target = $region56
      $region55: #{generator_forward.33} parent=47 // pred_region
        %p1649 = scmp.lt.s32.totalorder %s23, 1
        %s1650 = scalar_select %p1649, %s23, 1
        %p1651 = scmp.lt.s32.totalorder %s24, 0
        %s1652 = scalar_select %p1651, %s24, 0
        %s1653 = sadd.s32 %s1652, %s1650
        %s1654 = smul.addr %s1653, 2
        %s1655 = scalar_lea.vmem %s3, %s1654
      $region56: #{generator_forward.33} parent=47 // pred_fallthru
        _
    $region48: #{generator_forward.33} parent=5 // pred_fallthru
      _
  $region6: #{generator_forward.33} parent=0 // loop_footer
    %s14 = sadd.s32 1, %s10
  $region7: #{generator_forward.33} parent=0 // loop_footer_branch
    %9 = sbr.rel target = $region3
  $region8: #{generator_forward.33} parent=0 // loop_exit
    _

// kernel: generator_forward.37
$region0: #{generator_forward.37}
  #allocation0 [shape = 'u32[]', space=smem, size = 0x4, offset = 0x4, fixed_abs, tag = 'smem constant byte address 0x4 - core index']
  #allocation1 [shape = 'u32[72,128]{1,0:T(1,128)}', space=vmem, size = 0x9000, scoped, tag = 'internal scratch']
  %s0 = inlined_call_operand.vmem [shape: bf16[2048,128], index: 0, kind: input, shape index: {}]
  %s1 = inlined_call_operand.vmem [shape: f32[1,128], index: 1, kind: input, shape index: {}]
  %s2 = inlined_call_operand.vmem [shape: f32[1,128], index: 2, kind: input, shape index: {}]
  %s3 = inlined_call_operand.vmem [shape: bf16[2048,128], index: 3, kind: output, shape index: {}]
  %s4 = sld [smem:[#allocation0]]
  $region45: #{generator_forward.37} parent=0
    _
  %s6 = ssub.s32 1, %s4
  %s7 = scalar_select 0, %s6, %s4
  loop: start=0, step=1, limit=4
  $region2: #{generator_forward.37} parent=0 // loop_pre_header
    _
  $region3: #{generator_forward.37} parent=0 // loop_header
    %s9 = sphi 0, %s13
    %p10 = scmp.ge.s32.totalorder %s9, 4
    %s19 = sphi 0, %s21
    %s22 = sphi 0, %s19
    %s23 = sphi 0, %s22
    %s39 = sphi 0, %s23
    %s43 = sphi 0, %s43
    %s45 = sphi 0, %s43
    %s46 = sphi 0, %s45
    %s60 = sphi 0, %s46
    %s64 = sphi 0, %s64
    %s66 = sphi 0, %s64
    %s67 = sphi 0, %s66
    %s81 = sphi 0, %s67
    %s87 = sphi 0, %s89
    %s90 = sphi 0, %s87
    %s91 = sphi 0, %s90
    %s107 = sphi 0, %s91
  $region4: #{generator_forward.37} parent=0 // loop_header_branch
    %12 = sbr.rel (%p10) target = $region8
  $region5: #{generator_forward.37} parent=0 // loop_body
    %s14 = ssub.s32 %s9, 1
    %s15 = ssub.s32 %s9, 2
    %s16 = sadd.s32 %s9, 1
    %s17 = ssub.s32 %s9, %s16
    %p18 = scmp.eq.s32.totalorder %s17, 0
    %s20 = sadd.s32 %s19, 1
    %s21 = scalar_select %p18, %s19, %s20
    %p24 = pneg %p18
    %p25 = scmp.eq.s32.totalorder %s9, 1
    %p26 = por %p24, %p25
    %p27 = scmp.ne.s32.totalorder %s19, %s22
    %p28 = scmp.eq.s32.totalorder %s9, 0
    %p29 = por %p27, %p28
    %p30 = scmp.ne.s32.totalorder %s19, %s22
    %p31 = scmp.eq.s32.totalorder %s14, 1
    %p32 = por %p30, %p31
    %p33 = scmp.ne.s32.totalorder %s22, %s23
    %p34 = scmp.eq.s32.totalorder %s14, 0
    %p35 = por %p33, %p34
    %p36 = scmp.ne.s32.totalorder %s22, %s23
    %p37 = scmp.eq.s32.totalorder %s15, 1
    %p38 = por %p36, %p37
    %p40 = scmp.ne.s32.totalorder %s23, %s39
    %p41 = scmp.eq.s32.totalorder %s15, 0
    %p42 = por %p40, %p41
    %s44 = sadd.s32 %s43, 1
    %p47 = scmp.eq.s32.totalorder %s9, 1
    %p48 = scmp.ne.s32.totalorder %s43, %s45
    %p49 = scmp.eq.s32.totalorder %s9, 0
    %p50 = por %p48, %p49
    %p51 = scmp.ne.s32.totalorder %s43, %s45
    %p52 = scmp.eq.s32.totalorder %s14, 1
    %p53 = por %p51, %p52
    %p54 = scmp.ne.s32.totalorder %s45, %s46
    %p55 = scmp.eq.s32.totalorder %s14, 0
    %p56 = por %p54, %p55
    %p57 = scmp.ne.s32.totalorder %s45, %s46
    %p58 = scmp.eq.s32.totalorder %s15, 1
    %p59 = por %p57, %p58
    %p61 = scmp.ne.s32.totalorder %s46, %s60
    %p62 = scmp.eq.s32.totalorder %s15, 0
    %p63 = por %p61, %p62
    %s65 = sadd.s32 %s64, 1
    %p68 = scmp.eq.s32.totalorder %s9, 1
    %p69 = scmp.ne.s32.totalorder %s64, %s66
    %p70 = scmp.eq.s32.totalorder %s9, 0
    %p71 = por %p69, %p70
    %p72 = scmp.ne.s32.totalorder %s64, %s66
    %p73 = scmp.eq.s32.totalorder %s14, 1
    %p74 = por %p72, %p73
    %p75 = scmp.ne.s32.totalorder %s66, %s67
    %p76 = scmp.eq.s32.totalorder %s14, 0
    %p77 = por %p75, %p76
    %p78 = scmp.ne.s32.totalorder %s66, %s67
    %p79 = scmp.eq.s32.totalorder %s15, 1
    %p80 = por %p78, %p79
    %p82 = scmp.ne.s32.totalorder %s67, %s81
    %p83 = scmp.eq.s32.totalorder %s15, 0
    %p84 = por %p82, %p83
    %s85 = ssub.s32 %s9, %s16
    %p86 = scmp.eq.s32.totalorder %s85, 0
    %s88 = sadd.s32 %s87, 1
    %s89 = scalar_select %p86, %s87, %s88
    %p92 = pneg %p86
    %p93 = scmp.eq.s32.totalorder %s9, 1
    %p94 = por %p92, %p93
    %p95 = scmp.ne.s32.totalorder %s87, %s90
    %p96 = scmp.eq.s32.totalorder %s9, 0
    %p97 = por %p95, %p96
    %p98 = scmp.ne.s32.totalorder %s87, %s90
    %p99 = scmp.eq.s32.totalorder %s14, 1
    %p100 = por %p98, %p99
    %p101 = scmp.ne.s32.totalorder %s90, %s91
    %p102 = scmp.eq.s32.totalorder %s14, 0
    %p103 = por %p101, %p102
    %p104 = scmp.ne.s32.totalorder %s90, %s91
    %p105 = scmp.eq.s32.totalorder %s15, 1
    %p106 = por %p104, %p105
    %p108 = scmp.ne.s32.totalorder %s91, %s107
    %p109 = scmp.eq.s32.totalorder %s15, 0
    %p110 = por %p108, %p109
    %p111 = scmp.le.s32.totalorder 1, %s9
    %p112 = scmp.lt.s32.totalorder %s9, 3
    %p113 = pnand %p111, %p112
    %p114 = pneg %p113
    // Predicated region
    $region9: #{generator_forward.37} parent=5 // pred_check
      _
    $region10: #{generator_forward.37} parent=5 // pred_check_branch
      %116 = sbr.rel (%p113) target = $region12
    $region11: #{generator_forward.37} parent=5 // pred_region
      %s117 = ssub.s32 %s9, 1
      // Predicated region
      $region13: #{generator_forward.37} parent=11 // pred_check
        %p118 = pneg %p56
      $region14: #{generator_forward.37} parent=11 // pred_check_branch
        %120 = sbr.rel (%p118) target = $region16
      $region15: #{generator_forward.37} parent=11 // pred_region
        _
      $region16: #{generator_forward.37} parent=11 // pred_fallthru
        _
      // Predicated region
      $region17: #{generator_forward.37} parent=11 // pred_check
        %p121 = pneg %p77
      $region18: #{generator_forward.37} parent=11 // pred_check_branch
        %123 = sbr.rel (%p121) target = $region20
      $region19: #{generator_forward.37} parent=11 // pred_region
        _
      $region20: #{generator_forward.37} parent=11 // pred_fallthru
        _
    $region12: #{generator_forward.37} parent=5 // pred_fallthru
      _
    %p124 = scmp.lt.s32.totalorder %s9, 2
    // Predicated region
    $region21: #{generator_forward.37} parent=5 // pred_check
      %p125 = pneg %p124
    $region22: #{generator_forward.37} parent=5 // pred_check_branch
      %127 = sbr.rel (%p125) target = $region24
    $region23: #{generator_forward.37} parent=5 // pred_region
      // Predicated region
      $region25: #{generator_forward.37} parent=23 // pred_check
        %p128 = pneg %p29
      $region26: #{generator_forward.37} parent=23 // pred_check_branch
        %130 = sbr.rel (%p128) target = $region28
      $region27: #{generator_forward.37} parent=23 // pred_region
        %s131 = smul.u32 128, %s9
        %p132 = scmp.lt.s32.totalorder %s131, 255
        %s133 = scalar_select %p132, %s131, 255
        %s134 = smul.addr %s133, 4
        %s135 = scalar_lea.vmem %s0, %s134
        %s136 = smul.u32 128, %s9
      $region28: #{generator_forward.37} parent=23 // pred_fallthru
        _
    $region24: #{generator_forward.37} parent=5 // pred_fallthru
      _
    %p137 = scmp.le.s32.totalorder 1, %s9
    %p138 = scmp.lt.s32.totalorder %s9, 3
    %p139 = pnand %p137, %p138
    %p140 = pneg %p139
    // Predicated region
    $region29: #{generator_forward.37} parent=5 // pred_check
      _
    $region30: #{generator_forward.37} parent=5 // pred_check_branch
      %142 = sbr.rel (%p139) target = $region32
    $region31: #{generator_forward.37} parent=5 // pred_region
      %s143 = ssub.s32 %s9, 1
      %s144 = smul.u32 128, %s14
      %p145 = scmp.lt.s32.totalorder %s144, 255
      %s146 = scalar_select %p145, %s144, 255
      %s147 = smul.addr %s146, 4
      %s148 = scalar_lea.vmem %s0, %s147
      %p149 = pneg %p35
      %p150 = pneg %p32
      %p151 = pneg %p56
      %p152 = pneg %p53
      %p153 = pneg %p77
      %p154 = pneg %p74
      %p155 = pneg %p103
      %p156 = pneg %p100
      %s157 = smul.u32 128, %s14
      %p158 = scmp.lt.s32.totalorder %s157, 255
      %s159 = scalar_select %p158, %s157, 255
      %s160 = smul.addr %s159, 4
      %s161 = scalar_lea.vmem %s3, %s160
      %s162 = smul.u32 128, %s14
      %p163 = scmp.lt.s32.totalorder %s162, 255
      %s164 = scalar_select %p163, %s162, 255
      %s165 = smul.addr %s164, 4
      %s166 = scalar_lea.vmem %s0, %s165
      %s167 = smul.u32 128, %s14
      %s168 = smul.u32 128, %s14
      %p169 = scmp.lt.s32.totalorder %s168, 255
      %s170 = scalar_select %p169, %s168, 255
      %s171 = smul.addr %s170, 4
      %s172 = scalar_lea.vmem %s3, %s171
      %s173 = smul.u32 128, %s14
      %v174 = vld [vmem:[%s166] sm:$0xf]
      %v175 = vld [vmem:[%s166 + $0x4] sm:$0xf]
      %v176 = vld [vmem:[%s166 + $0x8] sm:$0xf]
      %v177 = vld [vmem:[%s166 + $0xc] sm:$0xf]
      %v178 = vld [vmem:[%s166 + $0x10] sm:$0xf]
      %v179 = vld [vmem:[%s166 + $0x14] sm:$0xf]
      %v180 = vld [vmem:[%s166 + $0x18] sm:$0xf]
      %v181 = vld [vmem:[%s166 + $0x1c] sm:$0xf]
      %v182 = vld [vmem:[%s166 + $0x20] sm:$0xf]
      %v183 = vld [vmem:[%s166 + $0x24] sm:$0xf]
      %v184 = vld [vmem:[%s166 + $0x28] sm:$0xf]
      %v185 = vld [vmem:[%s166 + $0x2c] sm:$0xf]
      %v186 = vld [vmem:[%s166 + $0x30] sm:$0xf]
      %v187 = vld [vmem:[%s166 + $0x34] sm:$0xf]
      %v188 = vld [vmem:[%s166 + $0x38] sm:$0xf]
      %v189 = vld [vmem:[%s166 + $0x3c] sm:$0xf]
      %v190 = vld [vmem:[%s166 + $0x40] sm:$0xf]
      %v191 = vld [vmem:[%s166 + $0x44] sm:$0xf]
      %v192 = vld [vmem:[%s166 + $0x48] sm:$0xf]
      %v193 = vld [vmem:[%s166 + $0x4c] sm:$0xf]
      %v194 = vld [vmem:[%s166 + $0x50] sm:$0xf]
      %v195 = vld [vmem:[%s166 + $0x54] sm:$0xf]
      %v196 = vld [vmem:[%s166 + $0x58] sm:$0xf]
      %v197 = vld [vmem:[%s166 + $0x5c] sm:$0xf]
      %v198 = vld [vmem:[%s166 + $0x60] sm:$0xf]
      %v199 = vld [vmem:[%s166 + $0x64] sm:$0xf]
      %v200 = vld [vmem:[%s166 + $0x68] sm:$0xf]
      %v201 = vld [vmem:[%s166 + $0x6c] sm:$0xf]
      %v202 = vld [vmem:[%s166 + $0x70] sm:$0xf]
      %v203 = vld [vmem:[%s166 + $0x74] sm:$0xf]
      %v204 = vld [vmem:[%s166 + $0x78] sm:$0xf]
      %v205 = vld [vmem:[%s166 + $0x7c] sm:$0xf]
      %v206 = vld [vmem:[%s166 + $0x80] sm:$0xf]
      %v207 = vld [vmem:[%s166 + $0x84] sm:$0xf]
      %v208 = vld [vmem:[%s166 + $0x88] sm:$0xf]
      %v209 = vld [vmem:[%s166 + $0x8c] sm:$0xf]
      %v210 = vld [vmem:[%s166 + $0x90] sm:$0xf]
      %v211 = vld [vmem:[%s166 + $0x94] sm:$0xf]
      %v212 = vld [vmem:[%s166 + $0x98] sm:$0xf]
      %v213 = vld [vmem:[%s166 + $0x9c] sm:$0xf]
      %v214 = vld [vmem:[%s166 + $0xa0] sm:$0xf]
      %v215 = vld [vmem:[%s166 + $0xa4] sm:$0xf]
      %v216 = vld [vmem:[%s166 + $0xa8] sm:$0xf]
      %v217 = vld [vmem:[%s166 + $0xac] sm:$0xf]
      %v218 = vld [vmem:[%s166 + $0xb0] sm:$0xf]
      %v219 = vld [vmem:[%s166 + $0xb4] sm:$0xf]
      %v220 = vld [vmem:[%s166 + $0xb8] sm:$0xf]
      %v221 = vld [vmem:[%s166 + $0xbc] sm:$0xf]
      %v222 = vld [vmem:[%s166 + $0xc0] sm:$0xf]
      %v223 = vld [vmem:[%s166 + $0xc4] sm:$0xf]
      %v224 = vld [vmem:[%s166 + $0xc8] sm:$0xf]
      %v225 = vld [vmem:[%s166 + $0xcc] sm:$0xf]
      %v226 = vld [vmem:[%s166 + $0xd0] sm:$0xf]
      %v227 = vld [vmem:[%s166 + $0xd4] sm:$0xf]
      %v228 = vld [vmem:[%s166 + $0xd8] sm:$0xf]
      %v229 = vld [vmem:[%s166 + $0xdc] sm:$0xf]
      %v230 = vld [vmem:[%s166 + $0xe0] sm:$0xf]
      %v231 = vld [vmem:[%s166 + $0xe4] sm:$0xf]
      %v232 = vld [vmem:[%s166 + $0xe8] sm:$0xf]
      %v233 = vld [vmem:[%s166 + $0xec] sm:$0xf]
      %v234 = vld [vmem:[%s166 + $0xf0] sm:$0xf]
      %v235 = vld [vmem:[%s166 + $0xf4] sm:$0xf]
      %v236 = vld [vmem:[%s166 + $0xf8] sm:$0xf]
      %v237 = vld [vmem:[%s166 + $0xfc] sm:$0xf]
      %v238 = vld [vmem:[%s166 + $0x100] sm:$0xf]
      %v239 = vld [vmem:[%s166 + $0x104] sm:$0xf]
      %v240 = vld [vmem:[%s166 + $0x108] sm:$0xf]
      %v241 = vld [vmem:[%s166 + $0x10c] sm:$0xf]
      %v242 = vld [vmem:[%s166 + $0x110] sm:$0xf]
      %v243 = vld [vmem:[%s166 + $0x114] sm:$0xf]
      %v244 = vld [vmem:[%s166 + $0x118] sm:$0xf]
      %v245 = vld [vmem:[%s166 + $0x11c] sm:$0xf]
      %v246 = vld [vmem:[%s166 + $0x120] sm:$0xf]
      %v247 = vld [vmem:[%s166 + $0x124] sm:$0xf]
      %v248 = vld [vmem:[%s166 + $0x128] sm:$0xf]
      %v249 = vld [vmem:[%s166 + $0x12c] sm:$0xf]
      %v250 = vld [vmem:[%s166 + $0x130] sm:$0xf]
      %v251 = vld [vmem:[%s166 + $0x134] sm:$0xf]
      %v252 = vld [vmem:[%s166 + $0x138] sm:$0xf]
      %v253 = vld [vmem:[%s166 + $0x13c] sm:$0xf]
      %v254 = vld [vmem:[%s166 + $0x140] sm:$0xf]
      %v255 = vld [vmem:[%s166 + $0x144] sm:$0xf]
      %v256 = vld [vmem:[%s166 + $0x148] sm:$0xf]
      %v257 = vld [vmem:[%s166 + $0x14c] sm:$0xf]
      %v258 = vld [vmem:[%s166 + $0x150] sm:$0xf]
      %v259 = vld [vmem:[%s166 + $0x154] sm:$0xf]
      %v260 = vld [vmem:[%s166 + $0x158] sm:$0xf]
      %v261 = vld [vmem:[%s166 + $0x15c] sm:$0xf]
      %v262 = vld [vmem:[%s166 + $0x160] sm:$0xf]
      %v263 = vld [vmem:[%s166 + $0x164] sm:$0xf]
      %v264 = vld [vmem:[%s166 + $0x168] sm:$0xf]
      %v265 = vld [vmem:[%s166 + $0x16c] sm:$0xf]
      %v266 = vld [vmem:[%s166 + $0x170] sm:$0xf]
      %v267 = vld [vmem:[%s166 + $0x174] sm:$0xf]
      %v268 = vld [vmem:[%s166 + $0x178] sm:$0xf]
      %v269 = vld [vmem:[%s166 + $0x17c] sm:$0xf]
      %v270 = vld [vmem:[%s166 + $0x180] sm:$0xf]
      %v271 = vld [vmem:[%s166 + $0x184] sm:$0xf]
      %v272 = vld [vmem:[%s166 + $0x188] sm:$0xf]
      %v273 = vld [vmem:[%s166 + $0x18c] sm:$0xf]
      %v274 = vld [vmem:[%s166 + $0x190] sm:$0xf]
      %v275 = vld [vmem:[%s166 + $0x194] sm:$0xf]
      %v276 = vld [vmem:[%s166 + $0x198] sm:$0xf]
      %v277 = vld [vmem:[%s166 + $0x19c] sm:$0xf]
      %v278 = vld [vmem:[%s166 + $0x1a0] sm:$0xf]
      %v279 = vld [vmem:[%s166 + $0x1a4] sm:$0xf]
      %v280 = vld [vmem:[%s166 + $0x1a8] sm:$0xf]
      %v281 = vld [vmem:[%s166 + $0x1ac] sm:$0xf]
      %v282 = vld [vmem:[%s166 + $0x1b0] sm:$0xf]
      %v283 = vld [vmem:[%s166 + $0x1b4] sm:$0xf]
      %v284 = vld [vmem:[%s166 + $0x1b8] sm:$0xf]
      %v285 = vld [vmem:[%s166 + $0x1bc] sm:$0xf]
      %v286 = vld [vmem:[%s166 + $0x1c0] sm:$0xf]
      %v287 = vld [vmem:[%s166 + $0x1c4] sm:$0xf]
      %v288 = vld [vmem:[%s166 + $0x1c8] sm:$0xf]
      %v289 = vld [vmem:[%s166 + $0x1cc] sm:$0xf]
      %v290 = vld [vmem:[%s166 + $0x1d0] sm:$0xf]
      %v291 = vld [vmem:[%s166 + $0x1d4] sm:$0xf]
      %v292 = vld [vmem:[%s166 + $0x1d8] sm:$0xf]
      %v293 = vld [vmem:[%s166 + $0x1dc] sm:$0xf]
      %v294 = vld [vmem:[%s166 + $0x1e0] sm:$0xf]
      %v295 = vld [vmem:[%s166 + $0x1e4] sm:$0xf]
      %v296 = vld [vmem:[%s166 + $0x1e8] sm:$0xf]
      %v297 = vld [vmem:[%s166 + $0x1ec] sm:$0xf]
      %v298 = vld [vmem:[%s166 + $0x1f0] sm:$0xf]
      %v299 = vld [vmem:[%s166 + $0x1f4] sm:$0xf]
      %v300 = vld [vmem:[%s166 + $0x1f8] sm:$0xf]
      %v301 = vld [vmem:[%s166 + $0x1fc] sm:$0xf]
      %v302 = vunpack.c.l.bf16 %v174
      %v303 = vunpack.c.l.bf16 %v175
      %v304 = vunpack.c.l.bf16 %v176
      %v305 = vunpack.c.l.bf16 %v177
      %v306 = vunpack.c.l.bf16 %v178
      %v307 = vunpack.c.l.bf16 %v179
      %v308 = vunpack.c.l.bf16 %v180
      %v309 = vunpack.c.l.bf16 %v181
      %v310 = vunpack.c.l.bf16 %v182
      %v311 = vunpack.c.l.bf16 %v183
      %v312 = vunpack.c.l.bf16 %v184
      %v313 = vunpack.c.l.bf16 %v185
      %v314 = vunpack.c.l.bf16 %v186
      %v315 = vunpack.c.l.bf16 %v187
      %v316 = vunpack.c.l.bf16 %v188
      %v317 = vunpack.c.l.bf16 %v189
      %v318 = vunpack.c.l.bf16 %v190
      %v319 = vunpack.c.l.bf16 %v191
      %v320 = vunpack.c.l.bf16 %v192
      %v321 = vunpack.c.l.bf16 %v193
      %v322 = vunpack.c.l.bf16 %v194
      %v323 = vunpack.c.l.bf16 %v195
      %v324 = vunpack.c.l.bf16 %v196
      %v325 = vunpack.c.l.bf16 %v197
      %v326 = vunpack.c.l.bf16 %v198
      %v327 = vunpack.c.l.bf16 %v199
      %v328 = vunpack.c.l.bf16 %v200
      %v329 = vunpack.c.l.bf16 %v201
      %v330 = vunpack.c.l.bf16 %v202
      %v331 = vunpack.c.l.bf16 %v203
      %v332 = vunpack.c.l.bf16 %v204
      %v333 = vunpack.c.l.bf16 %v205
      %v334 = vunpack.c.l.bf16 %v206
      %v335 = vunpack.c.l.bf16 %v207
      %v336 = vunpack.c.l.bf16 %v208
      %v337 = vunpack.c.l.bf16 %v209
      %v338 = vunpack.c.l.bf16 %v210
      %v339 = vunpack.c.l.bf16 %v211
      %v340 = vunpack.c.l.bf16 %v212
      %v341 = vunpack.c.l.bf16 %v213
      %v342 = vunpack.c.l.bf16 %v214
      %v343 = vunpack.c.l.bf16 %v215
      %v344 = vunpack.c.l.bf16 %v216
      %v345 = vunpack.c.l.bf16 %v217
      %v346 = vunpack.c.l.bf16 %v218
      %v347 = vunpack.c.l.bf16 %v219
      %v348 = vunpack.c.l.bf16 %v220
      %v349 = vunpack.c.l.bf16 %v221
      %v350 = vunpack.c.l.bf16 %v222
      %v351 = vunpack.c.l.bf16 %v223
      %v352 = vunpack.c.l.bf16 %v224
      %v353 = vunpack.c.l.bf16 %v225
      %v354 = vunpack.c.l.bf16 %v226
      %v355 = vunpack.c.l.bf16 %v227
      %v356 = vunpack.c.l.bf16 %v228
      %v357 = vunpack.c.l.bf16 %v229
      %v358 = vunpack.c.l.bf16 %v230
      %v359 = vunpack.c.l.bf16 %v231
      %v360 = vunpack.c.l.bf16 %v232
      %v361 = vunpack.c.l.bf16 %v233
      %v362 = vunpack.c.l.bf16 %v234
      %v363 = vunpack.c.l.bf16 %v235
      %v364 = vunpack.c.l.bf16 %v236
      %v365 = vunpack.c.l.bf16 %v237
      %v366 = vunpack.c.l.bf16 %v238
      %v367 = vunpack.c.l.bf16 %v239
      %v368 = vunpack.c.l.bf16 %v240
      %v369 = vunpack.c.l.bf16 %v241
      %v370 = vunpack.c.l.bf16 %v242
      %v371 = vunpack.c.l.bf16 %v243
      %v372 = vunpack.c.l.bf16 %v244
      %v373 = vunpack.c.l.bf16 %v245
      %v374 = vunpack.c.l.bf16 %v246
      %v375 = vunpack.c.l.bf16 %v247
      %v376 = vunpack.c.l.bf16 %v248
      %v377 = vunpack.c.l.bf16 %v249
      %v378 = vunpack.c.l.bf16 %v250
      %v379 = vunpack.c.l.bf16 %v251
      %v380 = vunpack.c.l.bf16 %v252
      %v381 = vunpack.c.l.bf16 %v253
      %v382 = vunpack.c.l.bf16 %v254
      %v383 = vunpack.c.l.bf16 %v255
      %v384 = vunpack.c.l.bf16 %v256
      %v385 = vunpack.c.l.bf16 %v257
      %v386 = vunpack.c.l.bf16 %v258
      %v387 = vunpack.c.l.bf16 %v259
      %v388 = vunpack.c.l.bf16 %v260
      %v389 = vunpack.c.l.bf16 %v261
      %v390 = vunpack.c.l.bf16 %v262
      %v391 = vunpack.c.l.bf16 %v263
      %v392 = vunpack.c.l.bf16 %v264
      %v393 = vunpack.c.l.bf16 %v265
      %v394 = vunpack.c.l.bf16 %v266
      %v395 = vunpack.c.l.bf16 %v267
      %v396 = vunpack.c.l.bf16 %v268
      %v397 = vunpack.c.l.bf16 %v269
      %v398 = vunpack.c.l.bf16 %v270
      %v399 = vunpack.c.l.bf16 %v271
      %v400 = vunpack.c.l.bf16 %v272
      %v401 = vunpack.c.l.bf16 %v273
      %v402 = vunpack.c.l.bf16 %v274
      %v403 = vunpack.c.l.bf16 %v275
      %v404 = vunpack.c.l.bf16 %v276
      %v405 = vunpack.c.l.bf16 %v277
      %v406 = vunpack.c.l.bf16 %v278
      %v407 = vunpack.c.l.bf16 %v279
      %v408 = vunpack.c.l.bf16 %v280
      %v409 = vunpack.c.l.bf16 %v281
      %v410 = vunpack.c.l.bf16 %v282
      %v411 = vunpack.c.l.bf16 %v283
      %v412 = vunpack.c.l.bf16 %v284
      %v413 = vunpack.c.l.bf16 %v285
      %v414 = vunpack.c.l.bf16 %v286
      %v415 = vunpack.c.l.bf16 %v287
      %v416 = vunpack.c.l.bf16 %v288
      %v417 = vunpack.c.l.bf16 %v289
      %v418 = vunpack.c.l.bf16 %v290
      %v419 = vunpack.c.l.bf16 %v291
      %v420 = vunpack.c.l.bf16 %v292
      %v421 = vunpack.c.l.bf16 %v293
      %v422 = vunpack.c.l.bf16 %v294
      %v423 = vunpack.c.l.bf16 %v295
      %v424 = vunpack.c.l.bf16 %v296
      %v425 = vunpack.c.l.bf16 %v297
      %v426 = vunpack.c.l.bf16 %v298
      %v427 = vunpack.c.l.bf16 %v299
      %v428 = vunpack.c.l.bf16 %v300
      %v429 = vunpack.c.l.bf16 %v301
      %v430 = vld [vmem:[%s1] sm:$0x1]
      %v432 = vperm.slane %v430, 0
      %v434 = vmul.f32 %v302, %v432
      %v435 = vmul.f32 %v303, %v432
      %v436 = vmul.f32 %v304, %v432
      %v437 = vmul.f32 %v305, %v432
      %v438 = vmul.f32 %v306, %v432
      %v439 = vmul.f32 %v307, %v432
      %v440 = vmul.f32 %v308, %v432
      %v441 = vmul.f32 %v309, %v432
      %v442 = vmul.f32 %v310, %v432
      %v443 = vmul.f32 %v311, %v432
      %v444 = vmul.f32 %v312, %v432
      %v445 = vmul.f32 %v313, %v432
      %v446 = vmul.f32 %v314, %v432
      %v447 = vmul.f32 %v315, %v432
      %v448 = vmul.f32 %v316, %v432
      %v449 = vmul.f32 %v317, %v432
      %v450 = vmul.f32 %v318, %v432
      %v451 = vmul.f32 %v319, %v432
      %v452 = vmul.f32 %v320, %v432
      %v453 = vmul.f32 %v321, %v432
      %v454 = vmul.f32 %v322, %v432
      %v455 = vmul.f32 %v323, %v432
      %v456 = vmul.f32 %v324, %v432
      %v457 = vmul.f32 %v325, %v432
      %v458 = vmul.f32 %v326, %v432
      %v459 = vmul.f32 %v327, %v432
      %v460 = vmul.f32 %v328, %v432
      %v461 = vmul.f32 %v329, %v432
      %v462 = vmul.f32 %v330, %v432
      %v463 = vmul.f32 %v331, %v432
      %v464 = vmul.f32 %v332, %v432
      %v465 = vmul.f32 %v333, %v432
      %v466 = vmul.f32 %v334, %v432
      %v467 = vmul.f32 %v335, %v432
      %v468 = vmul.f32 %v336, %v432
      %v469 = vmul.f32 %v337, %v432
      %v470 = vmul.f32 %v338, %v432
      %v471 = vmul.f32 %v339, %v432
      %v472 = vmul.f32 %v340, %v432
      %v473 = vmul.f32 %v341, %v432
      %v474 = vmul.f32 %v342, %v432
      %v475 = vmul.f32 %v343, %v432
      %v476 = vmul.f32 %v344, %v432
      %v477 = vmul.f32 %v345, %v432
      %v478 = vmul.f32 %v346, %v432
      %v479 = vmul.f32 %v347, %v432
      %v480 = vmul.f32 %v348, %v432
      %v481 = vmul.f32 %v349, %v432
      %v482 = vmul.f32 %v350, %v432
      %v483 = vmul.f32 %v351, %v432
      %v484 = vmul.f32 %v352, %v432
      %v485 = vmul.f32 %v353, %v432
      %v486 = vmul.f32 %v354, %v432
      %v487 = vmul.f32 %v355, %v432
      %v488 = vmul.f32 %v356, %v432
      %v489 = vmul.f32 %v357, %v432
      %v490 = vmul.f32 %v358, %v432
      %v491 = vmul.f32 %v359, %v432
      %v492 = vmul.f32 %v360, %v432
      %v493 = vmul.f32 %v361, %v432
      %v494 = vmul.f32 %v362, %v432
      %v495 = vmul.f32 %v363, %v432
      %v496 = vmul.f32 %v364, %v432
      %v497 = vmul.f32 %v365, %v432
      %v498 = vmul.f32 %v366, %v432
      %v499 = vmul.f32 %v367, %v432
      %v500 = vmul.f32 %v368, %v432
      %v501 = vmul.f32 %v369, %v432
      %v502 = vmul.f32 %v370, %v432
      %v503 = vmul.f32 %v371, %v432
      %v504 = vmul.f32 %v372, %v432
      %v505 = vmul.f32 %v373, %v432
      %v506 = vmul.f32 %v374, %v432
      %v507 = vmul.f32 %v375, %v432
      %v508 = vmul.f32 %v376, %v432
      %v509 = vmul.f32 %v377, %v432
      %v510 = vmul.f32 %v378, %v432
      %v511 = vmul.f32 %v379, %v432
      %v512 = vmul.f32 %v380, %v432
      %v513 = vmul.f32 %v381, %v432
      %v514 = vmul.f32 %v382, %v432
      %v515 = vmul.f32 %v383, %v432
      %v516 = vmul.f32 %v384, %v432
      %v517 = vmul.f32 %v385, %v432
      %v518 = vmul.f32 %v386, %v432
      %v519 = vmul.f32 %v387, %v432
      %v520 = vmul.f32 %v388, %v432
      %v521 = vmul.f32 %v389, %v432
      %v522 = vmul.f32 %v390, %v432
      %v523 = vmul.f32 %v391, %v432
      %v524 = vmul.f32 %v392, %v432
      %v525 = vmul.f32 %v393, %v432
      %v526 = vmul.f32 %v394, %v432
      %v527 = vmul.f32 %v395, %v432
      %v528 = vmul.f32 %v396, %v432
      %v529 = vmul.f32 %v397, %v432
      %v530 = vmul.f32 %v398, %v432
      %v531 = vmul.f32 %v399, %v432
      %v532 = vmul.f32 %v400, %v432
      %v533 = vmul.f32 %v401, %v432
      %v534 = vmul.f32 %v402, %v432
      %v535 = vmul.f32 %v403, %v432
      %v536 = vmul.f32 %v404, %v432
      %v537 = vmul.f32 %v405, %v432
      %v538 = vmul.f32 %v406, %v432
      %v539 = vmul.f32 %v407, %v432
      %v540 = vmul.f32 %v408, %v432
      %v541 = vmul.f32 %v409, %v432
      %v542 = vmul.f32 %v410, %v432
      %v543 = vmul.f32 %v411, %v432
      %v544 = vmul.f32 %v412, %v432
      %v545 = vmul.f32 %v413, %v432
      %v546 = vmul.f32 %v414, %v432
      %v547 = vmul.f32 %v415, %v432
      %v548 = vmul.f32 %v416, %v432
      %v549 = vmul.f32 %v417, %v432
      %v550 = vmul.f32 %v418, %v432
      %v551 = vmul.f32 %v419, %v432
      %v552 = vmul.f32 %v420, %v432
      %v553 = vmul.f32 %v421, %v432
      %v554 = vmul.f32 %v422, %v432
      %v555 = vmul.f32 %v423, %v432
      %v556 = vmul.f32 %v424, %v432
      %v557 = vmul.f32 %v425, %v432
      %v558 = vmul.f32 %v426, %v432
      %v559 = vmul.f32 %v427, %v432
      %v560 = vmul.f32 %v428, %v432
      %v561 = vmul.f32 %v429, %v432
      %v562 = vld [vmem:[%s2] sm:$0x1]
      %v564 = vperm.slane %v562, 0
      %v566 = vadd.f32 %v434, %v564
      %v567 = vadd.f32 %v435, %v564
      %v568 = vadd.f32 %v436, %v564
      %v569 = vadd.f32 %v437, %v564
      %v570 = vadd.f32 %v438, %v564
      %v571 = vadd.f32 %v439, %v564
      %v572 = vadd.f32 %v440, %v564
      %v573 = vadd.f32 %v441, %v564
      %v574 = vadd.f32 %v442, %v564
      %v575 = vadd.f32 %v443, %v564
      %v576 = vadd.f32 %v444, %v564
      %v577 = vadd.f32 %v445, %v564
      %v578 = vadd.f32 %v446, %v564
      %v579 = vadd.f32 %v447, %v564
      %v580 = vadd.f32 %v448, %v564
      %v581 = vadd.f32 %v449, %v564
      %v582 = vadd.f32 %v450, %v564
      %v583 = vadd.f32 %v451, %v564
      %v584 = vadd.f32 %v452, %v564
      %v585 = vadd.f32 %v453, %v564
      %v586 = vadd.f32 %v454, %v564
      %v587 = vadd.f32 %v455, %v564
      %v588 = vadd.f32 %v456, %v564
      %v589 = vadd.f32 %v457, %v564
      %v590 = vadd.f32 %v458, %v564
      %v591 = vadd.f32 %v459, %v564
      %v592 = vadd.f32 %v460, %v564
      %v593 = vadd.f32 %v461, %v564
      %v594 = vadd.f32 %v462, %v564
      %v595 = vadd.f32 %v463, %v564
      %v596 = vadd.f32 %v464, %v564
      %v597 = vadd.f32 %v465, %v564
      %v598 = vadd.f32 %v466, %v564
      %v599 = vadd.f32 %v467, %v564
      %v600 = vadd.f32 %v468, %v564
      %v601 = vadd.f32 %v469, %v564
      %v602 = vadd.f32 %v470, %v564
      %v603 = vadd.f32 %v471, %v564
      %v604 = vadd.f32 %v472, %v564
      %v605 = vadd.f32 %v473, %v564
      %v606 = vadd.f32 %v474, %v564
      %v607 = vadd.f32 %v475, %v564
      %v608 = vadd.f32 %v476, %v564
      %v609 = vadd.f32 %v477, %v564
      %v610 = vadd.f32 %v478, %v564
      %v611 = vadd.f32 %v479, %v564
      %v612 = vadd.f32 %v480, %v564
      %v613 = vadd.f32 %v481, %v564
      %v614 = vadd.f32 %v482, %v564
      %v615 = vadd.f32 %v483, %v564
      %v616 = vadd.f32 %v484, %v564
      %v617 = vadd.f32 %v485, %v564
      %v618 = vadd.f32 %v486, %v564
      %v619 = vadd.f32 %v487, %v564
      %v620 = vadd.f32 %v488, %v564
      %v621 = vadd.f32 %v489, %v564
      %v622 = vadd.f32 %v490, %v564
      %v623 = vadd.f32 %v491, %v564
      %v624 = vadd.f32 %v492, %v564
      %v625 = vadd.f32 %v493, %v564
      %v626 = vadd.f32 %v494, %v564
      %v627 = vadd.f32 %v495, %v564
      %v628 = vadd.f32 %v496, %v564
      %v629 = vadd.f32 %v497, %v564
      %v630 = vadd.f32 %v498, %v564
      %v631 = vadd.f32 %v499, %v564
      %v632 = vadd.f32 %v500, %v564
      %v633 = vadd.f32 %v501, %v564
      %v634 = vadd.f32 %v502, %v564
      %v635 = vadd.f32 %v503, %v564
      %v636 = vadd.f32 %v504, %v564
      %v637 = vadd.f32 %v505, %v564
      %v638 = vadd.f32 %v506, %v564
      %v639 = vadd.f32 %v507, %v564
      %v640 = vadd.f32 %v508, %v564
      %v641 = vadd.f32 %v509, %v564
      %v642 = vadd.f32 %v510, %v564
      %v643 = vadd.f32 %v511, %v564
      %v644 = vadd.f32 %v512, %v564
      %v645 = vadd.f32 %v513, %v564
      %v646 = vadd.f32 %v514, %v564
      %v647 = vadd.f32 %v515, %v564
      %v648 = vadd.f32 %v516, %v564
      %v649 = vadd.f32 %v517, %v564
      %v650 = vadd.f32 %v518, %v564
      %v651 = vadd.f32 %v519, %v564
      %v652 = vadd.f32 %v520, %v564
      %v653 = vadd.f32 %v521, %v564
      %v654 = vadd.f32 %v522, %v564
      %v655 = vadd.f32 %v523, %v564
      %v656 = vadd.f32 %v524, %v564
      %v657 = vadd.f32 %v525, %v564
      %v658 = vadd.f32 %v526, %v564
      %v659 = vadd.f32 %v527, %v564
      %v660 = vadd.f32 %v528, %v564
      %v661 = vadd.f32 %v529, %v564
      %v662 = vadd.f32 %v530, %v564
      %v663 = vadd.f32 %v531, %v564
      %v664 = vadd.f32 %v532, %v564
      %v665 = vadd.f32 %v533, %v564
      %v666 = vadd.f32 %v534, %v564
      %v667 = vadd.f32 %v535, %v564
      %v668 = vadd.f32 %v536, %v564
      %v669 = vadd.f32 %v537, %v564
      %v670 = vadd.f32 %v538, %v564
      %v671 = vadd.f32 %v539, %v564
      %v672 = vadd.f32 %v540, %v564
      %v673 = vadd.f32 %v541, %v564
      %v674 = vadd.f32 %v542, %v564
      %v675 = vadd.f32 %v543, %v564
      %v676 = vadd.f32 %v544, %v564
      %v677 = vadd.f32 %v545, %v564
      %v678 = vadd.f32 %v546, %v564
      %v679 = vadd.f32 %v547, %v564
      %v680 = vadd.f32 %v548, %v564
      %v681 = vadd.f32 %v549, %v564
      %v682 = vadd.f32 %v550, %v564
      %v683 = vadd.f32 %v551, %v564
      %v684 = vadd.f32 %v552, %v564
      %v685 = vadd.f32 %v553, %v564
      %v686 = vadd.f32 %v554, %v564
      %v687 = vadd.f32 %v555, %v564
      %v688 = vadd.f32 %v556, %v564
      %v689 = vadd.f32 %v557, %v564
      %v690 = vadd.f32 %v558, %v564
      %v691 = vadd.f32 %v559, %v564
      %v692 = vadd.f32 %v560, %v564
      %v693 = vadd.f32 %v561, %v564
      %v694 = vmax.f32 %v566, 0.0
      %v695 = vmax.f32 %v567, 0.0
      %v696 = vmax.f32 %v568, 0.0
      %v697 = vmax.f32 %v569, 0.0
      %v698 = vmax.f32 %v570, 0.0
      %v699 = vmax.f32 %v571, 0.0
      %v700 = vmax.f32 %v572, 0.0
      %v701 = vmax.f32 %v573, 0.0
      %v702 = vmax.f32 %v574, 0.0
      %v703 = vmax.f32 %v575, 0.0
      %v704 = vmax.f32 %v576, 0.0
      %v705 = vmax.f32 %v577, 0.0
      %v706 = vmax.f32 %v578, 0.0
      %v707 = vmax.f32 %v579, 0.0
      %v708 = vmax.f32 %v580, 0.0
      %v709 = vmax.f32 %v581, 0.0
      %v710 = vmax.f32 %v582, 0.0
      %v711 = vmax.f32 %v583, 0.0
      %v712 = vmax.f32 %v584, 0.0
      %v713 = vmax.f32 %v585, 0.0
      %v714 = vmax.f32 %v586, 0.0
      %v715 = vmax.f32 %v587, 0.0
      %v716 = vmax.f32 %v588, 0.0
      %v717 = vmax.f32 %v589, 0.0
      %v718 = vmax.f32 %v590, 0.0
      %v719 = vmax.f32 %v591, 0.0
      %v720 = vmax.f32 %v592, 0.0
      %v721 = vmax.f32 %v593, 0.0
      %v722 = vmax.f32 %v594, 0.0
      %v723 = vmax.f32 %v595, 0.0
      %v724 = vmax.f32 %v596, 0.0
      %v725 = vmax.f32 %v597, 0.0
      %v726 = vmax.f32 %v598, 0.0
      %v727 = vmax.f32 %v599, 0.0
      %v728 = vmax.f32 %v600, 0.0
      %v729 = vmax.f32 %v601, 0.0
      %v730 = vmax.f32 %v602, 0.0
      %v731 = vmax.f32 %v603, 0.0
      %v732 = vmax.f32 %v604, 0.0
      %v733 = vmax.f32 %v605, 0.0
      %v734 = vmax.f32 %v606, 0.0
      %v735 = vmax.f32 %v607, 0.0
      %v736 = vmax.f32 %v608, 0.0
      %v737 = vmax.f32 %v609, 0.0
      %v738 = vmax.f32 %v610, 0.0
      %v739 = vmax.f32 %v611, 0.0
      %v740 = vmax.f32 %v612, 0.0
      %v741 = vmax.f32 %v613, 0.0
      %v742 = vmax.f32 %v614, 0.0
      %v743 = vmax.f32 %v615, 0.0
      %v744 = vmax.f32 %v616, 0.0
      %v745 = vmax.f32 %v617, 0.0
      %v746 = vmax.f32 %v618, 0.0
      %v747 = vmax.f32 %v619, 0.0
      %v748 = vmax.f32 %v620, 0.0
      %v749 = vmax.f32 %v621, 0.0
      %v750 = vmax.f32 %v622, 0.0
      %v751 = vmax.f32 %v623, 0.0
      %v752 = vmax.f32 %v624, 0.0
      %v753 = vmax.f32 %v625, 0.0
      %v754 = vmax.f32 %v626, 0.0
      %v755 = vmax.f32 %v627, 0.0
      %v756 = vmax.f32 %v628, 0.0
      %v757 = vmax.f32 %v629, 0.0
      %v758 = vmax.f32 %v630, 0.0
      %v759 = vmax.f32 %v631, 0.0
      %v760 = vmax.f32 %v632, 0.0
      %v761 = vmax.f32 %v633, 0.0
      %v762 = vmax.f32 %v634, 0.0
      %v763 = vmax.f32 %v635, 0.0
      %v764 = vmax.f32 %v636, 0.0
      %v765 = vmax.f32 %v637, 0.0
      %v766 = vmax.f32 %v638, 0.0
      %v767 = vmax.f32 %v639, 0.0
      %v768 = vmax.f32 %v640, 0.0
      %v769 = vmax.f32 %v641, 0.0
      %v770 = vmax.f32 %v642, 0.0
      %v771 = vmax.f32 %v643, 0.0
      %v772 = vmax.f32 %v644, 0.0
      %v773 = vmax.f32 %v645, 0.0
      %v774 = vmax.f32 %v646, 0.0
      %v775 = vmax.f32 %v647, 0.0
      %v776 = vmax.f32 %v648, 0.0
      %v777 = vmax.f32 %v649, 0.0
      %v778 = vmax.f32 %v650, 0.0
      %v779 = vmax.f32 %v651, 0.0
      %v780 = vmax.f32 %v652, 0.0
      %v781 = vmax.f32 %v653, 0.0
      %v782 = vmax.f32 %v654, 0.0
      %v783 = vmax.f32 %v655, 0.0
      %v784 = vmax.f32 %v656, 0.0
      %v785 = vmax.f32 %v657, 0.0
      %v786 = vmax.f32 %v658, 0.0
      %v787 = vmax.f32 %v659, 0.0
      %v788 = vmax.f32 %v660, 0.0
      %v789 = vmax.f32 %v661, 0.0
      %v790 = vmax.f32 %v662, 0.0
      %v791 = vmax.f32 %v663, 0.0
      %v792 = vmax.f32 %v664, 0.0
      %v793 = vmax.f32 %v665, 0.0
      %v794 = vmax.f32 %v666, 0.0
      %v795 = vmax.f32 %v667, 0.0
      %v796 = vmax.f32 %v668, 0.0
      %v797 = vmax.f32 %v669, 0.0
      %v798 = vmax.f32 %v670, 0.0
      %v799 = vmax.f32 %v671, 0.0
      %v800 = vmax.f32 %v672, 0.0
      %v801 = vmax.f32 %v673, 0.0
      %v802 = vmax.f32 %v674, 0.0
      %v803 = vmax.f32 %v675, 0.0
      %v804 = vmax.f32 %v676, 0.0
      %v805 = vmax.f32 %v677, 0.0
      %v806 = vmax.f32 %v678, 0.0
      %v807 = vmax.f32 %v679, 0.0
      %v808 = vmax.f32 %v680, 0.0
      %v809 = vmax.f32 %v681, 0.0
      %v810 = vmax.f32 %v682, 0.0
      %v811 = vmax.f32 %v683, 0.0
      %v812 = vmax.f32 %v684, 0.0
      %v813 = vmax.f32 %v685, 0.0
      %v814 = vmax.f32 %v686, 0.0
      %v815 = vmax.f32 %v687, 0.0
      %v816 = vmax.f32 %v688, 0.0
      %v817 = vmax.f32 %v689, 0.0
      %v818 = vmax.f32 %v690, 0.0
      %v819 = vmax.f32 %v691, 0.0
      %v820 = vmax.f32 %v692, 0.0
      %v821 = vmax.f32 %v693, 0.0
      %v822 = vpack.c.bf16 %v694, %v694
      %v823 = vpack.c.bf16 %v695, %v695
      %v824 = vpack.c.bf16 %v696, %v696
      %v825 = vpack.c.bf16 %v697, %v697
      %v826 = vpack.c.bf16 %v698, %v698
      %v827 = vpack.c.bf16 %v699, %v699
      %v828 = vpack.c.bf16 %v700, %v700
      %v829 = vpack.c.bf16 %v701, %v701
      %v830 = vpack.c.bf16 %v702, %v702
      %v831 = vpack.c.bf16 %v703, %v703
      %v832 = vpack.c.bf16 %v704, %v704
      %v833 = vpack.c.bf16 %v705, %v705
      %v834 = vpack.c.bf16 %v706, %v706
      %v835 = vpack.c.bf16 %v707, %v707
      %v836 = vpack.c.bf16 %v708, %v708
      %v837 = vpack.c.bf16 %v709, %v709
      %v838 = vpack.c.bf16 %v710, %v710
      %v839 = vpack.c.bf16 %v711, %v711
      %v840 = vpack.c.bf16 %v712, %v712
      %v841 = vpack.c.bf16 %v713, %v713
      %v842 = vpack.c.bf16 %v714, %v714
      %v843 = vpack.c.bf16 %v715, %v715
      %v844 = vpack.c.bf16 %v716, %v716
      %v845 = vpack.c.bf16 %v717, %v717
      %v846 = vpack.c.bf16 %v718, %v718
      %v847 = vpack.c.bf16 %v719, %v719
      %v848 = vpack.c.bf16 %v720, %v720
      %v849 = vpack.c.bf16 %v721, %v721
      %v850 = vpack.c.bf16 %v722, %v722
      %v851 = vpack.c.bf16 %v723, %v723
      %v852 = vpack.c.bf16 %v724, %v724
      %v853 = vpack.c.bf16 %v725, %v725
      %v854 = vpack.c.bf16 %v726, %v726
      %v855 = vpack.c.bf16 %v727, %v727
      %v856 = vpack.c.bf16 %v728, %v728
      %v857 = vpack.c.bf16 %v729, %v729
      %v858 = vpack.c.bf16 %v730, %v730
      %v859 = vpack.c.bf16 %v731, %v731
      %v860 = vpack.c.bf16 %v732, %v732
      %v861 = vpack.c.bf16 %v733, %v733
      %v862 = vpack.c.bf16 %v734, %v734
      %v863 = vpack.c.bf16 %v735, %v735
      %v864 = vpack.c.bf16 %v736, %v736
      %v865 = vpack.c.bf16 %v737, %v737
      %v866 = vpack.c.bf16 %v738, %v738
      %v867 = vpack.c.bf16 %v739, %v739
      %v868 = vpack.c.bf16 %v740, %v740
      %v869 = vpack.c.bf16 %v741, %v741
      %v870 = vpack.c.bf16 %v742, %v742
      %v871 = vpack.c.bf16 %v743, %v743
      %v872 = vpack.c.bf16 %v744, %v744
      %v873 = vpack.c.bf16 %v745, %v745
      %v874 = vpack.c.bf16 %v746, %v746
      %v875 = vpack.c.bf16 %v747, %v747
      %v876 = vpack.c.bf16 %v748, %v748
      %v877 = vpack.c.bf16 %v749, %v749
      %v878 = vpack.c.bf16 %v750, %v750
      %v879 = vpack.c.bf16 %v751, %v751
      %v880 = vpack.c.bf16 %v752, %v752
      %v881 = vpack.c.bf16 %v753, %v753
      %v882 = vpack.c.bf16 %v754, %v754
      %v883 = vpack.c.bf16 %v755, %v755
      %v884 = vpack.c.bf16 %v756, %v756
      %v885 = vpack.c.bf16 %v757, %v757
      %v886 = vpack.c.bf16 %v758, %v758
      %v887 = vpack.c.bf16 %v759, %v759
      %v888 = vpack.c.bf16 %v760, %v760
      %v889 = vpack.c.bf16 %v761, %v761
      %v890 = vpack.c.bf16 %v762, %v762
      %v891 = vpack.c.bf16 %v763, %v763
      %v892 = vpack.c.bf16 %v764, %v764
      %v893 = vpack.c.bf16 %v765, %v765
      %v894 = vpack.c.bf16 %v766, %v766
      %v895 = vpack.c.bf16 %v767, %v767
      %v896 = vpack.c.bf16 %v768, %v768
      %v897 = vpack.c.bf16 %v769, %v769
      %v898 = vpack.c.bf16 %v770, %v770
      %v899 = vpack.c.bf16 %v771, %v771
      %v900 = vpack.c.bf16 %v772, %v772
      %v901 = vpack.c.bf16 %v773, %v773
      %v902 = vpack.c.bf16 %v774, %v774
      %v903 = vpack.c.bf16 %v775, %v775
      %v904 = vpack.c.bf16 %v776, %v776
      %v905 = vpack.c.bf16 %v777, %v777
      %v906 = vpack.c.bf16 %v778, %v778
      %v907 = vpack.c.bf16 %v779, %v779
      %v908 = vpack.c.bf16 %v780, %v780
      %v909 = vpack.c.bf16 %v781, %v781
      %v910 = vpack.c.bf16 %v782, %v782
      %v911 = vpack.c.bf16 %v783, %v783
      %v912 = vpack.c.bf16 %v784, %v784
      %v913 = vpack.c.bf16 %v785, %v785
      %v914 = vpack.c.bf16 %v786, %v786
      %v915 = vpack.c.bf16 %v787, %v787
      %v916 = vpack.c.bf16 %v788, %v788
      %v917 = vpack.c.bf16 %v789, %v789
      %v918 = vpack.c.bf16 %v790, %v790
      %v919 = vpack.c.bf16 %v791, %v791
      %v920 = vpack.c.bf16 %v792, %v792
      %v921 = vpack.c.bf16 %v793, %v793
      %v922 = vpack.c.bf16 %v794, %v794
      %v923 = vpack.c.bf16 %v795, %v795
      %v924 = vpack.c.bf16 %v796, %v796
      %v925 = vpack.c.bf16 %v797, %v797
      %v926 = vpack.c.bf16 %v798, %v798
      %v927 = vpack.c.bf16 %v799, %v799
      %v928 = vpack.c.bf16 %v800, %v800
      %v929 = vpack.c.bf16 %v801, %v801
      %v930 = vpack.c.bf16 %v802, %v802
      %v931 = vpack.c.bf16 %v803, %v803
      %v932 = vpack.c.bf16 %v804, %v804
      %v933 = vpack.c.bf16 %v805, %v805
      %v934 = vpack.c.bf16 %v806, %v806
      %v935 = vpack.c.bf16 %v807, %v807
      %v936 = vpack.c.bf16 %v808, %v808
      %v937 = vpack.c.bf16 %v809, %v809
      %v938 = vpack.c.bf16 %v810, %v810
      %v939 = vpack.c.bf16 %v811, %v811
      %v940 = vpack.c.bf16 %v812, %v812
      %v941 = vpack.c.bf16 %v813, %v813
      %v942 = vpack.c.bf16 %v814, %v814
      %v943 = vpack.c.bf16 %v815, %v815
      %v944 = vpack.c.bf16 %v816, %v816
      %v945 = vpack.c.bf16 %v817, %v817
      %v946 = vpack.c.bf16 %v818, %v818
      %v947 = vpack.c.bf16 %v819, %v819
      %v948 = vpack.c.bf16 %v820, %v820
      %v949 = vpack.c.bf16 %v821, %v821
      %950 = vst [vmem:[%s172] sm:$0xf] %v822
      %951 = vst [vmem:[%s172 + $0x4] sm:$0xf] %v823
      %952 = vst [vmem:[%s172 + $0x8] sm:$0xf] %v824
      %953 = vst [vmem:[%s172 + $0xc] sm:$0xf] %v825
      %954 = vst [vmem:[%s172 + $0x10] sm:$0xf] %v826
      %955 = vst [vmem:[%s172 + $0x14] sm:$0xf] %v827
      %956 = vst [vmem:[%s172 + $0x18] sm:$0xf] %v828
      %957 = vst [vmem:[%s172 + $0x1c] sm:$0xf] %v829
      %958 = vst [vmem:[%s172 + $0x20] sm:$0xf] %v830
      %959 = vst [vmem:[%s172 + $0x24] sm:$0xf] %v831
      %960 = vst [vmem:[%s172 + $0x28] sm:$0xf] %v832
      %961 = vst [vmem:[%s172 + $0x2c] sm:$0xf] %v833
      %962 = vst [vmem:[%s172 + $0x30] sm:$0xf] %v834
      %963 = vst [vmem:[%s172 + $0x34] sm:$0xf] %v835
      %964 = vst [vmem:[%s172 + $0x38] sm:$0xf] %v836
      %965 = vst [vmem:[%s172 + $0x3c] sm:$0xf] %v837
      %966 = vst [vmem:[%s172 + $0x40] sm:$0xf] %v838
      %967 = vst [vmem:[%s172 + $0x44] sm:$0xf] %v839
      %968 = vst [vmem:[%s172 + $0x48] sm:$0xf] %v840
      %969 = vst [vmem:[%s172 + $0x4c] sm:$0xf] %v841
      %970 = vst [vmem:[%s172 + $0x50] sm:$0xf] %v842
      %971 = vst [vmem:[%s172 + $0x54] sm:$0xf] %v843
      %972 = vst [vmem:[%s172 + $0x58] sm:$0xf] %v844
      %973 = vst [vmem:[%s172 + $0x5c] sm:$0xf] %v845
      %974 = vst [vmem:[%s172 + $0x60] sm:$0xf] %v846
      %975 = vst [vmem:[%s172 + $0x64] sm:$0xf] %v847
      %976 = vst [vmem:[%s172 + $0x68] sm:$0xf] %v848
      %977 = vst [vmem:[%s172 + $0x6c] sm:$0xf] %v849
      %978 = vst [vmem:[%s172 + $0x70] sm:$0xf] %v850
      %979 = vst [vmem:[%s172 + $0x74] sm:$0xf] %v851
      %980 = vst [vmem:[%s172 + $0x78] sm:$0xf] %v852
      %981 = vst [vmem:[%s172 + $0x7c] sm:$0xf] %v853
      %982 = vst [vmem:[%s172 + $0x80] sm:$0xf] %v854
      %983 = vst [vmem:[%s172 + $0x84] sm:$0xf] %v855
      %984 = vst [vmem:[%s172 + $0x88] sm:$0xf] %v856
      %985 = vst [vmem:[%s172 + $0x8c] sm:$0xf] %v857
      %986 = vst [vmem:[%s172 + $0x90] sm:$0xf] %v858
      %987 = vst [vmem:[%s172 + $0x94] sm:$0xf] %v859
      %988 = vst [vmem:[%s172 + $0x98] sm:$0xf] %v860
      %989 = vst [vmem:[%s172 + $0x9c] sm:$0xf] %v861
      %990 = vst [vmem:[%s172 + $0xa0] sm:$0xf] %v862
      %991 = vst [vmem:[%s172 + $0xa4] sm:$0xf] %v863
      %992 = vst [vmem:[%s172 + $0xa8] sm:$0xf] %v864
      %993 = vst [vmem:[%s172 + $0xac] sm:$0xf] %v865
      %994 = vst [vmem:[%s172 + $0xb0] sm:$0xf] %v866
      %995 = vst [vmem:[%s172 + $0xb4] sm:$0xf] %v867
      %996 = vst [vmem:[%s172 + $0xb8] sm:$0xf] %v868
      %997 = vst [vmem:[%s172 + $0xbc] sm:$0xf] %v869
      %998 = vst [vmem:[%s172 + $0xc0] sm:$0xf] %v870
      %999 = vst [vmem:[%s172 + $0xc4] sm:$0xf] %v871
      %1000 = vst [vmem:[%s172 + $0xc8] sm:$0xf] %v872
      %1001 = vst [vmem:[%s172 + $0xcc] sm:$0xf] %v873
      %1002 = vst [vmem:[%s172 + $0xd0] sm:$0xf] %v874
      %1003 = vst [vmem:[%s172 + $0xd4] sm:$0xf] %v875
      %1004 = vst [vmem:[%s172 + $0xd8] sm:$0xf] %v876
      %1005 = vst [vmem:[%s172 + $0xdc] sm:$0xf] %v877
      %1006 = vst [vmem:[%s172 + $0xe0] sm:$0xf] %v878
      %1007 = vst [vmem:[%s172 + $0xe4] sm:$0xf] %v879
      %1008 = vst [vmem:[%s172 + $0xe8] sm:$0xf] %v880
      %1009 = vst [vmem:[%s172 + $0xec] sm:$0xf] %v881
      %1010 = vst [vmem:[%s172 + $0xf0] sm:$0xf] %v882
      %1011 = vst [vmem:[%s172 + $0xf4] sm:$0xf] %v883
      %1012 = vst [vmem:[%s172 + $0xf8] sm:$0xf] %v884
      %1013 = vst [vmem:[%s172 + $0xfc] sm:$0xf] %v885
      %1014 = vst [vmem:[%s172 + $0x100] sm:$0xf] %v886
      %1015 = vst [vmem:[%s172 + $0x104] sm:$0xf] %v887
      %1016 = vst [vmem:[%s172 + $0x108] sm:$0xf] %v888
      %1017 = vst [vmem:[%s172 + $0x10c] sm:$0xf] %v889
      %1018 = vst [vmem:[%s172 + $0x110] sm:$0xf] %v890
      %1019 = vst [vmem:[%s172 + $0x114] sm:$0xf] %v891
      %1020 = vst [vmem:[%s172 + $0x118] sm:$0xf] %v892
      %1021 = vst [vmem:[%s172 + $0x11c] sm:$0xf] %v893
      %1022 = vst [vmem:[%s172 + $0x120] sm:$0xf] %v894
      %1023 = vst [vmem:[%s172 + $0x124] sm:$0xf] %v895
      %1024 = vst [vmem:[%s172 + $0x128] sm:$0xf] %v896
      %1025 = vst [vmem:[%s172 + $0x12c] sm:$0xf] %v897
      %1026 = vst [vmem:[%s172 + $0x130] sm:$0xf] %v898
      %1027 = vst [vmem:[%s172 + $0x134] sm:$0xf] %v899
      %1028 = vst [vmem:[%s172 + $0x138] sm:$0xf] %v900
      %1029 = vst [vmem:[%s172 + $0x13c] sm:$0xf] %v901
      %1030 = vst [vmem:[%s172 + $0x140] sm:$0xf] %v902
      %1031 = vst [vmem:[%s172 + $0x144] sm:$0xf] %v903
      %1032 = vst [vmem:[%s172 + $0x148] sm:$0xf] %v904
      %1033 = vst [vmem:[%s172 + $0x14c] sm:$0xf] %v905
      %1034 = vst [vmem:[%s172 + $0x150] sm:$0xf] %v906
      %1035 = vst [vmem:[%s172 + $0x154] sm:$0xf] %v907
      %1036 = vst [vmem:[%s172 + $0x158] sm:$0xf] %v908
      %1037 = vst [vmem:[%s172 + $0x15c] sm:$0xf] %v909
      %1038 = vst [vmem:[%s172 + $0x160] sm:$0xf] %v910
      %1039 = vst [vmem:[%s172 + $0x164] sm:$0xf] %v911
      %1040 = vst [vmem:[%s172 + $0x168] sm:$0xf] %v912
      %1041 = vst [vmem:[%s172 + $0x16c] sm:$0xf] %v913
      %1042 = vst [vmem:[%s172 + $0x170] sm:$0xf] %v914
      %1043 = vst [vmem:[%s172 + $0x174] sm:$0xf] %v915
      %1044 = vst [vmem:[%s172 + $0x178] sm:$0xf] %v916
      %1045 = vst [vmem:[%s172 + $0x17c] sm:$0xf] %v917
      %1046 = vst [vmem:[%s172 + $0x180] sm:$0xf] %v918
      %1047 = vst [vmem:[%s172 + $0x184] sm:$0xf] %v919
      %1048 = vst [vmem:[%s172 + $0x188] sm:$0xf] %v920
      %1049 = vst [vmem:[%s172 + $0x18c] sm:$0xf] %v921
      %1050 = vst [vmem:[%s172 + $0x190] sm:$0xf] %v922
      %1051 = vst [vmem:[%s172 + $0x194] sm:$0xf] %v923
      %1052 = vst [vmem:[%s172 + $0x198] sm:$0xf] %v924
      %1053 = vst [vmem:[%s172 + $0x19c] sm:$0xf] %v925
      %1054 = vst [vmem:[%s172 + $0x1a0] sm:$0xf] %v926
      %1055 = vst [vmem:[%s172 + $0x1a4] sm:$0xf] %v927
      %1056 = vst [vmem:[%s172 + $0x1a8] sm:$0xf] %v928
      %1057 = vst [vmem:[%s172 + $0x1ac] sm:$0xf] %v929
      %1058 = vst [vmem:[%s172 + $0x1b0] sm:$0xf] %v930
      %1059 = vst [vmem:[%s172 + $0x1b4] sm:$0xf] %v931
      %1060 = vst [vmem:[%s172 + $0x1b8] sm:$0xf] %v932
      %1061 = vst [vmem:[%s172 + $0x1bc] sm:$0xf] %v933
      %1062 = vst [vmem:[%s172 + $0x1c0] sm:$0xf] %v934
      %1063 = vst [vmem:[%s172 + $0x1c4] sm:$0xf] %v935
      %1064 = vst [vmem:[%s172 + $0x1c8] sm:$0xf] %v936
      %1065 = vst [vmem:[%s172 + $0x1cc] sm:$0xf] %v937
      %1066 = vst [vmem:[%s172 + $0x1d0] sm:$0xf] %v938
      %1067 = vst [vmem:[%s172 + $0x1d4] sm:$0xf] %v939
      %1068 = vst [vmem:[%s172 + $0x1d8] sm:$0xf] %v940
      %1069 = vst [vmem:[%s172 + $0x1dc] sm:$0xf] %v941
      %1070 = vst [vmem:[%s172 + $0x1e0] sm:$0xf] %v942
      %1071 = vst [vmem:[%s172 + $0x1e4] sm:$0xf] %v943
      %1072 = vst [vmem:[%s172 + $0x1e8] sm:$0xf] %v944
      %1073 = vst [vmem:[%s172 + $0x1ec] sm:$0xf] %v945
      %1074 = vst [vmem:[%s172 + $0x1f0] sm:$0xf] %v946
      %1075 = vst [vmem:[%s172 + $0x1f4] sm:$0xf] %v947
      %1076 = vst [vmem:[%s172 + $0x1f8] sm:$0xf] %v948
      %1077 = vst [vmem:[%s172 + $0x1fc] sm:$0xf] %v949
      %s1078 = smul.u32 128, %s14
      %p1079 = scmp.lt.s32.totalorder %s1078, 255
      %s1080 = scalar_select %p1079, %s1078, 255
      %s1081 = smul.addr %s1080, 4
      %s1082 = scalar_lea.vmem %s3, %s1081
      // Predicated region
      $region33: #{generator_forward.37} parent=31 // pred_check
        %p1083 = pneg %p100
      $region34: #{generator_forward.37} parent=31 // pred_check_branch
        %1085 = sbr.rel (%p1083) target = $region36
      $region35: #{generator_forward.37} parent=31 // pred_region
        %s1086 = smul.u32 128, %s14
      $region36: #{generator_forward.37} parent=31 // pred_fallthru
        _
    $region32: #{generator_forward.37} parent=5 // pred_fallthru
      _
    %p1087 = scmp.le.s32.totalorder 2, %s9
    // Predicated region
    $region37: #{generator_forward.37} parent=5 // pred_check
      %p1088 = pneg %p1087
    $region38: #{generator_forward.37} parent=5 // pred_check_branch
      %1090 = sbr.rel (%p1088) target = $region40
    $region39: #{generator_forward.37} parent=5 // pred_region
      %s1091 = ssub.s32 %s9, 2
      // Predicated region
      $region41: #{generator_forward.37} parent=39 // pred_check
        %p1092 = pneg %p106
      $region42: #{generator_forward.37} parent=39 // pred_check_branch
        %1094 = sbr.rel (%p1092) target = $region44
      $region43: #{generator_forward.37} parent=39 // pred_region
        %s1095 = smul.u32 128, %s15
        %p1096 = scmp.lt.s32.totalorder %s1095, 255
        %s1097 = scalar_select %p1096, %s1095, 255
        %s1098 = smul.addr %s1097, 4
        %s1099 = scalar_lea.vmem %s3, %s1098
      $region44: #{generator_forward.37} parent=39 // pred_fallthru
        _
    $region40: #{generator_forward.37} parent=5 // pred_fallthru
      _
  $region6: #{generator_forward.37} parent=0 // loop_footer
    %s13 = sadd.s32 1, %s9
  $region7: #{generator_forward.37} parent=0 // loop_footer_branch
    %8 = sbr.rel target = $region3
  $region8: #{generator_forward.37} parent=0 // loop_exit
    _

// kernel: generator_forward.38
$region0: #{generator_forward.38}
  #allocation0 [shape = 'u32[]', space=smem, size = 0x4, offset = 0x4, fixed_abs, tag = 'smem constant byte address 0x4 - core index']
  #allocation1 [shape = 'u32[72,128]{1,0:T(1,128)}', space=vmem, size = 0x9000, scoped, tag = 'internal scratch']
  #allocation2 [shape = 'f32[512,128]{1,0:T(8,128)}', space=vmem, size = 0x40000, scoped, tag = 'scratch operand']
  %s0 = inlined_call_operand.vmem [shape: bf16[2048,512], index: 0, kind: input, shape index: {}]
  %s1 = inlined_call_operand.vmem [shape: bf16[512,128], index: 1, kind: input, shape index: {}]
  %s2 = inlined_call_operand.vmem [shape: f32[2048,128], index: 2, kind: output, shape index: {}]
  %s3 = sld [smem:[#allocation0]]
  $region49: #{generator_forward.38} parent=0
    _
  %s5 = ssub.s32 1, %s3
  %s6 = scalar_select 0, %s5, %s3
  loop: start=0, step=1, limit=6
  $region2: #{generator_forward.38} parent=0 // loop_pre_header
    _
  $region3: #{generator_forward.38} parent=0 // loop_header
    %s8 = sphi 0, %s12
    %p9 = scmp.ge.s32.totalorder %s8, 6
    %s15 = sphi 0, %s34
    %s16 = sphi 0, %s30
    %s17 = sphi 0, %s26
    %s18 = sphi 0, %s15
    %s19 = sphi 0, %s16
    %s20 = sphi 0, %s17
    %s21 = sphi 0, %s18
    %s22 = sphi 0, %s19
    %s23 = sphi 0, %s20
    %s39 = sphi 0, %s41
    %s42 = sphi 0, %s39
    %s43 = sphi 0, %s42
    %s59 = sphi 0, %s43
    %s67 = sphi 0, %s69
    %s70 = sphi 0, %s67
    %s71 = sphi 0, %s70
    %s87 = sphi 0, %s71
    %s95 = sphi 0, %s97
    %s98 = sphi 0, %s95
    %s99 = sphi 0, %s98
    %s115 = sphi 0, %s99
  $region4: #{generator_forward.38} parent=0 // loop_header_branch
    %11 = sbr.rel (%p9) target = $region8
  $region5: #{generator_forward.38} parent=0 // loop_body
    %s13 = ssub.s32 %s8, 1
    %s14 = ssub.s32 %s8, 2
    %s24 = sadd.s32 1, %s17
    %p25 = scmp.ge.s32.totalorder %s24, 1
    %s26 = scalar_select %p25, 0, %s24
    %s27 = sadd.s32 1, %s16
    %s28 = scalar_select %p25, %s27, %s16
    %p29 = scmp.ge.s32.totalorder %s28, 1
    %s30 = scalar_select %p29, 0, %s28
    %s31 = sadd.s32 1, %s15
    %s32 = scalar_select %p29, %s31, %s15
    %p33 = scmp.ge.s32.totalorder %s32, 4
    %s34 = scalar_select %p33, 0, %s32
    %s35 = ssub.s32 %s15, %s34
    %s36 = ssub.s32 %s17, %s26
    %s37 = sor.u32 %s35, %s36
    %p38 = scmp.eq.s32.totalorder %s37, 0
    %s40 = sadd.s32 %s39, 1
    %s41 = scalar_select %p38, %s39, %s40
    %p44 = pneg %p38
    %p45 = scmp.eq.s32.totalorder %s8, 3
    %p46 = por %p44, %p45
    %p47 = scmp.ne.s32.totalorder %s39, %s42
    %p48 = scmp.eq.s32.totalorder %s8, 0
    %p49 = por %p47, %p48
    %p50 = scmp.ne.s32.totalorder %s39, %s42
    %p51 = scmp.eq.s32.totalorder %s13, 3
    %p52 = por %p50, %p51
    %p53 = scmp.ne.s32.totalorder %s42, %s43
    %p54 = scmp.eq.s32.totalorder %s13, 0
    %p55 = por %p53, %p54
    %p56 = scmp.ne.s32.totalorder %s42, %s43
    %p57 = scmp.eq.s32.totalorder %s14, 3
    %p58 = por %p56, %p57
    %p60 = scmp.ne.s32.totalorder %s43, %s59
    %p61 = scmp.eq.s32.totalorder %s14, 0
    %p62 = por %p60, %p61
    %s63 = ssub.s32 %s17, %s26
    %s64 = ssub.s32 %s16, %s30
    %s65 = sor.u32 %s63, %s64
    %p66 = scmp.eq.s32.totalorder %s65, 0
    %s68 = sadd.s32 %s67, 1
    %s69 = scalar_select %p66, %s67, %s68
    %p72 = pneg %p66
    %p73 = scmp.eq.s32.totalorder %s8, 3
    %p74 = por %p72, %p73
    %p75 = scmp.ne.s32.totalorder %s67, %s70
    %p76 = scmp.eq.s32.totalorder %s8, 0
    %p77 = por %p75, %p76
    %p78 = scmp.ne.s32.totalorder %s67, %s70
    %p79 = scmp.eq.s32.totalorder %s13, 3
    %p80 = por %p78, %p79
    %p81 = scmp.ne.s32.totalorder %s70, %s71
    %p82 = scmp.eq.s32.totalorder %s13, 0
    %p83 = por %p81, %p82
    %p84 = scmp.ne.s32.totalorder %s70, %s71
    %p85 = scmp.eq.s32.totalorder %s14, 3
    %p86 = por %p84, %p85
    %p88 = scmp.ne.s32.totalorder %s71, %s87
    %p89 = scmp.eq.s32.totalorder %s14, 0
    %p90 = por %p88, %p89
    %s91 = ssub.s32 %s15, %s34
    %s92 = ssub.s32 %s16, %s30
    %s93 = sor.u32 %s91, %s92
    %p94 = scmp.eq.s32.totalorder %s93, 0
    %s96 = sadd.s32 %s95, 1
    %s97 = scalar_select %p94, %s95, %s96
    %p100 = pneg %p94
    %p101 = scmp.eq.s32.totalorder %s8, 3
    %p102 = por %p100, %p101
    %p103 = scmp.ne.s32.totalorder %s95, %s98
    %p104 = scmp.eq.s32.totalorder %s8, 0
    %p105 = por %p103, %p104
    %p106 = scmp.ne.s32.totalorder %s95, %s98
    %p107 = scmp.eq.s32.totalorder %s13, 3
    %p108 = por %p106, %p107
    %p109 = scmp.ne.s32.totalorder %s98, %s99
    %p110 = scmp.eq.s32.totalorder %s13, 0
    %p111 = por %p109, %p110
    %p112 = scmp.ne.s32.totalorder %s98, %s99
    %p113 = scmp.eq.s32.totalorder %s14, 3
    %p114 = por %p112, %p113
    %p116 = scmp.ne.s32.totalorder %s99, %s115
    %p117 = scmp.eq.s32.totalorder %s14, 0
    %p118 = por %p116, %p117
    %p119 = scmp.le.s32.totalorder 1, %s8
    %p120 = scmp.lt.s32.totalorder %s8, 5
    %p121 = pnand %p119, %p120
    %p122 = pneg %p121
    // Predicated region
    $region9: #{generator_forward.38} parent=5 // pred_check
      _
    $region10: #{generator_forward.38} parent=5 // pred_check_branch
      %124 = sbr.rel (%p121) target = $region12
    $region11: #{generator_forward.38} parent=5 // pred_region
      %s125 = ssub.s32 %s8, 1
      // Predicated region
      $region13: #{generator_forward.38} parent=11 // pred_check
        %p126 = pneg %p83
      $region14: #{generator_forward.38} parent=11 // pred_check_branch
        %128 = sbr.rel (%p126) target = $region16
      $region15: #{generator_forward.38} parent=11 // pred_region
        %s129 = smul.u32 64, %s20
        %p130 = scmp.lt.s32.totalorder %s129, 63
        %s131 = scalar_select %p130, %s129, 63
        %p132 = scmp.lt.s32.totalorder %s19, 0
        %s133 = scalar_select %p132, %s19, 0
        %s134 = sadd.s32 %s133, %s131
        %s135 = smul.addr %s134, 4
        %s136 = scalar_lea.vmem %s1, %s135
        %s137 = smul.u32 64, %s20
      $region16: #{generator_forward.38} parent=11 // pred_fallthru
        _
    $region12: #{generator_forward.38} parent=5 // pred_fallthru
      _
    %p138 = scmp.lt.s32.totalorder %s8, 4
    // Predicated region
    $region17: #{generator_forward.38} parent=5 // pred_check
      %p139 = pneg %p138
    $region18: #{generator_forward.38} parent=5 // pred_check_branch
      %141 = sbr.rel (%p139) target = $region20
    $region19: #{generator_forward.38} parent=5 // pred_region
      // Predicated region
      $region21: #{generator_forward.38} parent=19 // pred_check
        %p142 = pneg %p49
      $region22: #{generator_forward.38} parent=19 // pred_check_branch
        %144 = sbr.rel (%p142) target = $region24
      $region23: #{generator_forward.38} parent=19 // pred_region
        %s145 = smul.u32 64, %s15
        %s146 = smul.u32 4, %s17
        %p147 = scmp.lt.s32.totalorder %s145, 255
        %s148 = scalar_select %p147, %s145, 255
        %p149 = scmp.lt.s32.totalorder %s146, 3
        %s150 = scalar_select %p149, %s146, 3
        %s151 = smul.addr %s148, 4
        %s152 = sadd.s32 %s150, %s151
        %s153 = smul.addr %s152, 4
        %s154 = scalar_lea.vmem %s0, %s153
        %s155 = smul.u32 64, %s15
        %s156 = smul.u32 4, %s17
      $region24: #{generator_forward.38} parent=19 // pred_fallthru
        _
    $region20: #{generator_forward.38} parent=5 // pred_fallthru
      _
    %p157 = scmp.le.s32.totalorder 1, %s8
    %p158 = scmp.lt.s32.totalorder %s8, 5
    %p159 = pnand %p157, %p158
    %p160 = pneg %p159
    // Predicated region
    $region25: #{generator_forward.38} parent=5 // pred_check
      _
    $region26: #{generator_forward.38} parent=5 // pred_check_branch
      %162 = sbr.rel (%p159) target = $region28
    $region27: #{generator_forward.38} parent=5 // pred_region
      %s163 = ssub.s32 %s8, 1
      %s164 = smul.u32 64, %s18
      %s165 = smul.u32 4, %s20
      %p166 = scmp.lt.s32.totalorder %s164, 255
      %s167 = scalar_select %p166, %s164, 255
      %p168 = scmp.lt.s32.totalorder %s165, 3
      %s169 = scalar_select %p168, %s165, 3
      %s170 = smul.addr %s167, 4
      %s171 = sadd.s32 %s169, %s170
      %s172 = smul.addr %s171, 4
      %s173 = scalar_lea.vmem %s0, %s172
      %p174 = pneg %p55
      %p175 = pneg %p52
      %s176 = smul.u32 64, %s20
      %p177 = scmp.lt.s32.totalorder %s176, 63
      %s178 = scalar_select %p177, %s176, 63
      %p179 = scmp.lt.s32.totalorder %s19, 0
      %s180 = scalar_select %p179, %s19, 0
      %s181 = sadd.s32 %s180, %s178
      %s182 = smul.addr %s181, 4
      %s183 = scalar_lea.vmem %s1, %s182
      %p184 = pneg %p83
      %p185 = pneg %p80
      %p186 = pneg %p111
      %p187 = pneg %p108
      %s188 = smul.u32 64, %s18
      %p189 = scmp.lt.s32.totalorder %s188, 255
      %s190 = scalar_select %p189, %s188, 255
      %p191 = scmp.lt.s32.totalorder %s19, 0
      %s192 = scalar_select %p191, %s19, 0
      %s193 = sadd.s32 %s192, %s190
      %s194 = smul.addr %s193, 8
      %s195 = scalar_lea.vmem %s2, %s194
      %s196 = smul.u32 64, %s18
      %s197 = smul.u32 4, %s20
      %p198 = scmp.lt.s32.totalorder %s196, 255
      %s199 = scalar_select %p198, %s196, 255
      %p200 = scmp.lt.s32.totalorder %s197, 3
      %s201 = scalar_select %p200, %s197, 3
      %s202 = smul.addr %s199, 4
      %s203 = sadd.s32 %s201, %s202
      %s204 = smul.addr %s203, 4
      %s205 = scalar_lea.vmem %s0, %s204
      %s206 = smul.u32 64, %s18
      %s207 = smul.u32 4, %s20
      %s208 = smul.u32 64, %s20
      %p209 = scmp.lt.s32.totalorder %s208, 63
      %s210 = scalar_select %p209, %s208, 63
      %p211 = scmp.lt.s32.totalorder %s19, 0
      %s212 = scalar_select %p211, %s19, 0
      %s213 = sadd.s32 %s212, %s210
      %s214 = smul.addr %s213, 4
      %s215 = scalar_lea.vmem %s1, %s214
      %s216 = smul.u32 64, %s20
      %s217 = smul.u32 64, %s18
      %p218 = scmp.lt.s32.totalorder %s217, 255
      %s219 = scalar_select %p218, %s217, 255
      %p220 = scmp.lt.s32.totalorder %s19, 0
      %s221 = scalar_select %p220, %s19, 0
      %s222 = sadd.s32 %s221, %s219
      %s223 = smul.addr %s222, 8
      %s224 = scalar_lea.vmem %s2, %s223
      %s225 = smul.u32 64, %s18
      %p226 = scmp.eq.s32.totalorder %s20, 0
      // Predicated region
      $region29: #{generator_forward.38} parent=27 // pred_check
        %p227 = pneg %p226
      $region30: #{generator_forward.38} parent=27 // pred_check_branch
        %229 = sbr.rel (%p227) target = $region32
      $region31: #{generator_forward.38} parent=27 // pred_region
        %230 = vst [vmem:[#allocation2] sm:$0xff] 0.0
        %231 = vst [vmem:[#allocation2 + $0x8] sm:$0xff] 0.0
        %232 = vst [vmem:[#allocation2 + $0x10] sm:$0xff] 0.0
        %233 = vst [vmem:[#allocation2 + $0x18] sm:$0xff] 0.0
        %234 = vst [vmem:[#allocation2 + $0x20] sm:$0xff] 0.0
        %235 = vst [vmem:[#allocation2 + $0x28] sm:$0xff] 0.0
        %236 = vst [vmem:[#allocation2 + $0x30] sm:$0xff] 0.0
        %237 = vst [vmem:[#allocation2 + $0x38] sm:$0xff] 0.0
        %238 = vst [vmem:[#allocation2 + $0x40] sm:$0xff] 0.0
        %239 = vst [vmem:[#allocation2 + $0x48] sm:$0xff] 0.0
        %240 = vst [vmem:[#allocation2 + $0x50] sm:$0xff] 0.0
        %241 = vst [vmem:[#allocation2 + $0x58] sm:$0xff] 0.0
        %242 = vst [vmem:[#allocation2 + $0x60] sm:$0xff] 0.0
        %243 = vst [vmem:[#allocation2 + $0x68] sm:$0xff] 0.0
        %244 = vst [vmem:[#allocation2 + $0x70] sm:$0xff] 0.0
        %245 = vst [vmem:[#allocation2 + $0x78] sm:$0xff] 0.0
        %246 = vst [vmem:[#allocation2 + $0x80] sm:$0xff] 0.0
        %247 = vst [vmem:[#allocation2 + $0x88] sm:$0xff] 0.0
        %248 = vst [vmem:[#allocation2 + $0x90] sm:$0xff] 0.0
        %249 = vst [vmem:[#allocation2 + $0x98] sm:$0xff] 0.0
        %250 = vst [vmem:[#allocation2 + $0xa0] sm:$0xff] 0.0
        %251 = vst [vmem:[#allocation2 + $0xa8] sm:$0xff] 0.0
        %252 = vst [vmem:[#allocation2 + $0xb0] sm:$0xff] 0.0
        %253 = vst [vmem:[#allocation2 + $0xb8] sm:$0xff] 0.0
        %254 = vst [vmem:[#allocation2 + $0xc0] sm:$0xff] 0.0
        %255 = vst [vmem:[#allocation2 + $0xc8] sm:$0xff] 0.0
        %256 = vst [vmem:[#allocation2 + $0xd0] sm:$0xff] 0.0
        %257 = vst [vmem:[#allocation2 + $0xd8] sm:$0xff] 0.0
        %258 = vst [vmem:[#allocation2 + $0xe0] sm:$0xff] 0.0
        %259 = vst [vmem:[#allocation2 + $0xe8] sm:$0xff] 0.0
        %260 = vst [vmem:[#allocation2 + $0xf0] sm:$0xff] 0.0
        %261 = vst [vmem:[#allocation2 + $0xf8] sm:$0xff] 0.0
        %262 = vst [vmem:[#allocation2 + $0x100] sm:$0xff] 0.0
        %263 = vst [vmem:[#allocation2 + $0x108] sm:$0xff] 0.0
        %264 = vst [vmem:[#allocation2 + $0x110] sm:$0xff] 0.0
        %265 = vst [vmem:[#allocation2 + $0x118] sm:$0xff] 0.0
        %266 = vst [vmem:[#allocation2 + $0x120] sm:$0xff] 0.0
        %267 = vst [vmem:[#allocation2 + $0x128] sm:$0xff] 0.0
        %268 = vst [vmem:[#allocation2 + $0x130] sm:$0xff] 0.0
        %269 = vst [vmem:[#allocation2 + $0x138] sm:$0xff] 0.0
        %270 = vst [vmem:[#allocation2 + $0x140] sm:$0xff] 0.0
        %271 = vst [vmem:[#allocation2 + $0x148] sm:$0xff] 0.0
        %272 = vst [vmem:[#allocation2 + $0x150] sm:$0xff] 0.0
        %273 = vst [vmem:[#allocation2 + $0x158] sm:$0xff] 0.0
        %274 = vst [vmem:[#allocation2 + $0x160] sm:$0xff] 0.0
        %275 = vst [vmem:[#allocation2 + $0x168] sm:$0xff] 0.0
        %276 = vst [vmem:[#allocation2 + $0x170] sm:$0xff] 0.0
        %277 = vst [vmem:[#allocation2 + $0x178] sm:$0xff] 0.0
        %278 = vst [vmem:[#allocation2 + $0x180] sm:$0xff] 0.0
        %279 = vst [vmem:[#allocation2 + $0x188] sm:$0xff] 0.0
        %280 = vst [vmem:[#allocation2 + $0x190] sm:$0xff] 0.0
        %281 = vst [vmem:[#allocation2 + $0x198] sm:$0xff] 0.0
        %282 = vst [vmem:[#allocation2 + $0x1a0] sm:$0xff] 0.0
        %283 = vst [vmem:[#allocation2 + $0x1a8] sm:$0xff] 0.0
        %284 = vst [vmem:[#allocation2 + $0x1b0] sm:$0xff] 0.0
        %285 = vst [vmem:[#allocation2 + $0x1b8] sm:$0xff] 0.0
        %286 = vst [vmem:[#allocation2 + $0x1c0] sm:$0xff] 0.0
        %287 = vst [vmem:[#allocation2 + $0x1c8] sm:$0xff] 0.0
        %288 = vst [vmem:[#allocation2 + $0x1d0] sm:$0xff] 0.0
        %289 = vst [vmem:[#allocation2 + $0x1d8] sm:$0xff] 0.0
        %290 = vst [vmem:[#allocation2 + $0x1e0] sm:$0xff] 0.0
        %291 = vst [vmem:[#allocation2 + $0x1e8] sm:$0xff] 0.0
        %292 = vst [vmem:[#allocation2 + $0x1f0] sm:$0xff] 0.0
        %293 = vst [vmem:[#allocation2 + $0x1f8] sm:$0xff] 0.0
      $region32: #{generator_forward.38} parent=27 // pred_fallthru
        _
      %v294 = vld [vmem:[#allocation2] sm:$0xff]
      %v295 = vld [vmem:[#allocation2 + $0x8] sm:$0xff]
      %v296 = vld [vmem:[#allocation2 + $0x10] sm:$0xff]
      %v297 = vld [vmem:[#allocation2 + $0x18] sm:$0xff]
      %v298 = vld [vmem:[#allocation2 + $0x20] sm:$0xff]
      %v299 = vld [vmem:[#allocation2 + $0x28] sm:$0xff]
      %v300 = vld [vmem:[#allocation2 + $0x30] sm:$0xff]
      %v301 = vld [vmem:[#allocation2 + $0x38] sm:$0xff]
      %v302 = vld [vmem:[#allocation2 + $0x40] sm:$0xff]
      %v303 = vld [vmem:[#allocation2 + $0x48] sm:$0xff]
      %v304 = vld [vmem:[#allocation2 + $0x50] sm:$0xff]
      %v305 = vld [vmem:[#allocation2 + $0x58] sm:$0xff]
      %v306 = vld [vmem:[#allocation2 + $0x60] sm:$0xff]
      %v307 = vld [vmem:[#allocation2 + $0x68] sm:$0xff]
      %v308 = vld [vmem:[#allocation2 + $0x70] sm:$0xff]
      %v309 = vld [vmem:[#allocation2 + $0x78] sm:$0xff]
      %v310 = vld [vmem:[#allocation2 + $0x80] sm:$0xff]
      %v311 = vld [vmem:[#allocation2 + $0x88] sm:$0xff]
      %v312 = vld [vmem:[#allocation2 + $0x90] sm:$0xff]
      %v313 = vld [vmem:[#allocation2 + $0x98] sm:$0xff]
      %v314 = vld [vmem:[#allocation2 + $0xa0] sm:$0xff]
      %v315 = vld [vmem:[#allocation2 + $0xa8] sm:$0xff]
      %v316 = vld [vmem:[#allocation2 + $0xb0] sm:$0xff]
      %v317 = vld [vmem:[#allocation2 + $0xb8] sm:$0xff]
      %v318 = vld [vmem:[#allocation2 + $0xc0] sm:$0xff]
      %v319 = vld [vmem:[#allocation2 + $0xc8] sm:$0xff]
      %v320 = vld [vmem:[#allocation2 + $0xd0] sm:$0xff]
      %v321 = vld [vmem:[#allocation2 + $0xd8] sm:$0xff]
      %v322 = vld [vmem:[#allocation2 + $0xe0] sm:$0xff]
      %v323 = vld [vmem:[#allocation2 + $0xe8] sm:$0xff]
      %v324 = vld [vmem:[#allocation2 + $0xf0] sm:$0xff]
      %v325 = vld [vmem:[#allocation2 + $0xf8] sm:$0xff]
      %v326 = vld [vmem:[#allocation2 + $0x100] sm:$0xff]
      %v327 = vld [vmem:[#allocation2 + $0x108] sm:$0xff]
      %v328 = vld [vmem:[#allocation2 + $0x110] sm:$0xff]
      %v329 = vld [vmem:[#allocation2 + $0x118] sm:$0xff]
      %v330 = vld [vmem:[#allocation2 + $0x120] sm:$0xff]
      %v331 = vld [vmem:[#allocation2 + $0x128] sm:$0xff]
      %v332 = vld [vmem:[#allocation2 + $0x130] sm:$0xff]
      %v333 = vld [vmem:[#allocation2 + $0x138] sm:$0xff]
      %v334 = vld [vmem:[#allocation2 + $0x140] sm:$0xff]
      %v335 = vld [vmem:[#allocation2 + $0x148] sm:$0xff]
      %v336 = vld [vmem:[#allocation2 + $0x150] sm:$0xff]
      %v337 = vld [vmem:[#allocation2 + $0x158] sm:$0xff]
      %v338 = vld [vmem:[#allocation2 + $0x160] sm:$0xff]
      %v339 = vld [vmem:[#allocation2 + $0x168] sm:$0xff]
      %v340 = vld [vmem:[#allocation2 + $0x170] sm:$0xff]
      %v341 = vld [vmem:[#allocation2 + $0x178] sm:$0xff]
      %v342 = vld [vmem:[#allocation2 + $0x180] sm:$0xff]
      %v343 = vld [vmem:[#allocation2 + $0x188] sm:$0xff]
      %v344 = vld [vmem:[#allocation2 + $0x190] sm:$0xff]
      %v345 = vld [vmem:[#allocation2 + $0x198] sm:$0xff]
      %v346 = vld [vmem:[#allocation2 + $0x1a0] sm:$0xff]
      %v347 = vld [vmem:[#allocation2 + $0x1a8] sm:$0xff]
      %v348 = vld [vmem:[#allocation2 + $0x1b0] sm:$0xff]
      %v349 = vld [vmem:[#allocation2 + $0x1b8] sm:$0xff]
      %v350 = vld [vmem:[#allocation2 + $0x1c0] sm:$0xff]
      %v351 = vld [vmem:[#allocation2 + $0x1c8] sm:$0xff]
      %v352 = vld [vmem:[#allocation2 + $0x1d0] sm:$0xff]
      %v353 = vld [vmem:[#allocation2 + $0x1d8] sm:$0xff]
      %v354 = vld [vmem:[#allocation2 + $0x1e0] sm:$0xff]
      %v355 = vld [vmem:[#allocation2 + $0x1e8] sm:$0xff]
      %v356 = vld [vmem:[#allocation2 + $0x1f0] sm:$0xff]
      %v357 = vld [vmem:[#allocation2 + $0x1f8] sm:$0xff]
      %v358 = vld [vmem:[%s205] sm:$0xff]
      %v359 = vld [vmem:[%s205 + $0x8] sm:$0xff]
      %v360 = vld [vmem:[%s205 + $0x10] sm:$0xff]
      %v361 = vld [vmem:[%s205 + $0x18] sm:$0xff]
      %v362 = vld [vmem:[%s205 + $0x20] sm:$0xff]
      %v363 = vld [vmem:[%s205 + $0x28] sm:$0xff]
      %v364 = vld [vmem:[%s205 + $0x30] sm:$0xff]
      %v365 = vld [vmem:[%s205 + $0x38] sm:$0xff]
      %v366 = vld [vmem:[%s205 + $0x40] sm:$0xff]
      %v367 = vld [vmem:[%s205 + $0x48] sm:$0xff]
      %v368 = vld [vmem:[%s205 + $0x50] sm:$0xff]
      %v369 = vld [vmem:[%s205 + $0x58] sm:$0xff]
      %v370 = vld [vmem:[%s205 + $0x60] sm:$0xff]
      %v371 = vld [vmem:[%s205 + $0x68] sm:$0xff]
      %v372 = vld [vmem:[%s205 + $0x70] sm:$0xff]
      %v373 = vld [vmem:[%s205 + $0x78] sm:$0xff]
      %v374 = vld [vmem:[%s205 + $0x80] sm:$0xff]
      %v375 = vld [vmem:[%s205 + $0x88] sm:$0xff]
      %v376 = vld [vmem:[%s205 + $0x90] sm:$0xff]
      %v377 = vld [vmem:[%s205 + $0x98] sm:$0xff]
      %v378 = vld [vmem:[%s205 + $0xa0] sm:$0xff]
      %v379 = vld [vmem:[%s205 + $0xa8] sm:$0xff]
      %v380 = vld [vmem:[%s205 + $0xb0] sm:$0xff]
      %v381 = vld [vmem:[%s205 + $0xb8] sm:$0xff]
      %v382 = vld [vmem:[%s205 + $0xc0] sm:$0xff]
      %v383 = vld [vmem:[%s205 + $0xc8] sm:$0xff]
      %v384 = vld [vmem:[%s205 + $0xd0] sm:$0xff]
      %v385 = vld [vmem:[%s205 + $0xd8] sm:$0xff]
      %v386 = vld [vmem:[%s205 + $0xe0] sm:$0xff]
      %v387 = vld [vmem:[%s205 + $0xe8] sm:$0xff]
      %v388 = vld [vmem:[%s205 + $0xf0] sm:$0xff]
      %v389 = vld [vmem:[%s205 + $0xf8] sm:$0xff]
      %v390 = vld [vmem:[%s205 + $0x100] sm:$0xff]
      %v391 = vld [vmem:[%s205 + $0x108] sm:$0xff]
      %v392 = vld [vmem:[%s205 + $0x110] sm:$0xff]
      %v393 = vld [vmem:[%s205 + $0x118] sm:$0xff]
      %v394 = vld [vmem:[%s205 + $0x120] sm:$0xff]
      %v395 = vld [vmem:[%s205 + $0x128] sm:$0xff]
      %v396 = vld [vmem:[%s205 + $0x130] sm:$0xff]
      %v397 = vld [vmem:[%s205 + $0x138] sm:$0xff]
      %v398 = vld [vmem:[%s205 + $0x140] sm:$0xff]
      %v399 = vld [vmem:[%s205 + $0x148] sm:$0xff]
      %v400 = vld [vmem:[%s205 + $0x150] sm:$0xff]
      %v401 = vld [vmem:[%s205 + $0x158] sm:$0xff]
      %v402 = vld [vmem:[%s205 + $0x160] sm:$0xff]
      %v403 = vld [vmem:[%s205 + $0x168] sm:$0xff]
      %v404 = vld [vmem:[%s205 + $0x170] sm:$0xff]
      %v405 = vld [vmem:[%s205 + $0x178] sm:$0xff]
      %v406 = vld [vmem:[%s205 + $0x180] sm:$0xff]
      %v407 = vld [vmem:[%s205 + $0x188] sm:$0xff]
      %v408 = vld [vmem:[%s205 + $0x190] sm:$0xff]
      %v409 = vld [vmem:[%s205 + $0x198] sm:$0xff]
      %v410 = vld [vmem:[%s205 + $0x1a0] sm:$0xff]
      %v411 = vld [vmem:[%s205 + $0x1a8] sm:$0xff]
      %v412 = vld [vmem:[%s205 + $0x1b0] sm:$0xff]
      %v413 = vld [vmem:[%s205 + $0x1b8] sm:$0xff]
      %v414 = vld [vmem:[%s205 + $0x1c0] sm:$0xff]
      %v415 = vld [vmem:[%s205 + $0x1c8] sm:$0xff]
      %v416 = vld [vmem:[%s205 + $0x1d0] sm:$0xff]
      %v417 = vld [vmem:[%s205 + $0x1d8] sm:$0xff]
      %v418 = vld [vmem:[%s205 + $0x1e0] sm:$0xff]
      %v419 = vld [vmem:[%s205 + $0x1e8] sm:$0xff]
      %v420 = vld [vmem:[%s205 + $0x1f0] sm:$0xff]
      %v421 = vld [vmem:[%s205 + $0x1f8] sm:$0xff]
      %v422 = vld [vmem:[%s205 + $0x200] sm:$0xff]
      %v423 = vld [vmem:[%s205 + $0x208] sm:$0xff]
      %v424 = vld [vmem:[%s205 + $0x210] sm:$0xff]
      %v425 = vld [vmem:[%s205 + $0x218] sm:$0xff]
      %v426 = vld [vmem:[%s205 + $0x220] sm:$0xff]
      %v427 = vld [vmem:[%s205 + $0x228] sm:$0xff]
      %v428 = vld [vmem:[%s205 + $0x230] sm:$0xff]
      %v429 = vld [vmem:[%s205 + $0x238] sm:$0xff]
      %v430 = vld [vmem:[%s205 + $0x240] sm:$0xff]
      %v431 = vld [vmem:[%s205 + $0x248] sm:$0xff]
      %v432 = vld [vmem:[%s205 + $0x250] sm:$0xff]
      %v433 = vld [vmem:[%s205 + $0x258] sm:$0xff]
      %v434 = vld [vmem:[%s205 + $0x260] sm:$0xff]
      %v435 = vld [vmem:[%s205 + $0x268] sm:$0xff]
      %v436 = vld [vmem:[%s205 + $0x270] sm:$0xff]
      %v437 = vld [vmem:[%s205 + $0x278] sm:$0xff]
      %v438 = vld [vmem:[%s205 + $0x280] sm:$0xff]
      %v439 = vld [vmem:[%s205 + $0x288] sm:$0xff]
      %v440 = vld [vmem:[%s205 + $0x290] sm:$0xff]
      %v441 = vld [vmem:[%s205 + $0x298] sm:$0xff]
      %v442 = vld [vmem:[%s205 + $0x2a0] sm:$0xff]
      %v443 = vld [vmem:[%s205 + $0x2a8] sm:$0xff]
      %v444 = vld [vmem:[%s205 + $0x2b0] sm:$0xff]
      %v445 = vld [vmem:[%s205 + $0x2b8] sm:$0xff]
      %v446 = vld [vmem:[%s205 + $0x2c0] sm:$0xff]
      %v447 = vld [vmem:[%s205 + $0x2c8] sm:$0xff]
      %v448 = vld [vmem:[%s205 + $0x2d0] sm:$0xff]
      %v449 = vld [vmem:[%s205 + $0x2d8] sm:$0xff]
      %v450 = vld [vmem:[%s205 + $0x2e0] sm:$0xff]
      %v451 = vld [vmem:[%s205 + $0x2e8] sm:$0xff]
      %v452 = vld [vmem:[%s205 + $0x2f0] sm:$0xff]
      %v453 = vld [vmem:[%s205 + $0x2f8] sm:$0xff]
      %v454 = vld [vmem:[%s205 + $0x300] sm:$0xff]
      %v455 = vld [vmem:[%s205 + $0x308] sm:$0xff]
      %v456 = vld [vmem:[%s205 + $0x310] sm:$0xff]
      %v457 = vld [vmem:[%s205 + $0x318] sm:$0xff]
      %v458 = vld [vmem:[%s205 + $0x320] sm:$0xff]
      %v459 = vld [vmem:[%s205 + $0x328] sm:$0xff]
      %v460 = vld [vmem:[%s205 + $0x330] sm:$0xff]
      %v461 = vld [vmem:[%s205 + $0x338] sm:$0xff]
      %v462 = vld [vmem:[%s205 + $0x340] sm:$0xff]
      %v463 = vld [vmem:[%s205 + $0x348] sm:$0xff]
      %v464 = vld [vmem:[%s205 + $0x350] sm:$0xff]
      %v465 = vld [vmem:[%s205 + $0x358] sm:$0xff]
      %v466 = vld [vmem:[%s205 + $0x360] sm:$0xff]
      %v467 = vld [vmem:[%s205 + $0x368] sm:$0xff]
      %v468 = vld [vmem:[%s205 + $0x370] sm:$0xff]
      %v469 = vld [vmem:[%s205 + $0x378] sm:$0xff]
      %v470 = vld [vmem:[%s205 + $0x380] sm:$0xff]
      %v471 = vld [vmem:[%s205 + $0x388] sm:$0xff]
      %v472 = vld [vmem:[%s205 + $0x390] sm:$0xff]
      %v473 = vld [vmem:[%s205 + $0x398] sm:$0xff]
      %v474 = vld [vmem:[%s205 + $0x3a0] sm:$0xff]
      %v475 = vld [vmem:[%s205 + $0x3a8] sm:$0xff]
      %v476 = vld [vmem:[%s205 + $0x3b0] sm:$0xff]
      %v477 = vld [vmem:[%s205 + $0x3b8] sm:$0xff]
      %v478 = vld [vmem:[%s205 + $0x3c0] sm:$0xff]
      %v479 = vld [vmem:[%s205 + $0x3c8] sm:$0xff]
      %v480 = vld [vmem:[%s205 + $0x3d0] sm:$0xff]
      %v481 = vld [vmem:[%s205 + $0x3d8] sm:$0xff]
      %v482 = vld [vmem:[%s205 + $0x3e0] sm:$0xff]
      %v483 = vld [vmem:[%s205 + $0x3e8] sm:$0xff]
      %v484 = vld [vmem:[%s205 + $0x3f0] sm:$0xff]
      %v485 = vld [vmem:[%s205 + $0x3f8] sm:$0xff]
      %v486 = vld [vmem:[%s215] sm:$0xf]
      %v487 = vld [vmem:[%s215 + $0x4] sm:$0xf]
      %v488 = vld [vmem:[%s215 + $0x8] sm:$0xf]
      %v489 = vld [vmem:[%s215 + $0xc] sm:$0xf]
      %v490 = vld [vmem:[%s215 + $0x10] sm:$0xf]
      %v491 = vld [vmem:[%s215 + $0x14] sm:$0xf]
      %v492 = vld [vmem:[%s215 + $0x18] sm:$0xf]
      %v493 = vld [vmem:[%s215 + $0x1c] sm:$0xf]
      %v494 = vld [vmem:[%s215 + $0x20] sm:$0xf]
      %v495 = vld [vmem:[%s215 + $0x24] sm:$0xf]
      %v496 = vld [vmem:[%s215 + $0x28] sm:$0xf]
      %v497 = vld [vmem:[%s215 + $0x2c] sm:$0xf]
      %v498 = vld [vmem:[%s215 + $0x30] sm:$0xf]
      %v499 = vld [vmem:[%s215 + $0x34] sm:$0xf]
      %v500 = vld [vmem:[%s215 + $0x38] sm:$0xf]
      %v501 = vld [vmem:[%s215 + $0x3c] sm:$0xf]
      %v502 = vld [vmem:[%s215 + $0x40] sm:$0xf]
      %v503 = vld [vmem:[%s215 + $0x44] sm:$0xf]
      %v504 = vld [vmem:[%s215 + $0x48] sm:$0xf]
      %v505 = vld [vmem:[%s215 + $0x4c] sm:$0xf]
      %v506 = vld [vmem:[%s215 + $0x50] sm:$0xf]
      %v507 = vld [vmem:[%s215 + $0x54] sm:$0xf]
      %v508 = vld [vmem:[%s215 + $0x58] sm:$0xf]
      %v509 = vld [vmem:[%s215 + $0x5c] sm:$0xf]
      %v510 = vld [vmem:[%s215 + $0x60] sm:$0xf]
      %v511 = vld [vmem:[%s215 + $0x64] sm:$0xf]
      %v512 = vld [vmem:[%s215 + $0x68] sm:$0xf]
      %v513 = vld [vmem:[%s215 + $0x6c] sm:$0xf]
      %v514 = vld [vmem:[%s215 + $0x70] sm:$0xf]
      %v515 = vld [vmem:[%s215 + $0x74] sm:$0xf]
      %v516 = vld [vmem:[%s215 + $0x78] sm:$0xf]
      %v517 = vld [vmem:[%s215 + $0x7c] sm:$0xf]
      %v518 = vld [vmem:[%s215 + $0x80] sm:$0xf]
      %v519 = vld [vmem:[%s215 + $0x84] sm:$0xf]
      %v520 = vld [vmem:[%s215 + $0x88] sm:$0xf]
      %v521 = vld [vmem:[%s215 + $0x8c] sm:$0xf]
      %v522 = vld [vmem:[%s215 + $0x90] sm:$0xf]
      %v523 = vld [vmem:[%s215 + $0x94] sm:$0xf]
      %v524 = vld [vmem:[%s215 + $0x98] sm:$0xf]
      %v525 = vld [vmem:[%s215 + $0x9c] sm:$0xf]
      %v526 = vld [vmem:[%s215 + $0xa0] sm:$0xf]
      %v527 = vld [vmem:[%s215 + $0xa4] sm:$0xf]
      %v528 = vld [vmem:[%s215 + $0xa8] sm:$0xf]
      %v529 = vld [vmem:[%s215 + $0xac] sm:$0xf]
      %v530 = vld [vmem:[%s215 + $0xb0] sm:$0xf]
      %v531 = vld [vmem:[%s215 + $0xb4] sm:$0xf]
      %v532 = vld [vmem:[%s215 + $0xb8] sm:$0xf]
      %v533 = vld [vmem:[%s215 + $0xbc] sm:$0xf]
      %v534 = vld [vmem:[%s215 + $0xc0] sm:$0xf]
      %v535 = vld [vmem:[%s215 + $0xc4] sm:$0xf]
      %v536 = vld [vmem:[%s215 + $0xc8] sm:$0xf]
      %v537 = vld [vmem:[%s215 + $0xcc] sm:$0xf]
      %v538 = vld [vmem:[%s215 + $0xd0] sm:$0xf]
      %v539 = vld [vmem:[%s215 + $0xd4] sm:$0xf]
      %v540 = vld [vmem:[%s215 + $0xd8] sm:$0xf]
      %v541 = vld [vmem:[%s215 + $0xdc] sm:$0xf]
      %v542 = vld [vmem:[%s215 + $0xe0] sm:$0xf]
      %v543 = vld [vmem:[%s215 + $0xe4] sm:$0xf]
      %v544 = vld [vmem:[%s215 + $0xe8] sm:$0xf]
      %v545 = vld [vmem:[%s215 + $0xec] sm:$0xf]
      %v546 = vld [vmem:[%s215 + $0xf0] sm:$0xf]
      %v547 = vld [vmem:[%s215 + $0xf4] sm:$0xf]
      %v548 = vld [vmem:[%s215 + $0xf8] sm:$0xf]
      %v549 = vld [vmem:[%s215 + $0xfc] sm:$0xf]
      %v678 = vunpack.c.l.b16 %v358
      %v679 = vunpack.c.h.b16 %v358
      %v680 = vunpack.c.l.b16 %v359
      %v681 = vunpack.c.h.b16 %v359
      %v682 = vunpack.c.l.b16 %v360
      %v683 = vunpack.c.h.b16 %v360
      %v684 = vunpack.c.l.b16 %v361
      %v685 = vunpack.c.h.b16 %v361
      %v686 = vunpack.c.l.b16 %v362
      %v687 = vunpack.c.h.b16 %v362
      %v688 = vunpack.c.l.b16 %v363
      %v689 = vunpack.c.h.b16 %v363
      %v690 = vunpack.c.l.b16 %v364
      %v691 = vunpack.c.h.b16 %v364
      %v692 = vunpack.c.l.b16 %v365
      %v693 = vunpack.c.h.b16 %v365
      %v694 = vunpack.c.l.b16 %v366
      %v695 = vunpack.c.h.b16 %v366
      %v696 = vunpack.c.l.b16 %v367
      %v697 = vunpack.c.h.b16 %v367
      %v698 = vunpack.c.l.b16 %v368
      %v699 = vunpack.c.h.b16 %v368
      %v700 = vunpack.c.l.b16 %v369
      %v701 = vunpack.c.h.b16 %v369
      %v702 = vunpack.c.l.b16 %v370
      %v703 = vunpack.c.h.b16 %v370
      %v704 = vunpack.c.l.b16 %v371
      %v705 = vunpack.c.h.b16 %v371
      %v706 = vunpack.c.l.b16 %v372
      %v707 = vunpack.c.h.b16 %v372
      %v708 = vunpack.c.l.b16 %v373
      %v709 = vunpack.c.h.b16 %v373
      %v710 = vunpack.c.l.b16 %v374
      %v711 = vunpack.c.h.b16 %v374
      %v712 = vunpack.c.l.b16 %v375
      %v713 = vunpack.c.h.b16 %v375
      %v714 = vunpack.c.l.b16 %v376
      %v715 = vunpack.c.h.b16 %v376
      %v716 = vunpack.c.l.b16 %v377
      %v717 = vunpack.c.h.b16 %v377
      %v718 = vunpack.c.l.b16 %v378
      %v719 = vunpack.c.h.b16 %v378
      %v720 = vunpack.c.l.b16 %v379
      %v721 = vunpack.c.h.b16 %v379
      %v722 = vunpack.c.l.b16 %v380
      %v723 = vunpack.c.h.b16 %v380
      %v724 = vunpack.c.l.b16 %v381
      %v725 = vunpack.c.h.b16 %v381
      %v726 = vunpack.c.l.b16 %v382
      %v727 = vunpack.c.h.b16 %v382
      %v728 = vunpack.c.l.b16 %v383
      %v729 = vunpack.c.h.b16 %v383
      %v730 = vunpack.c.l.b16 %v384
      %v731 = vunpack.c.h.b16 %v384
      %v732 = vunpack.c.l.b16 %v385
      %v733 = vunpack.c.h.b16 %v385
      %v734 = vunpack.c.l.b16 %v386
      %v735 = vunpack.c.h.b16 %v386
      %v736 = vunpack.c.l.b16 %v387
      %v737 = vunpack.c.h.b16 %v387
      %v738 = vunpack.c.l.b16 %v388
      %v739 = vunpack.c.h.b16 %v388
      %v740 = vunpack.c.l.b16 %v389
      %v741 = vunpack.c.h.b16 %v389
      %v742 = vunpack.c.l.b16 %v390
      %v743 = vunpack.c.h.b16 %v390
      %v744 = vunpack.c.l.b16 %v391
      %v745 = vunpack.c.h.b16 %v391
      %v746 = vunpack.c.l.b16 %v392
      %v747 = vunpack.c.h.b16 %v392
      %v748 = vunpack.c.l.b16 %v393
      %v749 = vunpack.c.h.b16 %v393
      %v750 = vunpack.c.l.b16 %v394
      %v751 = vunpack.c.h.b16 %v394
      %v752 = vunpack.c.l.b16 %v395
      %v753 = vunpack.c.h.b16 %v395
      %v754 = vunpack.c.l.b16 %v396
      %v755 = vunpack.c.h.b16 %v396
      %v756 = vunpack.c.l.b16 %v397
      %v757 = vunpack.c.h.b16 %v397
      %v758 = vunpack.c.l.b16 %v398
      %v759 = vunpack.c.h.b16 %v398
      %v760 = vunpack.c.l.b16 %v399
      %v761 = vunpack.c.h.b16 %v399
      %v762 = vunpack.c.l.b16 %v400
      %v763 = vunpack.c.h.b16 %v400
      %v764 = vunpack.c.l.b16 %v401
      %v765 = vunpack.c.h.b16 %v401
      %v766 = vunpack.c.l.b16 %v402
      %v767 = vunpack.c.h.b16 %v402
      %v768 = vunpack.c.l.b16 %v403
      %v769 = vunpack.c.h.b16 %v403
      %v770 = vunpack.c.l.b16 %v404
      %v771 = vunpack.c.h.b16 %v404
      %v772 = vunpack.c.l.b16 %v405
      %v773 = vunpack.c.h.b16 %v405
      %v774 = vunpack.c.l.b16 %v406
      %v775 = vunpack.c.h.b16 %v406
      %v776 = vunpack.c.l.b16 %v407
      %v777 = vunpack.c.h.b16 %v407
      %v778 = vunpack.c.l.b16 %v408
      %v779 = vunpack.c.h.b16 %v408
      %v780 = vunpack.c.l.b16 %v409
      %v781 = vunpack.c.h.b16 %v409
      %v782 = vunpack.c.l.b16 %v410
      %v783 = vunpack.c.h.b16 %v410
      %v784 = vunpack.c.l.b16 %v411
      %v785 = vunpack.c.h.b16 %v411
      %v786 = vunpack.c.l.b16 %v412
      %v787 = vunpack.c.h.b16 %v412
      %v788 = vunpack.c.l.b16 %v413
      %v789 = vunpack.c.h.b16 %v413
      %v790 = vunpack.c.l.b16 %v414
      %v791 = vunpack.c.h.b16 %v414
      %v792 = vunpack.c.l.b16 %v415
      %v793 = vunpack.c.h.b16 %v415
      %v794 = vunpack.c.l.b16 %v416
      %v795 = vunpack.c.h.b16 %v416
      %v796 = vunpack.c.l.b16 %v417
      %v797 = vunpack.c.h.b16 %v417
      %v798 = vunpack.c.l.b16 %v418
      %v799 = vunpack.c.h.b16 %v418
      %v800 = vunpack.c.l.b16 %v419
      %v801 = vunpack.c.h.b16 %v419
      %v802 = vunpack.c.l.b16 %v420
      %v803 = vunpack.c.h.b16 %v420
      %v804 = vunpack.c.l.b16 %v421
      %v805 = vunpack.c.h.b16 %v421
      %v806 = vunpack.c.l.b16 %v422
      %v807 = vunpack.c.h.b16 %v422
      %v808 = vunpack.c.l.b16 %v423
      %v809 = vunpack.c.h.b16 %v423
      %v810 = vunpack.c.l.b16 %v424
      %v811 = vunpack.c.h.b16 %v424
      %v812 = vunpack.c.l.b16 %v425
      %v813 = vunpack.c.h.b16 %v425
      %v814 = vunpack.c.l.b16 %v426
      %v815 = vunpack.c.h.b16 %v426
      %v816 = vunpack.c.l.b16 %v427
      %v817 = vunpack.c.h.b16 %v427
      %v818 = vunpack.c.l.b16 %v428
      %v819 = vunpack.c.h.b16 %v428
      %v820 = vunpack.c.l.b16 %v429
      %v821 = vunpack.c.h.b16 %v429
      %v822 = vunpack.c.l.b16 %v430
      %v823 = vunpack.c.h.b16 %v430
      %v824 = vunpack.c.l.b16 %v431
      %v825 = vunpack.c.h.b16 %v431
      %v826 = vunpack.c.l.b16 %v432
      %v827 = vunpack.c.h.b16 %v432
      %v828 = vunpack.c.l.b16 %v433
      %v829 = vunpack.c.h.b16 %v433
      %v830 = vunpack.c.l.b16 %v434
      %v831 = vunpack.c.h.b16 %v434
      %v832 = vunpack.c.l.b16 %v435
      %v833 = vunpack.c.h.b16 %v435
      %v834 = vunpack.c.l.b16 %v436
      %v835 = vunpack.c.h.b16 %v436
      %v836 = vunpack.c.l.b16 %v437
      %v837 = vunpack.c.h.b16 %v437
      %v838 = vunpack.c.l.b16 %v438
      %v839 = vunpack.c.h.b16 %v438
      %v840 = vunpack.c.l.b16 %v439
      %v841 = vunpack.c.h.b16 %v439
      %v842 = vunpack.c.l.b16 %v440
      %v843 = vunpack.c.h.b16 %v440
      %v844 = vunpack.c.l.b16 %v441
      %v845 = vunpack.c.h.b16 %v441
      %v846 = vunpack.c.l.b16 %v442
      %v847 = vunpack.c.h.b16 %v442
      %v848 = vunpack.c.l.b16 %v443
      %v849 = vunpack.c.h.b16 %v443
      %v850 = vunpack.c.l.b16 %v444
      %v851 = vunpack.c.h.b16 %v444
      %v852 = vunpack.c.l.b16 %v445
      %v853 = vunpack.c.h.b16 %v445
      %v854 = vunpack.c.l.b16 %v446
      %v855 = vunpack.c.h.b16 %v446
      %v856 = vunpack.c.l.b16 %v447
      %v857 = vunpack.c.h.b16 %v447
      %v858 = vunpack.c.l.b16 %v448
      %v859 = vunpack.c.h.b16 %v448
      %v860 = vunpack.c.l.b16 %v449
      %v861 = vunpack.c.h.b16 %v449
      %v862 = vunpack.c.l.b16 %v450
      %v863 = vunpack.c.h.b16 %v450
      %v864 = vunpack.c.l.b16 %v451
      %v865 = vunpack.c.h.b16 %v451
      %v866 = vunpack.c.l.b16 %v452
      %v867 = vunpack.c.h.b16 %v452
      %v868 = vunpack.c.l.b16 %v453
      %v869 = vunpack.c.h.b16 %v453
      %v870 = vunpack.c.l.b16 %v454
      %v871 = vunpack.c.h.b16 %v454
      %v872 = vunpack.c.l.b16 %v455
      %v873 = vunpack.c.h.b16 %v455
      %v874 = vunpack.c.l.b16 %v456
      %v875 = vunpack.c.h.b16 %v456
      %v876 = vunpack.c.l.b16 %v457
      %v877 = vunpack.c.h.b16 %v457
      %v878 = vunpack.c.l.b16 %v458
      %v879 = vunpack.c.h.b16 %v458
      %v880 = vunpack.c.l.b16 %v459
      %v881 = vunpack.c.h.b16 %v459
      %v882 = vunpack.c.l.b16 %v460
      %v883 = vunpack.c.h.b16 %v460
      %v884 = vunpack.c.l.b16 %v461
      %v885 = vunpack.c.h.b16 %v461
      %v886 = vunpack.c.l.b16 %v462
      %v887 = vunpack.c.h.b16 %v462
      %v888 = vunpack.c.l.b16 %v463
      %v889 = vunpack.c.h.b16 %v463
      %v890 = vunpack.c.l.b16 %v464
      %v891 = vunpack.c.h.b16 %v464
      %v892 = vunpack.c.l.b16 %v465
      %v893 = vunpack.c.h.b16 %v465
      %v894 = vunpack.c.l.b16 %v466
      %v895 = vunpack.c.h.b16 %v466
      %v896 = vunpack.c.l.b16 %v467
      %v897 = vunpack.c.h.b16 %v467
      %v898 = vunpack.c.l.b16 %v468
      %v899 = vunpack.c.h.b16 %v468
      %v900 = vunpack.c.l.b16 %v469
      %v901 = vunpack.c.h.b16 %v469
      %v902 = vunpack.c.l.b16 %v470
      %v903 = vunpack.c.h.b16 %v470
      %v904 = vunpack.c.l.b16 %v471
      %v905 = vunpack.c.h.b16 %v471
      %v906 = vunpack.c.l.b16 %v472
      %v907 = vunpack.c.h.b16 %v472
      %v908 = vunpack.c.l.b16 %v473
      %v909 = vunpack.c.h.b16 %v473
      %v910 = vunpack.c.l.b16 %v474
      %v911 = vunpack.c.h.b16 %v474
      %v912 = vunpack.c.l.b16 %v475
      %v913 = vunpack.c.h.b16 %v475
      %v914 = vunpack.c.l.b16 %v476
      %v915 = vunpack.c.h.b16 %v476
      %v916 = vunpack.c.l.b16 %v477
      %v917 = vunpack.c.h.b16 %v477
      %v918 = vunpack.c.l.b16 %v478
      %v919 = vunpack.c.h.b16 %v478
      %v920 = vunpack.c.l.b16 %v479
      %v921 = vunpack.c.h.b16 %v479
      %v922 = vunpack.c.l.b16 %v480
      %v923 = vunpack.c.h.b16 %v480
      %v924 = vunpack.c.l.b16 %v481
      %v925 = vunpack.c.h.b16 %v481
      %v926 = vunpack.c.l.b16 %v482
      %v927 = vunpack.c.h.b16 %v482
      %v928 = vunpack.c.l.b16 %v483
      %v929 = vunpack.c.h.b16 %v483
      %v930 = vunpack.c.l.b16 %v484
      %v931 = vunpack.c.h.b16 %v484
      %v932 = vunpack.c.l.b16 %v485
      %v933 = vunpack.c.h.b16 %v485
      %v934 = vpack.c.b16 %v682, %v678
      %v935 = vpack.c.b16 %v683, %v679
      %v936 = vpack.c.b16 %v684, %v680
      %v937 = vpack.c.b16 %v685, %v681
      %v938 = vpack.c.b16 %v690, %v686
      %v939 = vpack.c.b16 %v691, %v687
      %v940 = vpack.c.b16 %v692, %v688
      %v941 = vpack.c.b16 %v693, %v689
      %v942 = vpack.c.b16 %v698, %v694
      %v943 = vpack.c.b16 %v699, %v695
      %v944 = vpack.c.b16 %v700, %v696
      %v945 = vpack.c.b16 %v701, %v697
      %v946 = vpack.c.b16 %v706, %v702
      %v947 = vpack.c.b16 %v707, %v703
      %v948 = vpack.c.b16 %v708, %v704
      %v949 = vpack.c.b16 %v709, %v705
      %v950 = vpack.c.b16 %v714, %v710
      %v951 = vpack.c.b16 %v715, %v711
      %v952 = vpack.c.b16 %v716, %v712
      %v953 = vpack.c.b16 %v717, %v713
      %v954 = vpack.c.b16 %v722, %v718
      %v955 = vpack.c.b16 %v723, %v719
      %v956 = vpack.c.b16 %v724, %v720
      %v957 = vpack.c.b16 %v725, %v721
      %v958 = vpack.c.b16 %v730, %v726
      %v959 = vpack.c.b16 %v731, %v727
      %v960 = vpack.c.b16 %v732, %v728
      %v961 = vpack.c.b16 %v733, %v729
      %v962 = vpack.c.b16 %v738, %v734
      %v963 = vpack.c.b16 %v739, %v735
      %v964 = vpack.c.b16 %v740, %v736
      %v965 = vpack.c.b16 %v741, %v737
      %v966 = vpack.c.b16 %v746, %v742
      %v967 = vpack.c.b16 %v747, %v743
      %v968 = vpack.c.b16 %v748, %v744
      %v969 = vpack.c.b16 %v749, %v745
      %v970 = vpack.c.b16 %v754, %v750
      %v971 = vpack.c.b16 %v755, %v751
      %v972 = vpack.c.b16 %v756, %v752
      %v973 = vpack.c.b16 %v757, %v753
      %v974 = vpack.c.b16 %v762, %v758
      %v975 = vpack.c.b16 %v763, %v759
      %v976 = vpack.c.b16 %v764, %v760
      %v977 = vpack.c.b16 %v765, %v761
      %v978 = vpack.c.b16 %v770, %v766
      %v979 = vpack.c.b16 %v771, %v767
      %v980 = vpack.c.b16 %v772, %v768
      %v981 = vpack.c.b16 %v773, %v769
      %v982 = vpack.c.b16 %v778, %v774
      %v983 = vpack.c.b16 %v779, %v775
      %v984 = vpack.c.b16 %v780, %v776
      %v985 = vpack.c.b16 %v781, %v777
      %v986 = vpack.c.b16 %v786, %v782
      %v987 = vpack.c.b16 %v787, %v783
      %v988 = vpack.c.b16 %v788, %v784
      %v989 = vpack.c.b16 %v789, %v785
      %v990 = vpack.c.b16 %v794, %v790
      %v991 = vpack.c.b16 %v795, %v791
      %v992 = vpack.c.b16 %v796, %v792
      %v993 = vpack.c.b16 %v797, %v793
      %v994 = vpack.c.b16 %v802, %v798
      %v995 = vpack.c.b16 %v803, %v799
      %v996 = vpack.c.b16 %v804, %v800
      %v997 = vpack.c.b16 %v805, %v801
      %v998 = vpack.c.b16 %v810, %v806
      %v999 = vpack.c.b16 %v811, %v807
      %v1000 = vpack.c.b16 %v812, %v808
      %v1001 = vpack.c.b16 %v813, %v809
      %v1002 = vpack.c.b16 %v818, %v814
      %v1003 = vpack.c.b16 %v819, %v815
      %v1004 = vpack.c.b16 %v820, %v816
      %v1005 = vpack.c.b16 %v821, %v817
      %v1006 = vpack.c.b16 %v826, %v822
      %v1007 = vpack.c.b16 %v827, %v823
      %v1008 = vpack.c.b16 %v828, %v824
      %v1009 = vpack.c.b16 %v829, %v825
      %v1010 = vpack.c.b16 %v834, %v830
      %v1011 = vpack.c.b16 %v835, %v831
      %v1012 = vpack.c.b16 %v836, %v832
      %v1013 = vpack.c.b16 %v837, %v833
      %v1014 = vpack.c.b16 %v842, %v838
      %v1015 = vpack.c.b16 %v843, %v839
      %v1016 = vpack.c.b16 %v844, %v840
      %v1017 = vpack.c.b16 %v845, %v841
      %v1018 = vpack.c.b16 %v850, %v846
      %v1019 = vpack.c.b16 %v851, %v847
      %v1020 = vpack.c.b16 %v852, %v848
      %v1021 = vpack.c.b16 %v853, %v849
      %v1022 = vpack.c.b16 %v858, %v854
      %v1023 = vpack.c.b16 %v859, %v855
      %v1024 = vpack.c.b16 %v860, %v856
      %v1025 = vpack.c.b16 %v861, %v857
      %v1026 = vpack.c.b16 %v866, %v862
      %v1027 = vpack.c.b16 %v867, %v863
      %v1028 = vpack.c.b16 %v868, %v864
      %v1029 = vpack.c.b16 %v869, %v865
      %v1030 = vpack.c.b16 %v874, %v870
      %v1031 = vpack.c.b16 %v875, %v871
      %v1032 = vpack.c.b16 %v876, %v872
      %v1033 = vpack.c.b16 %v877, %v873
      %v1034 = vpack.c.b16 %v882, %v878
      %v1035 = vpack.c.b16 %v883, %v879
      %v1036 = vpack.c.b16 %v884, %v880
      %v1037 = vpack.c.b16 %v885, %v881
      %v1038 = vpack.c.b16 %v890, %v886
      %v1039 = vpack.c.b16 %v891, %v887
      %v1040 = vpack.c.b16 %v892, %v888
      %v1041 = vpack.c.b16 %v893, %v889
      %v1042 = vpack.c.b16 %v898, %v894
      %v1043 = vpack.c.b16 %v899, %v895
      %v1044 = vpack.c.b16 %v900, %v896
      %v1045 = vpack.c.b16 %v901, %v897
      %v1046 = vpack.c.b16 %v906, %v902
      %v1047 = vpack.c.b16 %v907, %v903
      %v1048 = vpack.c.b16 %v908, %v904
      %v1049 = vpack.c.b16 %v909, %v905
      %v1050 = vpack.c.b16 %v914, %v910
      %v1051 = vpack.c.b16 %v915, %v911
      %v1052 = vpack.c.b16 %v916, %v912
      %v1053 = vpack.c.b16 %v917, %v913
      %v1054 = vpack.c.b16 %v922, %v918
      %v1055 = vpack.c.b16 %v923, %v919
      %v1056 = vpack.c.b16 %v924, %v920
      %v1057 = vpack.c.b16 %v925, %v921
      %v1058 = vpack.c.b16 %v930, %v926
      %v1059 = vpack.c.b16 %v931, %v927
      %v1060 = vpack.c.b16 %v932, %v928
      %v1061 = vpack.c.b16 %v933, %v929
      %v1254 = vunpack.c.l.b16 %v486
      %v1255 = vunpack.c.l.b16 %v487
      %v1256 = vunpack.c.l.b16 %v488
      %v1257 = vunpack.c.l.b16 %v489
      %v1258 = vunpack.c.l.b16 %v490
      %v1259 = vunpack.c.l.b16 %v491
      %v1260 = vunpack.c.l.b16 %v492
      %v1261 = vunpack.c.l.b16 %v493
      %v1262 = vunpack.c.l.b16 %v494
      %v1263 = vunpack.c.l.b16 %v495
      %v1264 = vunpack.c.l.b16 %v496
      %v1265 = vunpack.c.l.b16 %v497
      %v1266 = vunpack.c.l.b16 %v498
      %v1267 = vunpack.c.l.b16 %v499
      %v1268 = vunpack.c.l.b16 %v500
      %v1269 = vunpack.c.l.b16 %v501
      %v1270 = vunpack.c.l.b16 %v502
      %v1271 = vunpack.c.l.b16 %v503
      %v1272 = vunpack.c.l.b16 %v504
      %v1273 = vunpack.c.l.b16 %v505
      %v1274 = vunpack.c.l.b16 %v506
      %v1275 = vunpack.c.l.b16 %v507
      %v1276 = vunpack.c.l.b16 %v508
      %v1277 = vunpack.c.l.b16 %v509
      %v1278 = vunpack.c.l.b16 %v510
      %v1279 = vunpack.c.l.b16 %v511
      %v1280 = vunpack.c.l.b16 %v512
      %v1281 = vunpack.c.l.b16 %v513
      %v1282 = vunpack.c.l.b16 %v514
      %v1283 = vunpack.c.l.b16 %v515
      %v1284 = vunpack.c.l.b16 %v516
      %v1285 = vunpack.c.l.b16 %v517
      %v1286 = vunpack.c.l.b16 %v518
      %v1287 = vunpack.c.l.b16 %v519
      %v1288 = vunpack.c.l.b16 %v520
      %v1289 = vunpack.c.l.b16 %v521
      %v1290 = vunpack.c.l.b16 %v522
      %v1291 = vunpack.c.l.b16 %v523
      %v1292 = vunpack.c.l.b16 %v524
      %v1293 = vunpack.c.l.b16 %v525
      %v1294 = vunpack.c.l.b16 %v526
      %v1295 = vunpack.c.l.b16 %v527
      %v1296 = vunpack.c.l.b16 %v528
      %v1297 = vunpack.c.l.b16 %v529
      %v1298 = vunpack.c.l.b16 %v530
      %v1299 = vunpack.c.l.b16 %v531
      %v1300 = vunpack.c.l.b16 %v532
      %v1301 = vunpack.c.l.b16 %v533
      %v1302 = vunpack.c.l.b16 %v534
      %v1303 = vunpack.c.l.b16 %v535
      %v1304 = vunpack.c.l.b16 %v536
      %v1305 = vunpack.c.l.b16 %v537
      %v1306 = vunpack.c.l.b16 %v538
      %v1307 = vunpack.c.l.b16 %v539
      %v1308 = vunpack.c.l.b16 %v540
      %v1309 = vunpack.c.l.b16 %v541
      %v1310 = vunpack.c.l.b16 %v542
      %v1311 = vunpack.c.l.b16 %v543
      %v1312 = vunpack.c.l.b16 %v544
      %v1313 = vunpack.c.l.b16 %v545
      %v1314 = vunpack.c.l.b16 %v546
      %v1315 = vunpack.c.l.b16 %v547
      %v1316 = vunpack.c.l.b16 %v548
      %v1317 = vunpack.c.l.b16 %v549
      %v1318 = vpack.c.b16 %v1255, %v1254
      %v1319 = vpack.c.b16 %v1257, %v1256
      %v1320 = vpack.c.b16 %v1259, %v1258
      %v1321 = vpack.c.b16 %v1261, %v1260
      %v1322 = vpack.c.b16 %v1263, %v1262
      %v1323 = vpack.c.b16 %v1265, %v1264
      %v1324 = vpack.c.b16 %v1267, %v1266
      %v1325 = vpack.c.b16 %v1269, %v1268
      %v1326 = vpack.c.b16 %v1271, %v1270
      %v1327 = vpack.c.b16 %v1273, %v1272
      %v1328 = vpack.c.b16 %v1275, %v1274
      %v1329 = vpack.c.b16 %v1277, %v1276
      %v1330 = vpack.c.b16 %v1279, %v1278
      %v1331 = vpack.c.b16 %v1281, %v1280
      %v1332 = vpack.c.b16 %v1283, %v1282
      %v1333 = vpack.c.b16 %v1285, %v1284
      %v1334 = vpack.c.b16 %v1287, %v1286
      %v1335 = vpack.c.b16 %v1289, %v1288
      %v1336 = vpack.c.b16 %v1291, %v1290
      %v1337 = vpack.c.b16 %v1293, %v1292
      %v1338 = vpack.c.b16 %v1295, %v1294
      %v1339 = vpack.c.b16 %v1297, %v1296
      %v1340 = vpack.c.b16 %v1299, %v1298
      %v1341 = vpack.c.b16 %v1301, %v1300
      %v1342 = vpack.c.b16 %v1303, %v1302
      %v1343 = vpack.c.b16 %v1305, %v1304
      %v1344 = vpack.c.b16 %v1307, %v1306
      %v1345 = vpack.c.b16 %v1309, %v1308
      %v1346 = vpack.c.b16 %v1311, %v1310
      %v1347 = vpack.c.b16 %v1313, %v1312
      %v1348 = vpack.c.b16 %v1315, %v1314
      %v1349 = vpack.c.b16 %v1317, %v1316
      %1382 = vmatpush.bf16.msra.mxu0 %v1325
      %1383 = vmatpush.bf16.msra.mxu0 %v1324
      %1384 = vmatpush.bf16.msra.mxu0 %v1323
      %1385 = vmatpush.bf16.msra.mxu0 %v1322
      %1386 = vmatpush.bf16.msra.mxu0 %v1321
      %1387 = vmatpush.bf16.msra.mxu0 %v1320
      %1388 = vmatpush.bf16.msra.mxu0 %v1319
      %1389 = vmatpush.bf16.msra.mxu0 %v1318
      %1390 = vmatmul.bf16.gmra.mxu0 %v934
      %v1391 = vpop.f32.mrf.mxu0
      %v1392 = vadd.f32 0.0, %v1391
      %v1393 = vpop.f32.mrf.mxu0
      %v1394 = vadd.f32 0.0, %v1393
      %1395 = vmatmul.bf16.gmra.mxu0 %v938
      %v1396 = vpop.f32.mrf.mxu0
      %v1397 = vadd.f32 0.0, %v1396
      %v1398 = vpop.f32.mrf.mxu0
      %v1399 = vadd.f32 0.0, %v1398
      %1400 = vmatmul.bf16.gmra.mxu0 %v942
      %v1401 = vpop.f32.mrf.mxu0
      %v1402 = vadd.f32 0.0, %v1401
      %v1403 = vpop.f32.mrf.mxu0
      %v1404 = vadd.f32 0.0, %v1403
      %1405 = vmatmul.bf16.gmra.mxu0 %v946
      %v1406 = vpop.f32.mrf.mxu0
      %v1407 = vadd.f32 0.0, %v1406
      %v1408 = vpop.f32.mrf.mxu0
      %v1409 = vadd.f32 0.0, %v1408
      %1410 = vmatmul.bf16.gmra.mxu0 %v950
      %v1411 = vpop.f32.mrf.mxu0
      %v1412 = vadd.f32 0.0, %v1411
      %v1413 = vpop.f32.mrf.mxu0
      %v1414 = vadd.f32 0.0, %v1413
      %1415 = vmatmul.bf16.gmra.mxu0 %v954
      %v1416 = vpop.f32.mrf.mxu0
      %v1417 = vadd.f32 0.0, %v1416
      %v1418 = vpop.f32.mrf.mxu0
      %v1419 = vadd.f32 0.0, %v1418
      %1420 = vmatmul.bf16.gmra.mxu0 %v958
      %v1421 = vpop.f32.mrf.mxu0
      %v1422 = vadd.f32 0.0, %v1421
      %v1423 = vpop.f32.mrf.mxu0
      %v1424 = vadd.f32 0.0, %v1423
      %1425 = vmatmul.bf16.gmra.mxu0 %v962
      %v1426 = vpop.f32.mrf.mxu0
      %v1427 = vadd.f32 0.0, %v1426
      %v1428 = vpop.f32.mrf.mxu0
      %v1429 = vadd.f32 0.0, %v1428
      %1430 = vmatmul.bf16.gmra.mxu0 %v966
      %v1431 = vpop.f32.mrf.mxu0
      %v1432 = vadd.f32 0.0, %v1431
      %v1433 = vpop.f32.mrf.mxu0
      %v1434 = vadd.f32 0.0, %v1433
      %1435 = vmatmul.bf16.gmra.mxu0 %v970
      %v1436 = vpop.f32.mrf.mxu0
      %v1437 = vadd.f32 0.0, %v1436
      %v1438 = vpop.f32.mrf.mxu0
      %v1439 = vadd.f32 0.0, %v1438
      %1440 = vmatmul.bf16.gmra.mxu0 %v974
      %v1441 = vpop.f32.mrf.mxu0
      %v1442 = vadd.f32 0.0, %v1441
      %v1443 = vpop.f32.mrf.mxu0
      %v1444 = vadd.f32 0.0, %v1443
      %1445 = vmatmul.bf16.gmra.mxu0 %v978
      %v1446 = vpop.f32.mrf.mxu0
      %v1447 = vadd.f32 0.0, %v1446
      %v1448 = vpop.f32.mrf.mxu0
      %v1449 = vadd.f32 0.0, %v1448
      %1450 = vmatmul.bf16.gmra.mxu0 %v982
      %v1451 = vpop.f32.mrf.mxu0
      %v1452 = vadd.f32 0.0, %v1451
      %v1453 = vpop.f32.mrf.mxu0
      %v1454 = vadd.f32 0.0, %v1453
      %1455 = vmatmul.bf16.gmra.mxu0 %v986
      %v1456 = vpop.f32.mrf.mxu0
      %v1457 = vadd.f32 0.0, %v1456
      %v1458 = vpop.f32.mrf.mxu0
      %v1459 = vadd.f32 0.0, %v1458
      %1460 = vmatmul.bf16.gmra.mxu0 %v990
      %v1461 = vpop.f32.mrf.mxu0
      %v1462 = vadd.f32 0.0, %v1461
      %v1463 = vpop.f32.mrf.mxu0
      %v1464 = vadd.f32 0.0, %v1463
      %1465 = vmatmul.bf16.gmra.mxu0 %v994
      %v1466 = vpop.f32.mrf.mxu0
      %v1467 = vadd.f32 0.0, %v1466
      %v1468 = vpop.f32.mrf.mxu0
      %v1469 = vadd.f32 0.0, %v1468
      %1470 = vmatmul.bf16.gmra.mxu0 %v998
      %v1471 = vpop.f32.mrf.mxu0
      %v1472 = vadd.f32 0.0, %v1471
      %v1473 = vpop.f32.mrf.mxu0
      %v1474 = vadd.f32 0.0, %v1473
      %1475 = vmatmul.bf16.gmra.mxu0 %v1002
      %v1476 = vpop.f32.mrf.mxu0
      %v1477 = vadd.f32 0.0, %v1476
      %v1478 = vpop.f32.mrf.mxu0
      %v1479 = vadd.f32 0.0, %v1478
      %1480 = vmatmul.bf16.gmra.mxu0 %v1006
      %v1481 = vpop.f32.mrf.mxu0
      %v1482 = vadd.f32 0.0, %v1481
      %v1483 = vpop.f32.mrf.mxu0
      %v1484 = vadd.f32 0.0, %v1483
      %1485 = vmatmul.bf16.gmra.mxu0 %v1010
      %v1486 = vpop.f32.mrf.mxu0
      %v1487 = vadd.f32 0.0, %v1486
      %v1488 = vpop.f32.mrf.mxu0
      %v1489 = vadd.f32 0.0, %v1488
      %1490 = vmatmul.bf16.gmra.mxu0 %v1014
      %v1491 = vpop.f32.mrf.mxu0
      %v1492 = vadd.f32 0.0, %v1491
      %v1493 = vpop.f32.mrf.mxu0
      %v1494 = vadd.f32 0.0, %v1493
      %1495 = vmatmul.bf16.gmra.mxu0 %v1018
      %v1496 = vpop.f32.mrf.mxu0
      %v1497 = vadd.f32 0.0, %v1496
      %v1498 = vpop.f32.mrf.mxu0
      %v1499 = vadd.f32 0.0, %v1498
      %1500 = vmatmul.bf16.gmra.mxu0 %v1022
      %v1501 = vpop.f32.mrf.mxu0
      %v1502 = vadd.f32 0.0, %v1501
      %v1503 = vpop.f32.mrf.mxu0
      %v1504 = vadd.f32 0.0, %v1503
      %1505 = vmatmul.bf16.gmra.mxu0 %v1026
      %v1506 = vpop.f32.mrf.mxu0
      %v1507 = vadd.f32 0.0, %v1506
      %v1508 = vpop.f32.mrf.mxu0
      %v1509 = vadd.f32 0.0, %v1508
      %1510 = vmatmul.bf16.gmra.mxu0 %v1030
      %v1511 = vpop.f32.mrf.mxu0
      %v1512 = vadd.f32 0.0, %v1511
      %v1513 = vpop.f32.mrf.mxu0
      %v1514 = vadd.f32 0.0, %v1513
      %1515 = vmatmul.bf16.gmra.mxu0 %v1034
      %v1516 = vpop.f32.mrf.mxu0
      %v1517 = vadd.f32 0.0, %v1516
      %v1518 = vpop.f32.mrf.mxu0
      %v1519 = vadd.f32 0.0, %v1518
      %1520 = vmatmul.bf16.gmra.mxu0 %v1038
      %v1521 = vpop.f32.mrf.mxu0
      %v1522 = vadd.f32 0.0, %v1521
      %v1523 = vpop.f32.mrf.mxu0
      %v1524 = vadd.f32 0.0, %v1523
      %1525 = vmatmul.bf16.gmra.mxu0 %v1042
      %v1526 = vpop.f32.mrf.mxu0
      %v1527 = vadd.f32 0.0, %v1526
      %v1528 = vpop.f32.mrf.mxu0
      %v1529 = vadd.f32 0.0, %v1528
      %1530 = vmatmul.bf16.gmra.mxu0 %v1046
      %v1531 = vpop.f32.mrf.mxu0
      %v1532 = vadd.f32 0.0, %v1531
      %v1533 = vpop.f32.mrf.mxu0
      %v1534 = vadd.f32 0.0, %v1533
      %1535 = vmatmul.bf16.gmra.mxu0 %v1050
      %v1536 = vpop.f32.mrf.mxu0
      %v1537 = vadd.f32 0.0, %v1536
      %v1538 = vpop.f32.mrf.mxu0
      %v1539 = vadd.f32 0.0, %v1538
      %1540 = vmatmul.bf16.gmra.mxu0 %v1054
      %v1541 = vpop.f32.mrf.mxu0
      %v1542 = vadd.f32 0.0, %v1541
      %v1543 = vpop.f32.mrf.mxu0
      %v1544 = vadd.f32 0.0, %v1543
      %1545 = vmatmul.bf16.gmra.mxu0 %v1058
      %v1546 = vpop.f32.mrf.mxu0
      %v1547 = vadd.f32 0.0, %v1546
      %v1548 = vpop.f32.mrf.mxu0
      %v1549 = vadd.f32 0.0, %v1548
      %1550 = vdwg.mxu0
      %1551 = vmatpush.bf16.msra.mxu0 %v1333
      %1552 = vmatpush.bf16.msra.mxu0 %v1332
      %1553 = vmatpush.bf16.msra.mxu0 %v1331
      %1554 = vmatpush.bf16.msra.mxu0 %v1330
      %1555 = vmatpush.bf16.msra.mxu0 %v1329
      %1556 = vmatpush.bf16.msra.mxu0 %v1328
      %1557 = vmatpush.bf16.msra.mxu0 %v1327
      %1558 = vmatpush.bf16.msra.mxu0 %v1326
      %1559 = vmatmul.bf16.gmra.mxu0 %v935
      %v1560 = vpop.f32.mrf.mxu0
      %v1561 = vadd.f32 %v1392, %v1560
      %v1562 = vpop.f32.mrf.mxu0
      %v1563 = vadd.f32 %v1394, %v1562
      %1564 = vmatmul.bf16.gmra.mxu0 %v939
      %v1565 = vpop.f32.mrf.mxu0
      %v1566 = vadd.f32 %v1397, %v1565
      %v1567 = vpop.f32.mrf.mxu0
      %v1568 = vadd.f32 %v1399, %v1567
      %1569 = vmatmul.bf16.gmra.mxu0 %v943
      %v1570 = vpop.f32.mrf.mxu0
      %v1571 = vadd.f32 %v1402, %v1570
      %v1572 = vpop.f32.mrf.mxu0
      %v1573 = vadd.f32 %v1404, %v1572
      %1574 = vmatmul.bf16.gmra.mxu0 %v947
      %v1575 = vpop.f32.mrf.mxu0
      %v1576 = vadd.f32 %v1407, %v1575
      %v1577 = vpop.f32.mrf.mxu0
      %v1578 = vadd.f32 %v1409, %v1577
      %1579 = vmatmul.bf16.gmra.mxu0 %v951
      %v1580 = vpop.f32.mrf.mxu0
      %v1581 = vadd.f32 %v1412, %v1580
      %v1582 = vpop.f32.mrf.mxu0
      %v1583 = vadd.f32 %v1414, %v1582
      %1584 = vmatmul.bf16.gmra.mxu0 %v955
      %v1585 = vpop.f32.mrf.mxu0
      %v1586 = vadd.f32 %v1417, %v1585
      %v1587 = vpop.f32.mrf.mxu0
      %v1588 = vadd.f32 %v1419, %v1587
      %1589 = vmatmul.bf16.gmra.mxu0 %v959
      %v1590 = vpop.f32.mrf.mxu0
      %v1591 = vadd.f32 %v1422, %v1590
      %v1592 = vpop.f32.mrf.mxu0
      %v1593 = vadd.f32 %v1424, %v1592
      %1594 = vmatmul.bf16.gmra.mxu0 %v963
      %v1595 = vpop.f32.mrf.mxu0
      %v1596 = vadd.f32 %v1427, %v1595
      %v1597 = vpop.f32.mrf.mxu0
      %v1598 = vadd.f32 %v1429, %v1597
      %1599 = vmatmul.bf16.gmra.mxu0 %v967
      %v1600 = vpop.f32.mrf.mxu0
      %v1601 = vadd.f32 %v1432, %v1600
      %v1602 = vpop.f32.mrf.mxu0
      %v1603 = vadd.f32 %v1434, %v1602
      %1604 = vmatmul.bf16.gmra.mxu0 %v971
      %v1605 = vpop.f32.mrf.mxu0
      %v1606 = vadd.f32 %v1437, %v1605
      %v1607 = vpop.f32.mrf.mxu0
      %v1608 = vadd.f32 %v1439, %v1607
      %1609 = vmatmul.bf16.gmra.mxu0 %v975
      %v1610 = vpop.f32.mrf.mxu0
      %v1611 = vadd.f32 %v1442, %v1610
      %v1612 = vpop.f32.mrf.mxu0
      %v1613 = vadd.f32 %v1444, %v1612
      %1614 = vmatmul.bf16.gmra.mxu0 %v979
      %v1615 = vpop.f32.mrf.mxu0
      %v1616 = vadd.f32 %v1447, %v1615
      %v1617 = vpop.f32.mrf.mxu0
      %v1618 = vadd.f32 %v1449, %v1617
      %1619 = vmatmul.bf16.gmra.mxu0 %v983
      %v1620 = vpop.f32.mrf.mxu0
      %v1621 = vadd.f32 %v1452, %v1620
      %v1622 = vpop.f32.mrf.mxu0
      %v1623 = vadd.f32 %v1454, %v1622
      %1624 = vmatmul.bf16.gmra.mxu0 %v987
      %v1625 = vpop.f32.mrf.mxu0
      %v1626 = vadd.f32 %v1457, %v1625
      %v1627 = vpop.f32.mrf.mxu0
      %v1628 = vadd.f32 %v1459, %v1627
      %1629 = vmatmul.bf16.gmra.mxu0 %v991
      %v1630 = vpop.f32.mrf.mxu0
      %v1631 = vadd.f32 %v1462, %v1630
      %v1632 = vpop.f32.mrf.mxu0
      %v1633 = vadd.f32 %v1464, %v1632
      %1634 = vmatmul.bf16.gmra.mxu0 %v995
      %v1635 = vpop.f32.mrf.mxu0
      %v1636 = vadd.f32 %v1467, %v1635
      %v1637 = vpop.f32.mrf.mxu0
      %v1638 = vadd.f32 %v1469, %v1637
      %1639 = vmatmul.bf16.gmra.mxu0 %v999
      %v1640 = vpop.f32.mrf.mxu0
      %v1641 = vadd.f32 %v1472, %v1640
      %v1642 = vpop.f32.mrf.mxu0
      %v1643 = vadd.f32 %v1474, %v1642
      %1644 = vmatmul.bf16.gmra.mxu0 %v1003
      %v1645 = vpop.f32.mrf.mxu0
      %v1646 = vadd.f32 %v1477, %v1645
      %v1647 = vpop.f32.mrf.mxu0
      %v1648 = vadd.f32 %v1479, %v1647
      %1649 = vmatmul.bf16.gmra.mxu0 %v1007
      %v1650 = vpop.f32.mrf.mxu0
      %v1651 = vadd.f32 %v1482, %v1650
      %v1652 = vpop.f32.mrf.mxu0
      %v1653 = vadd.f32 %v1484, %v1652
      %1654 = vmatmul.bf16.gmra.mxu0 %v1011
      %v1655 = vpop.f32.mrf.mxu0
      %v1656 = vadd.f32 %v1487, %v1655
      %v1657 = vpop.f32.mrf.mxu0
      %v1658 = vadd.f32 %v1489, %v1657
      %1659 = vmatmul.bf16.gmra.mxu0 %v1015
      %v1660 = vpop.f32.mrf.mxu0
      %v1661 = vadd.f32 %v1492, %v1660
      %v1662 = vpop.f32.mrf.mxu0
      %v1663 = vadd.f32 %v1494, %v1662
      %1664 = vmatmul.bf16.gmra.mxu0 %v1019
      %v1665 = vpop.f32.mrf.mxu0
      %v1666 = vadd.f32 %v1497, %v1665
      %v1667 = vpop.f32.mrf.mxu0
      %v1668 = vadd.f32 %v1499, %v1667
      %1669 = vmatmul.bf16.gmra.mxu0 %v1023
      %v1670 = vpop.f32.mrf.mxu0
      %v1671 = vadd.f32 %v1502, %v1670
      %v1672 = vpop.f32.mrf.mxu0
      %v1673 = vadd.f32 %v1504, %v1672
      %1674 = vmatmul.bf16.gmra.mxu0 %v1027
      %v1675 = vpop.f32.mrf.mxu0
      %v1676 = vadd.f32 %v1507, %v1675
      %v1677 = vpop.f32.mrf.mxu0
      %v1678 = vadd.f32 %v1509, %v1677
      %1679 = vmatmul.bf16.gmra.mxu0 %v1031
      %v1680 = vpop.f32.mrf.mxu0
      %v1681 = vadd.f32 %v1512, %v1680
      %v1682 = vpop.f32.mrf.mxu0
      %v1683 = vadd.f32 %v1514, %v1682
      %1684 = vmatmul.bf16.gmra.mxu0 %v1035
      %v1685 = vpop.f32.mrf.mxu0
      %v1686 = vadd.f32 %v1517, %v1685
      %v1687 = vpop.f32.mrf.mxu0
      %v1688 = vadd.f32 %v1519, %v1687
      %1689 = vmatmul.bf16.gmra.mxu0 %v1039
      %v1690 = vpop.f32.mrf.mxu0
      %v1691 = vadd.f32 %v1522, %v1690
      %v1692 = vpop.f32.mrf.mxu0
      %v1693 = vadd.f32 %v1524, %v1692
      %1694 = vmatmul.bf16.gmra.mxu0 %v1043
      %v1695 = vpop.f32.mrf.mxu0
      %v1696 = vadd.f32 %v1527, %v1695
      %v1697 = vpop.f32.mrf.mxu0
      %v1698 = vadd.f32 %v1529, %v1697
      %1699 = vmatmul.bf16.gmra.mxu0 %v1047
      %v1700 = vpop.f32.mrf.mxu0
      %v1701 = vadd.f32 %v1532, %v1700
      %v1702 = vpop.f32.mrf.mxu0
      %v1703 = vadd.f32 %v1534, %v1702
      %1704 = vmatmul.bf16.gmra.mxu0 %v1051
      %v1705 = vpop.f32.mrf.mxu0
      %v1706 = vadd.f32 %v1537, %v1705
      %v1707 = vpop.f32.mrf.mxu0
      %v1708 = vadd.f32 %v1539, %v1707
      %1709 = vmatmul.bf16.gmra.mxu0 %v1055
      %v1710 = vpop.f32.mrf.mxu0
      %v1711 = vadd.f32 %v1542, %v1710
      %v1712 = vpop.f32.mrf.mxu0
      %v1713 = vadd.f32 %v1544, %v1712
      %1714 = vmatmul.bf16.gmra.mxu0 %v1059
      %v1715 = vpop.f32.mrf.mxu0
      %v1716 = vadd.f32 %v1547, %v1715
      %v1717 = vpop.f32.mrf.mxu0
      %v1718 = vadd.f32 %v1549, %v1717
      %1719 = vdwg.mxu0
      %1720 = vmatpush.bf16.msra.mxu0 %v1341
      %1721 = vmatpush.bf16.msra.mxu0 %v1340
      %1722 = vmatpush.bf16.msra.mxu0 %v1339
      %1723 = vmatpush.bf16.msra.mxu0 %v1338
      %1724 = vmatpush.bf16.msra.mxu0 %v1337
      %1725 = vmatpush.bf16.msra.mxu0 %v1336
      %1726 = vmatpush.bf16.msra.mxu0 %v1335
      %1727 = vmatpush.bf16.msra.mxu0 %v1334
      %1728 = vmatmul.bf16.gmra.mxu0 %v936
      %v1729 = vpop.f32.mrf.mxu0
      %v1730 = vadd.f32 %v1561, %v1729
      %v1731 = vpop.f32.mrf.mxu0
      %v1732 = vadd.f32 %v1563, %v1731
      %1733 = vmatmul.bf16.gmra.mxu0 %v940
      %v1734 = vpop.f32.mrf.mxu0
      %v1735 = vadd.f32 %v1566, %v1734
      %v1736 = vpop.f32.mrf.mxu0
      %v1737 = vadd.f32 %v1568, %v1736
      %1738 = vmatmul.bf16.gmra.mxu0 %v944
      %v1739 = vpop.f32.mrf.mxu0
      %v1740 = vadd.f32 %v1571, %v1739
      %v1741 = vpop.f32.mrf.mxu0
      %v1742 = vadd.f32 %v1573, %v1741
      %1743 = vmatmul.bf16.gmra.mxu0 %v948
      %v1744 = vpop.f32.mrf.mxu0
      %v1745 = vadd.f32 %v1576, %v1744
      %v1746 = vpop.f32.mrf.mxu0
      %v1747 = vadd.f32 %v1578, %v1746
      %1748 = vmatmul.bf16.gmra.mxu0 %v952
      %v1749 = vpop.f32.mrf.mxu0
      %v1750 = vadd.f32 %v1581, %v1749
      %v1751 = vpop.f32.mrf.mxu0
      %v1752 = vadd.f32 %v1583, %v1751
      %1753 = vmatmul.bf16.gmra.mxu0 %v956
      %v1754 = vpop.f32.mrf.mxu0
      %v1755 = vadd.f32 %v1586, %v1754
      %v1756 = vpop.f32.mrf.mxu0
      %v1757 = vadd.f32 %v1588, %v1756
      %1758 = vmatmul.bf16.gmra.mxu0 %v960
      %v1759 = vpop.f32.mrf.mxu0
      %v1760 = vadd.f32 %v1591, %v1759
      %v1761 = vpop.f32.mrf.mxu0
      %v1762 = vadd.f32 %v1593, %v1761
      %1763 = vmatmul.bf16.gmra.mxu0 %v964
      %v1764 = vpop.f32.mrf.mxu0
      %v1765 = vadd.f32 %v1596, %v1764
      %v1766 = vpop.f32.mrf.mxu0
      %v1767 = vadd.f32 %v1598, %v1766
      %1768 = vmatmul.bf16.gmra.mxu0 %v968
      %v1769 = vpop.f32.mrf.mxu0
      %v1770 = vadd.f32 %v1601, %v1769
      %v1771 = vpop.f32.mrf.mxu0
      %v1772 = vadd.f32 %v1603, %v1771
      %1773 = vmatmul.bf16.gmra.mxu0 %v972
      %v1774 = vpop.f32.mrf.mxu0
      %v1775 = vadd.f32 %v1606, %v1774
      %v1776 = vpop.f32.mrf.mxu0
      %v1777 = vadd.f32 %v1608, %v1776
      %1778 = vmatmul.bf16.gmra.mxu0 %v976
      %v1779 = vpop.f32.mrf.mxu0
      %v1780 = vadd.f32 %v1611, %v1779
      %v1781 = vpop.f32.mrf.mxu0
      %v1782 = vadd.f32 %v1613, %v1781
      %1783 = vmatmul.bf16.gmra.mxu0 %v980
      %v1784 = vpop.f32.mrf.mxu0
      %v1785 = vadd.f32 %v1616, %v1784
      %v1786 = vpop.f32.mrf.mxu0
      %v1787 = vadd.f32 %v1618, %v1786
      %1788 = vmatmul.bf16.gmra.mxu0 %v984
      %v1789 = vpop.f32.mrf.mxu0
      %v1790 = vadd.f32 %v1621, %v1789
      %v1791 = vpop.f32.mrf.mxu0
      %v1792 = vadd.f32 %v1623, %v1791
      %1793 = vmatmul.bf16.gmra.mxu0 %v988
      %v1794 = vpop.f32.mrf.mxu0
      %v1795 = vadd.f32 %v1626, %v1794
      %v1796 = vpop.f32.mrf.mxu0
      %v1797 = vadd.f32 %v1628, %v1796
      %1798 = vmatmul.bf16.gmra.mxu0 %v992
      %v1799 = vpop.f32.mrf.mxu0
      %v1800 = vadd.f32 %v1631, %v1799
      %v1801 = vpop.f32.mrf.mxu0
      %v1802 = vadd.f32 %v1633, %v1801
      %1803 = vmatmul.bf16.gmra.mxu0 %v996
      %v1804 = vpop.f32.mrf.mxu0
      %v1805 = vadd.f32 %v1636, %v1804
      %v1806 = vpop.f32.mrf.mxu0
      %v1807 = vadd.f32 %v1638, %v1806
      %1808 = vmatmul.bf16.gmra.mxu0 %v1000
      %v1809 = vpop.f32.mrf.mxu0
      %v1810 = vadd.f32 %v1641, %v1809
      %v1811 = vpop.f32.mrf.mxu0
      %v1812 = vadd.f32 %v1643, %v1811
      %1813 = vmatmul.bf16.gmra.mxu0 %v1004
      %v1814 = vpop.f32.mrf.mxu0
      %v1815 = vadd.f32 %v1646, %v1814
      %v1816 = vpop.f32.mrf.mxu0
      %v1817 = vadd.f32 %v1648, %v1816
      %1818 = vmatmul.bf16.gmra.mxu0 %v1008
      %v1819 = vpop.f32.mrf.mxu0
      %v1820 = vadd.f32 %v1651, %v1819
      %v1821 = vpop.f32.mrf.mxu0
      %v1822 = vadd.f32 %v1653, %v1821
      %1823 = vmatmul.bf16.gmra.mxu0 %v1012
      %v1824 = vpop.f32.mrf.mxu0
      %v1825 = vadd.f32 %v1656, %v1824
      %v1826 = vpop.f32.mrf.mxu0
      %v1827 = vadd.f32 %v1658, %v1826
      %1828 = vmatmul.bf16.gmra.mxu0 %v1016
      %v1829 = vpop.f32.mrf.mxu0
      %v1830 = vadd.f32 %v1661, %v1829
      %v1831 = vpop.f32.mrf.mxu0
      %v1832 = vadd.f32 %v1663, %v1831
      %1833 = vmatmul.bf16.gmra.mxu0 %v1020
      %v1834 = vpop.f32.mrf.mxu0
      %v1835 = vadd.f32 %v1666, %v1834
      %v1836 = vpop.f32.mrf.mxu0
      %v1837 = vadd.f32 %v1668, %v1836
      %1838 = vmatmul.bf16.gmra.mxu0 %v1024
      %v1839 = vpop.f32.mrf.mxu0
      %v1840 = vadd.f32 %v1671, %v1839
      %v1841 = vpop.f32.mrf.mxu0
      %v1842 = vadd.f32 %v1673, %v1841
      %1843 = vmatmul.bf16.gmra.mxu0 %v1028
      %v1844 = vpop.f32.mrf.mxu0
      %v1845 = vadd.f32 %v1676, %v1844
      %v1846 = vpop.f32.mrf.mxu0
      %v1847 = vadd.f32 %v1678, %v1846
      %1848 = vmatmul.bf16.gmra.mxu0 %v1032
      %v1849 = vpop.f32.mrf.mxu0
      %v1850 = vadd.f32 %v1681, %v1849
      %v1851 = vpop.f32.mrf.mxu0
      %v1852 = vadd.f32 %v1683, %v1851
      %1853 = vmatmul.bf16.gmra.mxu0 %v1036
      %v1854 = vpop.f32.mrf.mxu0
      %v1855 = vadd.f32 %v1686, %v1854
      %v1856 = vpop.f32.mrf.mxu0
      %v1857 = vadd.f32 %v1688, %v1856
      %1858 = vmatmul.bf16.gmra.mxu0 %v1040
      %v1859 = vpop.f32.mrf.mxu0
      %v1860 = vadd.f32 %v1691, %v1859
      %v1861 = vpop.f32.mrf.mxu0
      %v1862 = vadd.f32 %v1693, %v1861
      %1863 = vmatmul.bf16.gmra.mxu0 %v1044
      %v1864 = vpop.f32.mrf.mxu0
      %v1865 = vadd.f32 %v1696, %v1864
      %v1866 = vpop.f32.mrf.mxu0
      %v1867 = vadd.f32 %v1698, %v1866
      %1868 = vmatmul.bf16.gmra.mxu0 %v1048
      %v1869 = vpop.f32.mrf.mxu0
      %v1870 = vadd.f32 %v1701, %v1869
      %v1871 = vpop.f32.mrf.mxu0
      %v1872 = vadd.f32 %v1703, %v1871
      %1873 = vmatmul.bf16.gmra.mxu0 %v1052
      %v1874 = vpop.f32.mrf.mxu0
      %v1875 = vadd.f32 %v1706, %v1874
      %v1876 = vpop.f32.mrf.mxu0
      %v1877 = vadd.f32 %v1708, %v1876
      %1878 = vmatmul.bf16.gmra.mxu0 %v1056
      %v1879 = vpop.f32.mrf.mxu0
      %v1880 = vadd.f32 %v1711, %v1879
      %v1881 = vpop.f32.mrf.mxu0
      %v1882 = vadd.f32 %v1713, %v1881
      %1883 = vmatmul.bf16.gmra.mxu0 %v1060
      %v1884 = vpop.f32.mrf.mxu0
      %v1885 = vadd.f32 %v1716, %v1884
      %v1886 = vpop.f32.mrf.mxu0
      %v1887 = vadd.f32 %v1718, %v1886
      %1888 = vdwg.mxu0
      %1889 = vmatpush.bf16.msra.mxu0 %v1349
      %1890 = vmatpush.bf16.msra.mxu0 %v1348
      %1891 = vmatpush.bf16.msra.mxu0 %v1347
      %1892 = vmatpush.bf16.msra.mxu0 %v1346
      %1893 = vmatpush.bf16.msra.mxu0 %v1345
      %1894 = vmatpush.bf16.msra.mxu0 %v1344
      %1895 = vmatpush.bf16.msra.mxu0 %v1343
      %1896 = vmatpush.bf16.msra.mxu0 %v1342
      %1897 = vmatmul.bf16.gmra.mxu0 %v937
      %v1898 = vpop.f32.mrf.mxu0
      %v1899 = vadd.f32 %v1730, %v1898
      %v1900 = vpop.f32.mrf.mxu0
      %v1901 = vadd.f32 %v1732, %v1900
      %1902 = vmatmul.bf16.gmra.mxu0 %v941
      %v1903 = vpop.f32.mrf.mxu0
      %v1904 = vadd.f32 %v1735, %v1903
      %v1905 = vpop.f32.mrf.mxu0
      %v1906 = vadd.f32 %v1737, %v1905
      %1907 = vmatmul.bf16.gmra.mxu0 %v945
      %v1908 = vpop.f32.mrf.mxu0
      %v1909 = vadd.f32 %v1740, %v1908
      %v1910 = vpop.f32.mrf.mxu0
      %v1911 = vadd.f32 %v1742, %v1910
      %1912 = vmatmul.bf16.gmra.mxu0 %v949
      %v1913 = vpop.f32.mrf.mxu0
      %v1914 = vadd.f32 %v1745, %v1913
      %v1915 = vpop.f32.mrf.mxu0
      %v1916 = vadd.f32 %v1747, %v1915
      %1917 = vmatmul.bf16.gmra.mxu0 %v953
      %v1918 = vpop.f32.mrf.mxu0
      %v1919 = vadd.f32 %v1750, %v1918
      %v1920 = vpop.f32.mrf.mxu0
      %v1921 = vadd.f32 %v1752, %v1920
      %1922 = vmatmul.bf16.gmra.mxu0 %v957
      %v1923 = vpop.f32.mrf.mxu0
      %v1924 = vadd.f32 %v1755, %v1923
      %v1925 = vpop.f32.mrf.mxu0
      %v1926 = vadd.f32 %v1757, %v1925
      %1927 = vmatmul.bf16.gmra.mxu0 %v961
      %v1928 = vpop.f32.mrf.mxu0
      %v1929 = vadd.f32 %v1760, %v1928
      %v1930 = vpop.f32.mrf.mxu0
      %v1931 = vadd.f32 %v1762, %v1930
      %1932 = vmatmul.bf16.gmra.mxu0 %v965
      %v1933 = vpop.f32.mrf.mxu0
      %v1934 = vadd.f32 %v1765, %v1933
      %v1935 = vpop.f32.mrf.mxu0
      %v1936 = vadd.f32 %v1767, %v1935
      %1937 = vmatmul.bf16.gmra.mxu0 %v969
      %v1938 = vpop.f32.mrf.mxu0
      %v1939 = vadd.f32 %v1770, %v1938
      %v1940 = vpop.f32.mrf.mxu0
      %v1941 = vadd.f32 %v1772, %v1940
      %1942 = vmatmul.bf16.gmra.mxu0 %v973
      %v1943 = vpop.f32.mrf.mxu0
      %v1944 = vadd.f32 %v1775, %v1943
      %v1945 = vpop.f32.mrf.mxu0
      %v1946 = vadd.f32 %v1777, %v1945
      %1947 = vmatmul.bf16.gmra.mxu0 %v977
      %v1948 = vpop.f32.mrf.mxu0
      %v1949 = vadd.f32 %v1780, %v1948
      %v1950 = vpop.f32.mrf.mxu0
      %v1951 = vadd.f32 %v1782, %v1950
      %1952 = vmatmul.bf16.gmra.mxu0 %v981
      %v1953 = vpop.f32.mrf.mxu0
      %v1954 = vadd.f32 %v1785, %v1953
      %v1955 = vpop.f32.mrf.mxu0
      %v1956 = vadd.f32 %v1787, %v1955
      %1957 = vmatmul.bf16.gmra.mxu0 %v985
      %v1958 = vpop.f32.mrf.mxu0
      %v1959 = vadd.f32 %v1790, %v1958
      %v1960 = vpop.f32.mrf.mxu0
      %v1961 = vadd.f32 %v1792, %v1960
      %1962 = vmatmul.bf16.gmra.mxu0 %v989
      %v1963 = vpop.f32.mrf.mxu0
      %v1964 = vadd.f32 %v1795, %v1963
      %v1965 = vpop.f32.mrf.mxu0
      %v1966 = vadd.f32 %v1797, %v1965
      %1967 = vmatmul.bf16.gmra.mxu0 %v993
      %v1968 = vpop.f32.mrf.mxu0
      %v1969 = vadd.f32 %v1800, %v1968
      %v1970 = vpop.f32.mrf.mxu0
      %v1971 = vadd.f32 %v1802, %v1970
      %1972 = vmatmul.bf16.gmra.mxu0 %v997
      %v1973 = vpop.f32.mrf.mxu0
      %v1974 = vadd.f32 %v1805, %v1973
      %v1975 = vpop.f32.mrf.mxu0
      %v1976 = vadd.f32 %v1807, %v1975
      %1977 = vmatmul.bf16.gmra.mxu0 %v1001
      %v1978 = vpop.f32.mrf.mxu0
      %v1979 = vadd.f32 %v1810, %v1978
      %v1980 = vpop.f32.mrf.mxu0
      %v1981 = vadd.f32 %v1812, %v1980
      %1982 = vmatmul.bf16.gmra.mxu0 %v1005
      %v1983 = vpop.f32.mrf.mxu0
      %v1984 = vadd.f32 %v1815, %v1983
      %v1985 = vpop.f32.mrf.mxu0
      %v1986 = vadd.f32 %v1817, %v1985
      %1987 = vmatmul.bf16.gmra.mxu0 %v1009
      %v1988 = vpop.f32.mrf.mxu0
      %v1989 = vadd.f32 %v1820, %v1988
      %v1990 = vpop.f32.mrf.mxu0
      %v1991 = vadd.f32 %v1822, %v1990
      %1992 = vmatmul.bf16.gmra.mxu0 %v1013
      %v1993 = vpop.f32.mrf.mxu0
      %v1994 = vadd.f32 %v1825, %v1993
      %v1995 = vpop.f32.mrf.mxu0
      %v1996 = vadd.f32 %v1827, %v1995
      %1997 = vmatmul.bf16.gmra.mxu0 %v1017
      %v1998 = vpop.f32.mrf.mxu0
      %v1999 = vadd.f32 %v1830, %v1998
      %v2000 = vpop.f32.mrf.mxu0
      %v2001 = vadd.f32 %v1832, %v2000
      %2002 = vmatmul.bf16.gmra.mxu0 %v1021
      %v2003 = vpop.f32.mrf.mxu0
      %v2004 = vadd.f32 %v1835, %v2003
      %v2005 = vpop.f32.mrf.mxu0
      %v2006 = vadd.f32 %v1837, %v2005
      %2007 = vmatmul.bf16.gmra.mxu0 %v1025
      %v2008 = vpop.f32.mrf.mxu0
      %v2009 = vadd.f32 %v1840, %v2008
      %v2010 = vpop.f32.mrf.mxu0
      %v2011 = vadd.f32 %v1842, %v2010
      %2012 = vmatmul.bf16.gmra.mxu0 %v1029
      %v2013 = vpop.f32.mrf.mxu0
      %v2014 = vadd.f32 %v1845, %v2013
      %v2015 = vpop.f32.mrf.mxu0
      %v2016 = vadd.f32 %v1847, %v2015
      %2017 = vmatmul.bf16.gmra.mxu0 %v1033
      %v2018 = vpop.f32.mrf.mxu0
      %v2019 = vadd.f32 %v1850, %v2018
      %v2020 = vpop.f32.mrf.mxu0
      %v2021 = vadd.f32 %v1852, %v2020
      %2022 = vmatmul.bf16.gmra.mxu0 %v1037
      %v2023 = vpop.f32.mrf.mxu0
      %v2024 = vadd.f32 %v1855, %v2023
      %v2025 = vpop.f32.mrf.mxu0
      %v2026 = vadd.f32 %v1857, %v2025
      %2027 = vmatmul.bf16.gmra.mxu0 %v1041
      %v2028 = vpop.f32.mrf.mxu0
      %v2029 = vadd.f32 %v1860, %v2028
      %v2030 = vpop.f32.mrf.mxu0
      %v2031 = vadd.f32 %v1862, %v2030
      %2032 = vmatmul.bf16.gmra.mxu0 %v1045
      %v2033 = vpop.f32.mrf.mxu0
      %v2034 = vadd.f32 %v1865, %v2033
      %v2035 = vpop.f32.mrf.mxu0
      %v2036 = vadd.f32 %v1867, %v2035
      %2037 = vmatmul.bf16.gmra.mxu0 %v1049
      %v2038 = vpop.f32.mrf.mxu0
      %v2039 = vadd.f32 %v1870, %v2038
      %v2040 = vpop.f32.mrf.mxu0
      %v2041 = vadd.f32 %v1872, %v2040
      %2042 = vmatmul.bf16.gmra.mxu0 %v1053
      %v2043 = vpop.f32.mrf.mxu0
      %v2044 = vadd.f32 %v1875, %v2043
      %v2045 = vpop.f32.mrf.mxu0
      %v2046 = vadd.f32 %v1877, %v2045
      %2047 = vmatmul.bf16.gmra.mxu0 %v1057
      %v2048 = vpop.f32.mrf.mxu0
      %v2049 = vadd.f32 %v1880, %v2048
      %v2050 = vpop.f32.mrf.mxu0
      %v2051 = vadd.f32 %v1882, %v2050
      %2052 = vmatmul.bf16.gmra.mxu0 %v1061
      %v2053 = vpop.f32.mrf.mxu0
      %v2054 = vadd.f32 %v1885, %v2053
      %v2055 = vpop.f32.mrf.mxu0
      %v2056 = vadd.f32 %v1887, %v2055
      %2057 = vdwg.mxu0
      %v2058 = vadd.f32 %v294, %v1899
      %v2059 = vadd.f32 %v295, %v1901
      %v2060 = vadd.f32 %v296, %v1904
      %v2061 = vadd.f32 %v297, %v1906
      %v2062 = vadd.f32 %v298, %v1909
      %v2063 = vadd.f32 %v299, %v1911
      %v2064 = vadd.f32 %v300, %v1914
      %v2065 = vadd.f32 %v301, %v1916
      %v2066 = vadd.f32 %v302, %v1919
      %v2067 = vadd.f32 %v303, %v1921
      %v2068 = vadd.f32 %v304, %v1924
      %v2069 = vadd.f32 %v305, %v1926
      %v2070 = vadd.f32 %v306, %v1929
      %v2071 = vadd.f32 %v307, %v1931
      %v2072 = vadd.f32 %v308, %v1934
      %v2073 = vadd.f32 %v309, %v1936
      %v2074 = vadd.f32 %v310, %v1939
      %v2075 = vadd.f32 %v311, %v1941
      %v2076 = vadd.f32 %v312, %v1944
      %v2077 = vadd.f32 %v313, %v1946
      %v2078 = vadd.f32 %v314, %v1949
      %v2079 = vadd.f32 %v315, %v1951
      %v2080 = vadd.f32 %v316, %v1954
      %v2081 = vadd.f32 %v317, %v1956
      %v2082 = vadd.f32 %v318, %v1959
      %v2083 = vadd.f32 %v319, %v1961
      %v2084 = vadd.f32 %v320, %v1964
      %v2085 = vadd.f32 %v321, %v1966
      %v2086 = vadd.f32 %v322, %v1969
      %v2087 = vadd.f32 %v323, %v1971
      %v2088 = vadd.f32 %v324, %v1974
      %v2089 = vadd.f32 %v325, %v1976
      %v2090 = vadd.f32 %v326, %v1979
      %v2091 = vadd.f32 %v327, %v1981
      %v2092 = vadd.f32 %v328, %v1984
      %v2093 = vadd.f32 %v329, %v1986
      %v2094 = vadd.f32 %v330, %v1989
      %v2095 = vadd.f32 %v331, %v1991
      %v2096 = vadd.f32 %v332, %v1994
      %v2097 = vadd.f32 %v333, %v1996
      %v2098 = vadd.f32 %v334, %v1999
      %v2099 = vadd.f32 %v335, %v2001
      %v2100 = vadd.f32 %v336, %v2004
      %v2101 = vadd.f32 %v337, %v2006
      %v2102 = vadd.f32 %v338, %v2009
      %v2103 = vadd.f32 %v339, %v2011
      %v2104 = vadd.f32 %v340, %v2014
      %v2105 = vadd.f32 %v341, %v2016
      %v2106 = vadd.f32 %v342, %v2019
      %v2107 = vadd.f32 %v343, %v2021
      %v2108 = vadd.f32 %v344, %v2024
      %v2109 = vadd.f32 %v345, %v2026
      %v2110 = vadd.f32 %v346, %v2029
      %v2111 = vadd.f32 %v347, %v2031
      %v2112 = vadd.f32 %v348, %v2034
      %v2113 = vadd.f32 %v349, %v2036
      %v2114 = vadd.f32 %v350, %v2039
      %v2115 = vadd.f32 %v351, %v2041
      %v2116 = vadd.f32 %v352, %v2044
      %v2117 = vadd.f32 %v353, %v2046
      %v2118 = vadd.f32 %v354, %v2049
      %v2119 = vadd.f32 %v355, %v2051
      %v2120 = vadd.f32 %v356, %v2054
      %v2121 = vadd.f32 %v357, %v2056
      %2122 = vst [vmem:[#allocation2] sm:$0xff] %v2058
      %2123 = vst [vmem:[#allocation2 + $0x8] sm:$0xff] %v2059
      %2124 = vst [vmem:[#allocation2 + $0x10] sm:$0xff] %v2060
      %2125 = vst [vmem:[#allocation2 + $0x18] sm:$0xff] %v2061
      %2126 = vst [vmem:[#allocation2 + $0x20] sm:$0xff] %v2062
      %2127 = vst [vmem:[#allocation2 + $0x28] sm:$0xff] %v2063
      %2128 = vst [vmem:[#allocation2 + $0x30] sm:$0xff] %v2064
      %2129 = vst [vmem:[#allocation2 + $0x38] sm:$0xff] %v2065
      %2130 = vst [vmem:[#allocation2 + $0x40] sm:$0xff] %v2066
      %2131 = vst [vmem:[#allocation2 + $0x48] sm:$0xff] %v2067
      %2132 = vst [vmem:[#allocation2 + $0x50] sm:$0xff] %v2068
      %2133 = vst [vmem:[#allocation2 + $0x58] sm:$0xff] %v2069
      %2134 = vst [vmem:[#allocation2 + $0x60] sm:$0xff] %v2070
      %2135 = vst [vmem:[#allocation2 + $0x68] sm:$0xff] %v2071
      %2136 = vst [vmem:[#allocation2 + $0x70] sm:$0xff] %v2072
      %2137 = vst [vmem:[#allocation2 + $0x78] sm:$0xff] %v2073
      %2138 = vst [vmem:[#allocation2 + $0x80] sm:$0xff] %v2074
      %2139 = vst [vmem:[#allocation2 + $0x88] sm:$0xff] %v2075
      %2140 = vst [vmem:[#allocation2 + $0x90] sm:$0xff] %v2076
      %2141 = vst [vmem:[#allocation2 + $0x98] sm:$0xff] %v2077
      %2142 = vst [vmem:[#allocation2 + $0xa0] sm:$0xff] %v2078
      %2143 = vst [vmem:[#allocation2 + $0xa8] sm:$0xff] %v2079
      %2144 = vst [vmem:[#allocation2 + $0xb0] sm:$0xff] %v2080
      %2145 = vst [vmem:[#allocation2 + $0xb8] sm:$0xff] %v2081
      %2146 = vst [vmem:[#allocation2 + $0xc0] sm:$0xff] %v2082
      %2147 = vst [vmem:[#allocation2 + $0xc8] sm:$0xff] %v2083
      %2148 = vst [vmem:[#allocation2 + $0xd0] sm:$0xff] %v2084
      %2149 = vst [vmem:[#allocation2 + $0xd8] sm:$0xff] %v2085
      %2150 = vst [vmem:[#allocation2 + $0xe0] sm:$0xff] %v2086
      %2151 = vst [vmem:[#allocation2 + $0xe8] sm:$0xff] %v2087
      %2152 = vst [vmem:[#allocation2 + $0xf0] sm:$0xff] %v2088
      %2153 = vst [vmem:[#allocation2 + $0xf8] sm:$0xff] %v2089
      %2154 = vst [vmem:[#allocation2 + $0x100] sm:$0xff] %v2090
      %2155 = vst [vmem:[#allocation2 + $0x108] sm:$0xff] %v2091
      %2156 = vst [vmem:[#allocation2 + $0x110] sm:$0xff] %v2092
      %2157 = vst [vmem:[#allocation2 + $0x118] sm:$0xff] %v2093
      %2158 = vst [vmem:[#allocation2 + $0x120] sm:$0xff] %v2094
      %2159 = vst [vmem:[#allocation2 + $0x128] sm:$0xff] %v2095
      %2160 = vst [vmem:[#allocation2 + $0x130] sm:$0xff] %v2096
      %2161 = vst [vmem:[#allocation2 + $0x138] sm:$0xff] %v2097
      %2162 = vst [vmem:[#allocation2 + $0x140] sm:$0xff] %v2098
      %2163 = vst [vmem:[#allocation2 + $0x148] sm:$0xff] %v2099
      %2164 = vst [vmem:[#allocation2 + $0x150] sm:$0xff] %v2100
      %2165 = vst [vmem:[#allocation2 + $0x158] sm:$0xff] %v2101
      %2166 = vst [vmem:[#allocation2 + $0x160] sm:$0xff] %v2102
      %2167 = vst [vmem:[#allocation2 + $0x168] sm:$0xff] %v2103
      %2168 = vst [vmem:[#allocation2 + $0x170] sm:$0xff] %v2104
      %2169 = vst [vmem:[#allocation2 + $0x178] sm:$0xff] %v2105
      %2170 = vst [vmem:[#allocation2 + $0x180] sm:$0xff] %v2106
      %2171 = vst [vmem:[#allocation2 + $0x188] sm:$0xff] %v2107
      %2172 = vst [vmem:[#allocation2 + $0x190] sm:$0xff] %v2108
      %2173 = vst [vmem:[#allocation2 + $0x198] sm:$0xff] %v2109
      %2174 = vst [vmem:[#allocation2 + $0x1a0] sm:$0xff] %v2110
      %2175 = vst [vmem:[#allocation2 + $0x1a8] sm:$0xff] %v2111
      %2176 = vst [vmem:[#allocation2 + $0x1b0] sm:$0xff] %v2112
      %2177 = vst [vmem:[#allocation2 + $0x1b8] sm:$0xff] %v2113
      %2178 = vst [vmem:[#allocation2 + $0x1c0] sm:$0xff] %v2114
      %2179 = vst [vmem:[#allocation2 + $0x1c8] sm:$0xff] %v2115
      %2180 = vst [vmem:[#allocation2 + $0x1d0] sm:$0xff] %v2116
      %2181 = vst [vmem:[#allocation2 + $0x1d8] sm:$0xff] %v2117
      %2182 = vst [vmem:[#allocation2 + $0x1e0] sm:$0xff] %v2118
      %2183 = vst [vmem:[#allocation2 + $0x1e8] sm:$0xff] %v2119
      %2184 = vst [vmem:[#allocation2 + $0x1f0] sm:$0xff] %v2120
      %2185 = vst [vmem:[#allocation2 + $0x1f8] sm:$0xff] %v2121
      // Predicated region
      $region33: #{generator_forward.38} parent=27 // pred_check
        %p2186 = pneg %p226
      $region34: #{generator_forward.38} parent=27 // pred_check_branch
        %2188 = sbr.rel (%p2186) target = $region36
      $region35: #{generator_forward.38} parent=27 // pred_region
        %v2189 = vld [vmem:[#allocation2] sm:$0xff]
        %v2190 = vld [vmem:[#allocation2 + $0x8] sm:$0xff]
        %v2191 = vld [vmem:[#allocation2 + $0x10] sm:$0xff]
        %v2192 = vld [vmem:[#allocation2 + $0x18] sm:$0xff]
        %v2193 = vld [vmem:[#allocation2 + $0x20] sm:$0xff]
        %v2194 = vld [vmem:[#allocation2 + $0x28] sm:$0xff]
        %v2195 = vld [vmem:[#allocation2 + $0x30] sm:$0xff]
        %v2196 = vld [vmem:[#allocation2 + $0x38] sm:$0xff]
        %v2197 = vld [vmem:[#allocation2 + $0x40] sm:$0xff]
        %v2198 = vld [vmem:[#allocation2 + $0x48] sm:$0xff]
        %v2199 = vld [vmem:[#allocation2 + $0x50] sm:$0xff]
        %v2200 = vld [vmem:[#allocation2 + $0x58] sm:$0xff]
        %v2201 = vld [vmem:[#allocation2 + $0x60] sm:$0xff]
        %v2202 = vld [vmem:[#allocation2 + $0x68] sm:$0xff]
        %v2203 = vld [vmem:[#allocation2 + $0x70] sm:$0xff]
        %v2204 = vld [vmem:[#allocation2 + $0x78] sm:$0xff]
        %v2205 = vld [vmem:[#allocation2 + $0x80] sm:$0xff]
        %v2206 = vld [vmem:[#allocation2 + $0x88] sm:$0xff]
        %v2207 = vld [vmem:[#allocation2 + $0x90] sm:$0xff]
        %v2208 = vld [vmem:[#allocation2 + $0x98] sm:$0xff]
        %v2209 = vld [vmem:[#allocation2 + $0xa0] sm:$0xff]
        %v2210 = vld [vmem:[#allocation2 + $0xa8] sm:$0xff]
        %v2211 = vld [vmem:[#allocation2 + $0xb0] sm:$0xff]
        %v2212 = vld [vmem:[#allocation2 + $0xb8] sm:$0xff]
        %v2213 = vld [vmem:[#allocation2 + $0xc0] sm:$0xff]
        %v2214 = vld [vmem:[#allocation2 + $0xc8] sm:$0xff]
        %v2215 = vld [vmem:[#allocation2 + $0xd0] sm:$0xff]
        %v2216 = vld [vmem:[#allocation2 + $0xd8] sm:$0xff]
        %v2217 = vld [vmem:[#allocation2 + $0xe0] sm:$0xff]
        %v2218 = vld [vmem:[#allocation2 + $0xe8] sm:$0xff]
        %v2219 = vld [vmem:[#allocation2 + $0xf0] sm:$0xff]
        %v2220 = vld [vmem:[#allocation2 + $0xf8] sm:$0xff]
        %v2221 = vld [vmem:[#allocation2 + $0x100] sm:$0xff]
        %v2222 = vld [vmem:[#allocation2 + $0x108] sm:$0xff]
        %v2223 = vld [vmem:[#allocation2 + $0x110] sm:$0xff]
        %v2224 = vld [vmem:[#allocation2 + $0x118] sm:$0xff]
        %v2225 = vld [vmem:[#allocation2 + $0x120] sm:$0xff]
        %v2226 = vld [vmem:[#allocation2 + $0x128] sm:$0xff]
        %v2227 = vld [vmem:[#allocation2 + $0x130] sm:$0xff]
        %v2228 = vld [vmem:[#allocation2 + $0x138] sm:$0xff]
        %v2229 = vld [vmem:[#allocation2 + $0x140] sm:$0xff]
        %v2230 = vld [vmem:[#allocation2 + $0x148] sm:$0xff]
        %v2231 = vld [vmem:[#allocation2 + $0x150] sm:$0xff]
        %v2232 = vld [vmem:[#allocation2 + $0x158] sm:$0xff]
        %v2233 = vld [vmem:[#allocation2 + $0x160] sm:$0xff]
        %v2234 = vld [vmem:[#allocation2 + $0x168] sm:$0xff]
        %v2235 = vld [vmem:[#allocation2 + $0x170] sm:$0xff]
        %v2236 = vld [vmem:[#allocation2 + $0x178] sm:$0xff]
        %v2237 = vld [vmem:[#allocation2 + $0x180] sm:$0xff]
        %v2238 = vld [vmem:[#allocation2 + $0x188] sm:$0xff]
        %v2239 = vld [vmem:[#allocation2 + $0x190] sm:$0xff]
        %v2240 = vld [vmem:[#allocation2 + $0x198] sm:$0xff]
        %v2241 = vld [vmem:[#allocation2 + $0x1a0] sm:$0xff]
        %v2242 = vld [vmem:[#allocation2 + $0x1a8] sm:$0xff]
        %v2243 = vld [vmem:[#allocation2 + $0x1b0] sm:$0xff]
        %v2244 = vld [vmem:[#allocation2 + $0x1b8] sm:$0xff]
        %v2245 = vld [vmem:[#allocation2 + $0x1c0] sm:$0xff]
        %v2246 = vld [vmem:[#allocation2 + $0x1c8] sm:$0xff]
        %v2247 = vld [vmem:[#allocation2 + $0x1d0] sm:$0xff]
        %v2248 = vld [vmem:[#allocation2 + $0x1d8] sm:$0xff]
        %v2249 = vld [vmem:[#allocation2 + $0x1e0] sm:$0xff]
        %v2250 = vld [vmem:[#allocation2 + $0x1e8] sm:$0xff]
        %v2251 = vld [vmem:[#allocation2 + $0x1f0] sm:$0xff]
        %v2252 = vld [vmem:[#allocation2 + $0x1f8] sm:$0xff]
        %v2253 = vtanh.pop %v2189
        %v2254 = vtanh.pop %v2190
        %v2255 = vtanh.pop %v2191
        %v2256 = vtanh.pop %v2192
        %v2257 = vtanh.pop %v2193
        %v2258 = vtanh.pop %v2194
        %v2259 = vtanh.pop %v2195
        %v2260 = vtanh.pop %v2196
        %v2261 = vtanh.pop %v2197
        %v2262 = vtanh.pop %v2198
        %v2263 = vtanh.pop %v2199
        %v2264 = vtanh.pop %v2200
        %v2265 = vtanh.pop %v2201
        %v2266 = vtanh.pop %v2202
        %v2267 = vtanh.pop %v2203
        %v2268 = vtanh.pop %v2204
        %v2269 = vtanh.pop %v2205
        %v2270 = vtanh.pop %v2206
        %v2271 = vtanh.pop %v2207
        %v2272 = vtanh.pop %v2208
        %v2273 = vtanh.pop %v2209
        %v2274 = vtanh.pop %v2210
        %v2275 = vtanh.pop %v2211
        %v2276 = vtanh.pop %v2212
        %v2277 = vtanh.pop %v2213
        %v2278 = vtanh.pop %v2214
        %v2279 = vtanh.pop %v2215
        %v2280 = vtanh.pop %v2216
        %v2281 = vtanh.pop %v2217
        %v2282 = vtanh.pop %v2218
        %v2283 = vtanh.pop %v2219
        %v2284 = vtanh.pop %v2220
        %v2285 = vtanh.pop %v2221
        %v2286 = vtanh.pop %v2222
        %v2287 = vtanh.pop %v2223
        %v2288 = vtanh.pop %v2224
        %v2289 = vtanh.pop %v2225
        %v2290 = vtanh.pop %v2226
        %v2291 = vtanh.pop %v2227
        %v2292 = vtanh.pop %v2228
        %v2293 = vtanh.pop %v2229
        %v2294 = vtanh.pop %v2230
        %v2295 = vtanh.pop %v2231
        %v2296 = vtanh.pop %v2232
        %v2297 = vtanh.pop %v2233
        %v2298 = vtanh.pop %v2234
        %v2299 = vtanh.pop %v2235
        %v2300 = vtanh.pop %v2236
        %v2301 = vtanh.pop %v2237
        %v2302 = vtanh.pop %v2238
        %v2303 = vtanh.pop %v2239
        %v2304 = vtanh.pop %v2240
        %v2305 = vtanh.pop %v2241
        %v2306 = vtanh.pop %v2242
        %v2307 = vtanh.pop %v2243
        %v2308 = vtanh.pop %v2244
        %v2309 = vtanh.pop %v2245
        %v2310 = vtanh.pop %v2246
        %v2311 = vtanh.pop %v2247
        %v2312 = vtanh.pop %v2248
        %v2313 = vtanh.pop %v2249
        %v2314 = vtanh.pop %v2250
        %v2315 = vtanh.pop %v2251
        %v2316 = vtanh.pop %v2252
        %2317 = vst [vmem:[%s224] sm:$0xff] %v2253
        %2318 = vst [vmem:[%s224 + $0x8] sm:$0xff] %v2254
        %2319 = vst [vmem:[%s224 + $0x10] sm:$0xff] %v2255
        %2320 = vst [vmem:[%s224 + $0x18] sm:$0xff] %v2256
        %2321 = vst [vmem:[%s224 + $0x20] sm:$0xff] %v2257
        %2322 = vst [vmem:[%s224 + $0x28] sm:$0xff] %v2258
        %2323 = vst [vmem:[%s224 + $0x30] sm:$0xff] %v2259
        %2324 = vst [vmem:[%s224 + $0x38] sm:$0xff] %v2260
        %2325 = vst [vmem:[%s224 + $0x40] sm:$0xff] %v2261
        %2326 = vst [vmem:[%s224 + $0x48] sm:$0xff] %v2262
        %2327 = vst [vmem:[%s224 + $0x50] sm:$0xff] %v2263
        %2328 = vst [vmem:[%s224 + $0x58] sm:$0xff] %v2264
        %2329 = vst [vmem:[%s224 + $0x60] sm:$0xff] %v2265
        %2330 = vst [vmem:[%s224 + $0x68] sm:$0xff] %v2266
        %2331 = vst [vmem:[%s224 + $0x70] sm:$0xff] %v2267
        %2332 = vst [vmem:[%s224 + $0x78] sm:$0xff] %v2268
        %2333 = vst [vmem:[%s224 + $0x80] sm:$0xff] %v2269
        %2334 = vst [vmem:[%s224 + $0x88] sm:$0xff] %v2270
        %2335 = vst [vmem:[%s224 + $0x90] sm:$0xff] %v2271
        %2336 = vst [vmem:[%s224 + $0x98] sm:$0xff] %v2272
        %2337 = vst [vmem:[%s224 + $0xa0] sm:$0xff] %v2273
        %2338 = vst [vmem:[%s224 + $0xa8] sm:$0xff] %v2274
        %2339 = vst [vmem:[%s224 + $0xb0] sm:$0xff] %v2275
        %2340 = vst [vmem:[%s224 + $0xb8] sm:$0xff] %v2276
        %2341 = vst [vmem:[%s224 + $0xc0] sm:$0xff] %v2277
        %2342 = vst [vmem:[%s224 + $0xc8] sm:$0xff] %v2278
        %2343 = vst [vmem:[%s224 + $0xd0] sm:$0xff] %v2279
        %2344 = vst [vmem:[%s224 + $0xd8] sm:$0xff] %v2280
        %2345 = vst [vmem:[%s224 + $0xe0] sm:$0xff] %v2281
        %2346 = vst [vmem:[%s224 + $0xe8] sm:$0xff] %v2282
        %2347 = vst [vmem:[%s224 + $0xf0] sm:$0xff] %v2283
        %2348 = vst [vmem:[%s224 + $0xf8] sm:$0xff] %v2284
        %2349 = vst [vmem:[%s224 + $0x100] sm:$0xff] %v2285
        %2350 = vst [vmem:[%s224 + $0x108] sm:$0xff] %v2286
        %2351 = vst [vmem:[%s224 + $0x110] sm:$0xff] %v2287
        %2352 = vst [vmem:[%s224 + $0x118] sm:$0xff] %v2288
        %2353 = vst [vmem:[%s224 + $0x120] sm:$0xff] %v2289
        %2354 = vst [vmem:[%s224 + $0x128] sm:$0xff] %v2290
        %2355 = vst [vmem:[%s224 + $0x130] sm:$0xff] %v2291
        %2356 = vst [vmem:[%s224 + $0x138] sm:$0xff] %v2292
        %2357 = vst [vmem:[%s224 + $0x140] sm:$0xff] %v2293
        %2358 = vst [vmem:[%s224 + $0x148] sm:$0xff] %v2294
        %2359 = vst [vmem:[%s224 + $0x150] sm:$0xff] %v2295
        %2360 = vst [vmem:[%s224 + $0x158] sm:$0xff] %v2296
        %2361 = vst [vmem:[%s224 + $0x160] sm:$0xff] %v2297
        %2362 = vst [vmem:[%s224 + $0x168] sm:$0xff] %v2298
        %2363 = vst [vmem:[%s224 + $0x170] sm:$0xff] %v2299
        %2364 = vst [vmem:[%s224 + $0x178] sm:$0xff] %v2300
        %2365 = vst [vmem:[%s224 + $0x180] sm:$0xff] %v2301
        %2366 = vst [vmem:[%s224 + $0x188] sm:$0xff] %v2302
        %2367 = vst [vmem:[%s224 + $0x190] sm:$0xff] %v2303
        %2368 = vst [vmem:[%s224 + $0x198] sm:$0xff] %v2304
        %2369 = vst [vmem:[%s224 + $0x1a0] sm:$0xff] %v2305
        %2370 = vst [vmem:[%s224 + $0x1a8] sm:$0xff] %v2306
        %2371 = vst [vmem:[%s224 + $0x1b0] sm:$0xff] %v2307
        %2372 = vst [vmem:[%s224 + $0x1b8] sm:$0xff] %v2308
        %2373 = vst [vmem:[%s224 + $0x1c0] sm:$0xff] %v2309
        %2374 = vst [vmem:[%s224 + $0x1c8] sm:$0xff] %v2310
        %2375 = vst [vmem:[%s224 + $0x1d0] sm:$0xff] %v2311
        %2376 = vst [vmem:[%s224 + $0x1d8] sm:$0xff] %v2312
        %2377 = vst [vmem:[%s224 + $0x1e0] sm:$0xff] %v2313
        %2378 = vst [vmem:[%s224 + $0x1e8] sm:$0xff] %v2314
        %2379 = vst [vmem:[%s224 + $0x1f0] sm:$0xff] %v2315
        %2380 = vst [vmem:[%s224 + $0x1f8] sm:$0xff] %v2316
      $region36: #{generator_forward.38} parent=27 // pred_fallthru
        _
      %s2381 = smul.u32 64, %s18
      %p2382 = scmp.lt.s32.totalorder %s2381, 255
      %s2383 = scalar_select %p2382, %s2381, 255
      %p2384 = scmp.lt.s32.totalorder %s19, 0
      %s2385 = scalar_select %p2384, %s19, 0
      %s2386 = sadd.s32 %s2385, %s2383
      %s2387 = smul.addr %s2386, 8
      %s2388 = scalar_lea.vmem %s2, %s2387
      // Predicated region
      $region37: #{generator_forward.38} parent=27 // pred_check
        %p2389 = pneg %p108
      $region38: #{generator_forward.38} parent=27 // pred_check_branch
        %2391 = sbr.rel (%p2389) target = $region40
      $region39: #{generator_forward.38} parent=27 // pred_region
        %s2392 = smul.u32 64, %s18
      $region40: #{generator_forward.38} parent=27 // pred_fallthru
        _
    $region28: #{generator_forward.38} parent=5 // pred_fallthru
      _
    %p2393 = scmp.le.s32.totalorder 2, %s8
    // Predicated region
    $region41: #{generator_forward.38} parent=5 // pred_check
      %p2394 = pneg %p2393
    $region42: #{generator_forward.38} parent=5 // pred_check_branch
      %2396 = sbr.rel (%p2394) target = $region44
    $region43: #{generator_forward.38} parent=5 // pred_region
      %s2397 = ssub.s32 %s8, 2
      // Predicated region
      $region45: #{generator_forward.38} parent=43 // pred_check
        %p2398 = pneg %p114
      $region46: #{generator_forward.38} parent=43 // pred_check_branch
        %2400 = sbr.rel (%p2398) target = $region48
      $region47: #{generator_forward.38} parent=43 // pred_region
        %s2401 = smul.u32 64, %s21
        %p2402 = scmp.lt.s32.totalorder %s2401, 255
        %s2403 = scalar_select %p2402, %s2401, 255
        %p2404 = scmp.lt.s32.totalorder %s22, 0
        %s2405 = scalar_select %p2404, %s22, 0
        %s2406 = sadd.s32 %s2405, %s2403
        %s2407 = smul.addr %s2406, 8
        %s2408 = scalar_lea.vmem %s2, %s2407
      $region48: #{generator_forward.38} parent=43 // pred_fallthru
        _
    $region44: #{generator_forward.38} parent=5 // pred_fallthru
      _
  $region6: #{generator_forward.38} parent=0 // loop_footer
    %s12 = sadd.s32 1, %s8
  $region7: #{generator_forward.38} parent=0 // loop_footer_branch
    %7 = sbr.rel target = $region3
  $region8: #{generator_forward.38} parent=0 // loop_exit
    _

</llo_original>
